<compile_context>
chip_gen: v5e
topology: v5e:2x2
jax: 0.10.0
libtpu: 0.0.40
codegen_flags: <defaults>
</compile_context>

<pallas_src>
import functools

import jax
import jax.numpy as jnp
from jax import lax
from jax.experimental import pallas as pl
from jax.experimental.pallas import tpu as pltpu


CONFIG = dict(
    input_dim=3,
    dim=16,
    n_layer=2,
    num_scales=2,
    norm="none",      # TODO(synk): 'bn'/'in'/'ln'/'adain' and SpectralNorm not implemented.
    activ="lrelu",
    pad_type="reflect",
)

_C_ALIGN = 8   # pad Cin to a multiple of 8 (layer-1 K becomes 128, taps 8-aligned)


def _round_up(x, m):
    return (x + m - 1) // m * m


# ---------------------------------------------------------------------------
# in-kernel helpers (operate on traced values inside the Pallas kernel body)
# ---------------------------------------------------------------------------

def _activate(a, activ):
    if activ == "lrelu":
        return jnp.maximum(a, 0.2 * a)        # LeakyReLU(0.2)
    if activ == "relu":
        return jnp.maximum(a, 0.0)
    if activ == "none":
        return a
    raise NotImplementedError(activ)          # TODO(synk): prelu / selu / tanh


def _pad1_hwc(x, pad_type):
    """Pad H and W (dims 0, 1) of an (H, W, C) value by 1, inside the kernel."""
    H, W, C = x.shape
    dt = x.dtype
    if pad_type == "zero":
        top = jnp.zeros((1, W, C), dt)
        bot = top
    elif pad_type == "reflect":
        top, bot = x[1:2], x[H - 2:H - 1]
    elif pad_type == "replicate":
        top, bot = x[0:1], x[H - 1:H]
    else:
        raise ValueError(f"Unsupported pad type: {pad_type}")
    xh = jnp.concatenate([top, x, bot], axis=0)              # (H+2, W, C)
    if pad_type == "zero":
        left = jnp.zeros((H + 2, 1, C), dt)
        right = left
    elif pad_type == "reflect":
        left, right = xh[:, 1:2], xh[:, W - 2:W - 1]
    else:  # replicate
        left, right = xh[:, 0:1], xh[:, W - 1:W]
    return jnp.concatenate([left, xh, right], axis=1)        # (H+2, W+2, C)


def _im2row_stride2_4x4(xp, Ho, Wo):
    """(Ho*Wo, 16*Cin) im2row of a padded (H+2, W+2, Cin) value.

    Even/odd row & column parities make every 4x4/stride-2 tap a contiguous
    slice; the 16 taps are concatenated along the channel (lane) dim so the
    whole conv is ONE MXU matmul with K = 16*Cin.
    """
    Hp, Wp, Cin = xp.shape
    xr = xp.reshape(Hp // 2, 2, Wp // 2, 2, Cin)
    sub = {(py, px): xr[:, py, :, px, :] for py in range(2) for px in range(2)}
    pieces = []
    for ky in range(4):
        qy, py = divmod(ky, 2)
        for kx in range(4):
            qx, px = divmod(kx, 2)
            pieces.append(sub[(py, px)][qy:qy + Ho, qx:qx + Wo, :])
    return jnp.concatenate(pieces, axis=-1).reshape(Ho * Wo, 16 * Cin)


def _conv4x4s2_block(x_hwc, w_kc, b_row, *, activ, pad_type):
    """Conv2dBlock(k=4, s=2, p=1, norm='none') + activation on an (H, W, C) value."""
    H, W, Cin = x_hwc.shape
    K, Cout = w_kc.shape
    Ho, Wo = H // 2, W // 2
    x = x_hwc.astype(w_kc.dtype)              # bf16 (or f32) for padding/im2row/MXU
    if K != 16 * Cin:                          # defensive in-kernel channel pad
        x = jnp.concatenate(
            [x, jnp.zeros((H, W, K // 16 - Cin), x.dtype)], axis=-1)
    xp = _pad1_hwc(x, pad_type)
    patch = _im2row_stride2_4x4(xp, Ho, Wo)                   # (Ho*Wo, K)
    prec = lax.Precision.HIGHEST if w_kc.dtype == jnp.float32 else None
    acc = jnp.dot(patch, w_kc, preferred_element_type=jnp.float32, precision=prec)
    acc = _activate(acc + b_row, activ)                       # f32 epilogue
    return acc.reshape(Ho, Wo, Cout)


def _avgpool3x3s2(x_hwc, recip_hw1):
    """AvgPool2d(3, stride=2, padding=1, count_include_pad=False) on (H, W, C)."""
    H, W, C = x_hwc.shape
    Ho, Wo = H // 2, W // 2
    xf = x_hwc.astype(jnp.float32)
    xp = jnp.concatenate(
        [jnp.zeros((1, W, C), jnp.float32), xf, jnp.zeros((1, W, C), jnp.float32)],
        axis=0)
    xp = jnp.concatenate(
        [jnp.zeros((H + 2, 1, C), jnp.float32), xp,
         jnp.zeros((H + 2, 1, C), jnp.float32)], axis=1)
    xr = xp.reshape((H + 2) // 2, 2, (W + 2) // 2, 2, C)
    sub = {(py, px): xr[:, py, :, px, :] for py in range(2) for px in range(2)}
    total = jnp.zeros((Ho, Wo, C), jnp.float32)
    for ky in range(3):
        qy, py = divmod(ky, 2)
        for kx in range(3):
            qx, px = divmod(kx, 2)
            total = total + sub[(py, px)][qy:qy + Ho, qx:qx + Wo, :]
    return total * recip_hw1[...]              # recip is (Ho, Wo, 1)


# ---------------------------------------------------------------------------
# fused per-scale kernel
# ---------------------------------------------------------------------------

def _dis_scale_kernel(*refs, n_conv, activ, pad_type, with_pool):
    """One full discriminator scale for one batch element, fully fused:

        [pad -> 4x4/s2 conv -> LeakyReLU] * n_conv -> 1x1 conv head
        (+ AvgPool2d(3, s=2, p=1) of the scale input, for the next scale)

    All intermediate activations stay on-chip; only the tiny head map and
    (optionally) the pooled image are written back to HBM.
    """
    idx = 0
    x_ref = refs[idx]; idx += 1
    conv_refs = []
    for _ in range(n_conv):
        conv_refs.append((refs[idx], refs[idx + 1]))
        idx += 2
    wh_ref, bh_ref = refs[idx], refs[idx + 1]; idx += 2
    recip_ref = None
    if with_pool:
        recip_ref = refs[idx]; idx += 1
    out_ref = refs[idx]; idx += 1
    pool_ref = refs[idx] if with_pool else None

    x = x_ref[0]                                           # (H, W, C), f32
    h = x
    for w_ref, b_ref in conv_refs:
        h = _conv4x4s2_block(h, w_ref[...], b_ref[...], activ=activ, pad_type=pad_type)

    Hh, Wh, Ch = h.shape
    hm = h.reshape(Hh * Wh, Ch)
    # 1x1 head as a VPU multiply + lane reduction (no N=1 MXU matmul).
    head = jnp.sum(hm * wh_ref[...], axis=-1, keepdims=True) + bh_ref[...]
    out_ref[...] = head.reshape(1, Hh, Wh, 1).astype(out_ref.dtype)

    if with_pool:
        H, W, C = x.shape
        pooled = _avgpool3x3s2(x, recip_ref[...])
        pool_ref[...] = pooled.reshape(1, H // 2, W // 2, C).astype(pool_ref.dtype)


def _dis_scale_call(x_nhwc, conv_params, head_params, recip, *,
                    activ, pad_type, with_pool):
    N, H, W, C = x_nhwc.shape
    n_conv = len(conv_params)
    assert H % (1 << n_conv) == 0 and W % (1 << n_conv) == 0, (H, W, n_conv)
    Hh, Wh = H >> n_conv, W >> n_conv

    inputs = [x_nhwc]
    in_specs = [pl.BlockSpec((1, H, W, C), lambda n: (n, 0, 0, 0))]
    for w_kc, b_row in conv_params:
        inputs += [w_kc, b_row]
        in_specs += [pl.BlockSpec(w_kc.shape, lambda n: (0, 0)),
                     pl.BlockSpec(b_row.shape, lambda n: (0, 0))]
    wh, bh = head_params
    inputs += [wh, bh]
    in_specs += [pl.BlockSpec(wh.shape, lambda n: (0, 0)),
                 pl.BlockSpec(bh.shape, lambda n: (0, 0))]
    if with_pool:
        inputs.append(recip)
        in_specs.append(pl.BlockSpec(recip.shape, lambda n: (0, 0, 0)))

    out_shapes = [jax.ShapeDtypeStruct((N, Hh, Wh, 1), x_nhwc.dtype)]
    out_specs = [pl.BlockSpec((1, Hh, Wh, 1), lambda n: (n, 0, 0, 0))]
    if with_pool:
        out_shapes.append(jax.ShapeDtypeStruct((N, H // 2, W // 2, C), x_nhwc.dtype))
        out_specs.append(pl.BlockSpec((1, H // 2, W // 2, C), lambda n: (n, 0, 0, 0)))

    kernel = functools.partial(_dis_scale_kernel, n_conv=n_conv, activ=activ,
                               pad_type=pad_type, with_pool=with_pool)
    return pl.pallas_call(
        kernel,
        out_shape=tuple(out_shapes),
        grid=(N,),
        in_specs=in_specs,
        out_specs=tuple(out_specs),
        compiler_params=pltpu.CompilerParams(dimension_semantics=("parallel",)),
    )(*inputs)


# ---------------------------------------------------------------------------
# parameters / forward
# ---------------------------------------------------------------------------

def init_ms_image_dis_params(key, cfg, dtype=jnp.float32):
    scales = []
    for s in range(cfg["num_scales"]):
        ks = jax.random.fold_in(key, s)
        convs = []
        cin, cout = cfg["input_dim"], cfg["dim"]
        for li in range(cfg["n_layer"]):
            kl = jax.random.fold_in(ks, li)
            kw, kb = jax.random.split(kl)
            scale = (2.0 / (16 * cin)) ** 0.5
            w = scale * jax.random.normal(kw, (4, 4, cin, cout), dtype)   # HWIO
            b = 0.01 * jax.random.normal(kb, (cout,), dtype)
            convs.append((w, b))
            cin, cout = cout, cout * 2
        kh = jax.random.fold_in(ks, 10_000)
        kw1, kb1 = jax.random.split(kh)
        w1 = (1.0 / cin) ** 0.5 * jax.random.normal(kw1, (cin, 1), dtype)
        b1 = 0.01 * jax.random.normal(kb1, (1,), dtype)
        scales.append({"convs": convs, "head": (w1, b1)})
    return scales


def _prepare_params(params, mm_dtype):
    prepared = []
    for sp in params:
        convs = []
        for w, b in sp["convs"]:
            kh, kw, cin, cout = w.shape
            cin_pad = _round_up(cin, _C_ALIGN)
            if cin_pad != cin:
                w = jnp.pad(w, ((0, 0), (0, 0), (0, cin_pad - cin), (0, 0)))
            w_kc = w.reshape(16 * cin_pad, cout).astype(mm_dtype)  # K order (ky,kx,cin)
            convs.append((w_kc, b.reshape(1, cout).astype(jnp.float32)))
        w1, b1 = sp["head"]
        head = (w1.reshape(1, -1).astype(jnp.float32),             # (1, C_last)
                b1.reshape(1, 1).astype(jnp.float32))
        prepared.append((convs, head))
    return prepared


def _avgpool_recip(H, W):
    """1 / (# valid cells) per output of AvgPool2d(3, s=2, p=1, count_include_pad=False)."""
    Ho, Wo = (H - 1) // 2 + 1, (W - 1) // 2 + 1
    i = jnp.arange(Ho)
    j = jnp.arange(Wo)
    rcnt = jnp.minimum(2 * i + 2, H) - jnp.maximum(2 * i, 1) + 1
    ccnt = jnp.minimum(2 * j + 2, W) - jnp.maximum(2 * j, 1) + 1
    cnt = (rcnt[:, None] * ccnt[None, :]).astype(jnp.float32)
    return (1.0 / cnt)[:, :, None]            # (Ho, Wo, 1)


def ms_image_dis_forward(x_nchw, params, *, use_bf16=True):
    """MsImageDis.forward: list of per-scale (N, 1, H/2^L, W/2^L) outputs."""
    cfg = CONFIG
    assert cfg["norm"] == "none"   # TODO(synk): other norms / spectral norm not implemented.
    mm_dtype = jnp.bfloat16 if use_bf16 else jnp.float32
    prepared = _prepare_params(params, mm_dtype)

    N, C, H, W = x_nchw.shape
    c_pad = _round_up(C, _C_ALIGN)
    # Single host-side prep op: NCHW -> NHWC + zero-pad channels (3 -> 8).
    # Everything between scales then stays NHWC with no further relayout.
    x = jnp.transpose(x_nchw, (0, 2, 3, 1))
    x = jnp.pad(x, ((0, 0), (0, 0), (0, 0), (0, c_pad - C)))

    outputs = []
    num_scales = len(prepared)
    for s, (convs, head) in enumerate(prepared):
        with_pool = s < num_scales - 1
        recip = _avgpool_recip(H, W) if with_pool else None
        res = _dis_scale_call(x, convs, head, recip,
                              activ=cfg["activ"], pad_type=cfg["pad_type"],
                              with_pool=with_pool)
        outputs.append(jnp.transpose(res[0], (0, 3, 1, 2)))   # tiny (N,1,h,w) map
        if with_pool:
            x = res[1]
            H, W = H // 2, W // 2
    return outputs


# ---------------------------------------------------------------------------
# pure-JAX reference (correctness check)
# ---------------------------------------------------------------------------

def _ref_forward(x_nchw, params):
    cfg = CONFIG
    hp = lax.Precision.HIGHEST
    pad_mode = {"zero": "constant", "reflect": "reflect", "replicate": "edge"}[cfg["pad_type"]]
    outs = []
    x = x_nchw
    for s, sp in enumerate(params):
        h = x
        for w, b in sp["convs"]:
            hpad = jnp.pad(h, ((0, 0), (0, 0), (1, 1), (1, 1)), mode=pad_mode)
            h = lax.conv_general_dilated(
                hpad, w, (2, 2), "VALID",
                dimension_numbers=("NCHW", "HWIO", "NCHW"), precision=hp)
            h = _activate(h + b.reshape(1, -1, 1, 1), cfg["activ"])
        w1, b1 = sp["head"]
        h = jnp.einsum("nchw,ck->nkhw", h, w1, precision=hp) + b1.reshape(1, 1, 1, 1)
        outs.append(h)
        if s < len(params) - 1:
            xp = jnp.pad(x, ((0, 0), (0, 0), (1, 1), (1, 1)))
            ssum = lax.reduce_window(xp, 0.0, lax.add, (1, 1, 3, 3), (1, 1, 2, 2), "VALID")
            ones = jnp.pad(jnp.ones_like(x), ((0, 0), (0, 0), (1, 1), (1, 1)))
            cnt = lax.reduce_window(ones, 0.0, lax.add, (1, 1, 3, 3), (1, 1, 2, 2), "VALID")
            x = ssum / cnt
    return outs


if __name__ == "__main__":
    key = jax.random.PRNGKey(0)
    kx, kp = jax.random.split(key)
    N, H, W = 2, 16, 16
    x = jax.random.normal(kx, (N, CONFIG["input_dim"], H, W), jnp.float32)
    params = init_ms_image_dis_params(kp, CONFIG)

    refs = _ref_forward(x, params)
    expected = [(N, 1, H // 4, W // 4), (N, 1, H // 8, W // 8)]

    # f32 path (tight tolerance) and bf16-MXU path (loose tolerance).
    for use_bf16, tol in ((False, 1e-3), (True, 5e-2)):
        fwd = jax.jit(functools.partial(ms_image_dis_forward, use_bf16=use_bf16))
        outs = fwd(x, params)
        outs = [jax.block_until_ready(o) for o in outs]
        for o, e in zip(outs, expected):
            assert o.shape == e, (o.shape, e)
        for o, r in zip(outs, refs):
            err = float(jnp.max(jnp.abs(o - r)))
            assert jnp.allclose(o, r, rtol=tol, atol=tol), (use_bf16, err)

    print("KERNEL_OK")
</pallas_src>

<mosaic_0001>
module attributes {stable_mosaic.version = 11 : i64} {
  func.func @_dis_scale_kernel(%arg0: i32, %arg1: memref<1x8x8x8xf32, #tpu.memory_space<vmem>>, %arg2: memref<128x16xf32, #tpu.memory_space<vmem>>, %arg3: memref<1x16xf32, #tpu.memory_space<vmem>>, %arg4: memref<256x32xf32, #tpu.memory_space<vmem>>, %arg5: memref<1x32xf32, #tpu.memory_space<vmem>>, %arg6: memref<1x32xf32, #tpu.memory_space<vmem>>, %arg7: memref<1x1xf32, #tpu.memory_space<vmem>>, %arg8: memref<1x2x2x1xf32, #tpu.memory_space<vmem>>) attributes {dimension_semantics = [#tpu.dimension_semantics<parallel>], iteration_bounds = array<i64: 2>, scalar_prefetch = 0 : i64, scratch_operands = 0 : i64, tpu.core_type = #tpu.core_type<tc>, window_params = [{transform_indices = @transform_0, window_bounds = array<i64: 1, 8, 8, 8>}, {pipeline_mode = #tpu.pipeline_mode<synchronous>, transform_indices = @transform_1, window_bounds = array<i64: 128, 16>}, {pipeline_mode = #tpu.pipeline_mode<synchronous>, transform_indices = @transform_2, window_bounds = array<i64: 1, 16>}, {pipeline_mode = #tpu.pipeline_mode<synchronous>, transform_indices = @transform_3, window_bounds = array<i64: 256, 32>}, {pipeline_mode = #tpu.pipeline_mode<synchronous>, transform_indices = @transform_4, window_bounds = array<i64: 1, 32>}, {pipeline_mode = #tpu.pipeline_mode<synchronous>, transform_indices = @transform_5, window_bounds = array<i64: 1, 32>}, {pipeline_mode = #tpu.pipeline_mode<synchronous>, transform_indices = @transform_6, window_bounds = array<i64: 1, 1>}, {transform_indices = @transform_7, window_bounds = array<i64: 1, 2, 2, 1>}]} {
    %c0 = arith.constant 0 : index
    %c0_0 = arith.constant 0 : index
    %c0_1 = arith.constant 0 : index
    %c0_2 = arith.constant 0 : index
    %0 = vector.load %arg1[%c0, %c0_0, %c0_1, %c0_2] : memref<1x8x8x8xf32, #tpu.memory_space<vmem>>, vector<1x8x8x8xf32>
    %1 = vector.shape_cast %0 : vector<1x8x8x8xf32> to vector<8x8x8xf32>
    %c0_3 = arith.constant 0 : index
    %c0_4 = arith.constant 0 : index
    %2 = vector.load %arg2[%c0_3, %c0_4] : memref<128x16xf32, #tpu.memory_space<vmem>>, vector<128x16xf32>
    %c0_5 = arith.constant 0 : index
    %c0_6 = arith.constant 0 : index
    %3 = vector.load %arg3[%c0_5, %c0_6] : memref<1x16xf32, #tpu.memory_space<vmem>>, vector<1x16xf32>
    %4 = vector.extract_strided_slice %1 {offsets = [1, 0, 0], sizes = [1, 8, 8], strides = [1, 1, 1]} : vector<8x8x8xf32> to vector<1x8x8xf32>
    %5 = vector.extract_strided_slice %1 {offsets = [6, 0, 0], sizes = [1, 8, 8], strides = [1, 1, 1]} : vector<8x8x8xf32> to vector<1x8x8xf32>
    %6 = tpu.concatenate %4, %1, %5 in 0 : vector<1x8x8xf32>, vector<8x8x8xf32>, vector<1x8x8xf32> -> vector<10x8x8xf32>
    %7 = vector.extract_strided_slice %6 {offsets = [0, 1, 0], sizes = [10, 1, 8], strides = [1, 1, 1]} : vector<10x8x8xf32> to vector<10x1x8xf32>
    %8 = vector.extract_strided_slice %6 {offsets = [0, 6, 0], sizes = [10, 1, 8], strides = [1, 1, 1]} : vector<10x8x8xf32> to vector<10x1x8xf32>
    %9 = tpu.concatenate %7, %6, %8 in 1 : vector<10x1x8xf32>, vector<10x8x8xf32>, vector<10x1x8xf32> -> vector<10x10x8xf32>
    %10 = vector.shape_cast %9 : vector<10x10x8xf32> to vector<5x2x5x2x8xf32>
    %11 = vector.extract_strided_slice %10 {offsets = [0, 0, 0, 0, 0], sizes = [5, 1, 5, 1, 8], strides = [1, 1, 1, 1, 1]} : vector<5x2x5x2x8xf32> to vector<5x1x5x1x8xf32>
    %12 = vector.shape_cast %11 : vector<5x1x5x1x8xf32> to vector<5x5x8xf32>
    %13 = vector.extract_strided_slice %10 {offsets = [0, 0, 0, 1, 0], sizes = [5, 1, 5, 1, 8], strides = [1, 1, 1, 1, 1]} : vector<5x2x5x2x8xf32> to vector<5x1x5x1x8xf32>
    %14 = vector.shape_cast %13 : vector<5x1x5x1x8xf32> to vector<5x5x8xf32>
    %15 = vector.extract_strided_slice %10 {offsets = [0, 1, 0, 0, 0], sizes = [5, 1, 5, 1, 8], strides = [1, 1, 1, 1, 1]} : vector<5x2x5x2x8xf32> to vector<5x1x5x1x8xf32>
    %16 = vector.shape_cast %15 : vector<5x1x5x1x8xf32> to vector<5x5x8xf32>
    %17 = vector.extract_strided_slice %10 {offsets = [0, 1, 0, 1, 0], sizes = [5, 1, 5, 1, 8], strides = [1, 1, 1, 1, 1]} : vector<5x2x5x2x8xf32> to vector<5x1x5x1x8xf32>
    %18 = vector.shape_cast %17 : vector<5x1x5x1x8xf32> to vector<5x5x8xf32>
    %19 = vector.extract_strided_slice %12 {offsets = [0, 0, 0], sizes = [4, 4, 8], strides = [1, 1, 1]} : vector<5x5x8xf32> to vector<4x4x8xf32>
    %20 = vector.extract_strided_slice %14 {offsets = [0, 0, 0], sizes = [4, 4, 8], strides = [1, 1, 1]} : vector<5x5x8xf32> to vector<4x4x8xf32>
    %21 = vector.extract_strided_slice %12 {offsets = [0, 1, 0], sizes = [4, 4, 8], strides = [1, 1, 1]} : vector<5x5x8xf32> to vector<4x4x8xf32>
    %22 = vector.extract_strided_slice %14 {offsets = [0, 1, 0], sizes = [4, 4, 8], strides = [1, 1, 1]} : vector<5x5x8xf32> to vector<4x4x8xf32>
    %23 = vector.extract_strided_slice %16 {offsets = [0, 0, 0], sizes = [4, 4, 8], strides = [1, 1, 1]} : vector<5x5x8xf32> to vector<4x4x8xf32>
    %24 = vector.extract_strided_slice %18 {offsets = [0, 0, 0], sizes = [4, 4, 8], strides = [1, 1, 1]} : vector<5x5x8xf32> to vector<4x4x8xf32>
    %25 = vector.extract_strided_slice %16 {offsets = [0, 1, 0], sizes = [4, 4, 8], strides = [1, 1, 1]} : vector<5x5x8xf32> to vector<4x4x8xf32>
    %26 = vector.extract_strided_slice %18 {offsets = [0, 1, 0], sizes = [4, 4, 8], strides = [1, 1, 1]} : vector<5x5x8xf32> to vector<4x4x8xf32>
    %27 = vector.extract_strided_slice %12 {offsets = [1, 0, 0], sizes = [4, 4, 8], strides = [1, 1, 1]} : vector<5x5x8xf32> to vector<4x4x8xf32>
    %28 = vector.extract_strided_slice %14 {offsets = [1, 0, 0], sizes = [4, 4, 8], strides = [1, 1, 1]} : vector<5x5x8xf32> to vector<4x4x8xf32>
    %29 = vector.extract_strided_slice %12 {offsets = [1, 1, 0], sizes = [4, 4, 8], strides = [1, 1, 1]} : vector<5x5x8xf32> to vector<4x4x8xf32>
    %30 = vector.extract_strided_slice %14 {offsets = [1, 1, 0], sizes = [4, 4, 8], strides = [1, 1, 1]} : vector<5x5x8xf32> to vector<4x4x8xf32>
    %31 = vector.extract_strided_slice %16 {offsets = [1, 0, 0], sizes = [4, 4, 8], strides = [1, 1, 1]} : vector<5x5x8xf32> to vector<4x4x8xf32>
    %32 = vector.extract_strided_slice %18 {offsets = [1, 0, 0], sizes = [4, 4, 8], strides = [1, 1, 1]} : vector<5x5x8xf32> to vector<4x4x8xf32>
    %33 = vector.extract_strided_slice %16 {offsets = [1, 1, 0], sizes = [4, 4, 8], strides = [1, 1, 1]} : vector<5x5x8xf32> to vector<4x4x8xf32>
    %34 = vector.extract_strided_slice %18 {offsets = [1, 1, 0], sizes = [4, 4, 8], strides = [1, 1, 1]} : vector<5x5x8xf32> to vector<4x4x8xf32>
    %35 = tpu.concatenate %19, %20, %21, %22, %23, %24, %25, %26, %27, %28, %29, %30, %31, %32, %33, %34 in 2 : vector<4x4x8xf32>, vector<4x4x8xf32>, vector<4x4x8xf32>, vector<4x4x8xf32>, vector<4x4x8xf32>, vector<4x4x8xf32>, vector<4x4x8xf32>, vector<4x4x8xf32>, vector<4x4x8xf32>, vector<4x4x8xf32>, vector<4x4x8xf32>, vector<4x4x8xf32>, vector<4x4x8xf32>, vector<4x4x8xf32>, vector<4x4x8xf32>, vector<4x4x8xf32> -> vector<4x4x128xf32>
    %36 = vector.shape_cast %35 : vector<4x4x128xf32> to vector<16x128xf32>
    %cst = arith.constant dense<0.000000e+00> : vector<16x16xf32>
    %37 = tpu.matmul %36, %2, %cst {dimension_numbers = #tpu.dot_dimension_numbers<[1], [0], [0], [1], [0, 0, 1, 1], [], []>, precision = #tpu.contract_precision<fp32>} : vector<16x128xf32>, vector<128x16xf32>, vector<16x16xf32> -> vector<16x16xf32>
    %38 = vector.broadcast %3 : vector<1x16xf32> to vector<16x16xf32>
    %39 = arith.addf %37, %38 : vector<16x16xf32>
    %cst_7 = arith.constant 2.000000e-01 : f32
    %40 = vector.broadcast %cst_7 : f32 to vector<16x16xf32>
    %41 = arith.mulf %40, %39 : vector<16x16xf32>
    %42 = arith.maximumf %39, %41 : vector<16x16xf32>
    %43 = vector.shape_cast %42 : vector<16x16xf32> to vector<4x4x16xf32>
    %c0_8 = arith.constant 0 : index
    %c0_9 = arith.constant 0 : index
    %44 = vector.load %arg4[%c0_8, %c0_9] : memref<256x32xf32, #tpu.memory_space<vmem>>, vector<256x32xf32>
    %c0_10 = arith.constant 0 : index
    %c0_11 = arith.constant 0 : index
    %45 = vector.load %arg5[%c0_10, %c0_11] : memref<1x32xf32, #tpu.memory_space<vmem>>, vector<1x32xf32>
    %46 = vector.extract_strided_slice %43 {offsets = [1, 0, 0], sizes = [1, 4, 16], strides = [1, 1, 1]} : vector<4x4x16xf32> to vector<1x4x16xf32>
    %47 = vector.extract_strided_slice %43 {offsets = [2, 0, 0], sizes = [1, 4, 16], strides = [1, 1, 1]} : vector<4x4x16xf32> to vector<1x4x16xf32>
    %48 = tpu.concatenate %46, %43, %47 in 0 : vector<1x4x16xf32>, vector<4x4x16xf32>, vector<1x4x16xf32> -> vector<6x4x16xf32>
    %49 = vector.extract_strided_slice %48 {offsets = [0, 1, 0], sizes = [6, 1, 16], strides = [1, 1, 1]} : vector<6x4x16xf32> to vector<6x1x16xf32>
    %50 = vector.extract_strided_slice %48 {offsets = [0, 2, 0], sizes = [6, 1, 16], strides = [1, 1, 1]} : vector<6x4x16xf32> to vector<6x1x16xf32>
    %51 = tpu.concatenate %49, %48, %50 in 1 : vector<6x1x16xf32>, vector<6x4x16xf32>, vector<6x1x16xf32> -> vector<6x6x16xf32>
    %52 = vector.shape_cast %51 : vector<6x6x16xf32> to vector<3x2x3x2x16xf32>
    %53 = vector.extract_strided_slice %52 {offsets = [0, 0, 0, 0, 0], sizes = [3, 1, 3, 1, 16], strides = [1, 1, 1, 1, 1]} : vector<3x2x3x2x16xf32> to vector<3x1x3x1x16xf32>
    %54 = vector.shape_cast %53 : vector<3x1x3x1x16xf32> to vector<3x3x16xf32>
    %55 = vector.extract_strided_slice %52 {offsets = [0, 0, 0, 1, 0], sizes = [3, 1, 3, 1, 16], strides = [1, 1, 1, 1, 1]} : vector<3x2x3x2x16xf32> to vector<3x1x3x1x16xf32>
    %56 = vector.shape_cast %55 : vector<3x1x3x1x16xf32> to vector<3x3x16xf32>
    %57 = vector.extract_strided_slice %52 {offsets = [0, 1, 0, 0, 0], sizes = [3, 1, 3, 1, 16], strides = [1, 1, 1, 1, 1]} : vector<3x2x3x2x16xf32> to vector<3x1x3x1x16xf32>
    %58 = vector.shape_cast %57 : vector<3x1x3x1x16xf32> to vector<3x3x16xf32>
    %59 = vector.extract_strided_slice %52 {offsets = [0, 1, 0, 1, 0], sizes = [3, 1, 3, 1, 16], strides = [1, 1, 1, 1, 1]} : vector<3x2x3x2x16xf32> to vector<3x1x3x1x16xf32>
    %60 = vector.shape_cast %59 : vector<3x1x3x1x16xf32> to vector<3x3x16xf32>
    %61 = vector.extract_strided_slice %54 {offsets = [0, 0, 0], sizes = [2, 2, 16], strides = [1, 1, 1]} : vector<3x3x16xf32> to vector<2x2x16xf32>
    %62 = vector.extract_strided_slice %56 {offsets = [0, 0, 0], sizes = [2, 2, 16], strides = [1, 1, 1]} : vector<3x3x16xf32> to vector<2x2x16xf32>
    %63 = vector.extract_strided_slice %54 {offsets = [0, 1, 0], sizes = [2, 2, 16], strides = [1, 1, 1]} : vector<3x3x16xf32> to vector<2x2x16xf32>
    %64 = vector.extract_strided_slice %56 {offsets = [0, 1, 0], sizes = [2, 2, 16], strides = [1, 1, 1]} : vector<3x3x16xf32> to vector<2x2x16xf32>
    %65 = vector.extract_strided_slice %58 {offsets = [0, 0, 0], sizes = [2, 2, 16], strides = [1, 1, 1]} : vector<3x3x16xf32> to vector<2x2x16xf32>
    %66 = vector.extract_strided_slice %60 {offsets = [0, 0, 0], sizes = [2, 2, 16], strides = [1, 1, 1]} : vector<3x3x16xf32> to vector<2x2x16xf32>
    %67 = vector.extract_strided_slice %58 {offsets = [0, 1, 0], sizes = [2, 2, 16], strides = [1, 1, 1]} : vector<3x3x16xf32> to vector<2x2x16xf32>
    %68 = vector.extract_strided_slice %60 {offsets = [0, 1, 0], sizes = [2, 2, 16], strides = [1, 1, 1]} : vector<3x3x16xf32> to vector<2x2x16xf32>
    %69 = vector.extract_strided_slice %54 {offsets = [1, 0, 0], sizes = [2, 2, 16], strides = [1, 1, 1]} : vector<3x3x16xf32> to vector<2x2x16xf32>
    %70 = vector.extract_strided_slice %56 {offsets = [1, 0, 0], sizes = [2, 2, 16], strides = [1, 1, 1]} : vector<3x3x16xf32> to vector<2x2x16xf32>
    %71 = vector.extract_strided_slice %54 {offsets = [1, 1, 0], sizes = [2, 2, 16], strides = [1, 1, 1]} : vector<3x3x16xf32> to vector<2x2x16xf32>
    %72 = vector.extract_strided_slice %56 {offsets = [1, 1, 0], sizes = [2, 2, 16], strides = [1, 1, 1]} : vector<3x3x16xf32> to vector<2x2x16xf32>
    %73 = vector.extract_strided_slice %58 {offsets = [1, 0, 0], sizes = [2, 2, 16], strides = [1, 1, 1]} : vector<3x3x16xf32> to vector<2x2x16xf32>
    %74 = vector.extract_strided_slice %60 {offsets = [1, 0, 0], sizes = [2, 2, 16], strides = [1, 1, 1]} : vector<3x3x16xf32> to vector<2x2x16xf32>
    %75 = vector.extract_strided_slice %58 {offsets = [1, 1, 0], sizes = [2, 2, 16], strides = [1, 1, 1]} : vector<3x3x16xf32> to vector<2x2x16xf32>
    %76 = vector.extract_strided_slice %60 {offsets = [1, 1, 0], sizes = [2, 2, 16], strides = [1, 1, 1]} : vector<3x3x16xf32> to vector<2x2x16xf32>
    %77 = tpu.concatenate %61, %62, %63, %64, %65, %66, %67, %68, %69, %70, %71, %72, %73, %74, %75, %76 in 2 : vector<2x2x16xf32>, vector<2x2x16xf32>, vector<2x2x16xf32>, vector<2x2x16xf32>, vector<2x2x16xf32>, vector<2x2x16xf32>, vector<2x2x16xf32>, vector<2x2x16xf32>, vector<2x2x16xf32>, vector<2x2x16xf32>, vector<2x2x16xf32>, vector<2x2x16xf32>, vector<2x2x16xf32>, vector<2x2x16xf32>, vector<2x2x16xf32>, vector<2x2x16xf32> -> vector<2x2x256xf32>
    %78 = vector.shape_cast %77 : vector<2x2x256xf32> to vector<4x256xf32>
    %cst_12 = arith.constant dense<0.000000e+00> : vector<4x32xf32>
    %79 = tpu.matmul %78, %44, %cst_12 {dimension_numbers = #tpu.dot_dimension_numbers<[1], [0], [0], [1], [0, 0, 1, 1], [], []>, precision = #tpu.contract_precision<fp32>} : vector<4x256xf32>, vector<256x32xf32>, vector<4x32xf32> -> vector<4x32xf32>
    %80 = vector.broadcast %45 : vector<1x32xf32> to vector<4x32xf32>
    %81 = arith.addf %79, %80 : vector<4x32xf32>
    %cst_13 = arith.constant 2.000000e-01 : f32
    %82 = vector.broadcast %cst_13 : f32 to vector<4x32xf32>
    %83 = arith.mulf %82, %81 : vector<4x32xf32>
    %84 = arith.maximumf %81, %83 : vector<4x32xf32>
    %85 = vector.shape_cast %84 : vector<4x32xf32> to vector<2x2x32xf32>
    %86 = vector.shape_cast %85 : vector<2x2x32xf32> to vector<4x32xf32>
    %c0_14 = arith.constant 0 : index
    %c0_15 = arith.constant 0 : index
    %87 = vector.load %arg6[%c0_14, %c0_15] : memref<1x32xf32, #tpu.memory_space<vmem>>, vector<1x32xf32>
    %88 = vector.broadcast %87 : vector<1x32xf32> to vector<4x32xf32>
    %89 = arith.mulf %86, %88 : vector<4x32xf32>
    %cst_16 = arith.constant dense<0.000000e+00> : vector<4xf32>
    %90 = vector.multi_reduction <add>, %89, %cst_16 [1] : vector<4x32xf32> to vector<4xf32>
    %91 = vector.shape_cast %90 : vector<4xf32> to vector<4x1xf32>
    %c0_17 = arith.constant 0 : index
    %c0_18 = arith.constant 0 : index
    %92 = vector.load %arg7[%c0_17, %c0_18] : memref<1x1xf32, #tpu.memory_space<vmem>>, vector<1x1xf32>
    %93 = vector.broadcast %92 : vector<1x1xf32> to vector<4x1xf32>
    %94 = arith.addf %91, %93 : vector<4x1xf32>
    %95 = vector.shape_cast %94 : vector<4x1xf32> to vector<1x2x2x1xf32>
    %c0_19 = arith.constant 0 : index
    %c0_20 = arith.constant 0 : index
    %c0_21 = arith.constant 0 : index
    %c0_22 = arith.constant 0 : index
    %96 = vector.load %arg8[%c0_19, %c0_20, %c0_21, %c0_22] : memref<1x2x2x1xf32, #tpu.memory_space<vmem>>, vector<1x2x2x1xf32>
    tpu.vector_store %arg8[%c0_19, %c0_20, %c0_21, %c0_22], %95 {strides = array<i32>} : memref<1x2x2x1xf32, #tpu.memory_space<vmem>>, vector<1x2x2x1xf32>,
    return
  }
  func.func @transform_0(%arg0: i32) -> (i32, i32, i32, i32) {
    %c0_i32 = arith.constant 0 : i32
    %c0_i32_0 = arith.constant 0 : i32
    %c0_i32_1 = arith.constant 0 : i32
    %c0_i32_2 = arith.constant 0 : i32
    return %arg0, %c0_i32, %c0_i32_0, %c0_i32_1 : i32, i32, i32, i32
  }
  func.func @transform_1(%arg0: i32) -> (i32, i32) {
    %c0_i32 = arith.constant 0 : i32
    %c0_i32_0 = arith.constant 0 : i32
    %c0_i32_1 = arith.constant 0 : i32
    return %c0_i32, %c0_i32_0 : i32, i32
  }
  func.func @transform_2(%arg0: i32) -> (i32, i32) {
    %c0_i32 = arith.constant 0 : i32
    %c0_i32_0 = arith.constant 0 : i32
    %c0_i32_1 = arith.constant 0 : i32
    return %c0_i32, %c0_i32_0 : i32, i32
  }
  func.func @transform_3(%arg0: i32) -> (i32, i32) {
    %c0_i32 = arith.constant 0 : i32
    %c0_i32_0 = arith.constant 0 : i32
    %c0_i32_1 = arith.constant 0 : i32
    return %c0_i32, %c0_i32_0 : i32, i32
  }
  func.func @transform_4(%arg0: i32) -> (i32, i32) {
    %c0_i32 = arith.constant 0 : i32
    %c0_i32_0 = arith.constant 0 : i32
    %c0_i32_1 = arith.constant 0 : i32
    return %c0_i32, %c0_i32_0 : i32, i32
  }
  func.func @transform_5(%arg0: i32) -> (i32, i32) {
    %c0_i32 = arith.constant 0 : i32
    %c0_i32_0 = arith.constant 0 : i32
    %c0_i32_1 = arith.constant 0 : i32
    return %c0_i32, %c0_i32_0 : i32, i32
  }
  func.func @transform_6(%arg0: i32) -> (i32, i32) {
    %c0_i32 = arith.constant 0 : i32
    %c0_i32_0 = arith.constant 0 : i32
    %c0_i32_1 = arith.constant 0 : i32
    return %c0_i32, %c0_i32_0 : i32, i32
  }
  func.func @transform_7(%arg0: i32) -> (i32, i32, i32, i32) {
    %c0_i32 = arith.constant 0 : i32
    %c0_i32_0 = arith.constant 0 : i32
    %c0_i32_1 = arith.constant 0 : i32
    %c0_i32_2 = arith.constant 0 : i32
    return %arg0, %c0_i32, %c0_i32_0, %c0_i32_1 : i32, i32, i32, i32
  }
}

module attributes {stable_mosaic.version = 11 : i64} {
  func.func @_dis_scale_kernel(%arg0: i32, %arg1: memref<1x16x16x8xf32, #tpu.memory_space<vmem>>, %arg2: memref<128x16xf32, #tpu.memory_space<vmem>>, %arg3: memref<1x16xf32, #tpu.memory_space<vmem>>, %arg4: memref<256x32xf32, #tpu.memory_space<vmem>>, %arg5: memref<1x32xf32, #tpu.memory_space<vmem>>, %arg6: memref<1x32xf32, #tpu.memory_space<vmem>>, %arg7: memref<1x1xf32, #tpu.memory_space<vmem>>, %arg8: memref<8x8x1xf32, #tpu.memory_space<vmem>>, %arg9: memref<1x4x4x1xf32, #tpu.memory_space<vmem>>, %arg10: memref<1x8x8x8xf32, #tpu.memory_space<vmem>>) attributes {dimension_semantics = [#tpu.dimension_semantics<parallel>], iteration_bounds = array<i64: 2>, scalar_prefetch = 0 : i64, scratch_operands = 0 : i64, tpu.core_type = #tpu.core_type<tc>, window_params = [{transform_indices = @transform_0, window_bounds = array<i64: 1, 16, 16, 8>}, {pipeline_mode = #tpu.pipeline_mode<synchronous>, transform_indices = @transform_1, window_bounds = array<i64: 128, 16>}, {pipeline_mode = #tpu.pipeline_mode<synchronous>, transform_indices = @transform_2, window_bounds = array<i64: 1, 16>}, {pipeline_mode = #tpu.pipeline_mode<synchronous>, transform_indices = @transform_3, window_bounds = array<i64: 256, 32>}, {pipeline_mode = #tpu.pipeline_mode<synchronous>, transform_indices = @transform_4, window_bounds = array<i64: 1, 32>}, {pipeline_mode = #tpu.pipeline_mode<synchronous>, transform_indices = @transform_5, window_bounds = array<i64: 1, 32>}, {pipeline_mode = #tpu.pipeline_mode<synchronous>, transform_indices = @transform_6, window_bounds = array<i64: 1, 1>}, {pipeline_mode = #tpu.pipeline_mode<synchronous>, transform_indices = @transform_7, window_bounds = array<i64: 8, 8, 1>}, {transform_indices = @transform_8, window_bounds = array<i64: 1, 4, 4, 1>}, {transform_indices = @transform_9, window_bounds = array<i64: 1, 8, 8, 8>}]} {
    %c0 = arith.constant 0 : index
    %c0_0 = arith.constant 0 : index
    %c0_1 = arith.constant 0 : index
    %c0_2 = arith.constant 0 : index
    %0 = vector.load %arg1[%c0, %c0_0, %c0_1, %c0_2] : memref<1x16x16x8xf32, #tpu.memory_space<vmem>>, vector<1x16x16x8xf32>
    %1 = vector.shape_cast %0 : vector<1x16x16x8xf32> to vector<16x16x8xf32>
    %c0_3 = arith.constant 0 : index
    %c0_4 = arith.constant 0 : index
    %2 = vector.load %arg2[%c0_3, %c0_4] : memref<128x16xf32, #tpu.memory_space<vmem>>, vector<128x16xf32>
    %c0_5 = arith.constant 0 : index
    %c0_6 = arith.constant 0 : index
    %3 = vector.load %arg3[%c0_5, %c0_6] : memref<1x16xf32, #tpu.memory_space<vmem>>, vector<1x16xf32>
    %4 = vector.extract_strided_slice %1 {offsets = [1, 0, 0], sizes = [1, 16, 8], strides = [1, 1, 1]} : vector<16x16x8xf32> to vector<1x16x8xf32>
    %5 = vector.extract_strided_slice %1 {offsets = [14, 0, 0], sizes = [1, 16, 8], strides = [1, 1, 1]} : vector<16x16x8xf32> to vector<1x16x8xf32>
    %6 = tpu.concatenate %4, %1, %5 in 0 : vector<1x16x8xf32>, vector<16x16x8xf32>, vector<1x16x8xf32> -> vector<18x16x8xf32>
    %7 = vector.extract_strided_slice %6 {offsets = [0, 1, 0], sizes = [18, 1, 8], strides = [1, 1, 1]} : vector<18x16x8xf32> to vector<18x1x8xf32>
    %8 = vector.extract_strided_slice %6 {offsets = [0, 14, 0], sizes = [18, 1, 8], strides = [1, 1, 1]} : vector<18x16x8xf32> to vector<18x1x8xf32>
    %9 = tpu.concatenate %7, %6, %8 in 1 : vector<18x1x8xf32>, vector<18x16x8xf32>, vector<18x1x8xf32> -> vector<18x18x8xf32>
    %10 = vector.shape_cast %9 : vector<18x18x8xf32> to vector<9x2x9x2x8xf32>
    %11 = vector.extract_strided_slice %10 {offsets = [0, 0, 0, 0, 0], sizes = [9, 1, 9, 1, 8], strides = [1, 1, 1, 1, 1]} : vector<9x2x9x2x8xf32> to vector<9x1x9x1x8xf32>
    %12 = vector.shape_cast %11 : vector<9x1x9x1x8xf32> to vector<9x9x8xf32>
    %13 = vector.extract_strided_slice %10 {offsets = [0, 0, 0, 1, 0], sizes = [9, 1, 9, 1, 8], strides = [1, 1, 1, 1, 1]} : vector<9x2x9x2x8xf32> to vector<9x1x9x1x8xf32>
    %14 = vector.shape_cast %13 : vector<9x1x9x1x8xf32> to vector<9x9x8xf32>
    %15 = vector.extract_strided_slice %10 {offsets = [0, 1, 0, 0, 0], sizes = [9, 1, 9, 1, 8], strides = [1, 1, 1, 1, 1]} : vector<9x2x9x2x8xf32> to vector<9x1x9x1x8xf32>
    %16 = vector.shape_cast %15 : vector<9x1x9x1x8xf32> to vector<9x9x8xf32>
    %17 = vector.extract_strided_slice %10 {offsets = [0, 1, 0, 1, 0], sizes = [9, 1, 9, 1, 8], strides = [1, 1, 1, 1, 1]} : vector<9x2x9x2x8xf32> to vector<9x1x9x1x8xf32>
    %18 = vector.shape_cast %17 : vector<9x1x9x1x8xf32> to vector<9x9x8xf32>
    %19 = vector.extract_strided_slice %12 {offsets = [0, 0, 0], sizes = [8, 8, 8], strides = [1, 1, 1]} : vector<9x9x8xf32> to vector<8x8x8xf32>
    %20 = vector.extract_strided_slice %14 {offsets = [0, 0, 0], sizes = [8, 8, 8], strides = [1, 1, 1]} : vector<9x9x8xf32> to vector<8x8x8xf32>
    %21 = vector.extract_strided_slice %12 {offsets = [0, 1, 0], sizes = [8, 8, 8], strides = [1, 1, 1]} : vector<9x9x8xf32> to vector<8x8x8xf32>
    %22 = vector.extract_strided_slice %14 {offsets = [0, 1, 0], sizes = [8, 8, 8], strides = [1, 1, 1]} : vector<9x9x8xf32> to vector<8x8x8xf32>
    %23 = vector.extract_strided_slice %16 {offsets = [0, 0, 0], sizes = [8, 8, 8], strides = [1, 1, 1]} : vector<9x9x8xf32> to vector<8x8x8xf32>
    %24 = vector.extract_strided_slice %18 {offsets = [0, 0, 0], sizes = [8, 8, 8], strides = [1, 1, 1]} : vector<9x9x8xf32> to vector<8x8x8xf32>
    %25 = vector.extract_strided_slice %16 {offsets = [0, 1, 0], sizes = [8, 8, 8], strides = [1, 1, 1]} : vector<9x9x8xf32> to vector<8x8x8xf32>
    %26 = vector.extract_strided_slice %18 {offsets = [0, 1, 0], sizes = [8, 8, 8], strides = [1, 1, 1]} : vector<9x9x8xf32> to vector<8x8x8xf32>
    %27 = vector.extract_strided_slice %12 {offsets = [1, 0, 0], sizes = [8, 8, 8], strides = [1, 1, 1]} : vector<9x9x8xf32> to vector<8x8x8xf32>
    %28 = vector.extract_strided_slice %14 {offsets = [1, 0, 0], sizes = [8, 8, 8], strides = [1, 1, 1]} : vector<9x9x8xf32> to vector<8x8x8xf32>
    %29 = vector.extract_strided_slice %12 {offsets = [1, 1, 0], sizes = [8, 8, 8], strides = [1, 1, 1]} : vector<9x9x8xf32> to vector<8x8x8xf32>
    %30 = vector.extract_strided_slice %14 {offsets = [1, 1, 0], sizes = [8, 8, 8], strides = [1, 1, 1]} : vector<9x9x8xf32> to vector<8x8x8xf32>
    %31 = vector.extract_strided_slice %16 {offsets = [1, 0, 0], sizes = [8, 8, 8], strides = [1, 1, 1]} : vector<9x9x8xf32> to vector<8x8x8xf32>
    %32 = vector.extract_strided_slice %18 {offsets = [1, 0, 0], sizes = [8, 8, 8], strides = [1, 1, 1]} : vector<9x9x8xf32> to vector<8x8x8xf32>
    %33 = vector.extract_strided_slice %16 {offsets = [1, 1, 0], sizes = [8, 8, 8], strides = [1, 1, 1]} : vector<9x9x8xf32> to vector<8x8x8xf32>
    %34 = vector.extract_strided_slice %18 {offsets = [1, 1, 0], sizes = [8, 8, 8], strides = [1, 1, 1]} : vector<9x9x8xf32> to vector<8x8x8xf32>
    %35 = tpu.concatenate %19, %20, %21, %22, %23, %24, %25, %26, %27, %28, %29, %30, %31, %32, %33, %34 in 2 : vector<8x8x8xf32>, vector<8x8x8xf32>, vector<8x8x8xf32>, vector<8x8x8xf32>, vector<8x8x8xf32>, vector<8x8x8xf32>, vector<8x8x8xf32>, vector<8x8x8xf32>, vector<8x8x8xf32>, vector<8x8x8xf32>, vector<8x8x8xf32>, vector<8x8x8xf32>, vector<8x8x8xf32>, vector<8x8x8xf32>, vector<8x8x8xf32>, vector<8x8x8xf32> -> vector<8x8x128xf32>
    %36 = vector.shape_cast %35 : vector<8x8x128xf32> to vector<64x128xf32>
    %cst = arith.constant dense<0.000000e+00> : vector<64x16xf32>
    %37 = tpu.matmul %36, %2, %cst {dimension_numbers = #tpu.dot_dimension_numbers<[1], [0], [0], [1], [0, 0, 1, 1], [], []>, precision = #tpu.contract_precision<fp32>} : vector<64x128xf32>, vector<128x16xf32>, vector<64x16xf32> -> vector<64x16xf32>
    %38 = vector.broadcast %3 : vector<1x16xf32> to vector<64x16xf32>
    %39 = arith.addf %37, %38 : vector<64x16xf32>
    %cst_7 = arith.constant 2.000000e-01 : f32
    %40 = vector.broadcast %cst_7 : f32 to vector<64x16xf32>
    %41 = arith.mulf %40, %39 : vector<64x16xf32>
    %42 = arith.maximumf %39, %41 : vector<64x16xf32>
    %43 = vector.shape_cast %42 : vector<64x16xf32> to vector<8x8x16xf32>
    %c0_8 = arith.constant 0 : index
    %c0_9 = arith.constant 0 : index
    %44 = vector.load %arg4[%c0_8, %c0_9] : memref<256x32xf32, #tpu.memory_space<vmem>>, vector<256x32xf32>
    %c0_10 = arith.constant 0 : index
    %c0_11 = arith.constant 0 : index
    %45 = vector.load %arg5[%c0_10, %c0_11] : memref<1x32xf32, #tpu.memory_space<vmem>>, vector<1x32xf32>
    %46 = vector.extract_strided_slice %43 {offsets = [1, 0, 0], sizes = [1, 8, 16], strides = [1, 1, 1]} : vector<8x8x16xf32> to vector<1x8x16xf32>
    %47 = vector.extract_strided_slice %43 {offsets = [6, 0, 0], sizes = [1, 8, 16], strides = [1, 1, 1]} : vector<8x8x16xf32> to vector<1x8x16xf32>
    %48 = tpu.concatenate %46, %43, %47 in 0 : vector<1x8x16xf32>, vector<8x8x16xf32>, vector<1x8x16xf32> -> vector<10x8x16xf32>
    %49 = vector.extract_strided_slice %48 {offsets = [0, 1, 0], sizes = [10, 1, 16], strides = [1, 1, 1]} : vector<10x8x16xf32> to vector<10x1x16xf32>
    %50 = vector.extract_strided_slice %48 {offsets = [0, 6, 0], sizes = [10, 1, 16], strides = [1, 1, 1]} : vector<10x8x16xf32> to vector<10x1x16xf32>
    %51 = tpu.concatenate %49, %48, %50 in 1 : vector<10x1x16xf32>, vector<10x8x16xf32>, vector<10x1x16xf32> -> vector<10x10x16xf32>
    %52 = vector.shape_cast %51 : vector<10x10x16xf32> to vector<5x2x5x2x16xf32>
    %53 = vector.extract_strided_slice %52 {offsets = [0, 0, 0, 0, 0], sizes = [5, 1, 5, 1, 16], strides = [1, 1, 1, 1, 1]} : vector<5x2x5x2x16xf32> to vector<5x1x5x1x16xf32>
    %54 = vector.shape_cast %53 : vector<5x1x5x1x16xf32> to vector<5x5x16xf32>
    %55 = vector.extract_strided_slice %52 {offsets = [0, 0, 0, 1, 0], sizes = [5, 1, 5, 1, 16], strides = [1, 1, 1, 1, 1]} : vector<5x2x5x2x16xf32> to vector<5x1x5x1x16xf32>
    %56 = vector.shape_cast %55 : vector<5x1x5x1x16xf32> to vector<5x5x16xf32>
    %57 = vector.extract_strided_slice %52 {offsets = [0, 1, 0, 0, 0], sizes = [5, 1, 5, 1, 16], strides = [1, 1, 1, 1, 1]} : vector<5x2x5x2x16xf32> to vector<5x1x5x1x16xf32>
    %58 = vector.shape_cast %57 : vector<5x1x5x1x16xf32> to vector<5x5x16xf32>
    %59 = vector.extract_strided_slice %52 {offsets = [0, 1, 0, 1, 0], sizes = [5, 1, 5, 1, 16], strides = [1, 1, 1, 1, 1]} : vector<5x2x5x2x16xf32> to vector<5x1x5x1x16xf32>
    %60 = vector.shape_cast %59 : vector<5x1x5x1x16xf32> to vector<5x5x16xf32>
    %61 = vector.extract_strided_slice %54 {offsets = [0, 0, 0], sizes = [4, 4, 16], strides = [1, 1, 1]} : vector<5x5x16xf32> to vector<4x4x16xf32>
    %62 = vector.extract_strided_slice %56 {offsets = [0, 0, 0], sizes = [4, 4, 16], strides = [1, 1, 1]} : vector<5x5x16xf32> to vector<4x4x16xf32>
    %63 = vector.extract_strided_slice %54 {offsets = [0, 1, 0], sizes = [4, 4, 16], strides = [1, 1, 1]} : vector<5x5x16xf32> to vector<4x4x16xf32>
    %64 = vector.extract_strided_slice %56 {offsets = [0, 1, 0], sizes = [4, 4, 16], strides = [1, 1, 1]} : vector<5x5x16xf32> to vector<4x4x16xf32>
    %65 = vector.extract_strided_slice %58 {offsets = [0, 0, 0], sizes = [4, 4, 16], strides = [1, 1, 1]} : vector<5x5x16xf32> to vector<4x4x16xf32>
    %66 = vector.extract_strided_slice %60 {offsets = [0, 0, 0], sizes = [4, 4, 16], strides = [1, 1, 1]} : vector<5x5x16xf32> to vector<4x4x16xf32>
    %67 = vector.extract_strided_slice %58 {offsets = [0, 1, 0], sizes = [4, 4, 16], strides = [1, 1, 1]} : vector<5x5x16xf32> to vector<4x4x16xf32>
    %68 = vector.extract_strided_slice %60 {offsets = [0, 1, 0], sizes = [4, 4, 16], strides = [1, 1, 1]} : vector<5x5x16xf32> to vector<4x4x16xf32>
    %69 = vector.extract_strided_slice %54 {offsets = [1, 0, 0], sizes = [4, 4, 16], strides = [1, 1, 1]} : vector<5x5x16xf32> to vector<4x4x16xf32>
    %70 = vector.extract_strided_slice %56 {offsets = [1, 0, 0], sizes = [4, 4, 16], strides = [1, 1, 1]} : vector<5x5x16xf32> to vector<4x4x16xf32>
    %71 = vector.extract_strided_slice %54 {offsets = [1, 1, 0], sizes = [4, 4, 16], strides = [1, 1, 1]} : vector<5x5x16xf32> to vector<4x4x16xf32>
    %72 = vector.extract_strided_slice %56 {offsets = [1, 1, 0], sizes = [4, 4, 16], strides = [1, 1, 1]} : vector<5x5x16xf32> to vector<4x4x16xf32>
    %73 = vector.extract_strided_slice %58 {offsets = [1, 0, 0], sizes = [4, 4, 16], strides = [1, 1, 1]} : vector<5x5x16xf32> to vector<4x4x16xf32>
    %74 = vector.extract_strided_slice %60 {offsets = [1, 0, 0], sizes = [4, 4, 16], strides = [1, 1, 1]} : vector<5x5x16xf32> to vector<4x4x16xf32>
    %75 = vector.extract_strided_slice %58 {offsets = [1, 1, 0], sizes = [4, 4, 16], strides = [1, 1, 1]} : vector<5x5x16xf32> to vector<4x4x16xf32>
    %76 = vector.extract_strided_slice %60 {offsets = [1, 1, 0], sizes = [4, 4, 16], strides = [1, 1, 1]} : vector<5x5x16xf32> to vector<4x4x16xf32>
    %77 = tpu.concatenate %61, %62, %63, %64, %65, %66, %67, %68, %69, %70, %71, %72, %73, %74, %75, %76 in 2 : vector<4x4x16xf32>, vector<4x4x16xf32>, vector<4x4x16xf32>, vector<4x4x16xf32>, vector<4x4x16xf32>, vector<4x4x16xf32>, vector<4x4x16xf32>, vector<4x4x16xf32>, vector<4x4x16xf32>, vector<4x4x16xf32>, vector<4x4x16xf32>, vector<4x4x16xf32>, vector<4x4x16xf32>, vector<4x4x16xf32>, vector<4x4x16xf32>, vector<4x4x16xf32> -> vector<4x4x256xf32>
    %78 = vector.shape_cast %77 : vector<4x4x256xf32> to vector<16x256xf32>
    %cst_12 = arith.constant dense<0.000000e+00> : vector<16x32xf32>
    %79 = tpu.matmul %78, %44, %cst_12 {dimension_numbers = #tpu.dot_dimension_numbers<[1], [0], [0], [1], [0, 0, 1, 1], [], []>, precision = #tpu.contract_precision<fp32>} : vector<16x256xf32>, vector<256x32xf32>, vector<16x32xf32> -> vector<16x32xf32>
    %80 = vector.broadcast %45 : vector<1x32xf32> to vector<16x32xf32>
    %81 = arith.addf %79, %80 : vector<16x32xf32>
    %cst_13 = arith.constant 2.000000e-01 : f32
    %82 = vector.broadcast %cst_13 : f32 to vector<16x32xf32>
    %83 = arith.mulf %82, %81 : vector<16x32xf32>
    %84 = arith.maximumf %81, %83 : vector<16x32xf32>
    %85 = vector.shape_cast %84 : vector<16x32xf32> to vector<4x4x32xf32>
    %86 = vector.shape_cast %85 : vector<4x4x32xf32> to vector<16x32xf32>
    %c0_14 = arith.constant 0 : index
    %c0_15 = arith.constant 0 : index
    %87 = vector.load %arg6[%c0_14, %c0_15] : memref<1x32xf32, #tpu.memory_space<vmem>>, vector<1x32xf32>
    %88 = vector.broadcast %87 : vector<1x32xf32> to vector<16x32xf32>
    %89 = arith.mulf %86, %88 : vector<16x32xf32>
    %cst_16 = arith.constant dense<0.000000e+00> : vector<16xf32>
    %90 = vector.multi_reduction <add>, %89, %cst_16 [1] : vector<16x32xf32> to vector<16xf32>
    %91 = vector.shape_cast %90 : vector<16xf32> to vector<16x1xf32>
    %c0_17 = arith.constant 0 : index
    %c0_18 = arith.constant 0 : index
    %92 = vector.load %arg7[%c0_17, %c0_18] : memref<1x1xf32, #tpu.memory_space<vmem>>, vector<1x1xf32>
    %93 = vector.broadcast %92 : vector<1x1xf32> to vector<16x1xf32>
    %94 = arith.addf %91, %93 : vector<16x1xf32>
    %95 = vector.shape_cast %94 : vector<16x1xf32> to vector<1x4x4x1xf32>
    %c0_19 = arith.constant 0 : index
    %c0_20 = arith.constant 0 : index
    %c0_21 = arith.constant 0 : index
    %c0_22 = arith.constant 0 : index
    %96 = vector.load %arg9[%c0_19, %c0_20, %c0_21, %c0_22] : memref<1x4x4x1xf32, #tpu.memory_space<vmem>>, vector<1x4x4x1xf32>
    tpu.vector_store %arg9[%c0_19, %c0_20, %c0_21, %c0_22], %95 {strides = array<i32>} : memref<1x4x4x1xf32, #tpu.memory_space<vmem>>, vector<1x4x4x1xf32>,
    %c0_23 = arith.constant 0 : index
    %c0_24 = arith.constant 0 : index
    %c0_25 = arith.constant 0 : index
    %97 = vector.load %arg8[%c0_23, %c0_24, %c0_25] : memref<8x8x1xf32, #tpu.memory_space<vmem>>, vector<8x8x1xf32>
    %cst_26 = arith.constant 0.000000e+00 : f32
    %98 = vector.broadcast %cst_26 : f32 to vector<1x16x8xf32>
    %cst_27 = arith.constant 0.000000e+00 : f32
    %99 = vector.broadcast %cst_27 : f32 to vector<1x16x8xf32>
    %100 = tpu.concatenate %98, %1, %99 in 0 : vector<1x16x8xf32>, vector<16x16x8xf32>, vector<1x16x8xf32> -> vector<18x16x8xf32>
    %cst_28 = arith.constant 0.000000e+00 : f32
    %101 = vector.broadcast %cst_28 : f32 to vector<18x1x8xf32>
    %cst_29 = arith.constant 0.000000e+00 : f32
    %102 = vector.broadcast %cst_29 : f32 to vector<18x1x8xf32>
    %103 = tpu.concatenate %101, %100, %102 in 1 : vector<18x1x8xf32>, vector<18x16x8xf32>, vector<18x1x8xf32> -> vector<18x18x8xf32>
    %104 = vector.shape_cast %103 : vector<18x18x8xf32> to vector<9x2x9x2x8xf32>
    %105 = vector.extract_strided_slice %104 {offsets = [0, 0, 0, 0, 0], sizes = [9, 1, 9, 1, 8], strides = [1, 1, 1, 1, 1]} : vector<9x2x9x2x8xf32> to vector<9x1x9x1x8xf32>
    %106 = vector.shape_cast %105 : vector<9x1x9x1x8xf32> to vector<9x9x8xf32>
    %107 = vector.extract_strided_slice %104 {offsets = [0, 0, 0, 1, 0], sizes = [9, 1, 9, 1, 8], strides = [1, 1, 1, 1, 1]} : vector<9x2x9x2x8xf32> to vector<9x1x9x1x8xf32>
    %108 = vector.shape_cast %107 : vector<9x1x9x1x8xf32> to vector<9x9x8xf32>
    %109 = vector.extract_strided_slice %104 {offsets = [0, 1, 0, 0, 0], sizes = [9, 1, 9, 1, 8], strides = [1, 1, 1, 1, 1]} : vector<9x2x9x2x8xf32> to vector<9x1x9x1x8xf32>
    %110 = vector.shape_cast %109 : vector<9x1x9x1x8xf32> to vector<9x9x8xf32>
    %111 = vector.extract_strided_slice %104 {offsets = [0, 1, 0, 1, 0], sizes = [9, 1, 9, 1, 8], strides = [1, 1, 1, 1, 1]} : vector<9x2x9x2x8xf32> to vector<9x1x9x1x8xf32>
    %112 = vector.shape_cast %111 : vector<9x1x9x1x8xf32> to vector<9x9x8xf32>
    %cst_30 = arith.constant 0.000000e+00 : f32
    %113 = vector.broadcast %cst_30 : f32 to vector<8x8x8xf32>
    %114 = vector.extract_strided_slice %106 {offsets = [0, 0, 0], sizes = [8, 8, 8], strides = [1, 1, 1]} : vector<9x9x8xf32> to vector<8x8x8xf32>
    %115 = arith.addf %113, %114 : vector<8x8x8xf32>
    %116 = vector.extract_strided_slice %108 {offsets = [0, 0, 0], sizes = [8, 8, 8], strides = [1, 1, 1]} : vector<9x9x8xf32> to vector<8x8x8xf32>
    %117 = arith.addf %115, %116 : vector<8x8x8xf32>
    %118 = vector.extract_strided_slice %106 {offsets = [0, 1, 0], sizes = [8, 8, 8], strides = [1, 1, 1]} : vector<9x9x8xf32> to vector<8x8x8xf32>
    %119 = arith.addf %117, %118 : vector<8x8x8xf32>
    %120 = vector.extract_strided_slice %110 {offsets = [0, 0, 0], sizes = [8, 8, 8], strides = [1, 1, 1]} : vector<9x9x8xf32> to vector<8x8x8xf32>
    %121 = arith.addf %119, %120 : vector<8x8x8xf32>
    %122 = vector.extract_strided_slice %112 {offsets = [0, 0, 0], sizes = [8, 8, 8], strides = [1, 1, 1]} : vector<9x9x8xf32> to vector<8x8x8xf32>
    %123 = arith.addf %121, %122 : vector<8x8x8xf32>
    %124 = vector.extract_strided_slice %110 {offsets = [0, 1, 0], sizes = [8, 8, 8], strides = [1, 1, 1]} : vector<9x9x8xf32> to vector<8x8x8xf32>
    %125 = arith.addf %123, %124 : vector<8x8x8xf32>
    %126 = vector.extract_strided_slice %106 {offsets = [1, 0, 0], sizes = [8, 8, 8], strides = [1, 1, 1]} : vector<9x9x8xf32> to vector<8x8x8xf32>
    %127 = arith.addf %125, %126 : vector<8x8x8xf32>
    %128 = vector.extract_strided_slice %108 {offsets = [1, 0, 0], sizes = [8, 8, 8], strides = [1, 1, 1]} : vector<9x9x8xf32> to vector<8x8x8xf32>
    %129 = arith.addf %127, %128 : vector<8x8x8xf32>
    %130 = vector.extract_strided_slice %106 {offsets = [1, 1, 0], sizes = [8, 8, 8], strides = [1, 1, 1]} : vector<9x9x8xf32> to vector<8x8x8xf32>
    %131 = arith.addf %129, %130 : vector<8x8x8xf32>
    %132 = vector.broadcast %97 : vector<8x8x1xf32> to vector<8x8x8xf32>
    %133 = arith.mulf %131, %132 : vector<8x8x8xf32>
    %134 = vector.shape_cast %133 : vector<8x8x8xf32> to vector<1x8x8x8xf32>
    %c0_31 = arith.constant 0 : index
    %c0_32 = arith.constant 0 : index
    %c0_33 = arith.constant 0 : index
    %c0_34 = arith.constant 0 : index
    %135 = vector.load %arg10[%c0_31, %c0_32, %c0_33, %c0_34] : memref<1x8x8x8xf32, #tpu.memory_space<vmem>>, vector<1x8x8x8xf32>
    tpu.vector_store %arg10[%c0_31, %c0_32, %c0_33, %c0_34], %134 {strides = array<i32>} : memref<1x8x8x8xf32, #tpu.memory_space<vmem>>, vector<1x8x8x8xf32>,
    return
  }
  func.func @transform_0(%arg0: i32) -> (i32, i32, i32, i32) {
    %c0_i32 = arith.constant 0 : i32
    %c0_i32_0 = arith.constant 0 : i32
    %c0_i32_1 = arith.constant 0 : i32
    %c0_i32_2 = arith.constant 0 : i32
    return %arg0, %c0_i32, %c0_i32_0, %c0_i32_1 : i32, i32, i32, i32
  }
  func.func @transform_1(%arg0: i32) -> (i32, i32) {
    %c0_i32 = arith.constant 0 : i32
    %c0_i32_0 = arith.constant 0 : i32
    %c0_i32_1 = arith.constant 0 : i32
    return %c0_i32, %c0_i32_0 : i32, i32
  }
  func.func @transform_2(%arg0: i32) -> (i32, i32) {
    %c0_i32 = arith.constant 0 : i32
    %c0_i32_0 = arith.constant 0 : i32
    %c0_i32_1 = arith.constant 0 : i32
    return %c0_i32, %c0_i32_0 : i32, i32
  }
  func.func @transform_3(%arg0: i32) -> (i32, i32) {
    %c0_i32 = arith.constant 0 : i32
    %c0_i32_0 = arith.constant 0 : i32
    %c0_i32_1 = arith.constant 0 : i32
    return %c0_i32, %c0_i32_0 : i32, i32
  }
  func.func @transform_4(%arg0: i32) -> (i32, i32) {
    %c0_i32 = arith.constant 0 : i32
    %c0_i32_0 = arith.constant 0 : i32
    %c0_i32_1 = arith.constant 0 : i32
    return %c0_i32, %c0_i32_0 : i32, i32
  }
  func.func @transform_5(%arg0: i32) -> (i32, i32) {
    %c0_i32 = arith.constant 0 : i32
    %c0_i32_0 = arith.constant 0 : i32
    %c0_i32_1 = arith.constant 0 : i32
    return %c0_i32, %c0_i32_0 : i32, i32
  }
  func.func @transform_6(%arg0: i32) -> (i32, i32) {
    %c0_i32 = arith.constant 0 : i32
    %c0_i32_0 = arith.constant 0 : i32
    %c0_i32_1 = arith.constant 0 : i32
    return %c0_i32, %c0_i32_0 : i32, i32
  }
  func.func @transform_7(%arg0: i32) -> (i32, i32, i32) {
    %c0_i32 = arith.constant 0 : i32
    %c0_i32_0 = arith.constant 0 : i32
    %c0_i32_1 = arith.constant 0 : i32
    %c0_i32_2 = arith.constant 0 : i32
    return %c0_i32, %c0_i32_0, %c0_i32_1 : i32, i32, i32
  }
  func.func @transform_8(%arg0: i32) -> (i32, i32, i32, i32) {
    %c0_i32 = arith.constant 0 : i32
    %c0_i32_0 = arith.constant 0 : i32
    %c0_i32_1 = arith.constant 0 : i32
    %c0_i32_2 = arith.constant 0 : i32
    return %arg0, %c0_i32, %c0_i32_0, %c0_i32_1 : i32, i32, i32, i32
  }
  func.func @transform_9(%arg0: i32) -> (i32, i32, i32, i32) {
    %c0_i32 = arith.constant 0 : i32
    %c0_i32_0 = arith.constant 0 : i32
    %c0_i32_1 = arith.constant 0 : i32
    %c0_i32_2 = arith.constant 0 : i32
    return %arg0, %c0_i32, %c0_i32_0, %c0_i32_1 : i32, i32, i32, i32
  }
}

</mosaic_0001>

<llo_original>
// kernel: ms_image_dis_forward.3
$region0: #{ms_image_dis_forward.3}
  #allocation0 [shape = 'u32[]', space=smem, size = 0x4, offset = 0x4, fixed_abs, tag = 'smem constant byte address 0x4 - core index']
  #allocation1 [shape = 'u32[72,128]{1,0:T(1,128)}', space=vmem, size = 0x9000, scoped, tag = 'internal scratch']
  #allocation2 [shape = 'f32[1,1]{1,0:T(1,128)S(1)}', space=vmem, size = 0x200, scoped, tag = 'scoped memory for ms_image_dis_forward.3']
  %s0 = inlined_call_operand.vmem [shape: f32[2,8,8,8], index: 0, kind: input, shape index: {}]
  %s1 = inlined_call_operand.vmem [shape: f32[128,16], index: 1, kind: input, shape index: {}]
  %s2 = inlined_call_operand.vmem [shape: f32[1,16], index: 2, kind: input, shape index: {}]
  %s3 = inlined_call_operand.vmem [shape: f32[256,32], index: 3, kind: input, shape index: {}]
  %s4 = inlined_call_operand.vmem [shape: f32[1,32], index: 4, kind: input, shape index: {}]
  %s5 = inlined_call_operand.vmem [shape: f32[1,32], index: 5, kind: input, shape index: {}]
  %s6 = inlined_call_operand.<no memory space> [shape: f32[1,1], index: 6, kind: input, shape index: {}]
  %s7 = inlined_call_operand.vmem [shape: f32[2,2,2,1], index: 7, kind: output, shape index: {}]
  %s8 = sld [smem:[#allocation0]]
  $region61: #{ms_image_dis_forward.3} parent=0
    _
  %s10 = ssub.s32 1, %s8
  %s11 = scalar_select 0, %s10, %s8
  %v12 = vstv %s6
  %13 = vst [vmem:[#allocation2] sm:$0x1] %v12
  loop: start=0, step=1, limit=4
  $region2: #{ms_image_dis_forward.3} parent=0 // loop_pre_header
    _
  $region3: #{ms_image_dis_forward.3} parent=0 // loop_header
    %s15 = sphi 0, %s19
    %p16 = scmp.ge.s32.totalorder %s15, 4
    %s25 = sphi 0, %s27
    %s28 = sphi 0, %s25
    %s29 = sphi 0, %s28
    %s45 = sphi 0, %s29
    %s49 = sphi 0, %s49
    %s51 = sphi 0, %s49
    %s52 = sphi 0, %s51
    %s66 = sphi 0, %s52
    %s70 = sphi 0, %s70
    %s72 = sphi 0, %s70
    %s73 = sphi 0, %s72
    %s87 = sphi 0, %s73
    %s91 = sphi 0, %s91
    %s93 = sphi 0, %s91
    %s94 = sphi 0, %s93
    %s108 = sphi 0, %s94
    %s112 = sphi 0, %s112
    %s114 = sphi 0, %s112
    %s115 = sphi 0, %s114
    %s129 = sphi 0, %s115
    %s133 = sphi 0, %s133
    %s135 = sphi 0, %s133
    %s136 = sphi 0, %s135
    %s150 = sphi 0, %s136
    %s154 = sphi 0, %s154
    %s156 = sphi 0, %s154
    %s157 = sphi 0, %s156
    %s171 = sphi 0, %s157
    %s177 = sphi 0, %s179
    %s180 = sphi 0, %s177
    %s181 = sphi 0, %s180
    %s197 = sphi 0, %s181
  $region4: #{ms_image_dis_forward.3} parent=0 // loop_header_branch
    %18 = sbr.rel (%p16) target = $region8
  $region5: #{ms_image_dis_forward.3} parent=0 // loop_body
    %s20 = ssub.s32 %s15, 1
    %s21 = ssub.s32 %s15, 2
    %s22 = sadd.s32 %s15, 1
    %s23 = ssub.s32 %s15, %s22
    %p24 = scmp.eq.s32.totalorder %s23, 0
    %s26 = sadd.s32 %s25, 1
    %s27 = scalar_select %p24, %s25, %s26
    %p30 = pneg %p24
    %p31 = scmp.eq.s32.totalorder %s15, 1
    %p32 = por %p30, %p31
    %p33 = scmp.ne.s32.totalorder %s25, %s28
    %p34 = scmp.eq.s32.totalorder %s15, 0
    %p35 = por %p33, %p34
    %p36 = scmp.ne.s32.totalorder %s25, %s28
    %p37 = scmp.eq.s32.totalorder %s20, 1
    %p38 = por %p36, %p37
    %p39 = scmp.ne.s32.totalorder %s28, %s29
    %p40 = scmp.eq.s32.totalorder %s20, 0
    %p41 = por %p39, %p40
    %p42 = scmp.ne.s32.totalorder %s28, %s29
    %p43 = scmp.eq.s32.totalorder %s21, 1
    %p44 = por %p42, %p43
    %p46 = scmp.ne.s32.totalorder %s29, %s45
    %p47 = scmp.eq.s32.totalorder %s21, 0
    %p48 = por %p46, %p47
    %s50 = sadd.s32 %s49, 1
    %p53 = scmp.eq.s32.totalorder %s15, 1
    %p54 = scmp.ne.s32.totalorder %s49, %s51
    %p55 = scmp.eq.s32.totalorder %s15, 0
    %p56 = por %p54, %p55
    %p57 = scmp.ne.s32.totalorder %s49, %s51
    %p58 = scmp.eq.s32.totalorder %s20, 1
    %p59 = por %p57, %p58
    %p60 = scmp.ne.s32.totalorder %s51, %s52
    %p61 = scmp.eq.s32.totalorder %s20, 0
    %p62 = por %p60, %p61
    %p63 = scmp.ne.s32.totalorder %s51, %s52
    %p64 = scmp.eq.s32.totalorder %s21, 1
    %p65 = por %p63, %p64
    %p67 = scmp.ne.s32.totalorder %s52, %s66
    %p68 = scmp.eq.s32.totalorder %s21, 0
    %p69 = por %p67, %p68
    %s71 = sadd.s32 %s70, 1
    %p74 = scmp.eq.s32.totalorder %s15, 1
    %p75 = scmp.ne.s32.totalorder %s70, %s72
    %p76 = scmp.eq.s32.totalorder %s15, 0
    %p77 = por %p75, %p76
    %p78 = scmp.ne.s32.totalorder %s70, %s72
    %p79 = scmp.eq.s32.totalorder %s20, 1
    %p80 = por %p78, %p79
    %p81 = scmp.ne.s32.totalorder %s72, %s73
    %p82 = scmp.eq.s32.totalorder %s20, 0
    %p83 = por %p81, %p82
    %p84 = scmp.ne.s32.totalorder %s72, %s73
    %p85 = scmp.eq.s32.totalorder %s21, 1
    %p86 = por %p84, %p85
    %p88 = scmp.ne.s32.totalorder %s73, %s87
    %p89 = scmp.eq.s32.totalorder %s21, 0
    %p90 = por %p88, %p89
    %s92 = sadd.s32 %s91, 1
    %p95 = scmp.eq.s32.totalorder %s15, 1
    %p96 = scmp.ne.s32.totalorder %s91, %s93
    %p97 = scmp.eq.s32.totalorder %s15, 0
    %p98 = por %p96, %p97
    %p99 = scmp.ne.s32.totalorder %s91, %s93
    %p100 = scmp.eq.s32.totalorder %s20, 1
    %p101 = por %p99, %p100
    %p102 = scmp.ne.s32.totalorder %s93, %s94
    %p103 = scmp.eq.s32.totalorder %s20, 0
    %p104 = por %p102, %p103
    %p105 = scmp.ne.s32.totalorder %s93, %s94
    %p106 = scmp.eq.s32.totalorder %s21, 1
    %p107 = por %p105, %p106
    %p109 = scmp.ne.s32.totalorder %s94, %s108
    %p110 = scmp.eq.s32.totalorder %s21, 0
    %p111 = por %p109, %p110
    %s113 = sadd.s32 %s112, 1
    %p116 = scmp.eq.s32.totalorder %s15, 1
    %p117 = scmp.ne.s32.totalorder %s112, %s114
    %p118 = scmp.eq.s32.totalorder %s15, 0
    %p119 = por %p117, %p118
    %p120 = scmp.ne.s32.totalorder %s112, %s114
    %p121 = scmp.eq.s32.totalorder %s20, 1
    %p122 = por %p120, %p121
    %p123 = scmp.ne.s32.totalorder %s114, %s115
    %p124 = scmp.eq.s32.totalorder %s20, 0
    %p125 = por %p123, %p124
    %p126 = scmp.ne.s32.totalorder %s114, %s115
    %p127 = scmp.eq.s32.totalorder %s21, 1
    %p128 = por %p126, %p127
    %p130 = scmp.ne.s32.totalorder %s115, %s129
    %p131 = scmp.eq.s32.totalorder %s21, 0
    %p132 = por %p130, %p131
    %s134 = sadd.s32 %s133, 1
    %p137 = scmp.eq.s32.totalorder %s15, 1
    %p138 = scmp.ne.s32.totalorder %s133, %s135
    %p139 = scmp.eq.s32.totalorder %s15, 0
    %p140 = por %p138, %p139
    %p141 = scmp.ne.s32.totalorder %s133, %s135
    %p142 = scmp.eq.s32.totalorder %s20, 1
    %p143 = por %p141, %p142
    %p144 = scmp.ne.s32.totalorder %s135, %s136
    %p145 = scmp.eq.s32.totalorder %s20, 0
    %p146 = por %p144, %p145
    %p147 = scmp.ne.s32.totalorder %s135, %s136
    %p148 = scmp.eq.s32.totalorder %s21, 1
    %p149 = por %p147, %p148
    %p151 = scmp.ne.s32.totalorder %s136, %s150
    %p152 = scmp.eq.s32.totalorder %s21, 0
    %p153 = por %p151, %p152
    %s155 = sadd.s32 %s154, 1
    %p158 = scmp.eq.s32.totalorder %s15, 1
    %p159 = scmp.ne.s32.totalorder %s154, %s156
    %p160 = scmp.eq.s32.totalorder %s15, 0
    %p161 = por %p159, %p160
    %p162 = scmp.ne.s32.totalorder %s154, %s156
    %p163 = scmp.eq.s32.totalorder %s20, 1
    %p164 = por %p162, %p163
    %p165 = scmp.ne.s32.totalorder %s156, %s157
    %p166 = scmp.eq.s32.totalorder %s20, 0
    %p167 = por %p165, %p166
    %p168 = scmp.ne.s32.totalorder %s156, %s157
    %p169 = scmp.eq.s32.totalorder %s21, 1
    %p170 = por %p168, %p169
    %p172 = scmp.ne.s32.totalorder %s157, %s171
    %p173 = scmp.eq.s32.totalorder %s21, 0
    %p174 = por %p172, %p173
    %s175 = ssub.s32 %s15, %s22
    %p176 = scmp.eq.s32.totalorder %s175, 0
    %s178 = sadd.s32 %s177, 1
    %s179 = scalar_select %p176, %s177, %s178
    %p182 = pneg %p176
    %p183 = scmp.eq.s32.totalorder %s15, 1
    %p184 = por %p182, %p183
    %p185 = scmp.ne.s32.totalorder %s177, %s180
    %p186 = scmp.eq.s32.totalorder %s15, 0
    %p187 = por %p185, %p186
    %p188 = scmp.ne.s32.totalorder %s177, %s180
    %p189 = scmp.eq.s32.totalorder %s20, 1
    %p190 = por %p188, %p189
    %p191 = scmp.ne.s32.totalorder %s180, %s181
    %p192 = scmp.eq.s32.totalorder %s20, 0
    %p193 = por %p191, %p192
    %p194 = scmp.ne.s32.totalorder %s180, %s181
    %p195 = scmp.eq.s32.totalorder %s21, 1
    %p196 = por %p194, %p195
    %p198 = scmp.ne.s32.totalorder %s181, %s197
    %p199 = scmp.eq.s32.totalorder %s21, 0
    %p200 = por %p198, %p199
    %p201 = scmp.le.s32.totalorder 1, %s15
    %p202 = scmp.lt.s32.totalorder %s15, 3
    %p203 = pnand %p201, %p202
    %p204 = pneg %p203
    // Predicated region
    $region9: #{ms_image_dis_forward.3} parent=5 // pred_check
      _
    $region10: #{ms_image_dis_forward.3} parent=5 // pred_check_branch
      %206 = sbr.rel (%p203) target = $region12
    $region11: #{ms_image_dis_forward.3} parent=5 // pred_region
      %s207 = ssub.s32 %s15, 1
      // Predicated region
      $region13: #{ms_image_dis_forward.3} parent=11 // pred_check
        %p208 = pneg %p62
      $region14: #{ms_image_dis_forward.3} parent=11 // pred_check_branch
        %210 = sbr.rel (%p208) target = $region16
      $region15: #{ms_image_dis_forward.3} parent=11 // pred_region
        _
      $region16: #{ms_image_dis_forward.3} parent=11 // pred_fallthru
        _
      // Predicated region
      $region17: #{ms_image_dis_forward.3} parent=11 // pred_check
        %p211 = pneg %p83
      $region18: #{ms_image_dis_forward.3} parent=11 // pred_check_branch
        %213 = sbr.rel (%p211) target = $region20
      $region19: #{ms_image_dis_forward.3} parent=11 // pred_region
        _
      $region20: #{ms_image_dis_forward.3} parent=11 // pred_fallthru
        _
      // Predicated region
      $region21: #{ms_image_dis_forward.3} parent=11 // pred_check
        %p214 = pneg %p104
      $region22: #{ms_image_dis_forward.3} parent=11 // pred_check_branch
        %216 = sbr.rel (%p214) target = $region24
      $region23: #{ms_image_dis_forward.3} parent=11 // pred_region
        _
      $region24: #{ms_image_dis_forward.3} parent=11 // pred_fallthru
        _
      // Predicated region
      $region25: #{ms_image_dis_forward.3} parent=11 // pred_check
        %p217 = pneg %p125
      $region26: #{ms_image_dis_forward.3} parent=11 // pred_check_branch
        %219 = sbr.rel (%p217) target = $region28
      $region27: #{ms_image_dis_forward.3} parent=11 // pred_region
        _
      $region28: #{ms_image_dis_forward.3} parent=11 // pred_fallthru
        _
      // Predicated region
      $region29: #{ms_image_dis_forward.3} parent=11 // pred_check
        %p220 = pneg %p146
      $region30: #{ms_image_dis_forward.3} parent=11 // pred_check_branch
        %222 = sbr.rel (%p220) target = $region32
      $region31: #{ms_image_dis_forward.3} parent=11 // pred_region
        _
      $region32: #{ms_image_dis_forward.3} parent=11 // pred_fallthru
        _
      // Predicated region
      $region33: #{ms_image_dis_forward.3} parent=11 // pred_check
        %p223 = pneg %p167
      $region34: #{ms_image_dis_forward.3} parent=11 // pred_check_branch
        %225 = sbr.rel (%p223) target = $region36
      $region35: #{ms_image_dis_forward.3} parent=11 // pred_region
        _
      $region36: #{ms_image_dis_forward.3} parent=11 // pred_fallthru
        _
    $region12: #{ms_image_dis_forward.3} parent=5 // pred_fallthru
      _
    %p226 = scmp.lt.s32.totalorder %s15, 2
    // Predicated region
    $region37: #{ms_image_dis_forward.3} parent=5 // pred_check
      %p227 = pneg %p226
    $region38: #{ms_image_dis_forward.3} parent=5 // pred_check_branch
      %229 = sbr.rel (%p227) target = $region40
    $region39: #{ms_image_dis_forward.3} parent=5 // pred_region
      // Predicated region
      $region41: #{ms_image_dis_forward.3} parent=39 // pred_check
        %p230 = pneg %p35
      $region42: #{ms_image_dis_forward.3} parent=39 // pred_check_branch
        %232 = sbr.rel (%p230) target = $region44
      $region43: #{ms_image_dis_forward.3} parent=39 // pred_region
        %p233 = scmp.lt.s32.totalorder %s15, 1
        %s234 = scalar_select %p233, %s15, 1
        %s235 = smul.addr %s234, 8
        %s236 = smul.addr %s235, 8
        %s237 = scalar_lea.vmem %s0, %s236
      $region44: #{ms_image_dis_forward.3} parent=39 // pred_fallthru
        _
    $region40: #{ms_image_dis_forward.3} parent=5 // pred_fallthru
      _
    %p238 = scmp.le.s32.totalorder 1, %s15
    %p239 = scmp.lt.s32.totalorder %s15, 3
    %p240 = pnand %p238, %p239
    %p241 = pneg %p240
    // Predicated region
    $region45: #{ms_image_dis_forward.3} parent=5 // pred_check
      _
    $region46: #{ms_image_dis_forward.3} parent=5 // pred_check_branch
      %243 = sbr.rel (%p240) target = $region48
    $region47: #{ms_image_dis_forward.3} parent=5 // pred_region
      %s244 = ssub.s32 %s15, 1
      %p245 = scmp.lt.s32.totalorder %s20, 1
      %s246 = scalar_select %p245, %s20, 1
      %s247 = smul.addr %s246, 8
      %s248 = smul.addr %s247, 8
      %s249 = scalar_lea.vmem %s0, %s248
      %p250 = pneg %p41
      %p251 = pneg %p38
      %p252 = pneg %p62
      %p253 = pneg %p59
      %p254 = pneg %p83
      %p255 = pneg %p80
      %p256 = pneg %p104
      %p257 = pneg %p101
      %p258 = pneg %p125
      %p259 = pneg %p122
      %p260 = pneg %p146
      %p261 = pneg %p143
      %p262 = pneg %p167
      %p263 = pneg %p164
      %p264 = pneg %p193
      %p265 = pneg %p190
      %p266 = scmp.lt.s32.totalorder %s20, 1
      %s267 = scalar_select %p266, %s20, 1
      %s268 = smul.addr %s267, 2
      %s269 = smul.addr %s268, 2
      %s270 = scalar_lea.vmem %s7, %s269
      %p271 = scmp.lt.s32.totalorder %s20, 1
      %s272 = scalar_select %p271, %s20, 1
      %s273 = smul.addr %s272, 8
      %s274 = smul.addr %s273, 8
      %s275 = scalar_lea.vmem %s0, %s274
      %p276 = scmp.lt.s32.totalorder %s20, 1
      %s277 = scalar_select %p276, %s20, 1
      %s278 = smul.addr %s277, 2
      %s279 = smul.addr %s278, 2
      %s280 = scalar_lea.vmem %s7, %s279
      %v281 = vld [vmem:[%s275] sm:$0xff]
      %v282 = vld [vmem:[%s275 + $0x8] sm:$0xff]
      %v283 = vld [vmem:[%s275 + $0x10] sm:$0xff]
      %v284 = vld [vmem:[%s275 + $0x18] sm:$0xff]
      %v285 = vld [vmem:[%s275 + $0x20] sm:$0xff]
      %v286 = vld [vmem:[%s275 + $0x28] sm:$0xff]
      %v287 = vld [vmem:[%s275 + $0x30] sm:$0xff]
      %v288 = vld [vmem:[%s275 + $0x38] sm:$0xff]
      %v289 = vld [vmem:[%s1] sm:$0xff]
      %v290 = vld [vmem:[%s1 + $0x8] sm:$0xff]
      %v291 = vld [vmem:[%s1 + $0x10] sm:$0xff]
      %v292 = vld [vmem:[%s1 + $0x18] sm:$0xff]
      %v293 = vld [vmem:[%s1 + $0x20] sm:$0xff]
      %v294 = vld [vmem:[%s1 + $0x28] sm:$0xff]
      %v295 = vld [vmem:[%s1 + $0x30] sm:$0xff]
      %v296 = vld [vmem:[%s1 + $0x38] sm:$0xff]
      %v297 = vld [vmem:[%s1 + $0x40] sm:$0xff]
      %v298 = vld [vmem:[%s1 + $0x48] sm:$0xff]
      %v299 = vld [vmem:[%s1 + $0x50] sm:$0xff]
      %v300 = vld [vmem:[%s1 + $0x58] sm:$0xff]
      %v301 = vld [vmem:[%s1 + $0x60] sm:$0xff]
      %v302 = vld [vmem:[%s1 + $0x68] sm:$0xff]
      %v303 = vld [vmem:[%s1 + $0x70] sm:$0xff]
      %v304 = vld [vmem:[%s1 + $0x78] sm:$0xff]
      %v305 = vld [vmem:[%s2] sm:$0x1]
      %v314 = vrot.slane %v282, 1
      %v315 = vrot.slane %v281, 1
      %v316 = vrot.slane %v283, 1
      %v317 = vrot.slane %v284, 1
      %v318 = vrot.slane %v285, 1
      %v319 = vrot.slane %v286, 1
      %v320 = vrot.slane %v287, 1
      %v321 = vrot.slane %v288, 1
      %v330 = vrot.slane %v282, 7
      %v331 = vrot.slane %v281, 7
      %v332 = vrot.slane %v283, 7
      %v333 = vrot.slane %v284, 7
      %v334 = vrot.slane %v285, 7
      %v335 = vrot.slane %v286, 7
      %v336 = vrot.slane %v287, 7
      %v337 = vrot.slane %v288, 7
      %v346 = vrot.slane %v282, 5
      %v347 = vrot.slane %v281, 5
      %v348 = vrot.slane %v283, 5
      %v349 = vrot.slane %v284, 5
      %v350 = vrot.slane %v285, 5
      %v351 = vrot.slane %v286, 5
      %v352 = vrot.slane %v287, 5
      %v353 = vrot.slane %v288, 5
      %vm362 = vcmask 1040384
      %v363 = vsel %vm362, %v314, %v330
      %v364 = vsel %vm362, %v315, %v331
      %v365 = vsel %vm362, %v316, %v332
      %v366 = vsel %vm362, %v317, %v333
      %v367 = vsel %vm362, %v318, %v334
      %v368 = vsel %vm362, %v319, %v335
      %v369 = vsel %vm362, %v320, %v336
      %v370 = vsel %vm362, %v321, %v337
      %v371 = vsel %vm362, %v330, %v346
      %v372 = vsel %vm362, %v331, %v347
      %v373 = vsel %vm362, %v332, %v348
      %v374 = vsel %vm362, %v333, %v349
      %v375 = vsel %vm362, %v334, %v350
      %v376 = vsel %vm362, %v335, %v351
      %v377 = vsel %vm362, %v336, %v352
      %v378 = vsel %vm362, %v337, %v353
      %v395 = vrot.slane %v363, 2
      %v396 = vrot.slane %v363, 4
      %v397 = vrot.slane %v363, 6
      %v398 = vrot.slane %v364, 2
      %v399 = vrot.slane %v364, 4
      %v400 = vrot.slane %v364, 6
      %v401 = vrot.slane %v365, 2
      %v402 = vrot.slane %v365, 4
      %v403 = vrot.slane %v365, 6
      %v404 = vrot.slane %v366, 2
      %v405 = vrot.slane %v366, 4
      %v406 = vrot.slane %v366, 6
      %v407 = vrot.slane %v367, 2
      %v408 = vrot.slane %v367, 4
      %v409 = vrot.slane %v367, 6
      %v410 = vrot.slane %v368, 2
      %v411 = vrot.slane %v368, 4
      %v412 = vrot.slane %v368, 6
      %v413 = vrot.slane %v369, 2
      %v414 = vrot.slane %v369, 4
      %v415 = vrot.slane %v369, 6
      %v416 = vrot.slane %v370, 2
      %v417 = vrot.slane %v370, 4
      %v418 = vrot.slane %v370, 6
      %v419 = vperm.slane %v363, 0
      %v420 = vperm.slane %v395, 0
      %v421 = vperm.slane %v396, 0
      %v422 = vperm.slane %v397, 0
      %v423 = vperm.slane %v366, 0
      %v424 = vperm.slane %v404, 0
      %v425 = vperm.slane %v405, 0
      %v426 = vperm.slane %v406, 0
      %v427 = vperm.slane %v368, 0
      %v428 = vperm.slane %v410, 0
      %v429 = vperm.slane %v411, 0
      %v430 = vperm.slane %v412, 0
      %vm431 = vcmask 1041409
      %v432 = vsel %vm431, %v420, %v419
      %vm433 = vcmask 1042434
      %v434 = vsel %vm433, %v421, %v432
      %vm435 = vcmask 1043459
      %v436 = vsel %vm435, %v422, %v434
      %v437 = vsel %vm431, %v424, %v423
      %v438 = vsel %vm433, %v425, %v437
      %v439 = vsel %vm435, %v426, %v438
      %v440 = vsel %vm431, %v428, %v427
      %v441 = vsel %vm433, %v429, %v440
      %v442 = vsel %vm435, %v430, %v441
      %v446 = vperm.slane %v363, 1
      %v447 = vperm.slane %v395, 1
      %v448 = vperm.slane %v396, 1
      %v449 = vperm.slane %v397, 1
      %v450 = vperm.slane %v366, 1
      %v451 = vperm.slane %v404, 1
      %v452 = vperm.slane %v405, 1
      %v453 = vperm.slane %v406, 1
      %v454 = vperm.slane %v368, 1
      %v455 = vperm.slane %v410, 1
      %v456 = vperm.slane %v411, 1
      %v457 = vperm.slane %v412, 1
      %v458 = vsel %vm431, %v447, %v446
      %v459 = vsel %vm433, %v448, %v458
      %v460 = vsel %vm435, %v449, %v459
      %v461 = vsel %vm431, %v451, %v450
      %v462 = vsel %vm433, %v452, %v461
      %v463 = vsel %vm435, %v453, %v462
      %v464 = vsel %vm431, %v455, %v454
      %v465 = vsel %vm433, %v456, %v464
      %v466 = vsel %vm435, %v457, %v465
      %467 = vrot.lane.b32.xlu0 %v460, 8
      %v468 = vpop.permute.xlu0 %467
      %469 = vrot.lane.b32.xlu0 %v463, 8
      %v470 = vpop.permute.xlu0 %469
      %471 = vrot.lane.b32.xlu0 %v466, 8
      %v472 = vpop.permute.xlu0 %471
      %v476 = vperm.slane %v371, 0
      %v477 = vperm.slane %v374, 0
      %v478 = vperm.slane %v376, 0
      %v479 = vsel %vm431, %v421, %v420
      %v480 = vsel %vm433, %v422, %v479
      %v481 = vsel %vm435, %v476, %v480
      %v482 = vsel %vm431, %v425, %v424
      %v483 = vsel %vm433, %v426, %v482
      %v484 = vsel %vm435, %v477, %v483
      %v485 = vsel %vm431, %v429, %v428
      %v486 = vsel %vm433, %v430, %v485
      %v487 = vsel %vm435, %v478, %v486
      %488 = vrot.lane.b32.xlu0 %v481, 16
      %v489 = vpop.permute.xlu0 %488
      %490 = vrot.lane.b32.xlu0 %v484, 16
      %v491 = vpop.permute.xlu0 %490
      %492 = vrot.lane.b32.xlu0 %v487, 16
      %v493 = vpop.permute.xlu0 %492
      %v497 = vperm.slane %v371, 1
      %v498 = vperm.slane %v374, 1
      %v499 = vperm.slane %v376, 1
      %v500 = vsel %vm431, %v448, %v447
      %v501 = vsel %vm433, %v449, %v500
      %v502 = vsel %vm435, %v497, %v501
      %v503 = vsel %vm431, %v452, %v451
      %v504 = vsel %vm433, %v453, %v503
      %v505 = vsel %vm435, %v498, %v504
      %v506 = vsel %vm431, %v456, %v455
      %v507 = vsel %vm433, %v457, %v506
      %v508 = vsel %vm435, %v499, %v507
      %509 = vrot.lane.b32.xlu0 %v502, 24
      %v510 = vpop.permute.xlu0 %509
      %511 = vrot.lane.b32.xlu0 %v505, 24
      %v512 = vpop.permute.xlu0 %511
      %513 = vrot.lane.b32.xlu0 %v508, 24
      %v514 = vpop.permute.xlu0 %513
      %v518 = vperm.slane %v364, 0
      %v519 = vperm.slane %v398, 0
      %v520 = vperm.slane %v399, 0
      %v521 = vperm.slane %v400, 0
      %v522 = vperm.slane %v365, 0
      %v523 = vperm.slane %v401, 0
      %v524 = vperm.slane %v402, 0
      %v525 = vperm.slane %v403, 0
      %v526 = vperm.slane %v367, 0
      %v527 = vperm.slane %v407, 0
      %v528 = vperm.slane %v408, 0
      %v529 = vperm.slane %v409, 0
      %v530 = vperm.slane %v369, 0
      %v531 = vperm.slane %v413, 0
      %v532 = vperm.slane %v414, 0
      %v533 = vperm.slane %v415, 0
      %v534 = vsel %vm431, %v519, %v518
      %v535 = vsel %vm433, %v520, %v534
      %v536 = vsel %vm435, %v521, %v535
      %v537 = vsel %vm431, %v523, %v522
      %v538 = vsel %vm433, %v524, %v537
      %v539 = vsel %vm435, %v525, %v538
      %v540 = vsel %vm431, %v527, %v526
      %v541 = vsel %vm433, %v528, %v540
      %v542 = vsel %vm435, %v529, %v541
      %v543 = vsel %vm431, %v531, %v530
      %v544 = vsel %vm433, %v532, %v543
      %v545 = vsel %vm435, %v533, %v544
      %546 = vrot.lane.b32.xlu0 %v536, 32
      %v547 = vpop.permute.xlu0 %546
      %548 = vrot.lane.b32.xlu0 %v539, 32
      %v549 = vpop.permute.xlu0 %548
      %550 = vrot.lane.b32.xlu0 %v542, 32
      %v551 = vpop.permute.xlu0 %550
      %552 = vrot.lane.b32.xlu0 %v545, 32
      %v553 = vpop.permute.xlu0 %552
      %v558 = vperm.slane %v364, 1
      %v559 = vperm.slane %v398, 1
      %v560 = vperm.slane %v399, 1
      %v561 = vperm.slane %v400, 1
      %v562 = vperm.slane %v365, 1
      %v563 = vperm.slane %v401, 1
      %v564 = vperm.slane %v402, 1
      %v565 = vperm.slane %v403, 1
      %v566 = vperm.slane %v367, 1
      %v567 = vperm.slane %v407, 1
      %v568 = vperm.slane %v408, 1
      %v569 = vperm.slane %v409, 1
      %v570 = vperm.slane %v369, 1
      %v571 = vperm.slane %v413, 1
      %v572 = vperm.slane %v414, 1
      %v573 = vperm.slane %v415, 1
      %v574 = vsel %vm431, %v559, %v558
      %v575 = vsel %vm433, %v560, %v574
      %v576 = vsel %vm435, %v561, %v575
      %v577 = vsel %vm431, %v563, %v562
      %v578 = vsel %vm433, %v564, %v577
      %v579 = vsel %vm435, %v565, %v578
      %v580 = vsel %vm431, %v567, %v566
      %v581 = vsel %vm433, %v568, %v580
      %v582 = vsel %vm435, %v569, %v581
      %v583 = vsel %vm431, %v571, %v570
      %v584 = vsel %vm433, %v572, %v583
      %v585 = vsel %vm435, %v573, %v584
      %586 = vrot.lane.b32.xlu0 %v576, 40
      %v587 = vpop.permute.xlu0 %586
      %588 = vrot.lane.b32.xlu0 %v579, 40
      %v589 = vpop.permute.xlu0 %588
      %590 = vrot.lane.b32.xlu0 %v582, 40
      %v591 = vpop.permute.xlu0 %590
      %592 = vrot.lane.b32.xlu0 %v585, 40
      %v593 = vpop.permute.xlu0 %592
      %v598 = vperm.slane %v372, 0
      %v599 = vperm.slane %v373, 0
      %v600 = vperm.slane %v375, 0
      %v601 = vperm.slane %v377, 0
      %v602 = vsel %vm431, %v520, %v519
      %v603 = vsel %vm433, %v521, %v602
      %v604 = vsel %vm435, %v598, %v603
      %v605 = vsel %vm431, %v524, %v523
      %v606 = vsel %vm433, %v525, %v605
      %v607 = vsel %vm435, %v599, %v606
      %v608 = vsel %vm431, %v528, %v527
      %v609 = vsel %vm433, %v529, %v608
      %v610 = vsel %vm435, %v600, %v609
      %v611 = vsel %vm431, %v532, %v531
      %v612 = vsel %vm433, %v533, %v611
      %v613 = vsel %vm435, %v601, %v612
      %614 = vrot.lane.b32.xlu0 %v604, 48
      %v615 = vpop.permute.xlu0 %614
      %616 = vrot.lane.b32.xlu0 %v607, 48
      %v617 = vpop.permute.xlu0 %616
      %618 = vrot.lane.b32.xlu0 %v610, 48
      %v619 = vpop.permute.xlu0 %618
      %620 = vrot.lane.b32.xlu0 %v613, 48
      %v621 = vpop.permute.xlu0 %620
      %v626 = vperm.slane %v372, 1
      %v627 = vperm.slane %v373, 1
      %v628 = vperm.slane %v375, 1
      %v629 = vperm.slane %v377, 1
      %v630 = vsel %vm431, %v560, %v559
      %v631 = vsel %vm433, %v561, %v630
      %v632 = vsel %vm435, %v626, %v631
      %v633 = vsel %vm431, %v564, %v563
      %v634 = vsel %vm433, %v565, %v633
      %v635 = vsel %vm435, %v627, %v634
      %v636 = vsel %vm431, %v568, %v567
      %v637 = vsel %vm433, %v569, %v636
      %v638 = vsel %vm435, %v628, %v637
      %v639 = vsel %vm431, %v572, %v571
      %v640 = vsel %vm433, %v573, %v639
      %v641 = vsel %vm435, %v629, %v640
      %642 = vrot.lane.b32.xlu0 %v632, 56
      %v643 = vpop.permute.xlu0 %642
      %644 = vrot.lane.b32.xlu0 %v635, 56
      %v645 = vpop.permute.xlu0 %644
      %646 = vrot.lane.b32.xlu0 %v638, 56
      %v647 = vpop.permute.xlu0 %646
      %648 = vrot.lane.b32.xlu0 %v641, 56
      %v649 = vpop.permute.xlu0 %648
      %v654 = vperm.slane %v370, 0
      %v655 = vperm.slane %v416, 0
      %v656 = vperm.slane %v417, 0
      %v657 = vperm.slane %v418, 0
      %v658 = vsel %vm431, %v655, %v654
      %v659 = vsel %vm433, %v656, %v658
      %v660 = vsel %vm435, %v657, %v659
      %661 = vrot.lane.b32.xlu0 %v436, 64
      %v662 = vpop.permute.xlu0 %661
      %663 = vrot.lane.b32.xlu0 %v439, 64
      %v664 = vpop.permute.xlu0 %663
      %665 = vrot.lane.b32.xlu0 %v442, 64
      %v666 = vpop.permute.xlu0 %665
      %667 = vrot.lane.b32.xlu0 %v660, 64
      %v668 = vpop.permute.xlu0 %667
      %v673 = vperm.slane %v370, 1
      %v674 = vperm.slane %v416, 1
      %v675 = vperm.slane %v417, 1
      %v676 = vperm.slane %v418, 1
      %v677 = vsel %vm431, %v674, %v673
      %v678 = vsel %vm433, %v675, %v677
      %v679 = vsel %vm435, %v676, %v678
      %680 = vrot.lane.b32.xlu0 %v460, 72
      %v681 = vpop.permute.xlu0 %680
      %682 = vrot.lane.b32.xlu0 %v463, 72
      %v683 = vpop.permute.xlu0 %682
      %684 = vrot.lane.b32.xlu0 %v466, 72
      %v685 = vpop.permute.xlu0 %684
      %686 = vrot.lane.b32.xlu0 %v679, 72
      %v687 = vpop.permute.xlu0 %686
      %v692 = vperm.slane %v378, 0
      %v693 = vsel %vm431, %v656, %v655
      %v694 = vsel %vm433, %v657, %v693
      %v695 = vsel %vm435, %v692, %v694
      %696 = vrot.lane.b32.xlu0 %v481, 80
      %v697 = vpop.permute.xlu0 %696
      %698 = vrot.lane.b32.xlu0 %v484, 80
      %v699 = vpop.permute.xlu0 %698
      %700 = vrot.lane.b32.xlu0 %v487, 80
      %v701 = vpop.permute.xlu0 %700
      %702 = vrot.lane.b32.xlu0 %v695, 80
      %v703 = vpop.permute.xlu0 %702
      %v708 = vperm.slane %v378, 1
      %v709 = vsel %vm431, %v675, %v674
      %v710 = vsel %vm433, %v676, %v709
      %v711 = vsel %vm435, %v708, %v710
      %712 = vrot.lane.b32.xlu0 %v502, 88
      %v713 = vpop.permute.xlu0 %712
      %714 = vrot.lane.b32.xlu0 %v505, 88
      %v715 = vpop.permute.xlu0 %714
      %716 = vrot.lane.b32.xlu0 %v508, 88
      %v717 = vpop.permute.xlu0 %716
      %718 = vrot.lane.b32.xlu0 %v711, 88
      %v719 = vpop.permute.xlu0 %718
      %724 = vrot.lane.b32.xlu0 %v539, 96
      %v725 = vpop.permute.xlu0 %724
      %726 = vrot.lane.b32.xlu0 %v542, 96
      %v727 = vpop.permute.xlu0 %726
      %728 = vrot.lane.b32.xlu0 %v545, 96
      %v729 = vpop.permute.xlu0 %728
      %733 = vrot.lane.b32.xlu0 %v579, 104
      %v734 = vpop.permute.xlu0 %733
      %735 = vrot.lane.b32.xlu0 %v582, 104
      %v736 = vpop.permute.xlu0 %735
      %737 = vrot.lane.b32.xlu0 %v585, 104
      %v738 = vpop.permute.xlu0 %737
      %742 = vrot.lane.b32.xlu0 %v607, 112
      %v743 = vpop.permute.xlu0 %742
      %744 = vrot.lane.b32.xlu0 %v610, 112
      %v745 = vpop.permute.xlu0 %744
      %746 = vrot.lane.b32.xlu0 %v613, 112
      %v747 = vpop.permute.xlu0 %746
      %751 = vrot.lane.b32.xlu0 %v635, 120
      %v752 = vpop.permute.xlu0 %751
      %753 = vrot.lane.b32.xlu0 %v638, 120
      %v754 = vpop.permute.xlu0 %753
      %755 = vrot.lane.b32.xlu0 %v641, 120
      %v756 = vpop.permute.xlu0 %755
      %vm760 = vcmask 64512
      %v761 = vsel %vm760, %v436, %v468
      %v762 = vsel %vm760, %v439, %v470
      %v763 = vsel %vm760, %v442, %v472
      %vm764 = vcmask 130048
      %v765 = vsel %vm764, %v761, %v489
      %v766 = vsel %vm764, %v762, %v491
      %v767 = vsel %vm764, %v763, %v493
      %vm768 = vcmask 195584
      %v769 = vsel %vm768, %v765, %v510
      %v770 = vsel %vm768, %v766, %v512
      %v771 = vsel %vm768, %v767, %v514
      %vm772 = vcmask 261120
      %v773 = vsel %vm772, %v769, %v547
      %v774 = vsel %vm772, %v769, %v549
      %v775 = vsel %vm772, %v770, %v551
      %v776 = vsel %vm772, %v771, %v553
      %vm777 = vcmask 326656
      %v778 = vsel %vm777, %v773, %v587
      %v779 = vsel %vm777, %v774, %v589
      %v780 = vsel %vm777, %v775, %v591
      %v781 = vsel %vm777, %v776, %v593
      %vm782 = vcmask 392192
      %v783 = vsel %vm782, %v778, %v615
      %v784 = vsel %vm782, %v779, %v617
      %v785 = vsel %vm782, %v780, %v619
      %v786 = vsel %vm782, %v781, %v621
      %vm787 = vcmask 457728
      %v788 = vsel %vm787, %v783, %v643
      %v789 = vsel %vm787, %v784, %v645
      %v790 = vsel %vm787, %v785, %v647
      %v791 = vsel %vm787, %v786, %v649
      %vm792 = vcmask 523264
      %v793 = vsel %vm792, %v788, %v662
      %v794 = vsel %vm792, %v789, %v664
      %v795 = vsel %vm792, %v790, %v666
      %v796 = vsel %vm792, %v791, %v668
      %vm797 = vcmask 588800
      %v798 = vsel %vm797, %v793, %v681
      %v799 = vsel %vm797, %v794, %v683
      %v800 = vsel %vm797, %v795, %v685
      %v801 = vsel %vm797, %v796, %v687
      %vm802 = vcmask 654336
      %v803 = vsel %vm802, %v798, %v697
      %v804 = vsel %vm802, %v799, %v699
      %v805 = vsel %vm802, %v800, %v701
      %v806 = vsel %vm802, %v801, %v703
      %vm807 = vcmask 719872
      %v808 = vsel %vm807, %v803, %v713
      %v809 = vsel %vm807, %v804, %v715
      %v810 = vsel %vm807, %v805, %v717
      %v811 = vsel %vm807, %v806, %v719
      %vm812 = vcmask 785408
      %v813 = vsel %vm812, %v808, %v725
      %v814 = vsel %vm812, %v809, %v727
      %v815 = vsel %vm812, %v810, %v729
      %v816 = vsel %vm812, %v811, %v729
      %vm817 = vcmask 850944
      %v818 = vsel %vm817, %v813, %v734
      %v819 = vsel %vm817, %v814, %v736
      %v820 = vsel %vm817, %v815, %v738
      %v821 = vsel %vm817, %v816, %v738
      %vm822 = vcmask 916480
      %v823 = vsel %vm822, %v818, %v743
      %v824 = vsel %vm822, %v819, %v745
      %v825 = vsel %vm822, %v820, %v747
      %v826 = vsel %vm822, %v821, %v747
      %vm827 = vcmask 982016
      %v828 = vsel %vm827, %v823, %v752
      %v829 = vsel %vm827, %v824, %v754
      %v830 = vsel %vm827, %v825, %v756
      %v831 = vsel %vm827, %v826, %v756
      %v833 = vperm.slane %v305, 0
      %839 = vst [vmem:[#allocation1] ss:$2 sm:$0xff] %v828
      %s840 = scalar_lea.vmem [#allocation1], 1
      %841 = vst [vmem:[%s840] ss:$2 sm:$0xff] %v829
      %s842 = scalar_lea.vmem [#allocation1], 16
      %843 = vst [vmem:[%s842] ss:$2 sm:$0xff] %v830
      %s844 = scalar_lea.vmem [#allocation1], 17
      %845 = vst [vmem:[%s844] ss:$2 sm:$0xff] %v831
      %v846 = vld.sshfl [vmem:[#allocation1] sm:$0xff pattern:$0x75316420]
      %v847 = vld.sshfl [vmem:[#allocation1 + $0x10] sm:$0xff pattern:$0x75316420]
      %v850 = vand.u32 %v304, 4294901760
      %851 = vmatpush.msra.mxu0 %v850
      %v852 = vand.u32 %v303, 4294901760
      %853 = vmatpush.msra.mxu0 %v852
      %v854 = vand.u32 %v302, 4294901760
      %855 = vmatpush.msra.mxu0 %v854
      %v856 = vand.u32 %v301, 4294901760
      %857 = vmatpush.msra.mxu0 %v856
      %v858 = vand.u32 %v300, 4294901760
      %859 = vmatpush.msra.mxu0 %v858
      %v860 = vand.u32 %v299, 4294901760
      %861 = vmatpush.msra.mxu0 %v860
      %v862 = vand.u32 %v298, 4294901760
      %863 = vmatpush.msra.mxu0 %v862
      %v864 = vand.u32 %v297, 4294901760
      %865 = vmatpush.msra.mxu0 %v864
      %v866 = vand.u32 %v296, 4294901760
      %867 = vmatpush.msra.mxu0 %v866
      %v868 = vand.u32 %v295, 4294901760
      %869 = vmatpush.msra.mxu0 %v868
      %v870 = vand.u32 %v294, 4294901760
      %871 = vmatpush.msra.mxu0 %v870
      %v872 = vand.u32 %v293, 4294901760
      %873 = vmatpush.msra.mxu0 %v872
      %v874 = vand.u32 %v292, 4294901760
      %875 = vmatpush.msra.mxu0 %v874
      %v876 = vand.u32 %v291, 4294901760
      %877 = vmatpush.msra.mxu0 %v876
      %v878 = vand.u32 %v290, 4294901760
      %879 = vmatpush.msra.mxu0 %v878
      %v880 = vand.u32 %v289, 4294901760
      %881 = vmatpush.msra.mxu0 %v880
      %v882 = vand.u32 %v846, 4294901760
      %v883 = vsub.f32 %v846, %v882
      %v884 = vand.u32 %v883, 4294901760
      %v885 = vsub.f32 %v883, %v884
      %v886 = vand.u32 %v885, 4294901760
      %887 = vmatmul.f32.gmra.mxu0 %v886
      %v888 = vpop.f32.mrf.mxu0
      %v889 = vadd.f32 %v833, %v888
      %v890 = vand.u32 %v847, 4294901760
      %v891 = vsub.f32 %v847, %v890
      %v892 = vand.u32 %v891, 4294901760
      %v893 = vsub.f32 %v891, %v892
      %v894 = vand.u32 %v893, 4294901760
      %895 = vmatmul.f32.gmra.mxu0 %v894
      %v896 = vpop.f32.mrf.mxu0
      %v897 = vadd.f32 %v833, %v896
      %898 = vdwg.mxu0
      %v899 = vand.u32 %v304, 4294901760
      %v900 = vsub.f32 %v304, %v899
      %v901 = vand.u32 %v900, 4294901760
      %v902 = vsub.f32 %v900, %v901
      %v903 = vand.u32 %v902, 4294901760
      %904 = vmatpush.msra.mxu0 %v903
      %v905 = vand.u32 %v303, 4294901760
      %v906 = vsub.f32 %v303, %v905
      %v907 = vand.u32 %v906, 4294901760
      %v908 = vsub.f32 %v906, %v907
      %v909 = vand.u32 %v908, 4294901760
      %910 = vmatpush.msra.mxu0 %v909
      %v911 = vand.u32 %v302, 4294901760
      %v912 = vsub.f32 %v302, %v911
      %v913 = vand.u32 %v912, 4294901760
      %v914 = vsub.f32 %v912, %v913
      %v915 = vand.u32 %v914, 4294901760
      %916 = vmatpush.msra.mxu0 %v915
      %v917 = vand.u32 %v301, 4294901760
      %v918 = vsub.f32 %v301, %v917
      %v919 = vand.u32 %v918, 4294901760
      %v920 = vsub.f32 %v918, %v919
      %v921 = vand.u32 %v920, 4294901760
      %922 = vmatpush.msra.mxu0 %v921
      %v923 = vand.u32 %v300, 4294901760
      %v924 = vsub.f32 %v300, %v923
      %v925 = vand.u32 %v924, 4294901760
      %v926 = vsub.f32 %v924, %v925
      %v927 = vand.u32 %v926, 4294901760
      %928 = vmatpush.msra.mxu0 %v927
      %v929 = vand.u32 %v299, 4294901760
      %v930 = vsub.f32 %v299, %v929
      %v931 = vand.u32 %v930, 4294901760
      %v932 = vsub.f32 %v930, %v931
      %v933 = vand.u32 %v932, 4294901760
      %934 = vmatpush.msra.mxu0 %v933
      %v935 = vand.u32 %v298, 4294901760
      %v936 = vsub.f32 %v298, %v935
      %v937 = vand.u32 %v936, 4294901760
      %v938 = vsub.f32 %v936, %v937
      %v939 = vand.u32 %v938, 4294901760
      %940 = vmatpush.msra.mxu0 %v939
      %v941 = vand.u32 %v297, 4294901760
      %v942 = vsub.f32 %v297, %v941
      %v943 = vand.u32 %v942, 4294901760
      %v944 = vsub.f32 %v942, %v943
      %v945 = vand.u32 %v944, 4294901760
      %946 = vmatpush.msra.mxu0 %v945
      %v947 = vand.u32 %v296, 4294901760
      %v948 = vsub.f32 %v296, %v947
      %v949 = vand.u32 %v948, 4294901760
      %v950 = vsub.f32 %v948, %v949
      %v951 = vand.u32 %v950, 4294901760
      %952 = vmatpush.msra.mxu0 %v951
      %v953 = vand.u32 %v295, 4294901760
      %v954 = vsub.f32 %v295, %v953
      %v955 = vand.u32 %v954, 4294901760
      %v956 = vsub.f32 %v954, %v955
      %v957 = vand.u32 %v956, 4294901760
      %958 = vmatpush.msra.mxu0 %v957
      %v959 = vand.u32 %v294, 4294901760
      %v960 = vsub.f32 %v294, %v959
      %v961 = vand.u32 %v960, 4294901760
      %v962 = vsub.f32 %v960, %v961
      %v963 = vand.u32 %v962, 4294901760
      %964 = vmatpush.msra.mxu0 %v963
      %v965 = vand.u32 %v293, 4294901760
      %v966 = vsub.f32 %v293, %v965
      %v967 = vand.u32 %v966, 4294901760
      %v968 = vsub.f32 %v966, %v967
      %v969 = vand.u32 %v968, 4294901760
      %970 = vmatpush.msra.mxu0 %v969
      %v971 = vand.u32 %v292, 4294901760
      %v972 = vsub.f32 %v292, %v971
      %v973 = vand.u32 %v972, 4294901760
      %v974 = vsub.f32 %v972, %v973
      %v975 = vand.u32 %v974, 4294901760
      %976 = vmatpush.msra.mxu0 %v975
      %v977 = vand.u32 %v291, 4294901760
      %v978 = vsub.f32 %v291, %v977
      %v979 = vand.u32 %v978, 4294901760
      %v980 = vsub.f32 %v978, %v979
      %v981 = vand.u32 %v980, 4294901760
      %982 = vmatpush.msra.mxu0 %v981
      %v983 = vand.u32 %v290, 4294901760
      %v984 = vsub.f32 %v290, %v983
      %v985 = vand.u32 %v984, 4294901760
      %v986 = vsub.f32 %v984, %v985
      %v987 = vand.u32 %v986, 4294901760
      %988 = vmatpush.msra.mxu0 %v987
      %v989 = vand.u32 %v289, 4294901760
      %v990 = vsub.f32 %v289, %v989
      %v991 = vand.u32 %v990, 4294901760
      %v992 = vsub.f32 %v990, %v991
      %v993 = vand.u32 %v992, 4294901760
      %994 = vmatpush.msra.mxu0 %v993
      %v995 = vand.u32 %v846, 4294901760
      %996 = vmatmul.f32.gmra.mxu0 %v995
      %v997 = vpop.f32.mrf.mxu0
      %v998 = vadd.f32 %v889, %v997
      %v999 = vand.u32 %v847, 4294901760
      %1000 = vmatmul.f32.gmra.mxu0 %v999
      %v1001 = vpop.f32.mrf.mxu0
      %v1002 = vadd.f32 %v897, %v1001
      %1003 = vdwg.mxu0
      %v1004 = vand.u32 %v304, 4294901760
      %v1005 = vsub.f32 %v304, %v1004
      %1006 = vmatpush.msra.mxu0 %v1005
      %v1007 = vand.u32 %v303, 4294901760
      %v1008 = vsub.f32 %v303, %v1007
      %1009 = vmatpush.msra.mxu0 %v1008
      %v1010 = vand.u32 %v302, 4294901760
      %v1011 = vsub.f32 %v302, %v1010
      %1012 = vmatpush.msra.mxu0 %v1011
      %v1013 = vand.u32 %v301, 4294901760
      %v1014 = vsub.f32 %v301, %v1013
      %1015 = vmatpush.msra.mxu0 %v1014
      %v1016 = vand.u32 %v300, 4294901760
      %v1017 = vsub.f32 %v300, %v1016
      %1018 = vmatpush.msra.mxu0 %v1017
      %v1019 = vand.u32 %v299, 4294901760
      %v1020 = vsub.f32 %v299, %v1019
      %1021 = vmatpush.msra.mxu0 %v1020
      %v1022 = vand.u32 %v298, 4294901760
      %v1023 = vsub.f32 %v298, %v1022
      %1024 = vmatpush.msra.mxu0 %v1023
      %v1025 = vand.u32 %v297, 4294901760
      %v1026 = vsub.f32 %v297, %v1025
      %1027 = vmatpush.msra.mxu0 %v1026
      %v1028 = vand.u32 %v296, 4294901760
      %v1029 = vsub.f32 %v296, %v1028
      %1030 = vmatpush.msra.mxu0 %v1029
      %v1031 = vand.u32 %v295, 4294901760
      %v1032 = vsub.f32 %v295, %v1031
      %1033 = vmatpush.msra.mxu0 %v1032
      %v1034 = vand.u32 %v294, 4294901760
      %v1035 = vsub.f32 %v294, %v1034
      %1036 = vmatpush.msra.mxu0 %v1035
      %v1037 = vand.u32 %v293, 4294901760
      %v1038 = vsub.f32 %v293, %v1037
      %1039 = vmatpush.msra.mxu0 %v1038
      %v1040 = vand.u32 %v292, 4294901760
      %v1041 = vsub.f32 %v292, %v1040
      %1042 = vmatpush.msra.mxu0 %v1041
      %v1043 = vand.u32 %v291, 4294901760
      %v1044 = vsub.f32 %v291, %v1043
      %1045 = vmatpush.msra.mxu0 %v1044
      %v1046 = vand.u32 %v290, 4294901760
      %v1047 = vsub.f32 %v290, %v1046
      %1048 = vmatpush.msra.mxu0 %v1047
      %v1049 = vand.u32 %v289, 4294901760
      %v1050 = vsub.f32 %v289, %v1049
      %1051 = vmatpush.msra.mxu0 %v1050
      %v1052 = vand.u32 %v846, 4294901760
      %v1053 = vsub.f32 %v846, %v1052
      %1054 = vmatmul.f32.gmra.mxu0 %v1053
      %v1055 = vpop.f32.mrf.mxu0
      %v1056 = vadd.f32 %v998, %v1055
      %v1057 = vand.u32 %v847, 4294901760
      %v1058 = vsub.f32 %v847, %v1057
      %1059 = vmatmul.f32.gmra.mxu0 %v1058
      %v1060 = vpop.f32.mrf.mxu0
      %v1061 = vadd.f32 %v1002, %v1060
      %1062 = vdwg.mxu0
      %v1063 = vand.u32 %v304, 4294901760
      %1064 = vmatpush.msra.mxu0 %v1063
      %v1065 = vand.u32 %v303, 4294901760
      %1066 = vmatpush.msra.mxu0 %v1065
      %v1067 = vand.u32 %v302, 4294901760
      %1068 = vmatpush.msra.mxu0 %v1067
      %v1069 = vand.u32 %v301, 4294901760
      %1070 = vmatpush.msra.mxu0 %v1069
      %v1071 = vand.u32 %v300, 4294901760
      %1072 = vmatpush.msra.mxu0 %v1071
      %v1073 = vand.u32 %v299, 4294901760
      %1074 = vmatpush.msra.mxu0 %v1073
      %v1075 = vand.u32 %v298, 4294901760
      %1076 = vmatpush.msra.mxu0 %v1075
      %v1077 = vand.u32 %v297, 4294901760
      %1078 = vmatpush.msra.mxu0 %v1077
      %v1079 = vand.u32 %v296, 4294901760
      %1080 = vmatpush.msra.mxu0 %v1079
      %v1081 = vand.u32 %v295, 4294901760
      %1082 = vmatpush.msra.mxu0 %v1081
      %v1083 = vand.u32 %v294, 4294901760
      %1084 = vmatpush.msra.mxu0 %v1083
      %v1085 = vand.u32 %v293, 4294901760
      %1086 = vmatpush.msra.mxu0 %v1085
      %v1087 = vand.u32 %v292, 4294901760
      %1088 = vmatpush.msra.mxu0 %v1087
      %v1089 = vand.u32 %v291, 4294901760
      %1090 = vmatpush.msra.mxu0 %v1089
      %v1091 = vand.u32 %v290, 4294901760
      %1092 = vmatpush.msra.mxu0 %v1091
      %v1093 = vand.u32 %v289, 4294901760
      %1094 = vmatpush.msra.mxu0 %v1093
      %v1095 = vand.u32 %v846, 4294901760
      %v1096 = vsub.f32 %v846, %v1095
      %v1097 = vand.u32 %v1096, 4294901760
      %1098 = vmatmul.f32.gmra.mxu0 %v1097
      %v1099 = vpop.f32.mrf.mxu0
      %v1100 = vadd.f32 %v1056, %v1099
      %v1101 = vand.u32 %v847, 4294901760
      %v1102 = vsub.f32 %v847, %v1101
      %v1103 = vand.u32 %v1102, 4294901760
      %1104 = vmatmul.f32.gmra.mxu0 %v1103
      %v1105 = vpop.f32.mrf.mxu0
      %v1106 = vadd.f32 %v1061, %v1105
      %1107 = vdwg.mxu0
      %v1108 = vand.u32 %v304, 4294901760
      %v1109 = vsub.f32 %v304, %v1108
      %v1110 = vand.u32 %v1109, 4294901760
      %1111 = vmatpush.msra.mxu0 %v1110
      %v1112 = vand.u32 %v303, 4294901760
      %v1113 = vsub.f32 %v303, %v1112
      %v1114 = vand.u32 %v1113, 4294901760
      %1115 = vmatpush.msra.mxu0 %v1114
      %v1116 = vand.u32 %v302, 4294901760
      %v1117 = vsub.f32 %v302, %v1116
      %v1118 = vand.u32 %v1117, 4294901760
      %1119 = vmatpush.msra.mxu0 %v1118
      %v1120 = vand.u32 %v301, 4294901760
      %v1121 = vsub.f32 %v301, %v1120
      %v1122 = vand.u32 %v1121, 4294901760
      %1123 = vmatpush.msra.mxu0 %v1122
      %v1124 = vand.u32 %v300, 4294901760
      %v1125 = vsub.f32 %v300, %v1124
      %v1126 = vand.u32 %v1125, 4294901760
      %1127 = vmatpush.msra.mxu0 %v1126
      %v1128 = vand.u32 %v299, 4294901760
      %v1129 = vsub.f32 %v299, %v1128
      %v1130 = vand.u32 %v1129, 4294901760
      %1131 = vmatpush.msra.mxu0 %v1130
      %v1132 = vand.u32 %v298, 4294901760
      %v1133 = vsub.f32 %v298, %v1132
      %v1134 = vand.u32 %v1133, 4294901760
      %1135 = vmatpush.msra.mxu0 %v1134
      %v1136 = vand.u32 %v297, 4294901760
      %v1137 = vsub.f32 %v297, %v1136
      %v1138 = vand.u32 %v1137, 4294901760
      %1139 = vmatpush.msra.mxu0 %v1138
      %v1140 = vand.u32 %v296, 4294901760
      %v1141 = vsub.f32 %v296, %v1140
      %v1142 = vand.u32 %v1141, 4294901760
      %1143 = vmatpush.msra.mxu0 %v1142
      %v1144 = vand.u32 %v295, 4294901760
      %v1145 = vsub.f32 %v295, %v1144
      %v1146 = vand.u32 %v1145, 4294901760
      %1147 = vmatpush.msra.mxu0 %v1146
      %v1148 = vand.u32 %v294, 4294901760
      %v1149 = vsub.f32 %v294, %v1148
      %v1150 = vand.u32 %v1149, 4294901760
      %1151 = vmatpush.msra.mxu0 %v1150
      %v1152 = vand.u32 %v293, 4294901760
      %v1153 = vsub.f32 %v293, %v1152
      %v1154 = vand.u32 %v1153, 4294901760
      %1155 = vmatpush.msra.mxu0 %v1154
      %v1156 = vand.u32 %v292, 4294901760
      %v1157 = vsub.f32 %v292, %v1156
      %v1158 = vand.u32 %v1157, 4294901760
      %1159 = vmatpush.msra.mxu0 %v1158
      %v1160 = vand.u32 %v291, 4294901760
      %v1161 = vsub.f32 %v291, %v1160
      %v1162 = vand.u32 %v1161, 4294901760
      %1163 = vmatpush.msra.mxu0 %v1162
      %v1164 = vand.u32 %v290, 4294901760
      %v1165 = vsub.f32 %v290, %v1164
      %v1166 = vand.u32 %v1165, 4294901760
      %1167 = vmatpush.msra.mxu0 %v1166
      %v1168 = vand.u32 %v289, 4294901760
      %v1169 = vsub.f32 %v289, %v1168
      %v1170 = vand.u32 %v1169, 4294901760
      %1171 = vmatpush.msra.mxu0 %v1170
      %v1172 = vand.u32 %v846, 4294901760
      %1173 = vmatmul.f32.gmra.mxu0 %v1172
      %v1174 = vpop.f32.mrf.mxu0
      %v1175 = vadd.f32 %v1100, %v1174
      %v1176 = vand.u32 %v847, 4294901760
      %1177 = vmatmul.f32.gmra.mxu0 %v1176
      %v1178 = vpop.f32.mrf.mxu0
      %v1179 = vadd.f32 %v1106, %v1178
      %1180 = vdwg.mxu0
      %v1181 = vand.u32 %v304, 4294901760
      %1182 = vmatpush.msra.mxu0 %v1181
      %v1183 = vand.u32 %v303, 4294901760
      %1184 = vmatpush.msra.mxu0 %v1183
      %v1185 = vand.u32 %v302, 4294901760
      %1186 = vmatpush.msra.mxu0 %v1185
      %v1187 = vand.u32 %v301, 4294901760
      %1188 = vmatpush.msra.mxu0 %v1187
      %v1189 = vand.u32 %v300, 4294901760
      %1190 = vmatpush.msra.mxu0 %v1189
      %v1191 = vand.u32 %v299, 4294901760
      %1192 = vmatpush.msra.mxu0 %v1191
      %v1193 = vand.u32 %v298, 4294901760
      %1194 = vmatpush.msra.mxu0 %v1193
      %v1195 = vand.u32 %v297, 4294901760
      %1196 = vmatpush.msra.mxu0 %v1195
      %v1197 = vand.u32 %v296, 4294901760
      %1198 = vmatpush.msra.mxu0 %v1197
      %v1199 = vand.u32 %v295, 4294901760
      %1200 = vmatpush.msra.mxu0 %v1199
      %v1201 = vand.u32 %v294, 4294901760
      %1202 = vmatpush.msra.mxu0 %v1201
      %v1203 = vand.u32 %v293, 4294901760
      %1204 = vmatpush.msra.mxu0 %v1203
      %v1205 = vand.u32 %v292, 4294901760
      %1206 = vmatpush.msra.mxu0 %v1205
      %v1207 = vand.u32 %v291, 4294901760
      %1208 = vmatpush.msra.mxu0 %v1207
      %v1209 = vand.u32 %v290, 4294901760
      %1210 = vmatpush.msra.mxu0 %v1209
      %v1211 = vand.u32 %v289, 4294901760
      %1212 = vmatpush.msra.mxu0 %v1211
      %v1213 = vand.u32 %v846, 4294901760
      %1214 = vmatmul.f32.gmra.mxu0 %v1213
      %v1215 = vpop.f32.mrf.mxu0
      %v1216 = vadd.f32 %v1175, %v1215
      %v1217 = vand.u32 %v847, 4294901760
      %1218 = vmatmul.f32.gmra.mxu0 %v1217
      %v1219 = vpop.f32.mrf.mxu0
      %v1220 = vadd.f32 %v1179, %v1219
      %1221 = vdwg.mxu0
      %v1222 = vmul.f32 %v1216, 0.2
      %v1223 = vmul.f32 %v1220, 0.2
      %v1224 = vmax.f32 %v1216, %v1222
      %v1225 = vmax.f32 %v1220, %v1223
      %v1228 = vrot.slane %v1224, 4
      %v1229 = vrot.slane %v1225, 4
      %v1230 = vld [vmem:[%s3] sm:$0xff]
      %v1231 = vld [vmem:[%s3 + $0x8] sm:$0xff]
      %v1232 = vld [vmem:[%s3 + $0x10] sm:$0xff]
      %v1233 = vld [vmem:[%s3 + $0x18] sm:$0xff]
      %v1234 = vld [vmem:[%s3 + $0x20] sm:$0xff]
      %v1235 = vld [vmem:[%s3 + $0x28] sm:$0xff]
      %v1236 = vld [vmem:[%s3 + $0x30] sm:$0xff]
      %v1237 = vld [vmem:[%s3 + $0x38] sm:$0xff]
      %v1238 = vld [vmem:[%s3 + $0x40] sm:$0xff]
      %v1239 = vld [vmem:[%s3 + $0x48] sm:$0xff]
      %v1240 = vld [vmem:[%s3 + $0x50] sm:$0xff]
      %v1241 = vld [vmem:[%s3 + $0x58] sm:$0xff]
      %v1242 = vld [vmem:[%s3 + $0x60] sm:$0xff]
      %v1243 = vld [vmem:[%s3 + $0x68] sm:$0xff]
      %v1244 = vld [vmem:[%s3 + $0x70] sm:$0xff]
      %v1245 = vld [vmem:[%s3 + $0x78] sm:$0xff]
      %v1246 = vld [vmem:[%s3 + $0x80] sm:$0xff]
      %v1247 = vld [vmem:[%s3 + $0x88] sm:$0xff]
      %v1248 = vld [vmem:[%s3 + $0x90] sm:$0xff]
      %v1249 = vld [vmem:[%s3 + $0x98] sm:$0xff]
      %v1250 = vld [vmem:[%s3 + $0xa0] sm:$0xff]
      %v1251 = vld [vmem:[%s3 + $0xa8] sm:$0xff]
      %v1252 = vld [vmem:[%s3 + $0xb0] sm:$0xff]
      %v1253 = vld [vmem:[%s3 + $0xb8] sm:$0xff]
      %v1254 = vld [vmem:[%s3 + $0xc0] sm:$0xff]
      %v1255 = vld [vmem:[%s3 + $0xc8] sm:$0xff]
      %v1256 = vld [vmem:[%s3 + $0xd0] sm:$0xff]
      %v1257 = vld [vmem:[%s3 + $0xd8] sm:$0xff]
      %v1258 = vld [vmem:[%s3 + $0xe0] sm:$0xff]
      %v1259 = vld [vmem:[%s3 + $0xe8] sm:$0xff]
      %v1260 = vld [vmem:[%s3 + $0xf0] sm:$0xff]
      %v1261 = vld [vmem:[%s3 + $0xf8] sm:$0xff]
      %v1262 = vld [vmem:[%s4] sm:$0x1]
      %v1263 = vperm.slane %v1228, 1
      %v1264 = vperm.slane %v1224, 1
      %v1265 = vperm.slane %v1225, 1
      %v1266 = vperm.slane %v1229, 1
      %1271 = vst [vmem:[#allocation1] ss:$2 sm:$0xff] %v1228
      %v1272 = vld.sshfl [vmem:[#allocation1] sm:$0xff pattern:$0x75316420]
      %s1273 = scalar_lea.vmem [#allocation1], 16
      %1274 = vst [vmem:[%s1273] ss:$2 sm:$0xff] %v1224
      %v1275 = vld.sshfl [vmem:[#allocation1 + $0x10] sm:$0xff pattern:$0x75316420]
      %s1276 = scalar_lea.vmem [#allocation1], 32
      %1277 = vst [vmem:[%s1276] ss:$2 sm:$0xff] %v1228
      %v1278 = vld.sshfl [vmem:[#allocation1 + $0x20] sm:$0xff pattern:$0x75316420]
      %s1279 = scalar_lea.vmem [#allocation1], 48
      %1280 = vst [vmem:[%s1279] ss:$2 sm:$0xff] %v1225
      %v1281 = vld.sshfl [vmem:[#allocation1 + $0x30] sm:$0xff pattern:$0x75316420]
      %1282 = vst [vmem:[#allocation1] ss:$2 sm:$0xff] %v1229
      %v1283 = vld.sshfl [vmem:[#allocation1] sm:$0xff pattern:$0x75316420]
      %1284 = vst [vmem:[%s1273] ss:$2 sm:$0xff] %v1225
      %v1285 = vld.sshfl [vmem:[#allocation1 + $0x10] sm:$0xff pattern:$0x75316420]
      %v1286 = vrot.slane %v1272, 7
      %v1287 = vrot.slane %v1275, 7
      %v1288 = vrot.slane %v1278, 7
      %v1289 = vrot.slane %v1281, 7
      %v1290 = vrot.slane %v1283, 7
      %v1291 = vrot.slane %v1285, 7
      %v1298 = vperm.slane %v1228, 2
      %v1299 = vperm.slane %v1224, 2
      %v1300 = vperm.slane %v1225, 2
      %v1301 = vperm.slane %v1229, 2
      %v1306 = vsel %vm362, %v1263, %v1286
      %v1307 = vsel %vm362, %v1264, %v1287
      %v1308 = vsel %vm362, %v1263, %v1288
      %v1309 = vsel %vm362, %v1265, %v1289
      %v1310 = vsel %vm362, %v1266, %v1290
      %v1311 = vsel %vm362, %v1265, %v1291
      %vm1312 = vcmask 1044480
      %v1313 = vsel %vm1312, %v1306, %v1298
      %v1314 = vsel %vm1312, %v1307, %v1299
      %v1315 = vsel %vm1312, %v1308, %v1298
      %v1316 = vsel %vm1312, %v1309, %v1300
      %v1317 = vsel %vm1312, %v1310, %v1301
      %v1318 = vsel %vm1312, %v1311, %v1300
      %v1325 = vrot.slane %v1313, 2
      %v1326 = vrot.slane %v1313, 4
      %v1327 = vrot.slane %v1314, 2
      %v1328 = vrot.slane %v1314, 4
      %v1329 = vrot.slane %v1315, 2
      %v1330 = vrot.slane %v1315, 4
      %v1331 = vrot.slane %v1316, 2
      %v1332 = vrot.slane %v1316, 4
      %v1333 = vrot.slane %v1317, 2
      %v1334 = vrot.slane %v1317, 4
      %v1335 = vrot.slane %v1318, 2
      %v1336 = vrot.slane %v1318, 4
      %v1337 = vperm.slane %v1313, 0
      %v1338 = vperm.slane %v1325, 0
      %v1339 = vperm.slane %v1315, 0
      %v1340 = vperm.slane %v1329, 0
      %v1341 = vsel %vm431, %v1338, %v1337
      %v1342 = vsel %vm431, %v1340, %v1339
      %v1345 = vperm.slane %v1313, 1
      %v1346 = vperm.slane %v1325, 1
      %v1347 = vperm.slane %v1315, 1
      %v1348 = vperm.slane %v1329, 1
      %v1349 = vsel %vm431, %v1346, %v1345
      %v1350 = vsel %vm431, %v1348, %v1347
      %1351 = vrot.lane.b32.xlu0 %v1349, 16
      %v1352 = vpop.permute.xlu0 %1351
      %1353 = vrot.lane.b32.xlu0 %v1350, 16
      %v1354 = vpop.permute.xlu0 %1353
      %v1357 = vperm.slane %v1326, 0
      %v1358 = vperm.slane %v1330, 0
      %v1359 = vsel %vm431, %v1357, %v1338
      %v1360 = vsel %vm431, %v1358, %v1340
      %1361 = vrot.lane.b32.xlu0 %v1359, 32
      %v1362 = vpop.permute.xlu0 %1361
      %1363 = vrot.lane.b32.xlu0 %v1360, 32
      %v1364 = vpop.permute.xlu0 %1363
      %v1367 = vperm.slane %v1326, 1
      %v1368 = vperm.slane %v1330, 1
      %v1369 = vsel %vm431, %v1367, %v1346
      %v1370 = vsel %vm431, %v1368, %v1348
      %1371 = vrot.lane.b32.xlu0 %v1369, 48
      %v1372 = vpop.permute.xlu0 %1371
      %1373 = vrot.lane.b32.xlu0 %v1370, 48
      %v1374 = vpop.permute.xlu0 %1373
      %v1377 = vperm.slane %v1314, 0
      %v1378 = vperm.slane %v1327, 0
      %v1379 = vperm.slane %v1316, 0
      %v1380 = vperm.slane %v1331, 0
      %v1381 = vsel %vm431, %v1378, %v1377
      %v1382 = vsel %vm431, %v1380, %v1379
      %1383 = vrot.lane.b32.xlu0 %v1381, 64
      %v1384 = vpop.permute.xlu0 %1383
      %1385 = vrot.lane.b32.xlu0 %v1382, 64
      %v1386 = vpop.permute.xlu0 %1385
      %v1389 = vperm.slane %v1314, 1
      %v1390 = vperm.slane %v1327, 1
      %v1391 = vperm.slane %v1316, 1
      %v1392 = vperm.slane %v1331, 1
      %v1393 = vsel %vm431, %v1390, %v1389
      %v1394 = vsel %vm431, %v1392, %v1391
      %1395 = vrot.lane.b32.xlu0 %v1393, 80
      %v1396 = vpop.permute.xlu0 %1395
      %1397 = vrot.lane.b32.xlu0 %v1394, 80
      %v1398 = vpop.permute.xlu0 %1397
      %v1401 = vperm.slane %v1328, 0
      %v1402 = vperm.slane %v1332, 0
      %v1403 = vsel %vm431, %v1401, %v1378
      %v1404 = vsel %vm431, %v1402, %v1380
      %1405 = vrot.lane.b32.xlu0 %v1403, 96
      %v1406 = vpop.permute.xlu0 %1405
      %1407 = vrot.lane.b32.xlu0 %v1404, 96
      %v1408 = vpop.permute.xlu0 %1407
      %v1411 = vperm.slane %v1328, 1
      %v1412 = vperm.slane %v1332, 1
      %v1413 = vsel %vm431, %v1411, %v1390
      %v1414 = vsel %vm431, %v1412, %v1392
      %1415 = vrot.lane.b32.xlu0 %v1413, 112
      %v1416 = vpop.permute.xlu0 %1415
      %1417 = vrot.lane.b32.xlu0 %v1414, 112
      %v1418 = vpop.permute.xlu0 %1417
      %v1421 = vperm.slane %v1317, 0
      %v1422 = vperm.slane %v1333, 0
      %v1423 = vsel %vm431, %v1422, %v1421
      %v1425 = vperm.slane %v1317, 1
      %v1426 = vperm.slane %v1333, 1
      %v1427 = vsel %vm431, %v1426, %v1425
      %1428 = vrot.lane.b32.xlu0 %v1427, 16
      %v1429 = vpop.permute.xlu0 %1428
      %v1431 = vperm.slane %v1334, 0
      %v1432 = vsel %vm431, %v1431, %v1422
      %1433 = vrot.lane.b32.xlu0 %v1432, 32
      %v1434 = vpop.permute.xlu0 %1433
      %v1436 = vperm.slane %v1334, 1
      %v1437 = vsel %vm431, %v1436, %v1426
      %1438 = vrot.lane.b32.xlu0 %v1437, 48
      %v1439 = vpop.permute.xlu0 %1438
      %v1441 = vperm.slane %v1318, 0
      %v1442 = vperm.slane %v1335, 0
      %v1443 = vsel %vm431, %v1442, %v1441
      %1444 = vrot.lane.b32.xlu0 %v1443, 64
      %v1445 = vpop.permute.xlu0 %1444
      %v1447 = vperm.slane %v1318, 1
      %v1448 = vperm.slane %v1335, 1
      %v1449 = vsel %vm431, %v1448, %v1447
      %1450 = vrot.lane.b32.xlu0 %v1449, 80
      %v1451 = vpop.permute.xlu0 %1450
      %v1453 = vperm.slane %v1336, 0
      %v1454 = vsel %vm431, %v1453, %v1442
      %1455 = vrot.lane.b32.xlu0 %v1454, 96
      %v1456 = vpop.permute.xlu0 %1455
      %v1458 = vperm.slane %v1336, 1
      %v1459 = vsel %vm431, %v1458, %v1448
      %1460 = vrot.lane.b32.xlu0 %v1459, 112
      %v1461 = vpop.permute.xlu0 %1460
      %v1463 = vsel %vm764, %v1341, %v1352
      %v1464 = vsel %vm764, %v1342, %v1354
      %v1465 = vsel %vm772, %v1463, %v1362
      %v1466 = vsel %vm772, %v1464, %v1364
      %v1467 = vsel %vm782, %v1465, %v1372
      %v1468 = vsel %vm782, %v1466, %v1374
      %v1469 = vsel %vm792, %v1467, %v1384
      %v1470 = vsel %vm792, %v1468, %v1386
      %v1471 = vsel %vm802, %v1469, %v1396
      %v1472 = vsel %vm802, %v1470, %v1398
      %v1473 = vsel %vm812, %v1471, %v1406
      %v1474 = vsel %vm812, %v1472, %v1408
      %v1475 = vsel %vm822, %v1473, %v1416
      %v1476 = vsel %vm822, %v1474, %v1418
      %v1477 = vsel %vm764, %v1423, %v1429
      %v1478 = vsel %vm772, %v1477, %v1434
      %v1479 = vsel %vm782, %v1478, %v1439
      %v1480 = vsel %vm792, %v1479, %v1445
      %v1481 = vsel %vm802, %v1480, %v1451
      %v1482 = vsel %vm812, %v1481, %v1456
      %v1483 = vsel %vm822, %v1482, %v1461
      %v1487 = vrot.slane %v1476, 6
      %v1488 = vrot.slane %v1483, 6
      %vm1489 = vcmask 1041408
      %v1490 = vsel %vm1489, %v1475, %v1487
      %v1491 = vsel %vm1489, %v1476, %v1488
      %v1493 = vperm.slane %v1262, 0
      %1495 = vst [vmem:[#allocation1] ss:$4 sm:$0xff] %v1490
      %s1496 = scalar_lea.vmem [#allocation1], 1
      %1497 = vst [vmem:[%s1496] ss:$4 sm:$0xff] %v1491
      %v1498 = vld.sshfl [vmem:[#allocation1] sm:$0xff pattern:$0x73625140]
      %v1499 = vld.sshfl [vmem:[#allocation1 + $0x8] sm:$0xff pattern:$0x73625140]
      %v1502 = vand.u32 %v1245, 4294901760
      %1503 = vmatpush.msra.mxu0 %v1502
      %v1504 = vand.u32 %v1244, 4294901760
      %1505 = vmatpush.msra.mxu0 %v1504
      %v1506 = vand.u32 %v1243, 4294901760
      %1507 = vmatpush.msra.mxu0 %v1506
      %v1508 = vand.u32 %v1242, 4294901760
      %1509 = vmatpush.msra.mxu0 %v1508
      %v1510 = vand.u32 %v1241, 4294901760
      %1511 = vmatpush.msra.mxu0 %v1510
      %v1512 = vand.u32 %v1240, 4294901760
      %1513 = vmatpush.msra.mxu0 %v1512
      %v1514 = vand.u32 %v1239, 4294901760
      %1515 = vmatpush.msra.mxu0 %v1514
      %v1516 = vand.u32 %v1238, 4294901760
      %1517 = vmatpush.msra.mxu0 %v1516
      %v1518 = vand.u32 %v1237, 4294901760
      %1519 = vmatpush.msra.mxu0 %v1518
      %v1520 = vand.u32 %v1236, 4294901760
      %1521 = vmatpush.msra.mxu0 %v1520
      %v1522 = vand.u32 %v1235, 4294901760
      %1523 = vmatpush.msra.mxu0 %v1522
      %v1524 = vand.u32 %v1234, 4294901760
      %1525 = vmatpush.msra.mxu0 %v1524
      %v1526 = vand.u32 %v1233, 4294901760
      %1527 = vmatpush.msra.mxu0 %v1526
      %v1528 = vand.u32 %v1232, 4294901760
      %1529 = vmatpush.msra.mxu0 %v1528
      %v1530 = vand.u32 %v1231, 4294901760
      %1531 = vmatpush.msra.mxu0 %v1530
      %v1532 = vand.u32 %v1230, 4294901760
      %1533 = vmatpush.msra.mxu0 %v1532
      %v1534 = vand.u32 %v1498, 4294901760
      %v1535 = vsub.f32 %v1498, %v1534
      %v1536 = vand.u32 %v1535, 4294901760
      %v1537 = vsub.f32 %v1535, %v1536
      %v1538 = vand.u32 %v1537, 4294901760
      %1539 = vmatmul.f32.gmra.mxu0 %v1538
      %v1540 = vpop.f32.mrf.mxu0
      %v1541 = vadd.f32 %v1493, %v1540
      %1542 = vdwg.mxu0
      %v1543 = vand.u32 %v1245, 4294901760
      %v1544 = vsub.f32 %v1245, %v1543
      %v1545 = vand.u32 %v1544, 4294901760
      %v1546 = vsub.f32 %v1544, %v1545
      %v1547 = vand.u32 %v1546, 4294901760
      %1548 = vmatpush.msra.mxu0 %v1547
      %v1549 = vand.u32 %v1244, 4294901760
      %v1550 = vsub.f32 %v1244, %v1549
      %v1551 = vand.u32 %v1550, 4294901760
      %v1552 = vsub.f32 %v1550, %v1551
      %v1553 = vand.u32 %v1552, 4294901760
      %1554 = vmatpush.msra.mxu0 %v1553
      %v1555 = vand.u32 %v1243, 4294901760
      %v1556 = vsub.f32 %v1243, %v1555
      %v1557 = vand.u32 %v1556, 4294901760
      %v1558 = vsub.f32 %v1556, %v1557
      %v1559 = vand.u32 %v1558, 4294901760
      %1560 = vmatpush.msra.mxu0 %v1559
      %v1561 = vand.u32 %v1242, 4294901760
      %v1562 = vsub.f32 %v1242, %v1561
      %v1563 = vand.u32 %v1562, 4294901760
      %v1564 = vsub.f32 %v1562, %v1563
      %v1565 = vand.u32 %v1564, 4294901760
      %1566 = vmatpush.msra.mxu0 %v1565
      %v1567 = vand.u32 %v1241, 4294901760
      %v1568 = vsub.f32 %v1241, %v1567
      %v1569 = vand.u32 %v1568, 4294901760
      %v1570 = vsub.f32 %v1568, %v1569
      %v1571 = vand.u32 %v1570, 4294901760
      %1572 = vmatpush.msra.mxu0 %v1571
      %v1573 = vand.u32 %v1240, 4294901760
      %v1574 = vsub.f32 %v1240, %v1573
      %v1575 = vand.u32 %v1574, 4294901760
      %v1576 = vsub.f32 %v1574, %v1575
      %v1577 = vand.u32 %v1576, 4294901760
      %1578 = vmatpush.msra.mxu0 %v1577
      %v1579 = vand.u32 %v1239, 4294901760
      %v1580 = vsub.f32 %v1239, %v1579
      %v1581 = vand.u32 %v1580, 4294901760
      %v1582 = vsub.f32 %v1580, %v1581
      %v1583 = vand.u32 %v1582, 4294901760
      %1584 = vmatpush.msra.mxu0 %v1583
      %v1585 = vand.u32 %v1238, 4294901760
      %v1586 = vsub.f32 %v1238, %v1585
      %v1587 = vand.u32 %v1586, 4294901760
      %v1588 = vsub.f32 %v1586, %v1587
      %v1589 = vand.u32 %v1588, 4294901760
      %1590 = vmatpush.msra.mxu0 %v1589
      %v1591 = vand.u32 %v1237, 4294901760
      %v1592 = vsub.f32 %v1237, %v1591
      %v1593 = vand.u32 %v1592, 4294901760
      %v1594 = vsub.f32 %v1592, %v1593
      %v1595 = vand.u32 %v1594, 4294901760
      %1596 = vmatpush.msra.mxu0 %v1595
      %v1597 = vand.u32 %v1236, 4294901760
      %v1598 = vsub.f32 %v1236, %v1597
      %v1599 = vand.u32 %v1598, 4294901760
      %v1600 = vsub.f32 %v1598, %v1599
      %v1601 = vand.u32 %v1600, 4294901760
      %1602 = vmatpush.msra.mxu0 %v1601
      %v1603 = vand.u32 %v1235, 4294901760
      %v1604 = vsub.f32 %v1235, %v1603
      %v1605 = vand.u32 %v1604, 4294901760
      %v1606 = vsub.f32 %v1604, %v1605
      %v1607 = vand.u32 %v1606, 4294901760
      %1608 = vmatpush.msra.mxu0 %v1607
      %v1609 = vand.u32 %v1234, 4294901760
      %v1610 = vsub.f32 %v1234, %v1609
      %v1611 = vand.u32 %v1610, 4294901760
      %v1612 = vsub.f32 %v1610, %v1611
      %v1613 = vand.u32 %v1612, 4294901760
      %1614 = vmatpush.msra.mxu0 %v1613
      %v1615 = vand.u32 %v1233, 4294901760
      %v1616 = vsub.f32 %v1233, %v1615
      %v1617 = vand.u32 %v1616, 4294901760
      %v1618 = vsub.f32 %v1616, %v1617
      %v1619 = vand.u32 %v1618, 4294901760
      %1620 = vmatpush.msra.mxu0 %v1619
      %v1621 = vand.u32 %v1232, 4294901760
      %v1622 = vsub.f32 %v1232, %v1621
      %v1623 = vand.u32 %v1622, 4294901760
      %v1624 = vsub.f32 %v1622, %v1623
      %v1625 = vand.u32 %v1624, 4294901760
      %1626 = vmatpush.msra.mxu0 %v1625
      %v1627 = vand.u32 %v1231, 4294901760
      %v1628 = vsub.f32 %v1231, %v1627
      %v1629 = vand.u32 %v1628, 4294901760
      %v1630 = vsub.f32 %v1628, %v1629
      %v1631 = vand.u32 %v1630, 4294901760
      %1632 = vmatpush.msra.mxu0 %v1631
      %v1633 = vand.u32 %v1230, 4294901760
      %v1634 = vsub.f32 %v1230, %v1633
      %v1635 = vand.u32 %v1634, 4294901760
      %v1636 = vsub.f32 %v1634, %v1635
      %v1637 = vand.u32 %v1636, 4294901760
      %1638 = vmatpush.msra.mxu0 %v1637
      %v1639 = vand.u32 %v1498, 4294901760
      %1640 = vmatmul.f32.gmra.mxu0 %v1639
      %v1641 = vpop.f32.mrf.mxu0
      %v1642 = vadd.f32 %v1541, %v1641
      %1643 = vdwg.mxu0
      %v1644 = vand.u32 %v1245, 4294901760
      %v1645 = vsub.f32 %v1245, %v1644
      %1646 = vmatpush.msra.mxu0 %v1645
      %v1647 = vand.u32 %v1244, 4294901760
      %v1648 = vsub.f32 %v1244, %v1647
      %1649 = vmatpush.msra.mxu0 %v1648
      %v1650 = vand.u32 %v1243, 4294901760
      %v1651 = vsub.f32 %v1243, %v1650
      %1652 = vmatpush.msra.mxu0 %v1651
      %v1653 = vand.u32 %v1242, 4294901760
      %v1654 = vsub.f32 %v1242, %v1653
      %1655 = vmatpush.msra.mxu0 %v1654
      %v1656 = vand.u32 %v1241, 4294901760
      %v1657 = vsub.f32 %v1241, %v1656
      %1658 = vmatpush.msra.mxu0 %v1657
      %v1659 = vand.u32 %v1240, 4294901760
      %v1660 = vsub.f32 %v1240, %v1659
      %1661 = vmatpush.msra.mxu0 %v1660
      %v1662 = vand.u32 %v1239, 4294901760
      %v1663 = vsub.f32 %v1239, %v1662
      %1664 = vmatpush.msra.mxu0 %v1663
      %v1665 = vand.u32 %v1238, 4294901760
      %v1666 = vsub.f32 %v1238, %v1665
      %1667 = vmatpush.msra.mxu0 %v1666
      %v1668 = vand.u32 %v1237, 4294901760
      %v1669 = vsub.f32 %v1237, %v1668
      %1670 = vmatpush.msra.mxu0 %v1669
      %v1671 = vand.u32 %v1236, 4294901760
      %v1672 = vsub.f32 %v1236, %v1671
      %1673 = vmatpush.msra.mxu0 %v1672
      %v1674 = vand.u32 %v1235, 4294901760
      %v1675 = vsub.f32 %v1235, %v1674
      %1676 = vmatpush.msra.mxu0 %v1675
      %v1677 = vand.u32 %v1234, 4294901760
      %v1678 = vsub.f32 %v1234, %v1677
      %1679 = vmatpush.msra.mxu0 %v1678
      %v1680 = vand.u32 %v1233, 4294901760
      %v1681 = vsub.f32 %v1233, %v1680
      %1682 = vmatpush.msra.mxu0 %v1681
      %v1683 = vand.u32 %v1232, 4294901760
      %v1684 = vsub.f32 %v1232, %v1683
      %1685 = vmatpush.msra.mxu0 %v1684
      %v1686 = vand.u32 %v1231, 4294901760
      %v1687 = vsub.f32 %v1231, %v1686
      %1688 = vmatpush.msra.mxu0 %v1687
      %v1689 = vand.u32 %v1230, 4294901760
      %v1690 = vsub.f32 %v1230, %v1689
      %1691 = vmatpush.msra.mxu0 %v1690
      %v1692 = vand.u32 %v1498, 4294901760
      %v1693 = vsub.f32 %v1498, %v1692
      %1694 = vmatmul.f32.gmra.mxu0 %v1693
      %v1695 = vpop.f32.mrf.mxu0
      %v1696 = vadd.f32 %v1642, %v1695
      %1697 = vdwg.mxu0
      %v1698 = vand.u32 %v1245, 4294901760
      %1699 = vmatpush.msra.mxu0 %v1698
      %v1700 = vand.u32 %v1244, 4294901760
      %1701 = vmatpush.msra.mxu0 %v1700
      %v1702 = vand.u32 %v1243, 4294901760
      %1703 = vmatpush.msra.mxu0 %v1702
      %v1704 = vand.u32 %v1242, 4294901760
      %1705 = vmatpush.msra.mxu0 %v1704
      %v1706 = vand.u32 %v1241, 4294901760
      %1707 = vmatpush.msra.mxu0 %v1706
      %v1708 = vand.u32 %v1240, 4294901760
      %1709 = vmatpush.msra.mxu0 %v1708
      %v1710 = vand.u32 %v1239, 4294901760
      %1711 = vmatpush.msra.mxu0 %v1710
      %v1712 = vand.u32 %v1238, 4294901760
      %1713 = vmatpush.msra.mxu0 %v1712
      %v1714 = vand.u32 %v1237, 4294901760
      %1715 = vmatpush.msra.mxu0 %v1714
      %v1716 = vand.u32 %v1236, 4294901760
      %1717 = vmatpush.msra.mxu0 %v1716
      %v1718 = vand.u32 %v1235, 4294901760
      %1719 = vmatpush.msra.mxu0 %v1718
      %v1720 = vand.u32 %v1234, 4294901760
      %1721 = vmatpush.msra.mxu0 %v1720
      %v1722 = vand.u32 %v1233, 4294901760
      %1723 = vmatpush.msra.mxu0 %v1722
      %v1724 = vand.u32 %v1232, 4294901760
      %1725 = vmatpush.msra.mxu0 %v1724
      %v1726 = vand.u32 %v1231, 4294901760
      %1727 = vmatpush.msra.mxu0 %v1726
      %v1728 = vand.u32 %v1230, 4294901760
      %1729 = vmatpush.msra.mxu0 %v1728
      %v1730 = vand.u32 %v1498, 4294901760
      %v1731 = vsub.f32 %v1498, %v1730
      %v1732 = vand.u32 %v1731, 4294901760
      %1733 = vmatmul.f32.gmra.mxu0 %v1732
      %v1734 = vpop.f32.mrf.mxu0
      %v1735 = vadd.f32 %v1696, %v1734
      %1736 = vdwg.mxu0
      %v1737 = vand.u32 %v1245, 4294901760
      %v1738 = vsub.f32 %v1245, %v1737
      %v1739 = vand.u32 %v1738, 4294901760
      %1740 = vmatpush.msra.mxu0 %v1739
      %v1741 = vand.u32 %v1244, 4294901760
      %v1742 = vsub.f32 %v1244, %v1741
      %v1743 = vand.u32 %v1742, 4294901760
      %1744 = vmatpush.msra.mxu0 %v1743
      %v1745 = vand.u32 %v1243, 4294901760
      %v1746 = vsub.f32 %v1243, %v1745
      %v1747 = vand.u32 %v1746, 4294901760
      %1748 = vmatpush.msra.mxu0 %v1747
      %v1749 = vand.u32 %v1242, 4294901760
      %v1750 = vsub.f32 %v1242, %v1749
      %v1751 = vand.u32 %v1750, 4294901760
      %1752 = vmatpush.msra.mxu0 %v1751
      %v1753 = vand.u32 %v1241, 4294901760
      %v1754 = vsub.f32 %v1241, %v1753
      %v1755 = vand.u32 %v1754, 4294901760
      %1756 = vmatpush.msra.mxu0 %v1755
      %v1757 = vand.u32 %v1240, 4294901760
      %v1758 = vsub.f32 %v1240, %v1757
      %v1759 = vand.u32 %v1758, 4294901760
      %1760 = vmatpush.msra.mxu0 %v1759
      %v1761 = vand.u32 %v1239, 4294901760
      %v1762 = vsub.f32 %v1239, %v1761
      %v1763 = vand.u32 %v1762, 4294901760
      %1764 = vmatpush.msra.mxu0 %v1763
      %v1765 = vand.u32 %v1238, 4294901760
      %v1766 = vsub.f32 %v1238, %v1765
      %v1767 = vand.u32 %v1766, 4294901760
      %1768 = vmatpush.msra.mxu0 %v1767
      %v1769 = vand.u32 %v1237, 4294901760
      %v1770 = vsub.f32 %v1237, %v1769
      %v1771 = vand.u32 %v1770, 4294901760
      %1772 = vmatpush.msra.mxu0 %v1771
      %v1773 = vand.u32 %v1236, 4294901760
      %v1774 = vsub.f32 %v1236, %v1773
      %v1775 = vand.u32 %v1774, 4294901760
      %1776 = vmatpush.msra.mxu0 %v1775
      %v1777 = vand.u32 %v1235, 4294901760
      %v1778 = vsub.f32 %v1235, %v1777
      %v1779 = vand.u32 %v1778, 4294901760
      %1780 = vmatpush.msra.mxu0 %v1779
      %v1781 = vand.u32 %v1234, 4294901760
      %v1782 = vsub.f32 %v1234, %v1781
      %v1783 = vand.u32 %v1782, 4294901760
      %1784 = vmatpush.msra.mxu0 %v1783
      %v1785 = vand.u32 %v1233, 4294901760
      %v1786 = vsub.f32 %v1233, %v1785
      %v1787 = vand.u32 %v1786, 4294901760
      %1788 = vmatpush.msra.mxu0 %v1787
      %v1789 = vand.u32 %v1232, 4294901760
      %v1790 = vsub.f32 %v1232, %v1789
      %v1791 = vand.u32 %v1790, 4294901760
      %1792 = vmatpush.msra.mxu0 %v1791
      %v1793 = vand.u32 %v1231, 4294901760
      %v1794 = vsub.f32 %v1231, %v1793
      %v1795 = vand.u32 %v1794, 4294901760
      %1796 = vmatpush.msra.mxu0 %v1795
      %v1797 = vand.u32 %v1230, 4294901760
      %v1798 = vsub.f32 %v1230, %v1797
      %v1799 = vand.u32 %v1798, 4294901760
      %1800 = vmatpush.msra.mxu0 %v1799
      %v1801 = vand.u32 %v1498, 4294901760
      %1802 = vmatmul.f32.gmra.mxu0 %v1801
      %v1803 = vpop.f32.mrf.mxu0
      %v1804 = vadd.f32 %v1735, %v1803
      %1805 = vdwg.mxu0
      %v1806 = vand.u32 %v1245, 4294901760
      %1807 = vmatpush.msra.mxu0 %v1806
      %v1808 = vand.u32 %v1244, 4294901760
      %1809 = vmatpush.msra.mxu0 %v1808
      %v1810 = vand.u32 %v1243, 4294901760
      %1811 = vmatpush.msra.mxu0 %v1810
      %v1812 = vand.u32 %v1242, 4294901760
      %1813 = vmatpush.msra.mxu0 %v1812
      %v1814 = vand.u32 %v1241, 4294901760
      %1815 = vmatpush.msra.mxu0 %v1814
      %v1816 = vand.u32 %v1240, 4294901760
      %1817 = vmatpush.msra.mxu0 %v1816
      %v1818 = vand.u32 %v1239, 4294901760
      %1819 = vmatpush.msra.mxu0 %v1818
      %v1820 = vand.u32 %v1238, 4294901760
      %1821 = vmatpush.msra.mxu0 %v1820
      %v1822 = vand.u32 %v1237, 4294901760
      %1823 = vmatpush.msra.mxu0 %v1822
      %v1824 = vand.u32 %v1236, 4294901760
      %1825 = vmatpush.msra.mxu0 %v1824
      %v1826 = vand.u32 %v1235, 4294901760
      %1827 = vmatpush.msra.mxu0 %v1826
      %v1828 = vand.u32 %v1234, 4294901760
      %1829 = vmatpush.msra.mxu0 %v1828
      %v1830 = vand.u32 %v1233, 4294901760
      %1831 = vmatpush.msra.mxu0 %v1830
      %v1832 = vand.u32 %v1232, 4294901760
      %1833 = vmatpush.msra.mxu0 %v1832
      %v1834 = vand.u32 %v1231, 4294901760
      %1835 = vmatpush.msra.mxu0 %v1834
      %v1836 = vand.u32 %v1230, 4294901760
      %1837 = vmatpush.msra.mxu0 %v1836
      %v1838 = vand.u32 %v1498, 4294901760
      %1839 = vmatmul.f32.gmra.mxu0 %v1838
      %v1840 = vpop.f32.mrf.mxu0
      %v1841 = vadd.f32 %v1804, %v1840
      %1842 = vdwg.mxu0
      %v1843 = vand.u32 %v1261, 4294901760
      %1844 = vmatpush.msra.mxu0 %v1843
      %v1845 = vand.u32 %v1260, 4294901760
      %1846 = vmatpush.msra.mxu0 %v1845
      %v1847 = vand.u32 %v1259, 4294901760
      %1848 = vmatpush.msra.mxu0 %v1847
      %v1849 = vand.u32 %v1258, 4294901760
      %1850 = vmatpush.msra.mxu0 %v1849
      %v1851 = vand.u32 %v1257, 4294901760
      %1852 = vmatpush.msra.mxu0 %v1851
      %v1853 = vand.u32 %v1256, 4294901760
      %1854 = vmatpush.msra.mxu0 %v1853
      %v1855 = vand.u32 %v1255, 4294901760
      %1856 = vmatpush.msra.mxu0 %v1855
      %v1857 = vand.u32 %v1254, 4294901760
      %1858 = vmatpush.msra.mxu0 %v1857
      %v1859 = vand.u32 %v1253, 4294901760
      %1860 = vmatpush.msra.mxu0 %v1859
      %v1861 = vand.u32 %v1252, 4294901760
      %1862 = vmatpush.msra.mxu0 %v1861
      %v1863 = vand.u32 %v1251, 4294901760
      %1864 = vmatpush.msra.mxu0 %v1863
      %v1865 = vand.u32 %v1250, 4294901760
      %1866 = vmatpush.msra.mxu0 %v1865
      %v1867 = vand.u32 %v1249, 4294901760
      %1868 = vmatpush.msra.mxu0 %v1867
      %v1869 = vand.u32 %v1248, 4294901760
      %1870 = vmatpush.msra.mxu0 %v1869
      %v1871 = vand.u32 %v1247, 4294901760
      %1872 = vmatpush.msra.mxu0 %v1871
      %v1873 = vand.u32 %v1246, 4294901760
      %1874 = vmatpush.msra.mxu0 %v1873
      %v1875 = vand.u32 %v1499, 4294901760
      %v1876 = vsub.f32 %v1499, %v1875
      %v1877 = vand.u32 %v1876, 4294901760
      %v1878 = vsub.f32 %v1876, %v1877
      %v1879 = vand.u32 %v1878, 4294901760
      %1880 = vmatmul.f32.gmra.mxu0 %v1879
      %v1881 = vpop.f32.mrf.mxu0
      %v1882 = vadd.f32 %v1841, %v1881
      %1883 = vdwg.mxu0
      %v1884 = vand.u32 %v1261, 4294901760
      %v1885 = vsub.f32 %v1261, %v1884
      %v1886 = vand.u32 %v1885, 4294901760
      %v1887 = vsub.f32 %v1885, %v1886
      %v1888 = vand.u32 %v1887, 4294901760
      %1889 = vmatpush.msra.mxu0 %v1888
      %v1890 = vand.u32 %v1260, 4294901760
      %v1891 = vsub.f32 %v1260, %v1890
      %v1892 = vand.u32 %v1891, 4294901760
      %v1893 = vsub.f32 %v1891, %v1892
      %v1894 = vand.u32 %v1893, 4294901760
      %1895 = vmatpush.msra.mxu0 %v1894
      %v1896 = vand.u32 %v1259, 4294901760
      %v1897 = vsub.f32 %v1259, %v1896
      %v1898 = vand.u32 %v1897, 4294901760
      %v1899 = vsub.f32 %v1897, %v1898
      %v1900 = vand.u32 %v1899, 4294901760
      %1901 = vmatpush.msra.mxu0 %v1900
      %v1902 = vand.u32 %v1258, 4294901760
      %v1903 = vsub.f32 %v1258, %v1902
      %v1904 = vand.u32 %v1903, 4294901760
      %v1905 = vsub.f32 %v1903, %v1904
      %v1906 = vand.u32 %v1905, 4294901760
      %1907 = vmatpush.msra.mxu0 %v1906
      %v1908 = vand.u32 %v1257, 4294901760
      %v1909 = vsub.f32 %v1257, %v1908
      %v1910 = vand.u32 %v1909, 4294901760
      %v1911 = vsub.f32 %v1909, %v1910
      %v1912 = vand.u32 %v1911, 4294901760
      %1913 = vmatpush.msra.mxu0 %v1912
      %v1914 = vand.u32 %v1256, 4294901760
      %v1915 = vsub.f32 %v1256, %v1914
      %v1916 = vand.u32 %v1915, 4294901760
      %v1917 = vsub.f32 %v1915, %v1916
      %v1918 = vand.u32 %v1917, 4294901760
      %1919 = vmatpush.msra.mxu0 %v1918
      %v1920 = vand.u32 %v1255, 4294901760
      %v1921 = vsub.f32 %v1255, %v1920
      %v1922 = vand.u32 %v1921, 4294901760
      %v1923 = vsub.f32 %v1921, %v1922
      %v1924 = vand.u32 %v1923, 4294901760
      %1925 = vmatpush.msra.mxu0 %v1924
      %v1926 = vand.u32 %v1254, 4294901760
      %v1927 = vsub.f32 %v1254, %v1926
      %v1928 = vand.u32 %v1927, 4294901760
      %v1929 = vsub.f32 %v1927, %v1928
      %v1930 = vand.u32 %v1929, 4294901760
      %1931 = vmatpush.msra.mxu0 %v1930
      %v1932 = vand.u32 %v1253, 4294901760
      %v1933 = vsub.f32 %v1253, %v1932
      %v1934 = vand.u32 %v1933, 4294901760
      %v1935 = vsub.f32 %v1933, %v1934
      %v1936 = vand.u32 %v1935, 4294901760
      %1937 = vmatpush.msra.mxu0 %v1936
      %v1938 = vand.u32 %v1252, 4294901760
      %v1939 = vsub.f32 %v1252, %v1938
      %v1940 = vand.u32 %v1939, 4294901760
      %v1941 = vsub.f32 %v1939, %v1940
      %v1942 = vand.u32 %v1941, 4294901760
      %1943 = vmatpush.msra.mxu0 %v1942
      %v1944 = vand.u32 %v1251, 4294901760
      %v1945 = vsub.f32 %v1251, %v1944
      %v1946 = vand.u32 %v1945, 4294901760
      %v1947 = vsub.f32 %v1945, %v1946
      %v1948 = vand.u32 %v1947, 4294901760
      %1949 = vmatpush.msra.mxu0 %v1948
      %v1950 = vand.u32 %v1250, 4294901760
      %v1951 = vsub.f32 %v1250, %v1950
      %v1952 = vand.u32 %v1951, 4294901760
      %v1953 = vsub.f32 %v1951, %v1952
      %v1954 = vand.u32 %v1953, 4294901760
      %1955 = vmatpush.msra.mxu0 %v1954
      %v1956 = vand.u32 %v1249, 4294901760
      %v1957 = vsub.f32 %v1249, %v1956
      %v1958 = vand.u32 %v1957, 4294901760
      %v1959 = vsub.f32 %v1957, %v1958
      %v1960 = vand.u32 %v1959, 4294901760
      %1961 = vmatpush.msra.mxu0 %v1960
      %v1962 = vand.u32 %v1248, 4294901760
      %v1963 = vsub.f32 %v1248, %v1962
      %v1964 = vand.u32 %v1963, 4294901760
      %v1965 = vsub.f32 %v1963, %v1964
      %v1966 = vand.u32 %v1965, 4294901760
      %1967 = vmatpush.msra.mxu0 %v1966
      %v1968 = vand.u32 %v1247, 4294901760
      %v1969 = vsub.f32 %v1247, %v1968
      %v1970 = vand.u32 %v1969, 4294901760
      %v1971 = vsub.f32 %v1969, %v1970
      %v1972 = vand.u32 %v1971, 4294901760
      %1973 = vmatpush.msra.mxu0 %v1972
      %v1974 = vand.u32 %v1246, 4294901760
      %v1975 = vsub.f32 %v1246, %v1974
      %v1976 = vand.u32 %v1975, 4294901760
      %v1977 = vsub.f32 %v1975, %v1976
      %v1978 = vand.u32 %v1977, 4294901760
      %1979 = vmatpush.msra.mxu0 %v1978
      %v1980 = vand.u32 %v1499, 4294901760
      %1981 = vmatmul.f32.gmra.mxu0 %v1980
      %v1982 = vpop.f32.mrf.mxu0
      %v1983 = vadd.f32 %v1882, %v1982
      %1984 = vdwg.mxu0
      %v1985 = vand.u32 %v1261, 4294901760
      %v1986 = vsub.f32 %v1261, %v1985
      %1987 = vmatpush.msra.mxu0 %v1986
      %v1988 = vand.u32 %v1260, 4294901760
      %v1989 = vsub.f32 %v1260, %v1988
      %1990 = vmatpush.msra.mxu0 %v1989
      %v1991 = vand.u32 %v1259, 4294901760
      %v1992 = vsub.f32 %v1259, %v1991
      %1993 = vmatpush.msra.mxu0 %v1992
      %v1994 = vand.u32 %v1258, 4294901760
      %v1995 = vsub.f32 %v1258, %v1994
      %1996 = vmatpush.msra.mxu0 %v1995
      %v1997 = vand.u32 %v1257, 4294901760
      %v1998 = vsub.f32 %v1257, %v1997
      %1999 = vmatpush.msra.mxu0 %v1998
      %v2000 = vand.u32 %v1256, 4294901760
      %v2001 = vsub.f32 %v1256, %v2000
      %2002 = vmatpush.msra.mxu0 %v2001
      %v2003 = vand.u32 %v1255, 4294901760
      %v2004 = vsub.f32 %v1255, %v2003
      %2005 = vmatpush.msra.mxu0 %v2004
      %v2006 = vand.u32 %v1254, 4294901760
      %v2007 = vsub.f32 %v1254, %v2006
      %2008 = vmatpush.msra.mxu0 %v2007
      %v2009 = vand.u32 %v1253, 4294901760
      %v2010 = vsub.f32 %v1253, %v2009
      %2011 = vmatpush.msra.mxu0 %v2010
      %v2012 = vand.u32 %v1252, 4294901760
      %v2013 = vsub.f32 %v1252, %v2012
      %2014 = vmatpush.msra.mxu0 %v2013
      %v2015 = vand.u32 %v1251, 4294901760
      %v2016 = vsub.f32 %v1251, %v2015
      %2017 = vmatpush.msra.mxu0 %v2016
      %v2018 = vand.u32 %v1250, 4294901760
      %v2019 = vsub.f32 %v1250, %v2018
      %2020 = vmatpush.msra.mxu0 %v2019
      %v2021 = vand.u32 %v1249, 4294901760
      %v2022 = vsub.f32 %v1249, %v2021
      %2023 = vmatpush.msra.mxu0 %v2022
      %v2024 = vand.u32 %v1248, 4294901760
      %v2025 = vsub.f32 %v1248, %v2024
      %2026 = vmatpush.msra.mxu0 %v2025
      %v2027 = vand.u32 %v1247, 4294901760
      %v2028 = vsub.f32 %v1247, %v2027
      %2029 = vmatpush.msra.mxu0 %v2028
      %v2030 = vand.u32 %v1246, 4294901760
      %v2031 = vsub.f32 %v1246, %v2030
      %2032 = vmatpush.msra.mxu0 %v2031
      %v2033 = vand.u32 %v1499, 4294901760
      %v2034 = vsub.f32 %v1499, %v2033
      %2035 = vmatmul.f32.gmra.mxu0 %v2034
      %v2036 = vpop.f32.mrf.mxu0
      %v2037 = vadd.f32 %v1983, %v2036
      %2038 = vdwg.mxu0
      %v2039 = vand.u32 %v1261, 4294901760
      %2040 = vmatpush.msra.mxu0 %v2039
      %v2041 = vand.u32 %v1260, 4294901760
      %2042 = vmatpush.msra.mxu0 %v2041
      %v2043 = vand.u32 %v1259, 4294901760
      %2044 = vmatpush.msra.mxu0 %v2043
      %v2045 = vand.u32 %v1258, 4294901760
      %2046 = vmatpush.msra.mxu0 %v2045
      %v2047 = vand.u32 %v1257, 4294901760
      %2048 = vmatpush.msra.mxu0 %v2047
      %v2049 = vand.u32 %v1256, 4294901760
      %2050 = vmatpush.msra.mxu0 %v2049
      %v2051 = vand.u32 %v1255, 4294901760
      %2052 = vmatpush.msra.mxu0 %v2051
      %v2053 = vand.u32 %v1254, 4294901760
      %2054 = vmatpush.msra.mxu0 %v2053
      %v2055 = vand.u32 %v1253, 4294901760
      %2056 = vmatpush.msra.mxu0 %v2055
      %v2057 = vand.u32 %v1252, 4294901760
      %2058 = vmatpush.msra.mxu0 %v2057
      %v2059 = vand.u32 %v1251, 4294901760
      %2060 = vmatpush.msra.mxu0 %v2059
      %v2061 = vand.u32 %v1250, 4294901760
      %2062 = vmatpush.msra.mxu0 %v2061
      %v2063 = vand.u32 %v1249, 4294901760
      %2064 = vmatpush.msra.mxu0 %v2063
      %v2065 = vand.u32 %v1248, 4294901760
      %2066 = vmatpush.msra.mxu0 %v2065
      %v2067 = vand.u32 %v1247, 4294901760
      %2068 = vmatpush.msra.mxu0 %v2067
      %v2069 = vand.u32 %v1246, 4294901760
      %2070 = vmatpush.msra.mxu0 %v2069
      %v2071 = vand.u32 %v1499, 4294901760
      %v2072 = vsub.f32 %v1499, %v2071
      %v2073 = vand.u32 %v2072, 4294901760
      %2074 = vmatmul.f32.gmra.mxu0 %v2073
      %v2075 = vpop.f32.mrf.mxu0
      %v2076 = vadd.f32 %v2037, %v2075
      %2077 = vdwg.mxu0
      %v2078 = vand.u32 %v1261, 4294901760
      %v2079 = vsub.f32 %v1261, %v2078
      %v2080 = vand.u32 %v2079, 4294901760
      %2081 = vmatpush.msra.mxu0 %v2080
      %v2082 = vand.u32 %v1260, 4294901760
      %v2083 = vsub.f32 %v1260, %v2082
      %v2084 = vand.u32 %v2083, 4294901760
      %2085 = vmatpush.msra.mxu0 %v2084
      %v2086 = vand.u32 %v1259, 4294901760
      %v2087 = vsub.f32 %v1259, %v2086
      %v2088 = vand.u32 %v2087, 4294901760
      %2089 = vmatpush.msra.mxu0 %v2088
      %v2090 = vand.u32 %v1258, 4294901760
      %v2091 = vsub.f32 %v1258, %v2090
      %v2092 = vand.u32 %v2091, 4294901760
      %2093 = vmatpush.msra.mxu0 %v2092
      %v2094 = vand.u32 %v1257, 4294901760
      %v2095 = vsub.f32 %v1257, %v2094
      %v2096 = vand.u32 %v2095, 4294901760
      %2097 = vmatpush.msra.mxu0 %v2096
      %v2098 = vand.u32 %v1256, 4294901760
      %v2099 = vsub.f32 %v1256, %v2098
      %v2100 = vand.u32 %v2099, 4294901760
      %2101 = vmatpush.msra.mxu0 %v2100
      %v2102 = vand.u32 %v1255, 4294901760
      %v2103 = vsub.f32 %v1255, %v2102
      %v2104 = vand.u32 %v2103, 4294901760
      %2105 = vmatpush.msra.mxu0 %v2104
      %v2106 = vand.u32 %v1254, 4294901760
      %v2107 = vsub.f32 %v1254, %v2106
      %v2108 = vand.u32 %v2107, 4294901760
      %2109 = vmatpush.msra.mxu0 %v2108
      %v2110 = vand.u32 %v1253, 4294901760
      %v2111 = vsub.f32 %v1253, %v2110
      %v2112 = vand.u32 %v2111, 4294901760
      %2113 = vmatpush.msra.mxu0 %v2112
      %v2114 = vand.u32 %v1252, 4294901760
      %v2115 = vsub.f32 %v1252, %v2114
      %v2116 = vand.u32 %v2115, 4294901760
      %2117 = vmatpush.msra.mxu0 %v2116
      %v2118 = vand.u32 %v1251, 4294901760
      %v2119 = vsub.f32 %v1251, %v2118
      %v2120 = vand.u32 %v2119, 4294901760
      %2121 = vmatpush.msra.mxu0 %v2120
      %v2122 = vand.u32 %v1250, 4294901760
      %v2123 = vsub.f32 %v1250, %v2122
      %v2124 = vand.u32 %v2123, 4294901760
      %2125 = vmatpush.msra.mxu0 %v2124
      %v2126 = vand.u32 %v1249, 4294901760
      %v2127 = vsub.f32 %v1249, %v2126
      %v2128 = vand.u32 %v2127, 4294901760
      %2129 = vmatpush.msra.mxu0 %v2128
      %v2130 = vand.u32 %v1248, 4294901760
      %v2131 = vsub.f32 %v1248, %v2130
      %v2132 = vand.u32 %v2131, 4294901760
      %2133 = vmatpush.msra.mxu0 %v2132
      %v2134 = vand.u32 %v1247, 4294901760
      %v2135 = vsub.f32 %v1247, %v2134
      %v2136 = vand.u32 %v2135, 4294901760
      %2137 = vmatpush.msra.mxu0 %v2136
      %v2138 = vand.u32 %v1246, 4294901760
      %v2139 = vsub.f32 %v1246, %v2138
      %v2140 = vand.u32 %v2139, 4294901760
      %2141 = vmatpush.msra.mxu0 %v2140
      %v2142 = vand.u32 %v1499, 4294901760
      %2143 = vmatmul.f32.gmra.mxu0 %v2142
      %v2144 = vpop.f32.mrf.mxu0
      %v2145 = vadd.f32 %v2076, %v2144
      %2146 = vdwg.mxu0
      %v2147 = vand.u32 %v1261, 4294901760
      %2148 = vmatpush.msra.mxu0 %v2147
      %v2149 = vand.u32 %v1260, 4294901760
      %2150 = vmatpush.msra.mxu0 %v2149
      %v2151 = vand.u32 %v1259, 4294901760
      %2152 = vmatpush.msra.mxu0 %v2151
      %v2153 = vand.u32 %v1258, 4294901760
      %2154 = vmatpush.msra.mxu0 %v2153
      %v2155 = vand.u32 %v1257, 4294901760
      %2156 = vmatpush.msra.mxu0 %v2155
      %v2157 = vand.u32 %v1256, 4294901760
      %2158 = vmatpush.msra.mxu0 %v2157
      %v2159 = vand.u32 %v1255, 4294901760
      %2160 = vmatpush.msra.mxu0 %v2159
      %v2161 = vand.u32 %v1254, 4294901760
      %2162 = vmatpush.msra.mxu0 %v2161
      %v2163 = vand.u32 %v1253, 4294901760
      %2164 = vmatpush.msra.mxu0 %v2163
      %v2165 = vand.u32 %v1252, 4294901760
      %2166 = vmatpush.msra.mxu0 %v2165
      %v2167 = vand.u32 %v1251, 4294901760
      %2168 = vmatpush.msra.mxu0 %v2167
      %v2169 = vand.u32 %v1250, 4294901760
      %2170 = vmatpush.msra.mxu0 %v2169
      %v2171 = vand.u32 %v1249, 4294901760
      %2172 = vmatpush.msra.mxu0 %v2171
      %v2173 = vand.u32 %v1248, 4294901760
      %2174 = vmatpush.msra.mxu0 %v2173
      %v2175 = vand.u32 %v1247, 4294901760
      %2176 = vmatpush.msra.mxu0 %v2175
      %v2177 = vand.u32 %v1246, 4294901760
      %2178 = vmatpush.msra.mxu0 %v2177
      %v2179 = vand.u32 %v1499, 4294901760
      %2180 = vmatmul.f32.gmra.mxu0 %v2179
      %v2181 = vpop.f32.mrf.mxu0
      %v2182 = vadd.f32 %v2145, %v2181
      %2183 = vdwg.mxu0
      %v2184 = vmul.f32 %v2182, 0.2
      %v2185 = vmax.f32 %v2182, %v2184
      %v2186 = vld [vmem:[%s5] sm:$0x1]
      %v2188 = vperm.slane %v2186, 0
      %v2190 = vmul.f32 %v2185, %v2188
      %vm2191 = vcmask 257024
      %v2192 = vsel %vm2191, %v2190, 0.0
      %2193 = vadd.xlane.f32.xlu0 %v2192
      %v2194 = vpop.xlane.xlu0 %2193
      %v2195 = vld [vmem:[#allocation2] sm:$0x1]
      %v2197 = vperm.slane %v2195, 0
      %v2199 = vadd.f32 %v2194, %v2197
      %v2201 = vrot.slane %v2199, 2
      %vm2203 = vcmask 1024
      %2204 = vst.msk [vmem:[%s280] sm:$0x3] %vm2203, %v2199
      %2205 = vst.msk [vmem:[%s280 + $0x2] sm:$0x3] %vm2203, %v2201
      %p2206 = scmp.lt.s32.totalorder %s20, 1
      %s2207 = scalar_select %p2206, %s20, 1
      %s2208 = smul.addr %s2207, 2
      %s2209 = smul.addr %s2208, 2
      %s2210 = scalar_lea.vmem %s7, %s2209
      // Predicated region
      $region49: #{ms_image_dis_forward.3} parent=47 // pred_check
        %p2211 = pneg %p190
      $region50: #{ms_image_dis_forward.3} parent=47 // pred_check_branch
        %2213 = sbr.rel (%p2211) target = $region52
      $region51: #{ms_image_dis_forward.3} parent=47 // pred_region
        _
      $region52: #{ms_image_dis_forward.3} parent=47 // pred_fallthru
        _
    $region48: #{ms_image_dis_forward.3} parent=5 // pred_fallthru
      _
    %p2214 = scmp.le.s32.totalorder 2, %s15
    // Predicated region
    $region53: #{ms_image_dis_forward.3} parent=5 // pred_check
      %p2215 = pneg %p2214
    $region54: #{ms_image_dis_forward.3} parent=5 // pred_check_branch
      %2217 = sbr.rel (%p2215) target = $region56
    $region55: #{ms_image_dis_forward.3} parent=5 // pred_region
      %s2218 = ssub.s32 %s15, 2
      // Predicated region
      $region57: #{ms_image_dis_forward.3} parent=55 // pred_check
        %p2219 = pneg %p196
      $region58: #{ms_image_dis_forward.3} parent=55 // pred_check_branch
        %2221 = sbr.rel (%p2219) target = $region60
      $region59: #{ms_image_dis_forward.3} parent=55 // pred_region
        %p2222 = scmp.lt.s32.totalorder %s21, 1
        %s2223 = scalar_select %p2222, %s21, 1
        %s2224 = smul.addr %s2223, 2
        %s2225 = smul.addr %s2224, 2
        %s2226 = scalar_lea.vmem %s7, %s2225
      $region60: #{ms_image_dis_forward.3} parent=55 // pred_fallthru
        _
    $region56: #{ms_image_dis_forward.3} parent=5 // pred_fallthru
      _
  $region6: #{ms_image_dis_forward.3} parent=0 // loop_footer
    %s19 = sadd.s32 1, %s15
  $region7: #{ms_image_dis_forward.3} parent=0 // loop_footer_branch
    %14 = sbr.rel target = $region3
  $region8: #{ms_image_dis_forward.3} parent=0 // loop_exit
    _

// kernel: ms_image_dis_forward.2
$region0: #{ms_image_dis_forward.2}
  #allocation0 [shape = 'u32[]', space=smem, size = 0x4, offset = 0x4, fixed_abs, tag = 'smem constant byte address 0x4 - core index']
  #allocation1 [shape = 'u32[72,128]{1,0:T(1,128)}', space=vmem, size = 0x9000, scoped, tag = 'internal scratch']
  #allocation2 [shape = 'f32[1,1]{1,0:T(1,128)S(1)}', space=vmem, size = 0x200, scoped, tag = 'scoped memory for ms_image_dis_forward.2']
  %s0 = inlined_call_operand.vmem [shape: f32[2,16,16,8], index: 0, kind: input, shape index: {}]
  %s1 = inlined_call_operand.vmem [shape: f32[128,16], index: 1, kind: input, shape index: {}]
  %s2 = inlined_call_operand.vmem [shape: f32[1,16], index: 2, kind: input, shape index: {}]
  %s3 = inlined_call_operand.vmem [shape: f32[256,32], index: 3, kind: input, shape index: {}]
  %s4 = inlined_call_operand.vmem [shape: f32[1,32], index: 4, kind: input, shape index: {}]
  %s5 = inlined_call_operand.vmem [shape: f32[1,32], index: 5, kind: input, shape index: {}]
  %s6 = inlined_call_operand.<no memory space> [shape: f32[1,1], index: 6, kind: input, shape index: {}]
  %s7 = inlined_call_operand.vmem [shape: f32[8,8,1], index: 7, kind: input, shape index: {}]
  %s8 = inlined_call_operand.vmem [shape: f32[2,4,4,1], index: 8, kind: output, shape index: {0}]
  %s9 = inlined_call_operand.vmem [shape: f32[2,8,8,8], index: 9, kind: output, shape index: {1}]
  %10 = xla_tuple %s8, %s9
  %s11 = sld [smem:[#allocation0]]
  $region73: #{ms_image_dis_forward.2} parent=0
    _
  %s13 = ssub.s32 1, %s11
  %s14 = scalar_select 0, %s13, %s11
  %v15 = vstv %s6
  %16 = vst [vmem:[#allocation2] sm:$0x1] %v15
  loop: start=0, step=1, limit=4
  $region2: #{ms_image_dis_forward.2} parent=0 // loop_pre_header
    _
  $region3: #{ms_image_dis_forward.2} parent=0 // loop_header
    %s18 = sphi 0, %s22
    %p19 = scmp.ge.s32.totalorder %s18, 4
    %s28 = sphi 0, %s30
    %s31 = sphi 0, %s28
    %s32 = sphi 0, %s31
    %s48 = sphi 0, %s32
    %s52 = sphi 0, %s52
    %s54 = sphi 0, %s52
    %s55 = sphi 0, %s54
    %s69 = sphi 0, %s55
    %s73 = sphi 0, %s73
    %s75 = sphi 0, %s73
    %s76 = sphi 0, %s75
    %s90 = sphi 0, %s76
    %s94 = sphi 0, %s94
    %s96 = sphi 0, %s94
    %s97 = sphi 0, %s96
    %s111 = sphi 0, %s97
    %s115 = sphi 0, %s115
    %s117 = sphi 0, %s115
    %s118 = sphi 0, %s117
    %s132 = sphi 0, %s118
    %s136 = sphi 0, %s136
    %s138 = sphi 0, %s136
    %s139 = sphi 0, %s138
    %s153 = sphi 0, %s139
    %s157 = sphi 0, %s157
    %s159 = sphi 0, %s157
    %s160 = sphi 0, %s159
    %s174 = sphi 0, %s160
    %s178 = sphi 0, %s178
    %s180 = sphi 0, %s178
    %s181 = sphi 0, %s180
    %s195 = sphi 0, %s181
    %s201 = sphi 0, %s203
    %s204 = sphi 0, %s201
    %s205 = sphi 0, %s204
    %s221 = sphi 0, %s205
    %s227 = sphi 0, %s229
    %s230 = sphi 0, %s227
    %s231 = sphi 0, %s230
    %s247 = sphi 0, %s231
  $region4: #{ms_image_dis_forward.2} parent=0 // loop_header_branch
    %21 = sbr.rel (%p19) target = $region8
  $region5: #{ms_image_dis_forward.2} parent=0 // loop_body
    %s23 = ssub.s32 %s18, 1
    %s24 = ssub.s32 %s18, 2
    %s25 = sadd.s32 %s18, 1
    %s26 = ssub.s32 %s18, %s25
    %p27 = scmp.eq.s32.totalorder %s26, 0
    %s29 = sadd.s32 %s28, 1
    %s30 = scalar_select %p27, %s28, %s29
    %p33 = pneg %p27
    %p34 = scmp.eq.s32.totalorder %s18, 1
    %p35 = por %p33, %p34
    %p36 = scmp.ne.s32.totalorder %s28, %s31
    %p37 = scmp.eq.s32.totalorder %s18, 0
    %p38 = por %p36, %p37
    %p39 = scmp.ne.s32.totalorder %s28, %s31
    %p40 = scmp.eq.s32.totalorder %s23, 1
    %p41 = por %p39, %p40
    %p42 = scmp.ne.s32.totalorder %s31, %s32
    %p43 = scmp.eq.s32.totalorder %s23, 0
    %p44 = por %p42, %p43
    %p45 = scmp.ne.s32.totalorder %s31, %s32
    %p46 = scmp.eq.s32.totalorder %s24, 1
    %p47 = por %p45, %p46
    %p49 = scmp.ne.s32.totalorder %s32, %s48
    %p50 = scmp.eq.s32.totalorder %s24, 0
    %p51 = por %p49, %p50
    %s53 = sadd.s32 %s52, 1
    %p56 = scmp.eq.s32.totalorder %s18, 1
    %p57 = scmp.ne.s32.totalorder %s52, %s54
    %p58 = scmp.eq.s32.totalorder %s18, 0
    %p59 = por %p57, %p58
    %p60 = scmp.ne.s32.totalorder %s52, %s54
    %p61 = scmp.eq.s32.totalorder %s23, 1
    %p62 = por %p60, %p61
    %p63 = scmp.ne.s32.totalorder %s54, %s55
    %p64 = scmp.eq.s32.totalorder %s23, 0
    %p65 = por %p63, %p64
    %p66 = scmp.ne.s32.totalorder %s54, %s55
    %p67 = scmp.eq.s32.totalorder %s24, 1
    %p68 = por %p66, %p67
    %p70 = scmp.ne.s32.totalorder %s55, %s69
    %p71 = scmp.eq.s32.totalorder %s24, 0
    %p72 = por %p70, %p71
    %s74 = sadd.s32 %s73, 1
    %p77 = scmp.eq.s32.totalorder %s18, 1
    %p78 = scmp.ne.s32.totalorder %s73, %s75
    %p79 = scmp.eq.s32.totalorder %s18, 0
    %p80 = por %p78, %p79
    %p81 = scmp.ne.s32.totalorder %s73, %s75
    %p82 = scmp.eq.s32.totalorder %s23, 1
    %p83 = por %p81, %p82
    %p84 = scmp.ne.s32.totalorder %s75, %s76
    %p85 = scmp.eq.s32.totalorder %s23, 0
    %p86 = por %p84, %p85
    %p87 = scmp.ne.s32.totalorder %s75, %s76
    %p88 = scmp.eq.s32.totalorder %s24, 1
    %p89 = por %p87, %p88
    %p91 = scmp.ne.s32.totalorder %s76, %s90
    %p92 = scmp.eq.s32.totalorder %s24, 0
    %p93 = por %p91, %p92
    %s95 = sadd.s32 %s94, 1
    %p98 = scmp.eq.s32.totalorder %s18, 1
    %p99 = scmp.ne.s32.totalorder %s94, %s96
    %p100 = scmp.eq.s32.totalorder %s18, 0
    %p101 = por %p99, %p100
    %p102 = scmp.ne.s32.totalorder %s94, %s96
    %p103 = scmp.eq.s32.totalorder %s23, 1
    %p104 = por %p102, %p103
    %p105 = scmp.ne.s32.totalorder %s96, %s97
    %p106 = scmp.eq.s32.totalorder %s23, 0
    %p107 = por %p105, %p106
    %p108 = scmp.ne.s32.totalorder %s96, %s97
    %p109 = scmp.eq.s32.totalorder %s24, 1
    %p110 = por %p108, %p109
    %p112 = scmp.ne.s32.totalorder %s97, %s111
    %p113 = scmp.eq.s32.totalorder %s24, 0
    %p114 = por %p112, %p113
    %s116 = sadd.s32 %s115, 1
    %p119 = scmp.eq.s32.totalorder %s18, 1
    %p120 = scmp.ne.s32.totalorder %s115, %s117
    %p121 = scmp.eq.s32.totalorder %s18, 0
    %p122 = por %p120, %p121
    %p123 = scmp.ne.s32.totalorder %s115, %s117
    %p124 = scmp.eq.s32.totalorder %s23, 1
    %p125 = por %p123, %p124
    %p126 = scmp.ne.s32.totalorder %s117, %s118
    %p127 = scmp.eq.s32.totalorder %s23, 0
    %p128 = por %p126, %p127
    %p129 = scmp.ne.s32.totalorder %s117, %s118
    %p130 = scmp.eq.s32.totalorder %s24, 1
    %p131 = por %p129, %p130
    %p133 = scmp.ne.s32.totalorder %s118, %s132
    %p134 = scmp.eq.s32.totalorder %s24, 0
    %p135 = por %p133, %p134
    %s137 = sadd.s32 %s136, 1
    %p140 = scmp.eq.s32.totalorder %s18, 1
    %p141 = scmp.ne.s32.totalorder %s136, %s138
    %p142 = scmp.eq.s32.totalorder %s18, 0
    %p143 = por %p141, %p142
    %p144 = scmp.ne.s32.totalorder %s136, %s138
    %p145 = scmp.eq.s32.totalorder %s23, 1
    %p146 = por %p144, %p145
    %p147 = scmp.ne.s32.totalorder %s138, %s139
    %p148 = scmp.eq.s32.totalorder %s23, 0
    %p149 = por %p147, %p148
    %p150 = scmp.ne.s32.totalorder %s138, %s139
    %p151 = scmp.eq.s32.totalorder %s24, 1
    %p152 = por %p150, %p151
    %p154 = scmp.ne.s32.totalorder %s139, %s153
    %p155 = scmp.eq.s32.totalorder %s24, 0
    %p156 = por %p154, %p155
    %s158 = sadd.s32 %s157, 1
    %p161 = scmp.eq.s32.totalorder %s18, 1
    %p162 = scmp.ne.s32.totalorder %s157, %s159
    %p163 = scmp.eq.s32.totalorder %s18, 0
    %p164 = por %p162, %p163
    %p165 = scmp.ne.s32.totalorder %s157, %s159
    %p166 = scmp.eq.s32.totalorder %s23, 1
    %p167 = por %p165, %p166
    %p168 = scmp.ne.s32.totalorder %s159, %s160
    %p169 = scmp.eq.s32.totalorder %s23, 0
    %p170 = por %p168, %p169
    %p171 = scmp.ne.s32.totalorder %s159, %s160
    %p172 = scmp.eq.s32.totalorder %s24, 1
    %p173 = por %p171, %p172
    %p175 = scmp.ne.s32.totalorder %s160, %s174
    %p176 = scmp.eq.s32.totalorder %s24, 0
    %p177 = por %p175, %p176
    %s179 = sadd.s32 %s178, 1
    %p182 = scmp.eq.s32.totalorder %s18, 1
    %p183 = scmp.ne.s32.totalorder %s178, %s180
    %p184 = scmp.eq.s32.totalorder %s18, 0
    %p185 = por %p183, %p184
    %p186 = scmp.ne.s32.totalorder %s178, %s180
    %p187 = scmp.eq.s32.totalorder %s23, 1
    %p188 = por %p186, %p187
    %p189 = scmp.ne.s32.totalorder %s180, %s181
    %p190 = scmp.eq.s32.totalorder %s23, 0
    %p191 = por %p189, %p190
    %p192 = scmp.ne.s32.totalorder %s180, %s181
    %p193 = scmp.eq.s32.totalorder %s24, 1
    %p194 = por %p192, %p193
    %p196 = scmp.ne.s32.totalorder %s181, %s195
    %p197 = scmp.eq.s32.totalorder %s24, 0
    %p198 = por %p196, %p197
    %s199 = ssub.s32 %s18, %s25
    %p200 = scmp.eq.s32.totalorder %s199, 0
    %s202 = sadd.s32 %s201, 1
    %s203 = scalar_select %p200, %s201, %s202
    %p206 = pneg %p200
    %p207 = scmp.eq.s32.totalorder %s18, 1
    %p208 = por %p206, %p207
    %p209 = scmp.ne.s32.totalorder %s201, %s204
    %p210 = scmp.eq.s32.totalorder %s18, 0
    %p211 = por %p209, %p210
    %p212 = scmp.ne.s32.totalorder %s201, %s204
    %p213 = scmp.eq.s32.totalorder %s23, 1
    %p214 = por %p212, %p213
    %p215 = scmp.ne.s32.totalorder %s204, %s205
    %p216 = scmp.eq.s32.totalorder %s23, 0
    %p217 = por %p215, %p216
    %p218 = scmp.ne.s32.totalorder %s204, %s205
    %p219 = scmp.eq.s32.totalorder %s24, 1
    %p220 = por %p218, %p219
    %p222 = scmp.ne.s32.totalorder %s205, %s221
    %p223 = scmp.eq.s32.totalorder %s24, 0
    %p224 = por %p222, %p223
    %s225 = ssub.s32 %s18, %s25
    %p226 = scmp.eq.s32.totalorder %s225, 0
    %s228 = sadd.s32 %s227, 1
    %s229 = scalar_select %p226, %s227, %s228
    %p232 = pneg %p226
    %p233 = scmp.eq.s32.totalorder %s18, 1
    %p234 = por %p232, %p233
    %p235 = scmp.ne.s32.totalorder %s227, %s230
    %p236 = scmp.eq.s32.totalorder %s18, 0
    %p237 = por %p235, %p236
    %p238 = scmp.ne.s32.totalorder %s227, %s230
    %p239 = scmp.eq.s32.totalorder %s23, 1
    %p240 = por %p238, %p239
    %p241 = scmp.ne.s32.totalorder %s230, %s231
    %p242 = scmp.eq.s32.totalorder %s23, 0
    %p243 = por %p241, %p242
    %p244 = scmp.ne.s32.totalorder %s230, %s231
    %p245 = scmp.eq.s32.totalorder %s24, 1
    %p246 = por %p244, %p245
    %p248 = scmp.ne.s32.totalorder %s231, %s247
    %p249 = scmp.eq.s32.totalorder %s24, 0
    %p250 = por %p248, %p249
    %p251 = scmp.le.s32.totalorder 1, %s18
    %p252 = scmp.lt.s32.totalorder %s18, 3
    %p253 = pnand %p251, %p252
    %p254 = pneg %p253
    // Predicated region
    $region9: #{ms_image_dis_forward.2} parent=5 // pred_check
      _
    $region10: #{ms_image_dis_forward.2} parent=5 // pred_check_branch
      %256 = sbr.rel (%p253) target = $region12
    $region11: #{ms_image_dis_forward.2} parent=5 // pred_region
      %s257 = ssub.s32 %s18, 1
      // Predicated region
      $region13: #{ms_image_dis_forward.2} parent=11 // pred_check
        %p258 = pneg %p65
      $region14: #{ms_image_dis_forward.2} parent=11 // pred_check_branch
        %260 = sbr.rel (%p258) target = $region16
      $region15: #{ms_image_dis_forward.2} parent=11 // pred_region
        _
      $region16: #{ms_image_dis_forward.2} parent=11 // pred_fallthru
        _
      // Predicated region
      $region17: #{ms_image_dis_forward.2} parent=11 // pred_check
        %p261 = pneg %p86
      $region18: #{ms_image_dis_forward.2} parent=11 // pred_check_branch
        %263 = sbr.rel (%p261) target = $region20
      $region19: #{ms_image_dis_forward.2} parent=11 // pred_region
        _
      $region20: #{ms_image_dis_forward.2} parent=11 // pred_fallthru
        _
      // Predicated region
      $region21: #{ms_image_dis_forward.2} parent=11 // pred_check
        %p264 = pneg %p107
      $region22: #{ms_image_dis_forward.2} parent=11 // pred_check_branch
        %266 = sbr.rel (%p264) target = $region24
      $region23: #{ms_image_dis_forward.2} parent=11 // pred_region
        _
      $region24: #{ms_image_dis_forward.2} parent=11 // pred_fallthru
        _
      // Predicated region
      $region25: #{ms_image_dis_forward.2} parent=11 // pred_check
        %p267 = pneg %p128
      $region26: #{ms_image_dis_forward.2} parent=11 // pred_check_branch
        %269 = sbr.rel (%p267) target = $region28
      $region27: #{ms_image_dis_forward.2} parent=11 // pred_region
        _
      $region28: #{ms_image_dis_forward.2} parent=11 // pred_fallthru
        _
      // Predicated region
      $region29: #{ms_image_dis_forward.2} parent=11 // pred_check
        %p270 = pneg %p149
      $region30: #{ms_image_dis_forward.2} parent=11 // pred_check_branch
        %272 = sbr.rel (%p270) target = $region32
      $region31: #{ms_image_dis_forward.2} parent=11 // pred_region
        _
      $region32: #{ms_image_dis_forward.2} parent=11 // pred_fallthru
        _
      // Predicated region
      $region33: #{ms_image_dis_forward.2} parent=11 // pred_check
        %p273 = pneg %p170
      $region34: #{ms_image_dis_forward.2} parent=11 // pred_check_branch
        %275 = sbr.rel (%p273) target = $region36
      $region35: #{ms_image_dis_forward.2} parent=11 // pred_region
        _
      $region36: #{ms_image_dis_forward.2} parent=11 // pred_fallthru
        _
      // Predicated region
      $region37: #{ms_image_dis_forward.2} parent=11 // pred_check
        %p276 = pneg %p191
      $region38: #{ms_image_dis_forward.2} parent=11 // pred_check_branch
        %278 = sbr.rel (%p276) target = $region40
      $region39: #{ms_image_dis_forward.2} parent=11 // pred_region
        _
      $region40: #{ms_image_dis_forward.2} parent=11 // pred_fallthru
        _
    $region12: #{ms_image_dis_forward.2} parent=5 // pred_fallthru
      _
    %p279 = scmp.lt.s32.totalorder %s18, 2
    // Predicated region
    $region41: #{ms_image_dis_forward.2} parent=5 // pred_check
      %p280 = pneg %p279
    $region42: #{ms_image_dis_forward.2} parent=5 // pred_check_branch
      %282 = sbr.rel (%p280) target = $region44
    $region43: #{ms_image_dis_forward.2} parent=5 // pred_region
      // Predicated region
      $region45: #{ms_image_dis_forward.2} parent=43 // pred_check
        %p283 = pneg %p38
      $region46: #{ms_image_dis_forward.2} parent=43 // pred_check_branch
        %285 = sbr.rel (%p283) target = $region48
      $region47: #{ms_image_dis_forward.2} parent=43 // pred_region
        %p286 = scmp.lt.s32.totalorder %s18, 1
        %s287 = scalar_select %p286, %s18, 1
        %s288 = smul.addr %s287, 32
        %s289 = smul.addr %s288, 8
        %s290 = scalar_lea.vmem %s0, %s289
      $region48: #{ms_image_dis_forward.2} parent=43 // pred_fallthru
        _
    $region44: #{ms_image_dis_forward.2} parent=5 // pred_fallthru
      _
    %p291 = scmp.le.s32.totalorder 1, %s18
    %p292 = scmp.lt.s32.totalorder %s18, 3
    %p293 = pnand %p291, %p292
    %p294 = pneg %p293
    // Predicated region
    $region49: #{ms_image_dis_forward.2} parent=5 // pred_check
      _
    $region50: #{ms_image_dis_forward.2} parent=5 // pred_check_branch
      %296 = sbr.rel (%p293) target = $region52
    $region51: #{ms_image_dis_forward.2} parent=5 // pred_region
      %s297 = ssub.s32 %s18, 1
      %p298 = scmp.lt.s32.totalorder %s23, 1
      %s299 = scalar_select %p298, %s23, 1
      %s300 = smul.addr %s299, 32
      %s301 = smul.addr %s300, 8
      %s302 = scalar_lea.vmem %s0, %s301
      %p303 = pneg %p44
      %p304 = pneg %p41
      %p305 = pneg %p65
      %p306 = pneg %p62
      %p307 = pneg %p86
      %p308 = pneg %p83
      %p309 = pneg %p107
      %p310 = pneg %p104
      %p311 = pneg %p128
      %p312 = pneg %p125
      %p313 = pneg %p149
      %p314 = pneg %p146
      %p315 = pneg %p170
      %p316 = pneg %p167
      %p317 = pneg %p191
      %p318 = pneg %p188
      %p319 = pneg %p217
      %p320 = pneg %p214
      %p321 = scmp.lt.s32.totalorder %s23, 1
      %s322 = scalar_select %p321, %s23, 1
      %s323 = smul.addr %s322, 4
      %s324 = smul.addr %s323, 4
      %s325 = scalar_lea.vmem %s8, %s324
      %p326 = pneg %p243
      %p327 = pneg %p240
      %p328 = scmp.lt.s32.totalorder %s23, 1
      %s329 = scalar_select %p328, %s23, 1
      %s330 = smul.addr %s329, 8
      %s331 = smul.addr %s330, 8
      %s332 = scalar_lea.vmem %s9, %s331
      %p333 = scmp.lt.s32.totalorder %s23, 1
      %s334 = scalar_select %p333, %s23, 1
      %s335 = smul.addr %s334, 32
      %s336 = smul.addr %s335, 8
      %s337 = scalar_lea.vmem %s0, %s336
      %p338 = scmp.lt.s32.totalorder %s23, 1
      %s339 = scalar_select %p338, %s23, 1
      %s340 = smul.addr %s339, 4
      %s341 = smul.addr %s340, 4
      %s342 = scalar_lea.vmem %s8, %s341
      %p343 = scmp.lt.s32.totalorder %s23, 1
      %s344 = scalar_select %p343, %s23, 1
      %s345 = smul.addr %s344, 8
      %s346 = smul.addr %s345, 8
      %s347 = scalar_lea.vmem %s9, %s346
      %v348 = vld [vmem:[%s337] sm:$0xff]
      %v349 = vld [vmem:[%s337 + $0x8] sm:$0xff]
      %v350 = vld [vmem:[%s337 + $0x10] sm:$0xff]
      %v351 = vld [vmem:[%s337 + $0x18] sm:$0xff]
      %v352 = vld [vmem:[%s337 + $0x20] sm:$0xff]
      %v353 = vld [vmem:[%s337 + $0x28] sm:$0xff]
      %v354 = vld [vmem:[%s337 + $0x30] sm:$0xff]
      %v355 = vld [vmem:[%s337 + $0x38] sm:$0xff]
      %v356 = vld [vmem:[%s337 + $0x40] sm:$0xff]
      %v357 = vld [vmem:[%s337 + $0x48] sm:$0xff]
      %v358 = vld [vmem:[%s337 + $0x50] sm:$0xff]
      %v359 = vld [vmem:[%s337 + $0x58] sm:$0xff]
      %v360 = vld [vmem:[%s337 + $0x60] sm:$0xff]
      %v361 = vld [vmem:[%s337 + $0x68] sm:$0xff]
      %v362 = vld [vmem:[%s337 + $0x70] sm:$0xff]
      %v363 = vld [vmem:[%s337 + $0x78] sm:$0xff]
      %v364 = vld [vmem:[%s337 + $0x80] sm:$0xff]
      %v365 = vld [vmem:[%s337 + $0x88] sm:$0xff]
      %v366 = vld [vmem:[%s337 + $0x90] sm:$0xff]
      %v367 = vld [vmem:[%s337 + $0x98] sm:$0xff]
      %v368 = vld [vmem:[%s337 + $0xa0] sm:$0xff]
      %v369 = vld [vmem:[%s337 + $0xa8] sm:$0xff]
      %v370 = vld [vmem:[%s337 + $0xb0] sm:$0xff]
      %v371 = vld [vmem:[%s337 + $0xb8] sm:$0xff]
      %v372 = vld [vmem:[%s337 + $0xc0] sm:$0xff]
      %v373 = vld [vmem:[%s337 + $0xc8] sm:$0xff]
      %v374 = vld [vmem:[%s337 + $0xd0] sm:$0xff]
      %v375 = vld [vmem:[%s337 + $0xd8] sm:$0xff]
      %v376 = vld [vmem:[%s337 + $0xe0] sm:$0xff]
      %v377 = vld [vmem:[%s337 + $0xe8] sm:$0xff]
      %v378 = vld [vmem:[%s337 + $0xf0] sm:$0xff]
      %v379 = vld [vmem:[%s337 + $0xf8] sm:$0xff]
      %v380 = vld [vmem:[%s1] sm:$0xff]
      %v381 = vld [vmem:[%s1 + $0x8] sm:$0xff]
      %v382 = vld [vmem:[%s1 + $0x10] sm:$0xff]
      %v383 = vld [vmem:[%s1 + $0x18] sm:$0xff]
      %v384 = vld [vmem:[%s1 + $0x20] sm:$0xff]
      %v385 = vld [vmem:[%s1 + $0x28] sm:$0xff]
      %v386 = vld [vmem:[%s1 + $0x30] sm:$0xff]
      %v387 = vld [vmem:[%s1 + $0x38] sm:$0xff]
      %v388 = vld [vmem:[%s1 + $0x40] sm:$0xff]
      %v389 = vld [vmem:[%s1 + $0x48] sm:$0xff]
      %v390 = vld [vmem:[%s1 + $0x50] sm:$0xff]
      %v391 = vld [vmem:[%s1 + $0x58] sm:$0xff]
      %v392 = vld [vmem:[%s1 + $0x60] sm:$0xff]
      %v393 = vld [vmem:[%s1 + $0x68] sm:$0xff]
      %v394 = vld [vmem:[%s1 + $0x70] sm:$0xff]
      %v395 = vld [vmem:[%s1 + $0x78] sm:$0xff]
      %v396 = vld [vmem:[%s2] sm:$0x1]
      %v413 = vrot.slane %v350, 1
      %v414 = vrot.slane %v348, 1
      %v415 = vrot.slane %v352, 1
      %v416 = vrot.slane %v354, 1
      %v417 = vrot.slane %v356, 1
      %v418 = vrot.slane %v358, 1
      %v419 = vrot.slane %v360, 1
      %v420 = vrot.slane %v362, 1
      %v421 = vrot.slane %v364, 1
      %v422 = vrot.slane %v366, 1
      %v423 = vrot.slane %v368, 1
      %v424 = vrot.slane %v370, 1
      %v425 = vrot.slane %v372, 1
      %v426 = vrot.slane %v374, 1
      %v427 = vrot.slane %v376, 1
      %v428 = vrot.slane %v378, 1
      %vm461 = vcmask 1040384
      %v462 = vrot.slane %v350, 7
      %v463 = vrot.slane %v351, 7
      %v464 = vsel %vm461, %v462, %v463
      %v465 = vrot.slane %v348, 7
      %v466 = vrot.slane %v349, 7
      %v467 = vsel %vm461, %v465, %v466
      %v468 = vrot.slane %v352, 7
      %v469 = vrot.slane %v353, 7
      %v470 = vsel %vm461, %v468, %v469
      %v471 = vrot.slane %v354, 7
      %v472 = vrot.slane %v355, 7
      %v473 = vsel %vm461, %v471, %v472
      %v474 = vrot.slane %v356, 7
      %v475 = vrot.slane %v357, 7
      %v476 = vsel %vm461, %v474, %v475
      %v477 = vrot.slane %v358, 7
      %v478 = vrot.slane %v359, 7
      %v479 = vsel %vm461, %v477, %v478
      %v480 = vrot.slane %v360, 7
      %v481 = vrot.slane %v361, 7
      %v482 = vsel %vm461, %v480, %v481
      %v483 = vrot.slane %v362, 7
      %v484 = vrot.slane %v363, 7
      %v485 = vsel %vm461, %v483, %v484
      %v486 = vrot.slane %v364, 7
      %v487 = vrot.slane %v365, 7
      %v488 = vsel %vm461, %v486, %v487
      %v489 = vrot.slane %v366, 7
      %v490 = vrot.slane %v367, 7
      %v491 = vsel %vm461, %v489, %v490
      %v492 = vrot.slane %v368, 7
      %v493 = vrot.slane %v369, 7
      %v494 = vsel %vm461, %v492, %v493
      %v495 = vrot.slane %v370, 7
      %v496 = vrot.slane %v371, 7
      %v497 = vsel %vm461, %v495, %v496
      %v498 = vrot.slane %v372, 7
      %v499 = vrot.slane %v373, 7
      %v500 = vsel %vm461, %v498, %v499
      %v501 = vrot.slane %v374, 7
      %v502 = vrot.slane %v375, 7
      %v503 = vsel %vm461, %v501, %v502
      %v504 = vrot.slane %v376, 7
      %v505 = vrot.slane %v377, 7
      %v506 = vsel %vm461, %v504, %v505
      %v507 = vrot.slane %v378, 7
      %v508 = vrot.slane %v379, 7
      %v509 = vsel %vm461, %v507, %v508
      %v542 = vrot.slane %v351, 5
      %v543 = vrot.slane %v349, 5
      %v544 = vrot.slane %v353, 5
      %v545 = vrot.slane %v355, 5
      %v546 = vrot.slane %v357, 5
      %v547 = vrot.slane %v359, 5
      %v548 = vrot.slane %v361, 5
      %v549 = vrot.slane %v363, 5
      %v550 = vrot.slane %v365, 5
      %v551 = vrot.slane %v367, 5
      %v552 = vrot.slane %v369, 5
      %v553 = vrot.slane %v371, 5
      %v554 = vrot.slane %v373, 5
      %v555 = vrot.slane %v375, 5
      %v556 = vrot.slane %v377, 5
      %v557 = vrot.slane %v379, 5
      %v574 = vsel %vm461, %v413, %v462
      %v575 = vsel %vm461, %v414, %v465
      %v576 = vsel %vm461, %v415, %v468
      %v577 = vsel %vm461, %v416, %v471
      %v578 = vsel %vm461, %v417, %v474
      %v579 = vsel %vm461, %v418, %v477
      %v580 = vsel %vm461, %v419, %v480
      %v581 = vsel %vm461, %v420, %v483
      %v582 = vsel %vm461, %v421, %v486
      %v583 = vsel %vm461, %v422, %v489
      %v584 = vsel %vm461, %v423, %v492
      %v585 = vsel %vm461, %v424, %v495
      %v586 = vsel %vm461, %v425, %v498
      %v587 = vsel %vm461, %v426, %v501
      %v588 = vsel %vm461, %v427, %v504
      %v589 = vsel %vm461, %v428, %v507
      %v590 = vsel %vm461, %v463, %v542
      %v591 = vsel %vm461, %v466, %v543
      %v592 = vsel %vm461, %v469, %v544
      %v593 = vsel %vm461, %v472, %v545
      %v594 = vsel %vm461, %v475, %v546
      %v595 = vsel %vm461, %v478, %v547
      %v596 = vsel %vm461, %v481, %v548
      %v597 = vsel %vm461, %v484, %v549
      %v598 = vsel %vm461, %v487, %v550
      %v599 = vsel %vm461, %v490, %v551
      %v600 = vsel %vm461, %v493, %v552
      %v601 = vsel %vm461, %v496, %v553
      %v602 = vsel %vm461, %v499, %v554
      %v603 = vsel %vm461, %v502, %v555
      %v604 = vsel %vm461, %v505, %v556
      %v605 = vsel %vm461, %v508, %v557
      %v638 = vrot.slane %v574, 2
      %v639 = vrot.slane %v574, 4
      %v640 = vrot.slane %v574, 6
      %v641 = vrot.slane %v464, 2
      %v642 = vrot.slane %v464, 4
      %v643 = vrot.slane %v464, 6
      %v644 = vrot.slane %v575, 2
      %v645 = vrot.slane %v575, 4
      %v646 = vrot.slane %v575, 6
      %v647 = vrot.slane %v467, 2
      %v648 = vrot.slane %v467, 4
      %v649 = vrot.slane %v467, 6
      %v650 = vrot.slane %v576, 2
      %v651 = vrot.slane %v576, 4
      %v652 = vrot.slane %v576, 6
      %v653 = vrot.slane %v470, 2
      %v654 = vrot.slane %v470, 4
      %v655 = vrot.slane %v470, 6
      %v656 = vrot.slane %v577, 2
      %v657 = vrot.slane %v577, 4
      %v658 = vrot.slane %v577, 6
      %v659 = vrot.slane %v473, 2
      %v660 = vrot.slane %v473, 4
      %v661 = vrot.slane %v473, 6
      %v662 = vrot.slane %v578, 2
      %v663 = vrot.slane %v578, 4
      %v664 = vrot.slane %v578, 6
      %v665 = vrot.slane %v476, 2
      %v666 = vrot.slane %v476, 4
      %v667 = vrot.slane %v476, 6
      %v668 = vrot.slane %v579, 2
      %v669 = vrot.slane %v579, 4
      %v670 = vrot.slane %v579, 6
      %v671 = vrot.slane %v479, 2
      %v672 = vrot.slane %v479, 4
      %v673 = vrot.slane %v479, 6
      %v674 = vrot.slane %v580, 2
      %v675 = vrot.slane %v580, 4
      %v676 = vrot.slane %v580, 6
      %v677 = vrot.slane %v482, 2
      %v678 = vrot.slane %v482, 4
      %v679 = vrot.slane %v482, 6
      %v680 = vrot.slane %v581, 2
      %v681 = vrot.slane %v581, 4
      %v682 = vrot.slane %v581, 6
      %v683 = vrot.slane %v485, 2
      %v684 = vrot.slane %v485, 4
      %v685 = vrot.slane %v485, 6
      %v686 = vrot.slane %v582, 2
      %v687 = vrot.slane %v582, 4
      %v688 = vrot.slane %v582, 6
      %v689 = vrot.slane %v488, 2
      %v690 = vrot.slane %v488, 4
      %v691 = vrot.slane %v488, 6
      %v692 = vrot.slane %v583, 2
      %v693 = vrot.slane %v583, 4
      %v694 = vrot.slane %v583, 6
      %v695 = vrot.slane %v491, 2
      %v696 = vrot.slane %v491, 4
      %v697 = vrot.slane %v491, 6
      %v698 = vrot.slane %v584, 2
      %v699 = vrot.slane %v584, 4
      %v700 = vrot.slane %v584, 6
      %v701 = vrot.slane %v494, 2
      %v702 = vrot.slane %v494, 4
      %v703 = vrot.slane %v494, 6
      %v704 = vrot.slane %v585, 2
      %v705 = vrot.slane %v585, 4
      %v706 = vrot.slane %v585, 6
      %v707 = vrot.slane %v497, 2
      %v708 = vrot.slane %v497, 4
      %v709 = vrot.slane %v497, 6
      %v710 = vrot.slane %v586, 2
      %v711 = vrot.slane %v586, 4
      %v712 = vrot.slane %v586, 6
      %v713 = vrot.slane %v500, 2
      %v714 = vrot.slane %v500, 4
      %v715 = vrot.slane %v500, 6
      %v716 = vrot.slane %v587, 2
      %v717 = vrot.slane %v587, 4
      %v718 = vrot.slane %v587, 6
      %v719 = vrot.slane %v503, 2
      %v720 = vrot.slane %v503, 4
      %v721 = vrot.slane %v503, 6
      %v722 = vrot.slane %v588, 2
      %v723 = vrot.slane %v588, 4
      %v724 = vrot.slane %v588, 6
      %v725 = vrot.slane %v506, 2
      %v726 = vrot.slane %v506, 4
      %v727 = vrot.slane %v506, 6
      %v728 = vrot.slane %v589, 2
      %v729 = vrot.slane %v589, 4
      %v730 = vrot.slane %v589, 6
      %v731 = vrot.slane %v509, 2
      %v732 = vrot.slane %v509, 4
      %v733 = vrot.slane %v509, 6
      %v734 = vperm.slane %v574, 0
      %v735 = vperm.slane %v638, 0
      %v736 = vperm.slane %v639, 0
      %v737 = vperm.slane %v640, 0
      %v738 = vperm.slane %v464, 0
      %v739 = vperm.slane %v641, 0
      %v740 = vperm.slane %v642, 0
      %v741 = vperm.slane %v643, 0
      %v742 = vperm.slane %v577, 0
      %v743 = vperm.slane %v656, 0
      %v744 = vperm.slane %v657, 0
      %v745 = vperm.slane %v658, 0
      %v746 = vperm.slane %v473, 0
      %v747 = vperm.slane %v659, 0
      %v748 = vperm.slane %v660, 0
      %v749 = vperm.slane %v661, 0
      %v750 = vperm.slane %v579, 0
      %v751 = vperm.slane %v668, 0
      %v752 = vperm.slane %v669, 0
      %v753 = vperm.slane %v670, 0
      %v754 = vperm.slane %v479, 0
      %v755 = vperm.slane %v671, 0
      %v756 = vperm.slane %v672, 0
      %v757 = vperm.slane %v673, 0
      %v758 = vperm.slane %v581, 0
      %v759 = vperm.slane %v680, 0
      %v760 = vperm.slane %v681, 0
      %v761 = vperm.slane %v682, 0
      %v762 = vperm.slane %v485, 0
      %v763 = vperm.slane %v683, 0
      %v764 = vperm.slane %v684, 0
      %v765 = vperm.slane %v685, 0
      %v766 = vperm.slane %v583, 0
      %v767 = vperm.slane %v692, 0
      %v768 = vperm.slane %v693, 0
      %v769 = vperm.slane %v694, 0
      %v770 = vperm.slane %v491, 0
      %v771 = vperm.slane %v695, 0
      %v772 = vperm.slane %v696, 0
      %v773 = vperm.slane %v697, 0
      %v774 = vperm.slane %v585, 0
      %v775 = vperm.slane %v704, 0
      %v776 = vperm.slane %v705, 0
      %v777 = vperm.slane %v706, 0
      %v778 = vperm.slane %v497, 0
      %v779 = vperm.slane %v707, 0
      %v780 = vperm.slane %v708, 0
      %v781 = vperm.slane %v709, 0
      %v782 = vperm.slane %v587, 0
      %v783 = vperm.slane %v716, 0
      %v784 = vperm.slane %v717, 0
      %v785 = vperm.slane %v718, 0
      %v786 = vperm.slane %v503, 0
      %v787 = vperm.slane %v719, 0
      %v788 = vperm.slane %v720, 0
      %v789 = vperm.slane %v721, 0
      %vm790 = vcmask 1041409
      %v791 = vsel %vm790, %v735, %v734
      %vm792 = vcmask 1042434
      %v793 = vsel %vm792, %v736, %v791
      %vm794 = vcmask 1043459
      %v795 = vsel %vm794, %v737, %v793
      %vm796 = vcmask 1044484
      %v797 = vsel %vm796, %v738, %v795
      %vm798 = vcmask 1045509
      %v799 = vsel %vm798, %v739, %v797
      %vm800 = vcmask 1046534
      %v801 = vsel %vm800, %v740, %v799
      %vm802 = vcmask 1047559
      %v803 = vsel %vm802, %v741, %v801
      %v804 = vsel %vm790, %v743, %v742
      %v805 = vsel %vm792, %v744, %v804
      %v806 = vsel %vm794, %v745, %v805
      %v807 = vsel %vm796, %v746, %v806
      %v808 = vsel %vm798, %v747, %v807
      %v809 = vsel %vm800, %v748, %v808
      %v810 = vsel %vm802, %v749, %v809
      %v811 = vsel %vm790, %v751, %v750
      %v812 = vsel %vm792, %v752, %v811
      %v813 = vsel %vm794, %v753, %v812
      %v814 = vsel %vm796, %v754, %v813
      %v815 = vsel %vm798, %v755, %v814
      %v816 = vsel %vm800, %v756, %v815
      %v817 = vsel %vm802, %v757, %v816
      %v818 = vsel %vm790, %v759, %v758
      %v819 = vsel %vm792, %v760, %v818
      %v820 = vsel %vm794, %v761, %v819
      %v821 = vsel %vm796, %v762, %v820
      %v822 = vsel %vm798, %v763, %v821
      %v823 = vsel %vm800, %v764, %v822
      %v824 = vsel %vm802, %v765, %v823
      %v825 = vsel %vm790, %v767, %v766
      %v826 = vsel %vm792, %v768, %v825
      %v827 = vsel %vm794, %v769, %v826
      %v828 = vsel %vm796, %v770, %v827
      %v829 = vsel %vm798, %v771, %v828
      %v830 = vsel %vm800, %v772, %v829
      %v831 = vsel %vm802, %v773, %v830
      %v832 = vsel %vm790, %v775, %v774
      %v833 = vsel %vm792, %v776, %v832
      %v834 = vsel %vm794, %v777, %v833
      %v835 = vsel %vm796, %v778, %v834
      %v836 = vsel %vm798, %v779, %v835
      %v837 = vsel %vm800, %v780, %v836
      %v838 = vsel %vm802, %v781, %v837
      %v839 = vsel %vm790, %v783, %v782
      %v840 = vsel %vm792, %v784, %v839
      %v841 = vsel %vm794, %v785, %v840
      %v842 = vsel %vm796, %v786, %v841
      %v843 = vsel %vm798, %v787, %v842
      %v844 = vsel %vm800, %v788, %v843
      %v845 = vsel %vm802, %v789, %v844
      %v853 = vperm.slane %v574, 1
      %v854 = vperm.slane %v638, 1
      %v855 = vperm.slane %v639, 1
      %v856 = vperm.slane %v640, 1
      %v857 = vperm.slane %v464, 1
      %v858 = vperm.slane %v641, 1
      %v859 = vperm.slane %v642, 1
      %v860 = vperm.slane %v643, 1
      %v861 = vperm.slane %v577, 1
      %v862 = vperm.slane %v656, 1
      %v863 = vperm.slane %v657, 1
      %v864 = vperm.slane %v658, 1
      %v865 = vperm.slane %v473, 1
      %v866 = vperm.slane %v659, 1
      %v867 = vperm.slane %v660, 1
      %v868 = vperm.slane %v661, 1
      %v869 = vperm.slane %v579, 1
      %v870 = vperm.slane %v668, 1
      %v871 = vperm.slane %v669, 1
      %v872 = vperm.slane %v670, 1
      %v873 = vperm.slane %v479, 1
      %v874 = vperm.slane %v671, 1
      %v875 = vperm.slane %v672, 1
      %v876 = vperm.slane %v673, 1
      %v877 = vperm.slane %v581, 1
      %v878 = vperm.slane %v680, 1
      %v879 = vperm.slane %v681, 1
      %v880 = vperm.slane %v682, 1
      %v881 = vperm.slane %v485, 1
      %v882 = vperm.slane %v683, 1
      %v883 = vperm.slane %v684, 1
      %v884 = vperm.slane %v685, 1
      %v885 = vperm.slane %v583, 1
      %v886 = vperm.slane %v692, 1
      %v887 = vperm.slane %v693, 1
      %v888 = vperm.slane %v694, 1
      %v889 = vperm.slane %v491, 1
      %v890 = vperm.slane %v695, 1
      %v891 = vperm.slane %v696, 1
      %v892 = vperm.slane %v697, 1
      %v893 = vperm.slane %v585, 1
      %v894 = vperm.slane %v704, 1
      %v895 = vperm.slane %v705, 1
      %v896 = vperm.slane %v706, 1
      %v897 = vperm.slane %v497, 1
      %v898 = vperm.slane %v707, 1
      %v899 = vperm.slane %v708, 1
      %v900 = vperm.slane %v709, 1
      %v901 = vperm.slane %v587, 1
      %v902 = vperm.slane %v716, 1
      %v903 = vperm.slane %v717, 1
      %v904 = vperm.slane %v718, 1
      %v905 = vperm.slane %v503, 1
      %v906 = vperm.slane %v719, 1
      %v907 = vperm.slane %v720, 1
      %v908 = vperm.slane %v721, 1
      %v909 = vsel %vm790, %v854, %v853
      %v910 = vsel %vm792, %v855, %v909
      %v911 = vsel %vm794, %v856, %v910
      %v912 = vsel %vm796, %v857, %v911
      %v913 = vsel %vm798, %v858, %v912
      %v914 = vsel %vm800, %v859, %v913
      %v915 = vsel %vm802, %v860, %v914
      %v916 = vsel %vm790, %v862, %v861
      %v917 = vsel %vm792, %v863, %v916
      %v918 = vsel %vm794, %v864, %v917
      %v919 = vsel %vm796, %v865, %v918
      %v920 = vsel %vm798, %v866, %v919
      %v921 = vsel %vm800, %v867, %v920
      %v922 = vsel %vm802, %v868, %v921
      %v923 = vsel %vm790, %v870, %v869
      %v924 = vsel %vm792, %v871, %v923
      %v925 = vsel %vm794, %v872, %v924
      %v926 = vsel %vm796, %v873, %v925
      %v927 = vsel %vm798, %v874, %v926
      %v928 = vsel %vm800, %v875, %v927
      %v929 = vsel %vm802, %v876, %v928
      %v930 = vsel %vm790, %v878, %v877
      %v931 = vsel %vm792, %v879, %v930
      %v932 = vsel %vm794, %v880, %v931
      %v933 = vsel %vm796, %v881, %v932
      %v934 = vsel %vm798, %v882, %v933
      %v935 = vsel %vm800, %v883, %v934
      %v936 = vsel %vm802, %v884, %v935
      %v937 = vsel %vm790, %v886, %v885
      %v938 = vsel %vm792, %v887, %v937
      %v939 = vsel %vm794, %v888, %v938
      %v940 = vsel %vm796, %v889, %v939
      %v941 = vsel %vm798, %v890, %v940
      %v942 = vsel %vm800, %v891, %v941
      %v943 = vsel %vm802, %v892, %v942
      %v944 = vsel %vm790, %v894, %v893
      %v945 = vsel %vm792, %v895, %v944
      %v946 = vsel %vm794, %v896, %v945
      %v947 = vsel %vm796, %v897, %v946
      %v948 = vsel %vm798, %v898, %v947
      %v949 = vsel %vm800, %v899, %v948
      %v950 = vsel %vm802, %v900, %v949
      %v951 = vsel %vm790, %v902, %v901
      %v952 = vsel %vm792, %v903, %v951
      %v953 = vsel %vm794, %v904, %v952
      %v954 = vsel %vm796, %v905, %v953
      %v955 = vsel %vm798, %v906, %v954
      %v956 = vsel %vm800, %v907, %v955
      %v957 = vsel %vm802, %v908, %v956
      %958 = vrot.lane.b32.xlu0 %v915, 8
      %v959 = vpop.permute.xlu0 %958
      %960 = vrot.lane.b32.xlu0 %v922, 8
      %v961 = vpop.permute.xlu0 %960
      %962 = vrot.lane.b32.xlu0 %v929, 8
      %v963 = vpop.permute.xlu0 %962
      %964 = vrot.lane.b32.xlu0 %v936, 8
      %v965 = vpop.permute.xlu0 %964
      %966 = vrot.lane.b32.xlu0 %v943, 8
      %v967 = vpop.permute.xlu0 %966
      %968 = vrot.lane.b32.xlu0 %v950, 8
      %v969 = vpop.permute.xlu0 %968
      %970 = vrot.lane.b32.xlu0 %v957, 8
      %v971 = vpop.permute.xlu0 %970
      %v979 = vperm.slane %v590, 0
      %v980 = vperm.slane %v593, 0
      %v981 = vperm.slane %v595, 0
      %v982 = vperm.slane %v597, 0
      %v983 = vperm.slane %v599, 0
      %v984 = vperm.slane %v601, 0
      %v985 = vperm.slane %v603, 0
      %v986 = vsel %vm790, %v736, %v735
      %v987 = vsel %vm792, %v737, %v986
      %v988 = vsel %vm794, %v738, %v987
      %v989 = vsel %vm796, %v739, %v988
      %v990 = vsel %vm798, %v740, %v989
      %v991 = vsel %vm800, %v741, %v990
      %v992 = vsel %vm802, %v979, %v991
      %v993 = vsel %vm790, %v744, %v743
      %v994 = vsel %vm792, %v745, %v993
      %v995 = vsel %vm794, %v746, %v994
      %v996 = vsel %vm796, %v747, %v995
      %v997 = vsel %vm798, %v748, %v996
      %v998 = vsel %vm800, %v749, %v997
      %v999 = vsel %vm802, %v980, %v998
      %v1000 = vsel %vm790, %v752, %v751
      %v1001 = vsel %vm792, %v753, %v1000
      %v1002 = vsel %vm794, %v754, %v1001
      %v1003 = vsel %vm796, %v755, %v1002
      %v1004 = vsel %vm798, %v756, %v1003
      %v1005 = vsel %vm800, %v757, %v1004
      %v1006 = vsel %vm802, %v981, %v1005
      %v1007 = vsel %vm790, %v760, %v759
      %v1008 = vsel %vm792, %v761, %v1007
      %v1009 = vsel %vm794, %v762, %v1008
      %v1010 = vsel %vm796, %v763, %v1009
      %v1011 = vsel %vm798, %v764, %v1010
      %v1012 = vsel %vm800, %v765, %v1011
      %v1013 = vsel %vm802, %v982, %v1012
      %v1014 = vsel %vm790, %v768, %v767
      %v1015 = vsel %vm792, %v769, %v1014
      %v1016 = vsel %vm794, %v770, %v1015
      %v1017 = vsel %vm796, %v771, %v1016
      %v1018 = vsel %vm798, %v772, %v1017
      %v1019 = vsel %vm800, %v773, %v1018
      %v1020 = vsel %vm802, %v983, %v1019
      %v1021 = vsel %vm790, %v776, %v775
      %v1022 = vsel %vm792, %v777, %v1021
      %v1023 = vsel %vm794, %v778, %v1022
      %v1024 = vsel %vm796, %v779, %v1023
      %v1025 = vsel %vm798, %v780, %v1024
      %v1026 = vsel %vm800, %v781, %v1025
      %v1027 = vsel %vm802, %v984, %v1026
      %v1028 = vsel %vm790, %v784, %v783
      %v1029 = vsel %vm792, %v785, %v1028
      %v1030 = vsel %vm794, %v786, %v1029
      %v1031 = vsel %vm796, %v787, %v1030
      %v1032 = vsel %vm798, %v788, %v1031
      %v1033 = vsel %vm800, %v789, %v1032
      %v1034 = vsel %vm802, %v985, %v1033
      %1035 = vrot.lane.b32.xlu0 %v992, 16
      %v1036 = vpop.permute.xlu0 %1035
      %1037 = vrot.lane.b32.xlu0 %v999, 16
      %v1038 = vpop.permute.xlu0 %1037
      %1039 = vrot.lane.b32.xlu0 %v1006, 16
      %v1040 = vpop.permute.xlu0 %1039
      %1041 = vrot.lane.b32.xlu0 %v1013, 16
      %v1042 = vpop.permute.xlu0 %1041
      %1043 = vrot.lane.b32.xlu0 %v1020, 16
      %v1044 = vpop.permute.xlu0 %1043
      %1045 = vrot.lane.b32.xlu0 %v1027, 16
      %v1046 = vpop.permute.xlu0 %1045
      %1047 = vrot.lane.b32.xlu0 %v1034, 16
      %v1048 = vpop.permute.xlu0 %1047
      %v1056 = vperm.slane %v590, 1
      %v1057 = vperm.slane %v593, 1
      %v1058 = vperm.slane %v595, 1
      %v1059 = vperm.slane %v597, 1
      %v1060 = vperm.slane %v599, 1
      %v1061 = vperm.slane %v601, 1
      %v1062 = vperm.slane %v603, 1
      %v1063 = vsel %vm790, %v855, %v854
      %v1064 = vsel %vm792, %v856, %v1063
      %v1065 = vsel %vm794, %v857, %v1064
      %v1066 = vsel %vm796, %v858, %v1065
      %v1067 = vsel %vm798, %v859, %v1066
      %v1068 = vsel %vm800, %v860, %v1067
      %v1069 = vsel %vm802, %v1056, %v1068
      %v1070 = vsel %vm790, %v863, %v862
      %v1071 = vsel %vm792, %v864, %v1070
      %v1072 = vsel %vm794, %v865, %v1071
      %v1073 = vsel %vm796, %v866, %v1072
      %v1074 = vsel %vm798, %v867, %v1073
      %v1075 = vsel %vm800, %v868, %v1074
      %v1076 = vsel %vm802, %v1057, %v1075
      %v1077 = vsel %vm790, %v871, %v870
      %v1078 = vsel %vm792, %v872, %v1077
      %v1079 = vsel %vm794, %v873, %v1078
      %v1080 = vsel %vm796, %v874, %v1079
      %v1081 = vsel %vm798, %v875, %v1080
      %v1082 = vsel %vm800, %v876, %v1081
      %v1083 = vsel %vm802, %v1058, %v1082
      %v1084 = vsel %vm790, %v879, %v878
      %v1085 = vsel %vm792, %v880, %v1084
      %v1086 = vsel %vm794, %v881, %v1085
      %v1087 = vsel %vm796, %v882, %v1086
      %v1088 = vsel %vm798, %v883, %v1087
      %v1089 = vsel %vm800, %v884, %v1088
      %v1090 = vsel %vm802, %v1059, %v1089
      %v1091 = vsel %vm790, %v887, %v886
      %v1092 = vsel %vm792, %v888, %v1091
      %v1093 = vsel %vm794, %v889, %v1092
      %v1094 = vsel %vm796, %v890, %v1093
      %v1095 = vsel %vm798, %v891, %v1094
      %v1096 = vsel %vm800, %v892, %v1095
      %v1097 = vsel %vm802, %v1060, %v1096
      %v1098 = vsel %vm790, %v895, %v894
      %v1099 = vsel %vm792, %v896, %v1098
      %v1100 = vsel %vm794, %v897, %v1099
      %v1101 = vsel %vm796, %v898, %v1100
      %v1102 = vsel %vm798, %v899, %v1101
      %v1103 = vsel %vm800, %v900, %v1102
      %v1104 = vsel %vm802, %v1061, %v1103
      %v1105 = vsel %vm790, %v903, %v902
      %v1106 = vsel %vm792, %v904, %v1105
      %v1107 = vsel %vm794, %v905, %v1106
      %v1108 = vsel %vm796, %v906, %v1107
      %v1109 = vsel %vm798, %v907, %v1108
      %v1110 = vsel %vm800, %v908, %v1109
      %v1111 = vsel %vm802, %v1062, %v1110
      %1112 = vrot.lane.b32.xlu0 %v1069, 24
      %v1113 = vpop.permute.xlu0 %1112
      %1114 = vrot.lane.b32.xlu0 %v1076, 24
      %v1115 = vpop.permute.xlu0 %1114
      %1116 = vrot.lane.b32.xlu0 %v1083, 24
      %v1117 = vpop.permute.xlu0 %1116
      %1118 = vrot.lane.b32.xlu0 %v1090, 24
      %v1119 = vpop.permute.xlu0 %1118
      %1120 = vrot.lane.b32.xlu0 %v1097, 24
      %v1121 = vpop.permute.xlu0 %1120
      %1122 = vrot.lane.b32.xlu0 %v1104, 24
      %v1123 = vpop.permute.xlu0 %1122
      %1124 = vrot.lane.b32.xlu0 %v1111, 24
      %v1125 = vpop.permute.xlu0 %1124
      %v1133 = vperm.slane %v575, 0
      %v1134 = vperm.slane %v644, 0
      %v1135 = vperm.slane %v645, 0
      %v1136 = vperm.slane %v646, 0
      %v1137 = vperm.slane %v467, 0
      %v1138 = vperm.slane %v647, 0
      %v1139 = vperm.slane %v648, 0
      %v1140 = vperm.slane %v649, 0
      %v1141 = vperm.slane %v576, 0
      %v1142 = vperm.slane %v650, 0
      %v1143 = vperm.slane %v651, 0
      %v1144 = vperm.slane %v652, 0
      %v1145 = vperm.slane %v470, 0
      %v1146 = vperm.slane %v653, 0
      %v1147 = vperm.slane %v654, 0
      %v1148 = vperm.slane %v655, 0
      %v1149 = vperm.slane %v578, 0
      %v1150 = vperm.slane %v662, 0
      %v1151 = vperm.slane %v663, 0
      %v1152 = vperm.slane %v664, 0
      %v1153 = vperm.slane %v476, 0
      %v1154 = vperm.slane %v665, 0
      %v1155 = vperm.slane %v666, 0
      %v1156 = vperm.slane %v667, 0
      %v1157 = vperm.slane %v580, 0
      %v1158 = vperm.slane %v674, 0
      %v1159 = vperm.slane %v675, 0
      %v1160 = vperm.slane %v676, 0
      %v1161 = vperm.slane %v482, 0
      %v1162 = vperm.slane %v677, 0
      %v1163 = vperm.slane %v678, 0
      %v1164 = vperm.slane %v679, 0
      %v1165 = vperm.slane %v582, 0
      %v1166 = vperm.slane %v686, 0
      %v1167 = vperm.slane %v687, 0
      %v1168 = vperm.slane %v688, 0
      %v1169 = vperm.slane %v488, 0
      %v1170 = vperm.slane %v689, 0
      %v1171 = vperm.slane %v690, 0
      %v1172 = vperm.slane %v691, 0
      %v1173 = vperm.slane %v584, 0
      %v1174 = vperm.slane %v698, 0
      %v1175 = vperm.slane %v699, 0
      %v1176 = vperm.slane %v700, 0
      %v1177 = vperm.slane %v494, 0
      %v1178 = vperm.slane %v701, 0
      %v1179 = vperm.slane %v702, 0
      %v1180 = vperm.slane %v703, 0
      %v1181 = vperm.slane %v586, 0
      %v1182 = vperm.slane %v710, 0
      %v1183 = vperm.slane %v711, 0
      %v1184 = vperm.slane %v712, 0
      %v1185 = vperm.slane %v500, 0
      %v1186 = vperm.slane %v713, 0
      %v1187 = vperm.slane %v714, 0
      %v1188 = vperm.slane %v715, 0
      %v1189 = vperm.slane %v588, 0
      %v1190 = vperm.slane %v722, 0
      %v1191 = vperm.slane %v723, 0
      %v1192 = vperm.slane %v724, 0
      %v1193 = vperm.slane %v506, 0
      %v1194 = vperm.slane %v725, 0
      %v1195 = vperm.slane %v726, 0
      %v1196 = vperm.slane %v727, 0
      %v1197 = vsel %vm790, %v1134, %v1133
      %v1198 = vsel %vm792, %v1135, %v1197
      %v1199 = vsel %vm794, %v1136, %v1198
      %v1200 = vsel %vm796, %v1137, %v1199
      %v1201 = vsel %vm798, %v1138, %v1200
      %v1202 = vsel %vm800, %v1139, %v1201
      %v1203 = vsel %vm802, %v1140, %v1202
      %v1204 = vsel %vm790, %v1142, %v1141
      %v1205 = vsel %vm792, %v1143, %v1204
      %v1206 = vsel %vm794, %v1144, %v1205
      %v1207 = vsel %vm796, %v1145, %v1206
      %v1208 = vsel %vm798, %v1146, %v1207
      %v1209 = vsel %vm800, %v1147, %v1208
      %v1210 = vsel %vm802, %v1148, %v1209
      %v1211 = vsel %vm790, %v1150, %v1149
      %v1212 = vsel %vm792, %v1151, %v1211
      %v1213 = vsel %vm794, %v1152, %v1212
      %v1214 = vsel %vm796, %v1153, %v1213
      %v1215 = vsel %vm798, %v1154, %v1214
      %v1216 = vsel %vm800, %v1155, %v1215
      %v1217 = vsel %vm802, %v1156, %v1216
      %v1218 = vsel %vm790, %v1158, %v1157
      %v1219 = vsel %vm792, %v1159, %v1218
      %v1220 = vsel %vm794, %v1160, %v1219
      %v1221 = vsel %vm796, %v1161, %v1220
      %v1222 = vsel %vm798, %v1162, %v1221
      %v1223 = vsel %vm800, %v1163, %v1222
      %v1224 = vsel %vm802, %v1164, %v1223
      %v1225 = vsel %vm790, %v1166, %v1165
      %v1226 = vsel %vm792, %v1167, %v1225
      %v1227 = vsel %vm794, %v1168, %v1226
      %v1228 = vsel %vm796, %v1169, %v1227
      %v1229 = vsel %vm798, %v1170, %v1228
      %v1230 = vsel %vm800, %v1171, %v1229
      %v1231 = vsel %vm802, %v1172, %v1230
      %v1232 = vsel %vm790, %v1174, %v1173
      %v1233 = vsel %vm792, %v1175, %v1232
      %v1234 = vsel %vm794, %v1176, %v1233
      %v1235 = vsel %vm796, %v1177, %v1234
      %v1236 = vsel %vm798, %v1178, %v1235
      %v1237 = vsel %vm800, %v1179, %v1236
      %v1238 = vsel %vm802, %v1180, %v1237
      %v1239 = vsel %vm790, %v1182, %v1181
      %v1240 = vsel %vm792, %v1183, %v1239
      %v1241 = vsel %vm794, %v1184, %v1240
      %v1242 = vsel %vm796, %v1185, %v1241
      %v1243 = vsel %vm798, %v1186, %v1242
      %v1244 = vsel %vm800, %v1187, %v1243
      %v1245 = vsel %vm802, %v1188, %v1244
      %v1246 = vsel %vm790, %v1190, %v1189
      %v1247 = vsel %vm792, %v1191, %v1246
      %v1248 = vsel %vm794, %v1192, %v1247
      %v1249 = vsel %vm796, %v1193, %v1248
      %v1250 = vsel %vm798, %v1194, %v1249
      %v1251 = vsel %vm800, %v1195, %v1250
      %v1252 = vsel %vm802, %v1196, %v1251
      %1253 = vrot.lane.b32.xlu0 %v1203, 32
      %v1254 = vpop.permute.xlu0 %1253
      %1255 = vrot.lane.b32.xlu0 %v1210, 32
      %v1256 = vpop.permute.xlu0 %1255
      %1257 = vrot.lane.b32.xlu0 %v1217, 32
      %v1258 = vpop.permute.xlu0 %1257
      %1259 = vrot.lane.b32.xlu0 %v1224, 32
      %v1260 = vpop.permute.xlu0 %1259
      %1261 = vrot.lane.b32.xlu0 %v1231, 32
      %v1262 = vpop.permute.xlu0 %1261
      %1263 = vrot.lane.b32.xlu0 %v1238, 32
      %v1264 = vpop.permute.xlu0 %1263
      %1265 = vrot.lane.b32.xlu0 %v1245, 32
      %v1266 = vpop.permute.xlu0 %1265
      %1267 = vrot.lane.b32.xlu0 %v1252, 32
      %v1268 = vpop.permute.xlu0 %1267
      %v1277 = vperm.slane %v575, 1
      %v1278 = vperm.slane %v644, 1
      %v1279 = vperm.slane %v645, 1
      %v1280 = vperm.slane %v646, 1
      %v1281 = vperm.slane %v467, 1
      %v1282 = vperm.slane %v647, 1
      %v1283 = vperm.slane %v648, 1
      %v1284 = vperm.slane %v649, 1
      %v1285 = vperm.slane %v576, 1
      %v1286 = vperm.slane %v650, 1
      %v1287 = vperm.slane %v651, 1
      %v1288 = vperm.slane %v652, 1
      %v1289 = vperm.slane %v470, 1
      %v1290 = vperm.slane %v653, 1
      %v1291 = vperm.slane %v654, 1
      %v1292 = vperm.slane %v655, 1
      %v1293 = vperm.slane %v578, 1
      %v1294 = vperm.slane %v662, 1
      %v1295 = vperm.slane %v663, 1
      %v1296 = vperm.slane %v664, 1
      %v1297 = vperm.slane %v476, 1
      %v1298 = vperm.slane %v665, 1
      %v1299 = vperm.slane %v666, 1
      %v1300 = vperm.slane %v667, 1
      %v1301 = vperm.slane %v580, 1
      %v1302 = vperm.slane %v674, 1
      %v1303 = vperm.slane %v675, 1
      %v1304 = vperm.slane %v676, 1
      %v1305 = vperm.slane %v482, 1
      %v1306 = vperm.slane %v677, 1
      %v1307 = vperm.slane %v678, 1
      %v1308 = vperm.slane %v679, 1
      %v1309 = vperm.slane %v582, 1
      %v1310 = vperm.slane %v686, 1
      %v1311 = vperm.slane %v687, 1
      %v1312 = vperm.slane %v688, 1
      %v1313 = vperm.slane %v488, 1
      %v1314 = vperm.slane %v689, 1
      %v1315 = vperm.slane %v690, 1
      %v1316 = vperm.slane %v691, 1
      %v1317 = vperm.slane %v584, 1
      %v1318 = vperm.slane %v698, 1
      %v1319 = vperm.slane %v699, 1
      %v1320 = vperm.slane %v700, 1
      %v1321 = vperm.slane %v494, 1
      %v1322 = vperm.slane %v701, 1
      %v1323 = vperm.slane %v702, 1
      %v1324 = vperm.slane %v703, 1
      %v1325 = vperm.slane %v586, 1
      %v1326 = vperm.slane %v710, 1
      %v1327 = vperm.slane %v711, 1
      %v1328 = vperm.slane %v712, 1
      %v1329 = vperm.slane %v500, 1
      %v1330 = vperm.slane %v713, 1
      %v1331 = vperm.slane %v714, 1
      %v1332 = vperm.slane %v715, 1
      %v1333 = vperm.slane %v588, 1
      %v1334 = vperm.slane %v722, 1
      %v1335 = vperm.slane %v723, 1
      %v1336 = vperm.slane %v724, 1
      %v1337 = vperm.slane %v506, 1
      %v1338 = vperm.slane %v725, 1
      %v1339 = vperm.slane %v726, 1
      %v1340 = vperm.slane %v727, 1
      %v1341 = vsel %vm790, %v1278, %v1277
      %v1342 = vsel %vm792, %v1279, %v1341
      %v1343 = vsel %vm794, %v1280, %v1342
      %v1344 = vsel %vm796, %v1281, %v1343
      %v1345 = vsel %vm798, %v1282, %v1344
      %v1346 = vsel %vm800, %v1283, %v1345
      %v1347 = vsel %vm802, %v1284, %v1346
      %v1348 = vsel %vm790, %v1286, %v1285
      %v1349 = vsel %vm792, %v1287, %v1348
      %v1350 = vsel %vm794, %v1288, %v1349
      %v1351 = vsel %vm796, %v1289, %v1350
      %v1352 = vsel %vm798, %v1290, %v1351
      %v1353 = vsel %vm800, %v1291, %v1352
      %v1354 = vsel %vm802, %v1292, %v1353
      %v1355 = vsel %vm790, %v1294, %v1293
      %v1356 = vsel %vm792, %v1295, %v1355
      %v1357 = vsel %vm794, %v1296, %v1356
      %v1358 = vsel %vm796, %v1297, %v1357
      %v1359 = vsel %vm798, %v1298, %v1358
      %v1360 = vsel %vm800, %v1299, %v1359
      %v1361 = vsel %vm802, %v1300, %v1360
      %v1362 = vsel %vm790, %v1302, %v1301
      %v1363 = vsel %vm792, %v1303, %v1362
      %v1364 = vsel %vm794, %v1304, %v1363
      %v1365 = vsel %vm796, %v1305, %v1364
      %v1366 = vsel %vm798, %v1306, %v1365
      %v1367 = vsel %vm800, %v1307, %v1366
      %v1368 = vsel %vm802, %v1308, %v1367
      %v1369 = vsel %vm790, %v1310, %v1309
      %v1370 = vsel %vm792, %v1311, %v1369
      %v1371 = vsel %vm794, %v1312, %v1370
      %v1372 = vsel %vm796, %v1313, %v1371
      %v1373 = vsel %vm798, %v1314, %v1372
      %v1374 = vsel %vm800, %v1315, %v1373
      %v1375 = vsel %vm802, %v1316, %v1374
      %v1376 = vsel %vm790, %v1318, %v1317
      %v1377 = vsel %vm792, %v1319, %v1376
      %v1378 = vsel %vm794, %v1320, %v1377
      %v1379 = vsel %vm796, %v1321, %v1378
      %v1380 = vsel %vm798, %v1322, %v1379
      %v1381 = vsel %vm800, %v1323, %v1380
      %v1382 = vsel %vm802, %v1324, %v1381
      %v1383 = vsel %vm790, %v1326, %v1325
      %v1384 = vsel %vm792, %v1327, %v1383
      %v1385 = vsel %vm794, %v1328, %v1384
      %v1386 = vsel %vm796, %v1329, %v1385
      %v1387 = vsel %vm798, %v1330, %v1386
      %v1388 = vsel %vm800, %v1331, %v1387
      %v1389 = vsel %vm802, %v1332, %v1388
      %v1390 = vsel %vm790, %v1334, %v1333
      %v1391 = vsel %vm792, %v1335, %v1390
      %v1392 = vsel %vm794, %v1336, %v1391
      %v1393 = vsel %vm796, %v1337, %v1392
      %v1394 = vsel %vm798, %v1338, %v1393
      %v1395 = vsel %vm800, %v1339, %v1394
      %v1396 = vsel %vm802, %v1340, %v1395
      %1397 = vrot.lane.b32.xlu0 %v1347, 40
      %v1398 = vpop.permute.xlu0 %1397
      %1399 = vrot.lane.b32.xlu0 %v1354, 40
      %v1400 = vpop.permute.xlu0 %1399
      %1401 = vrot.lane.b32.xlu0 %v1361, 40
      %v1402 = vpop.permute.xlu0 %1401
      %1403 = vrot.lane.b32.xlu0 %v1368, 40
      %v1404 = vpop.permute.xlu0 %1403
      %1405 = vrot.lane.b32.xlu0 %v1375, 40
      %v1406 = vpop.permute.xlu0 %1405
      %1407 = vrot.lane.b32.xlu0 %v1382, 40
      %v1408 = vpop.permute.xlu0 %1407
      %1409 = vrot.lane.b32.xlu0 %v1389, 40
      %v1410 = vpop.permute.xlu0 %1409
      %1411 = vrot.lane.b32.xlu0 %v1396, 40
      %v1412 = vpop.permute.xlu0 %1411
      %v1421 = vperm.slane %v591, 0
      %v1422 = vperm.slane %v592, 0
      %v1423 = vperm.slane %v594, 0
      %v1424 = vperm.slane %v596, 0
      %v1425 = vperm.slane %v598, 0
      %v1426 = vperm.slane %v600, 0
      %v1427 = vperm.slane %v602, 0
      %v1428 = vperm.slane %v604, 0
      %v1429 = vsel %vm790, %v1135, %v1134
      %v1430 = vsel %vm792, %v1136, %v1429
      %v1431 = vsel %vm794, %v1137, %v1430
      %v1432 = vsel %vm796, %v1138, %v1431
      %v1433 = vsel %vm798, %v1139, %v1432
      %v1434 = vsel %vm800, %v1140, %v1433
      %v1435 = vsel %vm802, %v1421, %v1434
      %v1436 = vsel %vm790, %v1143, %v1142
      %v1437 = vsel %vm792, %v1144, %v1436
      %v1438 = vsel %vm794, %v1145, %v1437
      %v1439 = vsel %vm796, %v1146, %v1438
      %v1440 = vsel %vm798, %v1147, %v1439
      %v1441 = vsel %vm800, %v1148, %v1440
      %v1442 = vsel %vm802, %v1422, %v1441
      %v1443 = vsel %vm790, %v1151, %v1150
      %v1444 = vsel %vm792, %v1152, %v1443
      %v1445 = vsel %vm794, %v1153, %v1444
      %v1446 = vsel %vm796, %v1154, %v1445
      %v1447 = vsel %vm798, %v1155, %v1446
      %v1448 = vsel %vm800, %v1156, %v1447
      %v1449 = vsel %vm802, %v1423, %v1448
      %v1450 = vsel %vm790, %v1159, %v1158
      %v1451 = vsel %vm792, %v1160, %v1450
      %v1452 = vsel %vm794, %v1161, %v1451
      %v1453 = vsel %vm796, %v1162, %v1452
      %v1454 = vsel %vm798, %v1163, %v1453
      %v1455 = vsel %vm800, %v1164, %v1454
      %v1456 = vsel %vm802, %v1424, %v1455
      %v1457 = vsel %vm790, %v1167, %v1166
      %v1458 = vsel %vm792, %v1168, %v1457
      %v1459 = vsel %vm794, %v1169, %v1458
      %v1460 = vsel %vm796, %v1170, %v1459
      %v1461 = vsel %vm798, %v1171, %v1460
      %v1462 = vsel %vm800, %v1172, %v1461
      %v1463 = vsel %vm802, %v1425, %v1462
      %v1464 = vsel %vm790, %v1175, %v1174
      %v1465 = vsel %vm792, %v1176, %v1464
      %v1466 = vsel %vm794, %v1177, %v1465
      %v1467 = vsel %vm796, %v1178, %v1466
      %v1468 = vsel %vm798, %v1179, %v1467
      %v1469 = vsel %vm800, %v1180, %v1468
      %v1470 = vsel %vm802, %v1426, %v1469
      %v1471 = vsel %vm790, %v1183, %v1182
      %v1472 = vsel %vm792, %v1184, %v1471
      %v1473 = vsel %vm794, %v1185, %v1472
      %v1474 = vsel %vm796, %v1186, %v1473
      %v1475 = vsel %vm798, %v1187, %v1474
      %v1476 = vsel %vm800, %v1188, %v1475
      %v1477 = vsel %vm802, %v1427, %v1476
      %v1478 = vsel %vm790, %v1191, %v1190
      %v1479 = vsel %vm792, %v1192, %v1478
      %v1480 = vsel %vm794, %v1193, %v1479
      %v1481 = vsel %vm796, %v1194, %v1480
      %v1482 = vsel %vm798, %v1195, %v1481
      %v1483 = vsel %vm800, %v1196, %v1482
      %v1484 = vsel %vm802, %v1428, %v1483
      %1485 = vrot.lane.b32.xlu0 %v1435, 48
      %v1486 = vpop.permute.xlu0 %1485
      %1487 = vrot.lane.b32.xlu0 %v1442, 48
      %v1488 = vpop.permute.xlu0 %1487
      %1489 = vrot.lane.b32.xlu0 %v1449, 48
      %v1490 = vpop.permute.xlu0 %1489
      %1491 = vrot.lane.b32.xlu0 %v1456, 48
      %v1492 = vpop.permute.xlu0 %1491
      %1493 = vrot.lane.b32.xlu0 %v1463, 48
      %v1494 = vpop.permute.xlu0 %1493
      %1495 = vrot.lane.b32.xlu0 %v1470, 48
      %v1496 = vpop.permute.xlu0 %1495
      %1497 = vrot.lane.b32.xlu0 %v1477, 48
      %v1498 = vpop.permute.xlu0 %1497
      %1499 = vrot.lane.b32.xlu0 %v1484, 48
      %v1500 = vpop.permute.xlu0 %1499
      %v1509 = vperm.slane %v591, 1
      %v1510 = vperm.slane %v592, 1
      %v1511 = vperm.slane %v594, 1
      %v1512 = vperm.slane %v596, 1
      %v1513 = vperm.slane %v598, 1
      %v1514 = vperm.slane %v600, 1
      %v1515 = vperm.slane %v602, 1
      %v1516 = vperm.slane %v604, 1
      %v1517 = vsel %vm790, %v1279, %v1278
      %v1518 = vsel %vm792, %v1280, %v1517
      %v1519 = vsel %vm794, %v1281, %v1518
      %v1520 = vsel %vm796, %v1282, %v1519
      %v1521 = vsel %vm798, %v1283, %v1520
      %v1522 = vsel %vm800, %v1284, %v1521
      %v1523 = vsel %vm802, %v1509, %v1522
      %v1524 = vsel %vm790, %v1287, %v1286
      %v1525 = vsel %vm792, %v1288, %v1524
      %v1526 = vsel %vm794, %v1289, %v1525
      %v1527 = vsel %vm796, %v1290, %v1526
      %v1528 = vsel %vm798, %v1291, %v1527
      %v1529 = vsel %vm800, %v1292, %v1528
      %v1530 = vsel %vm802, %v1510, %v1529
      %v1531 = vsel %vm790, %v1295, %v1294
      %v1532 = vsel %vm792, %v1296, %v1531
      %v1533 = vsel %vm794, %v1297, %v1532
      %v1534 = vsel %vm796, %v1298, %v1533
      %v1535 = vsel %vm798, %v1299, %v1534
      %v1536 = vsel %vm800, %v1300, %v1535
      %v1537 = vsel %vm802, %v1511, %v1536
      %v1538 = vsel %vm790, %v1303, %v1302
      %v1539 = vsel %vm792, %v1304, %v1538
      %v1540 = vsel %vm794, %v1305, %v1539
      %v1541 = vsel %vm796, %v1306, %v1540
      %v1542 = vsel %vm798, %v1307, %v1541
      %v1543 = vsel %vm800, %v1308, %v1542
      %v1544 = vsel %vm802, %v1512, %v1543
      %v1545 = vsel %vm790, %v1311, %v1310
      %v1546 = vsel %vm792, %v1312, %v1545
      %v1547 = vsel %vm794, %v1313, %v1546
      %v1548 = vsel %vm796, %v1314, %v1547
      %v1549 = vsel %vm798, %v1315, %v1548
      %v1550 = vsel %vm800, %v1316, %v1549
      %v1551 = vsel %vm802, %v1513, %v1550
      %v1552 = vsel %vm790, %v1319, %v1318
      %v1553 = vsel %vm792, %v1320, %v1552
      %v1554 = vsel %vm794, %v1321, %v1553
      %v1555 = vsel %vm796, %v1322, %v1554
      %v1556 = vsel %vm798, %v1323, %v1555
      %v1557 = vsel %vm800, %v1324, %v1556
      %v1558 = vsel %vm802, %v1514, %v1557
      %v1559 = vsel %vm790, %v1327, %v1326
      %v1560 = vsel %vm792, %v1328, %v1559
      %v1561 = vsel %vm794, %v1329, %v1560
      %v1562 = vsel %vm796, %v1330, %v1561
      %v1563 = vsel %vm798, %v1331, %v1562
      %v1564 = vsel %vm800, %v1332, %v1563
      %v1565 = vsel %vm802, %v1515, %v1564
      %v1566 = vsel %vm790, %v1335, %v1334
      %v1567 = vsel %vm792, %v1336, %v1566
      %v1568 = vsel %vm794, %v1337, %v1567
      %v1569 = vsel %vm796, %v1338, %v1568
      %v1570 = vsel %vm798, %v1339, %v1569
      %v1571 = vsel %vm800, %v1340, %v1570
      %v1572 = vsel %vm802, %v1516, %v1571
      %1573 = vrot.lane.b32.xlu0 %v1523, 56
      %v1574 = vpop.permute.xlu0 %1573
      %1575 = vrot.lane.b32.xlu0 %v1530, 56
      %v1576 = vpop.permute.xlu0 %1575
      %1577 = vrot.lane.b32.xlu0 %v1537, 56
      %v1578 = vpop.permute.xlu0 %1577
      %1579 = vrot.lane.b32.xlu0 %v1544, 56
      %v1580 = vpop.permute.xlu0 %1579
      %1581 = vrot.lane.b32.xlu0 %v1551, 56
      %v1582 = vpop.permute.xlu0 %1581
      %1583 = vrot.lane.b32.xlu0 %v1558, 56
      %v1584 = vpop.permute.xlu0 %1583
      %1585 = vrot.lane.b32.xlu0 %v1565, 56
      %v1586 = vpop.permute.xlu0 %1585
      %1587 = vrot.lane.b32.xlu0 %v1572, 56
      %v1588 = vpop.permute.xlu0 %1587
      %v1597 = vperm.slane %v589, 0
      %v1598 = vperm.slane %v728, 0
      %v1599 = vperm.slane %v729, 0
      %v1600 = vperm.slane %v730, 0
      %v1601 = vperm.slane %v509, 0
      %v1602 = vperm.slane %v731, 0
      %v1603 = vperm.slane %v732, 0
      %v1604 = vperm.slane %v733, 0
      %v1605 = vsel %vm790, %v1598, %v1597
      %v1606 = vsel %vm792, %v1599, %v1605
      %v1607 = vsel %vm794, %v1600, %v1606
      %v1608 = vsel %vm796, %v1601, %v1607
      %v1609 = vsel %vm798, %v1602, %v1608
      %v1610 = vsel %vm800, %v1603, %v1609
      %v1611 = vsel %vm802, %v1604, %v1610
      %1612 = vrot.lane.b32.xlu0 %v803, 64
      %v1613 = vpop.permute.xlu0 %1612
      %1614 = vrot.lane.b32.xlu0 %v810, 64
      %v1615 = vpop.permute.xlu0 %1614
      %1616 = vrot.lane.b32.xlu0 %v817, 64
      %v1617 = vpop.permute.xlu0 %1616
      %1618 = vrot.lane.b32.xlu0 %v824, 64
      %v1619 = vpop.permute.xlu0 %1618
      %1620 = vrot.lane.b32.xlu0 %v831, 64
      %v1621 = vpop.permute.xlu0 %1620
      %1622 = vrot.lane.b32.xlu0 %v838, 64
      %v1623 = vpop.permute.xlu0 %1622
      %1624 = vrot.lane.b32.xlu0 %v845, 64
      %v1625 = vpop.permute.xlu0 %1624
      %1626 = vrot.lane.b32.xlu0 %v1611, 64
      %v1627 = vpop.permute.xlu0 %1626
      %v1636 = vperm.slane %v589, 1
      %v1637 = vperm.slane %v728, 1
      %v1638 = vperm.slane %v729, 1
      %v1639 = vperm.slane %v730, 1
      %v1640 = vperm.slane %v509, 1
      %v1641 = vperm.slane %v731, 1
      %v1642 = vperm.slane %v732, 1
      %v1643 = vperm.slane %v733, 1
      %v1644 = vsel %vm790, %v1637, %v1636
      %v1645 = vsel %vm792, %v1638, %v1644
      %v1646 = vsel %vm794, %v1639, %v1645
      %v1647 = vsel %vm796, %v1640, %v1646
      %v1648 = vsel %vm798, %v1641, %v1647
      %v1649 = vsel %vm800, %v1642, %v1648
      %v1650 = vsel %vm802, %v1643, %v1649
      %1651 = vrot.lane.b32.xlu0 %v915, 72
      %v1652 = vpop.permute.xlu0 %1651
      %1653 = vrot.lane.b32.xlu0 %v922, 72
      %v1654 = vpop.permute.xlu0 %1653
      %1655 = vrot.lane.b32.xlu0 %v929, 72
      %v1656 = vpop.permute.xlu0 %1655
      %1657 = vrot.lane.b32.xlu0 %v936, 72
      %v1658 = vpop.permute.xlu0 %1657
      %1659 = vrot.lane.b32.xlu0 %v943, 72
      %v1660 = vpop.permute.xlu0 %1659
      %1661 = vrot.lane.b32.xlu0 %v950, 72
      %v1662 = vpop.permute.xlu0 %1661
      %1663 = vrot.lane.b32.xlu0 %v957, 72
      %v1664 = vpop.permute.xlu0 %1663
      %1665 = vrot.lane.b32.xlu0 %v1650, 72
      %v1666 = vpop.permute.xlu0 %1665
      %v1675 = vperm.slane %v605, 0
      %v1676 = vsel %vm790, %v1599, %v1598
      %v1677 = vsel %vm792, %v1600, %v1676
      %v1678 = vsel %vm794, %v1601, %v1677
      %v1679 = vsel %vm796, %v1602, %v1678
      %v1680 = vsel %vm798, %v1603, %v1679
      %v1681 = vsel %vm800, %v1604, %v1680
      %v1682 = vsel %vm802, %v1675, %v1681
      %1683 = vrot.lane.b32.xlu0 %v992, 80
      %v1684 = vpop.permute.xlu0 %1683
      %1685 = vrot.lane.b32.xlu0 %v999, 80
      %v1686 = vpop.permute.xlu0 %1685
      %1687 = vrot.lane.b32.xlu0 %v1006, 80
      %v1688 = vpop.permute.xlu0 %1687
      %1689 = vrot.lane.b32.xlu0 %v1013, 80
      %v1690 = vpop.permute.xlu0 %1689
      %1691 = vrot.lane.b32.xlu0 %v1020, 80
      %v1692 = vpop.permute.xlu0 %1691
      %1693 = vrot.lane.b32.xlu0 %v1027, 80
      %v1694 = vpop.permute.xlu0 %1693
      %1695 = vrot.lane.b32.xlu0 %v1034, 80
      %v1696 = vpop.permute.xlu0 %1695
      %1697 = vrot.lane.b32.xlu0 %v1682, 80
      %v1698 = vpop.permute.xlu0 %1697
      %v1707 = vperm.slane %v605, 1
      %v1708 = vsel %vm790, %v1638, %v1637
      %v1709 = vsel %vm792, %v1639, %v1708
      %v1710 = vsel %vm794, %v1640, %v1709
      %v1711 = vsel %vm796, %v1641, %v1710
      %v1712 = vsel %vm798, %v1642, %v1711
      %v1713 = vsel %vm800, %v1643, %v1712
      %v1714 = vsel %vm802, %v1707, %v1713
      %1715 = vrot.lane.b32.xlu0 %v1069, 88
      %v1716 = vpop.permute.xlu0 %1715
      %1717 = vrot.lane.b32.xlu0 %v1076, 88
      %v1718 = vpop.permute.xlu0 %1717
      %1719 = vrot.lane.b32.xlu0 %v1083, 88
      %v1720 = vpop.permute.xlu0 %1719
      %1721 = vrot.lane.b32.xlu0 %v1090, 88
      %v1722 = vpop.permute.xlu0 %1721
      %1723 = vrot.lane.b32.xlu0 %v1097, 88
      %v1724 = vpop.permute.xlu0 %1723
      %1725 = vrot.lane.b32.xlu0 %v1104, 88
      %v1726 = vpop.permute.xlu0 %1725
      %1727 = vrot.lane.b32.xlu0 %v1111, 88
      %v1728 = vpop.permute.xlu0 %1727
      %1729 = vrot.lane.b32.xlu0 %v1714, 88
      %v1730 = vpop.permute.xlu0 %1729
      %1739 = vrot.lane.b32.xlu0 %v1210, 96
      %v1740 = vpop.permute.xlu0 %1739
      %1741 = vrot.lane.b32.xlu0 %v1217, 96
      %v1742 = vpop.permute.xlu0 %1741
      %1743 = vrot.lane.b32.xlu0 %v1224, 96
      %v1744 = vpop.permute.xlu0 %1743
      %1745 = vrot.lane.b32.xlu0 %v1231, 96
      %v1746 = vpop.permute.xlu0 %1745
      %1747 = vrot.lane.b32.xlu0 %v1238, 96
      %v1748 = vpop.permute.xlu0 %1747
      %1749 = vrot.lane.b32.xlu0 %v1245, 96
      %v1750 = vpop.permute.xlu0 %1749
      %1751 = vrot.lane.b32.xlu0 %v1252, 96
      %v1752 = vpop.permute.xlu0 %1751
      %1760 = vrot.lane.b32.xlu0 %v1354, 104
      %v1761 = vpop.permute.xlu0 %1760
      %1762 = vrot.lane.b32.xlu0 %v1361, 104
      %v1763 = vpop.permute.xlu0 %1762
      %1764 = vrot.lane.b32.xlu0 %v1368, 104
      %v1765 = vpop.permute.xlu0 %1764
      %1766 = vrot.lane.b32.xlu0 %v1375, 104
      %v1767 = vpop.permute.xlu0 %1766
      %1768 = vrot.lane.b32.xlu0 %v1382, 104
      %v1769 = vpop.permute.xlu0 %1768
      %1770 = vrot.lane.b32.xlu0 %v1389, 104
      %v1771 = vpop.permute.xlu0 %1770
      %1772 = vrot.lane.b32.xlu0 %v1396, 104
      %v1773 = vpop.permute.xlu0 %1772
      %1781 = vrot.lane.b32.xlu0 %v1442, 112
      %v1782 = vpop.permute.xlu0 %1781
      %1783 = vrot.lane.b32.xlu0 %v1449, 112
      %v1784 = vpop.permute.xlu0 %1783
      %1785 = vrot.lane.b32.xlu0 %v1456, 112
      %v1786 = vpop.permute.xlu0 %1785
      %1787 = vrot.lane.b32.xlu0 %v1463, 112
      %v1788 = vpop.permute.xlu0 %1787
      %1789 = vrot.lane.b32.xlu0 %v1470, 112
      %v1790 = vpop.permute.xlu0 %1789
      %1791 = vrot.lane.b32.xlu0 %v1477, 112
      %v1792 = vpop.permute.xlu0 %1791
      %1793 = vrot.lane.b32.xlu0 %v1484, 112
      %v1794 = vpop.permute.xlu0 %1793
      %1802 = vrot.lane.b32.xlu0 %v1530, 120
      %v1803 = vpop.permute.xlu0 %1802
      %1804 = vrot.lane.b32.xlu0 %v1537, 120
      %v1805 = vpop.permute.xlu0 %1804
      %1806 = vrot.lane.b32.xlu0 %v1544, 120
      %v1807 = vpop.permute.xlu0 %1806
      %1808 = vrot.lane.b32.xlu0 %v1551, 120
      %v1809 = vpop.permute.xlu0 %1808
      %1810 = vrot.lane.b32.xlu0 %v1558, 120
      %v1811 = vpop.permute.xlu0 %1810
      %1812 = vrot.lane.b32.xlu0 %v1565, 120
      %v1813 = vpop.permute.xlu0 %1812
      %1814 = vrot.lane.b32.xlu0 %v1572, 120
      %v1815 = vpop.permute.xlu0 %1814
      %vm1823 = vcmask 64512
      %v1824 = vsel %vm1823, %v803, %v959
      %v1825 = vsel %vm1823, %v810, %v961
      %v1826 = vsel %vm1823, %v817, %v963
      %v1827 = vsel %vm1823, %v824, %v965
      %v1828 = vsel %vm1823, %v831, %v967
      %v1829 = vsel %vm1823, %v838, %v969
      %v1830 = vsel %vm1823, %v845, %v971
      %vm1831 = vcmask 130048
      %v1832 = vsel %vm1831, %v1824, %v1036
      %v1833 = vsel %vm1831, %v1825, %v1038
      %v1834 = vsel %vm1831, %v1826, %v1040
      %v1835 = vsel %vm1831, %v1827, %v1042
      %v1836 = vsel %vm1831, %v1828, %v1044
      %v1837 = vsel %vm1831, %v1829, %v1046
      %v1838 = vsel %vm1831, %v1830, %v1048
      %vm1839 = vcmask 195584
      %v1840 = vsel %vm1839, %v1832, %v1113
      %v1841 = vsel %vm1839, %v1833, %v1115
      %v1842 = vsel %vm1839, %v1834, %v1117
      %v1843 = vsel %vm1839, %v1835, %v1119
      %v1844 = vsel %vm1839, %v1836, %v1121
      %v1845 = vsel %vm1839, %v1837, %v1123
      %v1846 = vsel %vm1839, %v1838, %v1125
      %vm1847 = vcmask 261120
      %v1848 = vsel %vm1847, %v1840, %v1254
      %v1849 = vsel %vm1847, %v1840, %v1256
      %v1850 = vsel %vm1847, %v1841, %v1258
      %v1851 = vsel %vm1847, %v1842, %v1260
      %v1852 = vsel %vm1847, %v1843, %v1262
      %v1853 = vsel %vm1847, %v1844, %v1264
      %v1854 = vsel %vm1847, %v1845, %v1266
      %v1855 = vsel %vm1847, %v1846, %v1268
      %vm1856 = vcmask 326656
      %v1857 = vsel %vm1856, %v1848, %v1398
      %v1858 = vsel %vm1856, %v1849, %v1400
      %v1859 = vsel %vm1856, %v1850, %v1402
      %v1860 = vsel %vm1856, %v1851, %v1404
      %v1861 = vsel %vm1856, %v1852, %v1406
      %v1862 = vsel %vm1856, %v1853, %v1408
      %v1863 = vsel %vm1856, %v1854, %v1410
      %v1864 = vsel %vm1856, %v1855, %v1412
      %vm1865 = vcmask 392192
      %v1866 = vsel %vm1865, %v1857, %v1486
      %v1867 = vsel %vm1865, %v1858, %v1488
      %v1868 = vsel %vm1865, %v1859, %v1490
      %v1869 = vsel %vm1865, %v1860, %v1492
      %v1870 = vsel %vm1865, %v1861, %v1494
      %v1871 = vsel %vm1865, %v1862, %v1496
      %v1872 = vsel %vm1865, %v1863, %v1498
      %v1873 = vsel %vm1865, %v1864, %v1500
      %vm1874 = vcmask 457728
      %v1875 = vsel %vm1874, %v1866, %v1574
      %v1876 = vsel %vm1874, %v1867, %v1576
      %v1877 = vsel %vm1874, %v1868, %v1578
      %v1878 = vsel %vm1874, %v1869, %v1580
      %v1879 = vsel %vm1874, %v1870, %v1582
      %v1880 = vsel %vm1874, %v1871, %v1584
      %v1881 = vsel %vm1874, %v1872, %v1586
      %v1882 = vsel %vm1874, %v1873, %v1588
      %vm1883 = vcmask 523264
      %v1884 = vsel %vm1883, %v1875, %v1613
      %v1885 = vsel %vm1883, %v1876, %v1615
      %v1886 = vsel %vm1883, %v1877, %v1617
      %v1887 = vsel %vm1883, %v1878, %v1619
      %v1888 = vsel %vm1883, %v1879, %v1621
      %v1889 = vsel %vm1883, %v1880, %v1623
      %v1890 = vsel %vm1883, %v1881, %v1625
      %v1891 = vsel %vm1883, %v1882, %v1627
      %vm1892 = vcmask 588800
      %v1893 = vsel %vm1892, %v1884, %v1652
      %v1894 = vsel %vm1892, %v1885, %v1654
      %v1895 = vsel %vm1892, %v1886, %v1656
      %v1896 = vsel %vm1892, %v1887, %v1658
      %v1897 = vsel %vm1892, %v1888, %v1660
      %v1898 = vsel %vm1892, %v1889, %v1662
      %v1899 = vsel %vm1892, %v1890, %v1664
      %v1900 = vsel %vm1892, %v1891, %v1666
      %vm1901 = vcmask 654336
      %v1902 = vsel %vm1901, %v1893, %v1684
      %v1903 = vsel %vm1901, %v1894, %v1686
      %v1904 = vsel %vm1901, %v1895, %v1688
      %v1905 = vsel %vm1901, %v1896, %v1690
      %v1906 = vsel %vm1901, %v1897, %v1692
      %v1907 = vsel %vm1901, %v1898, %v1694
      %v1908 = vsel %vm1901, %v1899, %v1696
      %v1909 = vsel %vm1901, %v1900, %v1698
      %vm1910 = vcmask 719872
      %v1911 = vsel %vm1910, %v1902, %v1716
      %v1912 = vsel %vm1910, %v1903, %v1718
      %v1913 = vsel %vm1910, %v1904, %v1720
      %v1914 = vsel %vm1910, %v1905, %v1722
      %v1915 = vsel %vm1910, %v1906, %v1724
      %v1916 = vsel %vm1910, %v1907, %v1726
      %v1917 = vsel %vm1910, %v1908, %v1728
      %v1918 = vsel %vm1910, %v1909, %v1730
      %vm1919 = vcmask 785408
      %v1920 = vsel %vm1919, %v1911, %v1740
      %v1921 = vsel %vm1919, %v1912, %v1742
      %v1922 = vsel %vm1919, %v1913, %v1744
      %v1923 = vsel %vm1919, %v1914, %v1746
      %v1924 = vsel %vm1919, %v1915, %v1748
      %v1925 = vsel %vm1919, %v1916, %v1750
      %v1926 = vsel %vm1919, %v1917, %v1752
      %v1927 = vsel %vm1919, %v1918, %v1752
      %vm1928 = vcmask 850944
      %v1929 = vsel %vm1928, %v1920, %v1761
      %v1930 = vsel %vm1928, %v1921, %v1763
      %v1931 = vsel %vm1928, %v1922, %v1765
      %v1932 = vsel %vm1928, %v1923, %v1767
      %v1933 = vsel %vm1928, %v1924, %v1769
      %v1934 = vsel %vm1928, %v1925, %v1771
      %v1935 = vsel %vm1928, %v1926, %v1773
      %v1936 = vsel %vm1928, %v1927, %v1773
      %vm1937 = vcmask 916480
      %v1938 = vsel %vm1937, %v1929, %v1782
      %v1939 = vsel %vm1937, %v1930, %v1784
      %v1940 = vsel %vm1937, %v1931, %v1786
      %v1941 = vsel %vm1937, %v1932, %v1788
      %v1942 = vsel %vm1937, %v1933, %v1790
      %v1943 = vsel %vm1937, %v1934, %v1792
      %v1944 = vsel %vm1937, %v1935, %v1794
      %v1945 = vsel %vm1937, %v1936, %v1794
      %vm1946 = vcmask 982016
      %v1947 = vsel %vm1946, %v1938, %v1803
      %v1948 = vsel %vm1946, %v1939, %v1805
      %v1949 = vsel %vm1946, %v1940, %v1807
      %v1950 = vsel %vm1946, %v1941, %v1809
      %v1951 = vsel %vm1946, %v1942, %v1811
      %v1952 = vsel %vm1946, %v1943, %v1813
      %v1953 = vsel %vm1946, %v1944, %v1815
      %v1954 = vsel %vm1946, %v1945, %v1815
      %v1956 = vperm.slane %v396, 0
      %v1958 = vand.u32 %v395, 4294901760
      %1959 = vmatpush.msra.mxu0 %v1958
      %v1960 = vand.u32 %v394, 4294901760
      %1961 = vmatpush.msra.mxu0 %v1960
      %v1962 = vand.u32 %v393, 4294901760
      %1963 = vmatpush.msra.mxu0 %v1962
      %v1964 = vand.u32 %v392, 4294901760
      %1965 = vmatpush.msra.mxu0 %v1964
      %v1966 = vand.u32 %v391, 4294901760
      %1967 = vmatpush.msra.mxu0 %v1966
      %v1968 = vand.u32 %v390, 4294901760
      %1969 = vmatpush.msra.mxu0 %v1968
      %v1970 = vand.u32 %v389, 4294901760
      %1971 = vmatpush.msra.mxu0 %v1970
      %v1972 = vand.u32 %v388, 4294901760
      %1973 = vmatpush.msra.mxu0 %v1972
      %v1974 = vand.u32 %v387, 4294901760
      %1975 = vmatpush.msra.mxu0 %v1974
      %v1976 = vand.u32 %v386, 4294901760
      %1977 = vmatpush.msra.mxu0 %v1976
      %v1978 = vand.u32 %v385, 4294901760
      %1979 = vmatpush.msra.mxu0 %v1978
      %v1980 = vand.u32 %v384, 4294901760
      %1981 = vmatpush.msra.mxu0 %v1980
      %v1982 = vand.u32 %v383, 4294901760
      %1983 = vmatpush.msra.mxu0 %v1982
      %v1984 = vand.u32 %v382, 4294901760
      %1985 = vmatpush.msra.mxu0 %v1984
      %v1986 = vand.u32 %v381, 4294901760
      %1987 = vmatpush.msra.mxu0 %v1986
      %v1988 = vand.u32 %v380, 4294901760
      %1989 = vmatpush.msra.mxu0 %v1988
      %v1990 = vand.u32 %v1947, 4294901760
      %v1991 = vsub.f32 %v1947, %v1990
      %v1992 = vand.u32 %v1991, 4294901760
      %v1993 = vsub.f32 %v1991, %v1992
      %v1994 = vand.u32 %v1993, 4294901760
      %1995 = vmatmul.f32.gmra.mxu0 %v1994
      %v1996 = vpop.f32.mrf.mxu0
      %v1997 = vadd.f32 %v1956, %v1996
      %v1998 = vand.u32 %v1948, 4294901760
      %v1999 = vsub.f32 %v1948, %v1998
      %v2000 = vand.u32 %v1999, 4294901760
      %v2001 = vsub.f32 %v1999, %v2000
      %v2002 = vand.u32 %v2001, 4294901760
      %2003 = vmatmul.f32.gmra.mxu0 %v2002
      %v2004 = vpop.f32.mrf.mxu0
      %v2005 = vadd.f32 %v1956, %v2004
      %v2006 = vand.u32 %v1949, 4294901760
      %v2007 = vsub.f32 %v1949, %v2006
      %v2008 = vand.u32 %v2007, 4294901760
      %v2009 = vsub.f32 %v2007, %v2008
      %v2010 = vand.u32 %v2009, 4294901760
      %2011 = vmatmul.f32.gmra.mxu0 %v2010
      %v2012 = vpop.f32.mrf.mxu0
      %v2013 = vadd.f32 %v1956, %v2012
      %v2014 = vand.u32 %v1950, 4294901760
      %v2015 = vsub.f32 %v1950, %v2014
      %v2016 = vand.u32 %v2015, 4294901760
      %v2017 = vsub.f32 %v2015, %v2016
      %v2018 = vand.u32 %v2017, 4294901760
      %2019 = vmatmul.f32.gmra.mxu0 %v2018
      %v2020 = vpop.f32.mrf.mxu0
      %v2021 = vadd.f32 %v1956, %v2020
      %v2022 = vand.u32 %v1951, 4294901760
      %v2023 = vsub.f32 %v1951, %v2022
      %v2024 = vand.u32 %v2023, 4294901760
      %v2025 = vsub.f32 %v2023, %v2024
      %v2026 = vand.u32 %v2025, 4294901760
      %2027 = vmatmul.f32.gmra.mxu0 %v2026
      %v2028 = vpop.f32.mrf.mxu0
      %v2029 = vadd.f32 %v1956, %v2028
      %v2030 = vand.u32 %v1952, 4294901760
      %v2031 = vsub.f32 %v1952, %v2030
      %v2032 = vand.u32 %v2031, 4294901760
      %v2033 = vsub.f32 %v2031, %v2032
      %v2034 = vand.u32 %v2033, 4294901760
      %2035 = vmatmul.f32.gmra.mxu0 %v2034
      %v2036 = vpop.f32.mrf.mxu0
      %v2037 = vadd.f32 %v1956, %v2036
      %v2038 = vand.u32 %v1953, 4294901760
      %v2039 = vsub.f32 %v1953, %v2038
      %v2040 = vand.u32 %v2039, 4294901760
      %v2041 = vsub.f32 %v2039, %v2040
      %v2042 = vand.u32 %v2041, 4294901760
      %2043 = vmatmul.f32.gmra.mxu0 %v2042
      %v2044 = vpop.f32.mrf.mxu0
      %v2045 = vadd.f32 %v1956, %v2044
      %v2046 = vand.u32 %v1954, 4294901760
      %v2047 = vsub.f32 %v1954, %v2046
      %v2048 = vand.u32 %v2047, 4294901760
      %v2049 = vsub.f32 %v2047, %v2048
      %v2050 = vand.u32 %v2049, 4294901760
      %2051 = vmatmul.f32.gmra.mxu0 %v2050
      %v2052 = vpop.f32.mrf.mxu0
      %v2053 = vadd.f32 %v1956, %v2052
      %2054 = vdwg.mxu0
      %v2055 = vand.u32 %v395, 4294901760
      %v2056 = vsub.f32 %v395, %v2055
      %v2057 = vand.u32 %v2056, 4294901760
      %v2058 = vsub.f32 %v2056, %v2057
      %v2059 = vand.u32 %v2058, 4294901760
      %2060 = vmatpush.msra.mxu0 %v2059
      %v2061 = vand.u32 %v394, 4294901760
      %v2062 = vsub.f32 %v394, %v2061
      %v2063 = vand.u32 %v2062, 4294901760
      %v2064 = vsub.f32 %v2062, %v2063
      %v2065 = vand.u32 %v2064, 4294901760
      %2066 = vmatpush.msra.mxu0 %v2065
      %v2067 = vand.u32 %v393, 4294901760
      %v2068 = vsub.f32 %v393, %v2067
      %v2069 = vand.u32 %v2068, 4294901760
      %v2070 = vsub.f32 %v2068, %v2069
      %v2071 = vand.u32 %v2070, 4294901760
      %2072 = vmatpush.msra.mxu0 %v2071
      %v2073 = vand.u32 %v392, 4294901760
      %v2074 = vsub.f32 %v392, %v2073
      %v2075 = vand.u32 %v2074, 4294901760
      %v2076 = vsub.f32 %v2074, %v2075
      %v2077 = vand.u32 %v2076, 4294901760
      %2078 = vmatpush.msra.mxu0 %v2077
      %v2079 = vand.u32 %v391, 4294901760
      %v2080 = vsub.f32 %v391, %v2079
      %v2081 = vand.u32 %v2080, 4294901760
      %v2082 = vsub.f32 %v2080, %v2081
      %v2083 = vand.u32 %v2082, 4294901760
      %2084 = vmatpush.msra.mxu0 %v2083
      %v2085 = vand.u32 %v390, 4294901760
      %v2086 = vsub.f32 %v390, %v2085
      %v2087 = vand.u32 %v2086, 4294901760
      %v2088 = vsub.f32 %v2086, %v2087
      %v2089 = vand.u32 %v2088, 4294901760
      %2090 = vmatpush.msra.mxu0 %v2089
      %v2091 = vand.u32 %v389, 4294901760
      %v2092 = vsub.f32 %v389, %v2091
      %v2093 = vand.u32 %v2092, 4294901760
      %v2094 = vsub.f32 %v2092, %v2093
      %v2095 = vand.u32 %v2094, 4294901760
      %2096 = vmatpush.msra.mxu0 %v2095
      %v2097 = vand.u32 %v388, 4294901760
      %v2098 = vsub.f32 %v388, %v2097
      %v2099 = vand.u32 %v2098, 4294901760
      %v2100 = vsub.f32 %v2098, %v2099
      %v2101 = vand.u32 %v2100, 4294901760
      %2102 = vmatpush.msra.mxu0 %v2101
      %v2103 = vand.u32 %v387, 4294901760
      %v2104 = vsub.f32 %v387, %v2103
      %v2105 = vand.u32 %v2104, 4294901760
      %v2106 = vsub.f32 %v2104, %v2105
      %v2107 = vand.u32 %v2106, 4294901760
      %2108 = vmatpush.msra.mxu0 %v2107
      %v2109 = vand.u32 %v386, 4294901760
      %v2110 = vsub.f32 %v386, %v2109
      %v2111 = vand.u32 %v2110, 4294901760
      %v2112 = vsub.f32 %v2110, %v2111
      %v2113 = vand.u32 %v2112, 4294901760
      %2114 = vmatpush.msra.mxu0 %v2113
      %v2115 = vand.u32 %v385, 4294901760
      %v2116 = vsub.f32 %v385, %v2115
      %v2117 = vand.u32 %v2116, 4294901760
      %v2118 = vsub.f32 %v2116, %v2117
      %v2119 = vand.u32 %v2118, 4294901760
      %2120 = vmatpush.msra.mxu0 %v2119
      %v2121 = vand.u32 %v384, 4294901760
      %v2122 = vsub.f32 %v384, %v2121
      %v2123 = vand.u32 %v2122, 4294901760
      %v2124 = vsub.f32 %v2122, %v2123
      %v2125 = vand.u32 %v2124, 4294901760
      %2126 = vmatpush.msra.mxu0 %v2125
      %v2127 = vand.u32 %v383, 4294901760
      %v2128 = vsub.f32 %v383, %v2127
      %v2129 = vand.u32 %v2128, 4294901760
      %v2130 = vsub.f32 %v2128, %v2129
      %v2131 = vand.u32 %v2130, 4294901760
      %2132 = vmatpush.msra.mxu0 %v2131
      %v2133 = vand.u32 %v382, 4294901760
      %v2134 = vsub.f32 %v382, %v2133
      %v2135 = vand.u32 %v2134, 4294901760
      %v2136 = vsub.f32 %v2134, %v2135
      %v2137 = vand.u32 %v2136, 4294901760
      %2138 = vmatpush.msra.mxu0 %v2137
      %v2139 = vand.u32 %v381, 4294901760
      %v2140 = vsub.f32 %v381, %v2139
      %v2141 = vand.u32 %v2140, 4294901760
      %v2142 = vsub.f32 %v2140, %v2141
      %v2143 = vand.u32 %v2142, 4294901760
      %2144 = vmatpush.msra.mxu0 %v2143
      %v2145 = vand.u32 %v380, 4294901760
      %v2146 = vsub.f32 %v380, %v2145
      %v2147 = vand.u32 %v2146, 4294901760
      %v2148 = vsub.f32 %v2146, %v2147
      %v2149 = vand.u32 %v2148, 4294901760
      %2150 = vmatpush.msra.mxu0 %v2149
      %v2151 = vand.u32 %v1947, 4294901760
      %2152 = vmatmul.f32.gmra.mxu0 %v2151
      %v2153 = vpop.f32.mrf.mxu0
      %v2154 = vadd.f32 %v1997, %v2153
      %v2155 = vand.u32 %v1948, 4294901760
      %2156 = vmatmul.f32.gmra.mxu0 %v2155
      %v2157 = vpop.f32.mrf.mxu0
      %v2158 = vadd.f32 %v2005, %v2157
      %v2159 = vand.u32 %v1949, 4294901760
      %2160 = vmatmul.f32.gmra.mxu0 %v2159
      %v2161 = vpop.f32.mrf.mxu0
      %v2162 = vadd.f32 %v2013, %v2161
      %v2163 = vand.u32 %v1950, 4294901760
      %2164 = vmatmul.f32.gmra.mxu0 %v2163
      %v2165 = vpop.f32.mrf.mxu0
      %v2166 = vadd.f32 %v2021, %v2165
      %v2167 = vand.u32 %v1951, 4294901760
      %2168 = vmatmul.f32.gmra.mxu0 %v2167
      %v2169 = vpop.f32.mrf.mxu0
      %v2170 = vadd.f32 %v2029, %v2169
      %v2171 = vand.u32 %v1952, 4294901760
      %2172 = vmatmul.f32.gmra.mxu0 %v2171
      %v2173 = vpop.f32.mrf.mxu0
      %v2174 = vadd.f32 %v2037, %v2173
      %v2175 = vand.u32 %v1953, 4294901760
      %2176 = vmatmul.f32.gmra.mxu0 %v2175
      %v2177 = vpop.f32.mrf.mxu0
      %v2178 = vadd.f32 %v2045, %v2177
      %v2179 = vand.u32 %v1954, 4294901760
      %2180 = vmatmul.f32.gmra.mxu0 %v2179
      %v2181 = vpop.f32.mrf.mxu0
      %v2182 = vadd.f32 %v2053, %v2181
      %2183 = vdwg.mxu0
      %v2184 = vand.u32 %v395, 4294901760
      %v2185 = vsub.f32 %v395, %v2184
      %2186 = vmatpush.msra.mxu0 %v2185
      %v2187 = vand.u32 %v394, 4294901760
      %v2188 = vsub.f32 %v394, %v2187
      %2189 = vmatpush.msra.mxu0 %v2188
      %v2190 = vand.u32 %v393, 4294901760
      %v2191 = vsub.f32 %v393, %v2190
      %2192 = vmatpush.msra.mxu0 %v2191
      %v2193 = vand.u32 %v392, 4294901760
      %v2194 = vsub.f32 %v392, %v2193
      %2195 = vmatpush.msra.mxu0 %v2194
      %v2196 = vand.u32 %v391, 4294901760
      %v2197 = vsub.f32 %v391, %v2196
      %2198 = vmatpush.msra.mxu0 %v2197
      %v2199 = vand.u32 %v390, 4294901760
      %v2200 = vsub.f32 %v390, %v2199
      %2201 = vmatpush.msra.mxu0 %v2200
      %v2202 = vand.u32 %v389, 4294901760
      %v2203 = vsub.f32 %v389, %v2202
      %2204 = vmatpush.msra.mxu0 %v2203
      %v2205 = vand.u32 %v388, 4294901760
      %v2206 = vsub.f32 %v388, %v2205
      %2207 = vmatpush.msra.mxu0 %v2206
      %v2208 = vand.u32 %v387, 4294901760
      %v2209 = vsub.f32 %v387, %v2208
      %2210 = vmatpush.msra.mxu0 %v2209
      %v2211 = vand.u32 %v386, 4294901760
      %v2212 = vsub.f32 %v386, %v2211
      %2213 = vmatpush.msra.mxu0 %v2212
      %v2214 = vand.u32 %v385, 4294901760
      %v2215 = vsub.f32 %v385, %v2214
      %2216 = vmatpush.msra.mxu0 %v2215
      %v2217 = vand.u32 %v384, 4294901760
      %v2218 = vsub.f32 %v384, %v2217
      %2219 = vmatpush.msra.mxu0 %v2218
      %v2220 = vand.u32 %v383, 4294901760
      %v2221 = vsub.f32 %v383, %v2220
      %2222 = vmatpush.msra.mxu0 %v2221
      %v2223 = vand.u32 %v382, 4294901760
      %v2224 = vsub.f32 %v382, %v2223
      %2225 = vmatpush.msra.mxu0 %v2224
      %v2226 = vand.u32 %v381, 4294901760
      %v2227 = vsub.f32 %v381, %v2226
      %2228 = vmatpush.msra.mxu0 %v2227
      %v2229 = vand.u32 %v380, 4294901760
      %v2230 = vsub.f32 %v380, %v2229
      %2231 = vmatpush.msra.mxu0 %v2230
      %v2232 = vand.u32 %v1947, 4294901760
      %v2233 = vsub.f32 %v1947, %v2232
      %2234 = vmatmul.f32.gmra.mxu0 %v2233
      %v2235 = vpop.f32.mrf.mxu0
      %v2236 = vadd.f32 %v2154, %v2235
      %v2237 = vand.u32 %v1948, 4294901760
      %v2238 = vsub.f32 %v1948, %v2237
      %2239 = vmatmul.f32.gmra.mxu0 %v2238
      %v2240 = vpop.f32.mrf.mxu0
      %v2241 = vadd.f32 %v2158, %v2240
      %v2242 = vand.u32 %v1949, 4294901760
      %v2243 = vsub.f32 %v1949, %v2242
      %2244 = vmatmul.f32.gmra.mxu0 %v2243
      %v2245 = vpop.f32.mrf.mxu0
      %v2246 = vadd.f32 %v2162, %v2245
      %v2247 = vand.u32 %v1950, 4294901760
      %v2248 = vsub.f32 %v1950, %v2247
      %2249 = vmatmul.f32.gmra.mxu0 %v2248
      %v2250 = vpop.f32.mrf.mxu0
      %v2251 = vadd.f32 %v2166, %v2250
      %v2252 = vand.u32 %v1951, 4294901760
      %v2253 = vsub.f32 %v1951, %v2252
      %2254 = vmatmul.f32.gmra.mxu0 %v2253
      %v2255 = vpop.f32.mrf.mxu0
      %v2256 = vadd.f32 %v2170, %v2255
      %v2257 = vand.u32 %v1952, 4294901760
      %v2258 = vsub.f32 %v1952, %v2257
      %2259 = vmatmul.f32.gmra.mxu0 %v2258
      %v2260 = vpop.f32.mrf.mxu0
      %v2261 = vadd.f32 %v2174, %v2260
      %v2262 = vand.u32 %v1953, 4294901760
      %v2263 = vsub.f32 %v1953, %v2262
      %2264 = vmatmul.f32.gmra.mxu0 %v2263
      %v2265 = vpop.f32.mrf.mxu0
      %v2266 = vadd.f32 %v2178, %v2265
      %v2267 = vand.u32 %v1954, 4294901760
      %v2268 = vsub.f32 %v1954, %v2267
      %2269 = vmatmul.f32.gmra.mxu0 %v2268
      %v2270 = vpop.f32.mrf.mxu0
      %v2271 = vadd.f32 %v2182, %v2270
      %2272 = vdwg.mxu0
      %v2273 = vand.u32 %v395, 4294901760
      %2274 = vmatpush.msra.mxu0 %v2273
      %v2275 = vand.u32 %v394, 4294901760
      %2276 = vmatpush.msra.mxu0 %v2275
      %v2277 = vand.u32 %v393, 4294901760
      %2278 = vmatpush.msra.mxu0 %v2277
      %v2279 = vand.u32 %v392, 4294901760
      %2280 = vmatpush.msra.mxu0 %v2279
      %v2281 = vand.u32 %v391, 4294901760
      %2282 = vmatpush.msra.mxu0 %v2281
      %v2283 = vand.u32 %v390, 4294901760
      %2284 = vmatpush.msra.mxu0 %v2283
      %v2285 = vand.u32 %v389, 4294901760
      %2286 = vmatpush.msra.mxu0 %v2285
      %v2287 = vand.u32 %v388, 4294901760
      %2288 = vmatpush.msra.mxu0 %v2287
      %v2289 = vand.u32 %v387, 4294901760
      %2290 = vmatpush.msra.mxu0 %v2289
      %v2291 = vand.u32 %v386, 4294901760
      %2292 = vmatpush.msra.mxu0 %v2291
      %v2293 = vand.u32 %v385, 4294901760
      %2294 = vmatpush.msra.mxu0 %v2293
      %v2295 = vand.u32 %v384, 4294901760
      %2296 = vmatpush.msra.mxu0 %v2295
      %v2297 = vand.u32 %v383, 4294901760
      %2298 = vmatpush.msra.mxu0 %v2297
      %v2299 = vand.u32 %v382, 4294901760
      %2300 = vmatpush.msra.mxu0 %v2299
      %v2301 = vand.u32 %v381, 4294901760
      %2302 = vmatpush.msra.mxu0 %v2301
      %v2303 = vand.u32 %v380, 4294901760
      %2304 = vmatpush.msra.mxu0 %v2303
      %v2305 = vand.u32 %v1947, 4294901760
      %v2306 = vsub.f32 %v1947, %v2305
      %v2307 = vand.u32 %v2306, 4294901760
      %2308 = vmatmul.f32.gmra.mxu0 %v2307
      %v2309 = vpop.f32.mrf.mxu0
      %v2310 = vadd.f32 %v2236, %v2309
      %v2311 = vand.u32 %v1948, 4294901760
      %v2312 = vsub.f32 %v1948, %v2311
      %v2313 = vand.u32 %v2312, 4294901760
      %2314 = vmatmul.f32.gmra.mxu0 %v2313
      %v2315 = vpop.f32.mrf.mxu0
      %v2316 = vadd.f32 %v2241, %v2315
      %v2317 = vand.u32 %v1949, 4294901760
      %v2318 = vsub.f32 %v1949, %v2317
      %v2319 = vand.u32 %v2318, 4294901760
      %2320 = vmatmul.f32.gmra.mxu0 %v2319
      %v2321 = vpop.f32.mrf.mxu0
      %v2322 = vadd.f32 %v2246, %v2321
      %v2323 = vand.u32 %v1950, 4294901760
      %v2324 = vsub.f32 %v1950, %v2323
      %v2325 = vand.u32 %v2324, 4294901760
      %2326 = vmatmul.f32.gmra.mxu0 %v2325
      %v2327 = vpop.f32.mrf.mxu0
      %v2328 = vadd.f32 %v2251, %v2327
      %v2329 = vand.u32 %v1951, 4294901760
      %v2330 = vsub.f32 %v1951, %v2329
      %v2331 = vand.u32 %v2330, 4294901760
      %2332 = vmatmul.f32.gmra.mxu0 %v2331
      %v2333 = vpop.f32.mrf.mxu0
      %v2334 = vadd.f32 %v2256, %v2333
      %v2335 = vand.u32 %v1952, 4294901760
      %v2336 = vsub.f32 %v1952, %v2335
      %v2337 = vand.u32 %v2336, 4294901760
      %2338 = vmatmul.f32.gmra.mxu0 %v2337
      %v2339 = vpop.f32.mrf.mxu0
      %v2340 = vadd.f32 %v2261, %v2339
      %v2341 = vand.u32 %v1953, 4294901760
      %v2342 = vsub.f32 %v1953, %v2341
      %v2343 = vand.u32 %v2342, 4294901760
      %2344 = vmatmul.f32.gmra.mxu0 %v2343
      %v2345 = vpop.f32.mrf.mxu0
      %v2346 = vadd.f32 %v2266, %v2345
      %v2347 = vand.u32 %v1954, 4294901760
      %v2348 = vsub.f32 %v1954, %v2347
      %v2349 = vand.u32 %v2348, 4294901760
      %2350 = vmatmul.f32.gmra.mxu0 %v2349
      %v2351 = vpop.f32.mrf.mxu0
      %v2352 = vadd.f32 %v2271, %v2351
      %2353 = vdwg.mxu0
      %v2354 = vand.u32 %v395, 4294901760
      %v2355 = vsub.f32 %v395, %v2354
      %v2356 = vand.u32 %v2355, 4294901760
      %2357 = vmatpush.msra.mxu0 %v2356
      %v2358 = vand.u32 %v394, 4294901760
      %v2359 = vsub.f32 %v394, %v2358
      %v2360 = vand.u32 %v2359, 4294901760
      %2361 = vmatpush.msra.mxu0 %v2360
      %v2362 = vand.u32 %v393, 4294901760
      %v2363 = vsub.f32 %v393, %v2362
      %v2364 = vand.u32 %v2363, 4294901760
      %2365 = vmatpush.msra.mxu0 %v2364
      %v2366 = vand.u32 %v392, 4294901760
      %v2367 = vsub.f32 %v392, %v2366
      %v2368 = vand.u32 %v2367, 4294901760
      %2369 = vmatpush.msra.mxu0 %v2368
      %v2370 = vand.u32 %v391, 4294901760
      %v2371 = vsub.f32 %v391, %v2370
      %v2372 = vand.u32 %v2371, 4294901760
      %2373 = vmatpush.msra.mxu0 %v2372
      %v2374 = vand.u32 %v390, 4294901760
      %v2375 = vsub.f32 %v390, %v2374
      %v2376 = vand.u32 %v2375, 4294901760
      %2377 = vmatpush.msra.mxu0 %v2376
      %v2378 = vand.u32 %v389, 4294901760
      %v2379 = vsub.f32 %v389, %v2378
      %v2380 = vand.u32 %v2379, 4294901760
      %2381 = vmatpush.msra.mxu0 %v2380
      %v2382 = vand.u32 %v388, 4294901760
      %v2383 = vsub.f32 %v388, %v2382
      %v2384 = vand.u32 %v2383, 4294901760
      %2385 = vmatpush.msra.mxu0 %v2384
      %v2386 = vand.u32 %v387, 4294901760
      %v2387 = vsub.f32 %v387, %v2386
      %v2388 = vand.u32 %v2387, 4294901760
      %2389 = vmatpush.msra.mxu0 %v2388
      %v2390 = vand.u32 %v386, 4294901760
      %v2391 = vsub.f32 %v386, %v2390
      %v2392 = vand.u32 %v2391, 4294901760
      %2393 = vmatpush.msra.mxu0 %v2392
      %v2394 = vand.u32 %v385, 4294901760
      %v2395 = vsub.f32 %v385, %v2394
      %v2396 = vand.u32 %v2395, 4294901760
      %2397 = vmatpush.msra.mxu0 %v2396
      %v2398 = vand.u32 %v384, 4294901760
      %v2399 = vsub.f32 %v384, %v2398
      %v2400 = vand.u32 %v2399, 4294901760
      %2401 = vmatpush.msra.mxu0 %v2400
      %v2402 = vand.u32 %v383, 4294901760
      %v2403 = vsub.f32 %v383, %v2402
      %v2404 = vand.u32 %v2403, 4294901760
      %2405 = vmatpush.msra.mxu0 %v2404
      %v2406 = vand.u32 %v382, 4294901760
      %v2407 = vsub.f32 %v382, %v2406
      %v2408 = vand.u32 %v2407, 4294901760
      %2409 = vmatpush.msra.mxu0 %v2408
      %v2410 = vand.u32 %v381, 4294901760
      %v2411 = vsub.f32 %v381, %v2410
      %v2412 = vand.u32 %v2411, 4294901760
      %2413 = vmatpush.msra.mxu0 %v2412
      %v2414 = vand.u32 %v380, 4294901760
      %v2415 = vsub.f32 %v380, %v2414
      %v2416 = vand.u32 %v2415, 4294901760
      %2417 = vmatpush.msra.mxu0 %v2416
      %v2418 = vand.u32 %v1947, 4294901760
      %2419 = vmatmul.f32.gmra.mxu0 %v2418
      %v2420 = vpop.f32.mrf.mxu0
      %v2421 = vadd.f32 %v2310, %v2420
      %v2422 = vand.u32 %v1948, 4294901760
      %2423 = vmatmul.f32.gmra.mxu0 %v2422
      %v2424 = vpop.f32.mrf.mxu0
      %v2425 = vadd.f32 %v2316, %v2424
      %v2426 = vand.u32 %v1949, 4294901760
      %2427 = vmatmul.f32.gmra.mxu0 %v2426
      %v2428 = vpop.f32.mrf.mxu0
      %v2429 = vadd.f32 %v2322, %v2428
      %v2430 = vand.u32 %v1950, 4294901760
      %2431 = vmatmul.f32.gmra.mxu0 %v2430
      %v2432 = vpop.f32.mrf.mxu0
      %v2433 = vadd.f32 %v2328, %v2432
      %v2434 = vand.u32 %v1951, 4294901760
      %2435 = vmatmul.f32.gmra.mxu0 %v2434
      %v2436 = vpop.f32.mrf.mxu0
      %v2437 = vadd.f32 %v2334, %v2436
      %v2438 = vand.u32 %v1952, 4294901760
      %2439 = vmatmul.f32.gmra.mxu0 %v2438
      %v2440 = vpop.f32.mrf.mxu0
      %v2441 = vadd.f32 %v2340, %v2440
      %v2442 = vand.u32 %v1953, 4294901760
      %2443 = vmatmul.f32.gmra.mxu0 %v2442
      %v2444 = vpop.f32.mrf.mxu0
      %v2445 = vadd.f32 %v2346, %v2444
      %v2446 = vand.u32 %v1954, 4294901760
      %2447 = vmatmul.f32.gmra.mxu0 %v2446
      %v2448 = vpop.f32.mrf.mxu0
      %v2449 = vadd.f32 %v2352, %v2448
      %2450 = vdwg.mxu0
      %v2451 = vand.u32 %v395, 4294901760
      %2452 = vmatpush.msra.mxu0 %v2451
      %v2453 = vand.u32 %v394, 4294901760
      %2454 = vmatpush.msra.mxu0 %v2453
      %v2455 = vand.u32 %v393, 4294901760
      %2456 = vmatpush.msra.mxu0 %v2455
      %v2457 = vand.u32 %v392, 4294901760
      %2458 = vmatpush.msra.mxu0 %v2457
      %v2459 = vand.u32 %v391, 4294901760
      %2460 = vmatpush.msra.mxu0 %v2459
      %v2461 = vand.u32 %v390, 4294901760
      %2462 = vmatpush.msra.mxu0 %v2461
      %v2463 = vand.u32 %v389, 4294901760
      %2464 = vmatpush.msra.mxu0 %v2463
      %v2465 = vand.u32 %v388, 4294901760
      %2466 = vmatpush.msra.mxu0 %v2465
      %v2467 = vand.u32 %v387, 4294901760
      %2468 = vmatpush.msra.mxu0 %v2467
      %v2469 = vand.u32 %v386, 4294901760
      %2470 = vmatpush.msra.mxu0 %v2469
      %v2471 = vand.u32 %v385, 4294901760
      %2472 = vmatpush.msra.mxu0 %v2471
      %v2473 = vand.u32 %v384, 4294901760
      %2474 = vmatpush.msra.mxu0 %v2473
      %v2475 = vand.u32 %v383, 4294901760
      %2476 = vmatpush.msra.mxu0 %v2475
      %v2477 = vand.u32 %v382, 4294901760
      %2478 = vmatpush.msra.mxu0 %v2477
      %v2479 = vand.u32 %v381, 4294901760
      %2480 = vmatpush.msra.mxu0 %v2479
      %v2481 = vand.u32 %v380, 4294901760
      %2482 = vmatpush.msra.mxu0 %v2481
      %v2483 = vand.u32 %v1947, 4294901760
      %2484 = vmatmul.f32.gmra.mxu0 %v2483
      %v2485 = vpop.f32.mrf.mxu0
      %v2486 = vadd.f32 %v2421, %v2485
      %v2487 = vand.u32 %v1948, 4294901760
      %2488 = vmatmul.f32.gmra.mxu0 %v2487
      %v2489 = vpop.f32.mrf.mxu0
      %v2490 = vadd.f32 %v2425, %v2489
      %v2491 = vand.u32 %v1949, 4294901760
      %2492 = vmatmul.f32.gmra.mxu0 %v2491
      %v2493 = vpop.f32.mrf.mxu0
      %v2494 = vadd.f32 %v2429, %v2493
      %v2495 = vand.u32 %v1950, 4294901760
      %2496 = vmatmul.f32.gmra.mxu0 %v2495
      %v2497 = vpop.f32.mrf.mxu0
      %v2498 = vadd.f32 %v2433, %v2497
      %v2499 = vand.u32 %v1951, 4294901760
      %2500 = vmatmul.f32.gmra.mxu0 %v2499
      %v2501 = vpop.f32.mrf.mxu0
      %v2502 = vadd.f32 %v2437, %v2501
      %v2503 = vand.u32 %v1952, 4294901760
      %2504 = vmatmul.f32.gmra.mxu0 %v2503
      %v2505 = vpop.f32.mrf.mxu0
      %v2506 = vadd.f32 %v2441, %v2505
      %v2507 = vand.u32 %v1953, 4294901760
      %2508 = vmatmul.f32.gmra.mxu0 %v2507
      %v2509 = vpop.f32.mrf.mxu0
      %v2510 = vadd.f32 %v2445, %v2509
      %v2511 = vand.u32 %v1954, 4294901760
      %2512 = vmatmul.f32.gmra.mxu0 %v2511
      %v2513 = vpop.f32.mrf.mxu0
      %v2514 = vadd.f32 %v2449, %v2513
      %2515 = vdwg.mxu0
      %v2516 = vmul.f32 %v2486, 0.2
      %v2517 = vmul.f32 %v2490, 0.2
      %v2518 = vmul.f32 %v2494, 0.2
      %v2519 = vmul.f32 %v2498, 0.2
      %v2520 = vmul.f32 %v2502, 0.2
      %v2521 = vmul.f32 %v2506, 0.2
      %v2522 = vmul.f32 %v2510, 0.2
      %v2523 = vmul.f32 %v2514, 0.2
      %v2524 = vmax.f32 %v2486, %v2516
      %v2525 = vmax.f32 %v2490, %v2517
      %v2526 = vmax.f32 %v2494, %v2518
      %v2527 = vmax.f32 %v2498, %v2519
      %v2528 = vmax.f32 %v2502, %v2520
      %v2529 = vmax.f32 %v2506, %v2521
      %v2530 = vmax.f32 %v2510, %v2522
      %v2531 = vmax.f32 %v2514, %v2523
      %v2532 = vld [vmem:[%s3] sm:$0xff]
      %v2533 = vld [vmem:[%s3 + $0x8] sm:$0xff]
      %v2534 = vld [vmem:[%s3 + $0x10] sm:$0xff]
      %v2535 = vld [vmem:[%s3 + $0x18] sm:$0xff]
      %v2536 = vld [vmem:[%s3 + $0x20] sm:$0xff]
      %v2537 = vld [vmem:[%s3 + $0x28] sm:$0xff]
      %v2538 = vld [vmem:[%s3 + $0x30] sm:$0xff]
      %v2539 = vld [vmem:[%s3 + $0x38] sm:$0xff]
      %v2540 = vld [vmem:[%s3 + $0x40] sm:$0xff]
      %v2541 = vld [vmem:[%s3 + $0x48] sm:$0xff]
      %v2542 = vld [vmem:[%s3 + $0x50] sm:$0xff]
      %v2543 = vld [vmem:[%s3 + $0x58] sm:$0xff]
      %v2544 = vld [vmem:[%s3 + $0x60] sm:$0xff]
      %v2545 = vld [vmem:[%s3 + $0x68] sm:$0xff]
      %v2546 = vld [vmem:[%s3 + $0x70] sm:$0xff]
      %v2547 = vld [vmem:[%s3 + $0x78] sm:$0xff]
      %v2548 = vld [vmem:[%s3 + $0x80] sm:$0xff]
      %v2549 = vld [vmem:[%s3 + $0x88] sm:$0xff]
      %v2550 = vld [vmem:[%s3 + $0x90] sm:$0xff]
      %v2551 = vld [vmem:[%s3 + $0x98] sm:$0xff]
      %v2552 = vld [vmem:[%s3 + $0xa0] sm:$0xff]
      %v2553 = vld [vmem:[%s3 + $0xa8] sm:$0xff]
      %v2554 = vld [vmem:[%s3 + $0xb0] sm:$0xff]
      %v2555 = vld [vmem:[%s3 + $0xb8] sm:$0xff]
      %v2556 = vld [vmem:[%s3 + $0xc0] sm:$0xff]
      %v2557 = vld [vmem:[%s3 + $0xc8] sm:$0xff]
      %v2558 = vld [vmem:[%s3 + $0xd0] sm:$0xff]
      %v2559 = vld [vmem:[%s3 + $0xd8] sm:$0xff]
      %v2560 = vld [vmem:[%s3 + $0xe0] sm:$0xff]
      %v2561 = vld [vmem:[%s3 + $0xe8] sm:$0xff]
      %v2562 = vld [vmem:[%s3 + $0xf0] sm:$0xff]
      %v2563 = vld [vmem:[%s3 + $0xf8] sm:$0xff]
      %v2564 = vld [vmem:[%s4] sm:$0x1]
      %v2573 = vrot.slane %v2525, 1
      %v2574 = vrot.slane %v2524, 1
      %v2575 = vrot.slane %v2526, 1
      %v2576 = vrot.slane %v2527, 1
      %v2577 = vrot.slane %v2528, 1
      %v2578 = vrot.slane %v2529, 1
      %v2579 = vrot.slane %v2530, 1
      %v2580 = vrot.slane %v2531, 1
      %v2589 = vrot.slane %v2525, 7
      %v2590 = vrot.slane %v2524, 7
      %v2591 = vrot.slane %v2526, 7
      %v2592 = vrot.slane %v2527, 7
      %v2593 = vrot.slane %v2528, 7
      %v2594 = vrot.slane %v2529, 7
      %v2595 = vrot.slane %v2530, 7
      %v2596 = vrot.slane %v2531, 7
      %v2605 = vrot.slane %v2525, 5
      %v2606 = vrot.slane %v2524, 5
      %v2607 = vrot.slane %v2526, 5
      %v2608 = vrot.slane %v2527, 5
      %v2609 = vrot.slane %v2528, 5
      %v2610 = vrot.slane %v2529, 5
      %v2611 = vrot.slane %v2530, 5
      %v2612 = vrot.slane %v2531, 5
      %v2621 = vsel %vm461, %v2573, %v2589
      %v2622 = vsel %vm461, %v2574, %v2590
      %v2623 = vsel %vm461, %v2575, %v2591
      %v2624 = vsel %vm461, %v2576, %v2592
      %v2625 = vsel %vm461, %v2577, %v2593
      %v2626 = vsel %vm461, %v2578, %v2594
      %v2627 = vsel %vm461, %v2579, %v2595
      %v2628 = vsel %vm461, %v2580, %v2596
      %v2629 = vsel %vm461, %v2589, %v2605
      %v2630 = vsel %vm461, %v2590, %v2606
      %v2631 = vsel %vm461, %v2591, %v2607
      %v2632 = vsel %vm461, %v2592, %v2608
      %v2633 = vsel %vm461, %v2593, %v2609
      %v2634 = vsel %vm461, %v2594, %v2610
      %v2635 = vsel %vm461, %v2595, %v2611
      %v2636 = vsel %vm461, %v2596, %v2612
      %v2653 = vrot.slane %v2621, 2
      %v2654 = vrot.slane %v2621, 4
      %v2655 = vrot.slane %v2621, 6
      %v2656 = vrot.slane %v2622, 2
      %v2657 = vrot.slane %v2622, 4
      %v2658 = vrot.slane %v2622, 6
      %v2659 = vrot.slane %v2623, 2
      %v2660 = vrot.slane %v2623, 4
      %v2661 = vrot.slane %v2623, 6
      %v2662 = vrot.slane %v2624, 2
      %v2663 = vrot.slane %v2624, 4
      %v2664 = vrot.slane %v2624, 6
      %v2665 = vrot.slane %v2625, 2
      %v2666 = vrot.slane %v2625, 4
      %v2667 = vrot.slane %v2625, 6
      %v2668 = vrot.slane %v2626, 2
      %v2669 = vrot.slane %v2626, 4
      %v2670 = vrot.slane %v2626, 6
      %v2671 = vrot.slane %v2627, 2
      %v2672 = vrot.slane %v2627, 4
      %v2673 = vrot.slane %v2627, 6
      %v2674 = vrot.slane %v2628, 2
      %v2675 = vrot.slane %v2628, 4
      %v2676 = vrot.slane %v2628, 6
      %v2677 = vperm.slane %v2621, 0
      %v2678 = vperm.slane %v2653, 0
      %v2679 = vperm.slane %v2654, 0
      %v2680 = vperm.slane %v2655, 0
      %v2681 = vperm.slane %v2624, 0
      %v2682 = vperm.slane %v2662, 0
      %v2683 = vperm.slane %v2663, 0
      %v2684 = vperm.slane %v2664, 0
      %v2685 = vperm.slane %v2626, 0
      %v2686 = vperm.slane %v2668, 0
      %v2687 = vperm.slane %v2669, 0
      %v2688 = vperm.slane %v2670, 0
      %v2689 = vsel %vm790, %v2678, %v2677
      %v2690 = vsel %vm792, %v2679, %v2689
      %v2691 = vsel %vm794, %v2680, %v2690
      %v2692 = vsel %vm790, %v2682, %v2681
      %v2693 = vsel %vm792, %v2683, %v2692
      %v2694 = vsel %vm794, %v2684, %v2693
      %v2695 = vsel %vm790, %v2686, %v2685
      %v2696 = vsel %vm792, %v2687, %v2695
      %v2697 = vsel %vm794, %v2688, %v2696
      %v2701 = vperm.slane %v2621, 1
      %v2702 = vperm.slane %v2653, 1
      %v2703 = vperm.slane %v2654, 1
      %v2704 = vperm.slane %v2655, 1
      %v2705 = vperm.slane %v2624, 1
      %v2706 = vperm.slane %v2662, 1
      %v2707 = vperm.slane %v2663, 1
      %v2708 = vperm.slane %v2664, 1
      %v2709 = vperm.slane %v2626, 1
      %v2710 = vperm.slane %v2668, 1
      %v2711 = vperm.slane %v2669, 1
      %v2712 = vperm.slane %v2670, 1
      %v2713 = vsel %vm790, %v2702, %v2701
      %v2714 = vsel %vm792, %v2703, %v2713
      %v2715 = vsel %vm794, %v2704, %v2714
      %v2716 = vsel %vm790, %v2706, %v2705
      %v2717 = vsel %vm792, %v2707, %v2716
      %v2718 = vsel %vm794, %v2708, %v2717
      %v2719 = vsel %vm790, %v2710, %v2709
      %v2720 = vsel %vm792, %v2711, %v2719
      %v2721 = vsel %vm794, %v2712, %v2720
      %2722 = vrot.lane.b32.xlu0 %v2715, 16
      %v2723 = vpop.permute.xlu0 %2722
      %2724 = vrot.lane.b32.xlu0 %v2718, 16
      %v2725 = vpop.permute.xlu0 %2724
      %2726 = vrot.lane.b32.xlu0 %v2721, 16
      %v2727 = vpop.permute.xlu0 %2726
      %v2731 = vperm.slane %v2629, 0
      %v2732 = vperm.slane %v2632, 0
      %v2733 = vperm.slane %v2634, 0
      %v2734 = vsel %vm790, %v2679, %v2678
      %v2735 = vsel %vm792, %v2680, %v2734
      %v2736 = vsel %vm794, %v2731, %v2735
      %v2737 = vsel %vm790, %v2683, %v2682
      %v2738 = vsel %vm792, %v2684, %v2737
      %v2739 = vsel %vm794, %v2732, %v2738
      %v2740 = vsel %vm790, %v2687, %v2686
      %v2741 = vsel %vm792, %v2688, %v2740
      %v2742 = vsel %vm794, %v2733, %v2741
      %2743 = vrot.lane.b32.xlu0 %v2736, 32
      %v2744 = vpop.permute.xlu0 %2743
      %2745 = vrot.lane.b32.xlu0 %v2739, 32
      %v2746 = vpop.permute.xlu0 %2745
      %2747 = vrot.lane.b32.xlu0 %v2742, 32
      %v2748 = vpop.permute.xlu0 %2747
      %v2752 = vperm.slane %v2629, 1
      %v2753 = vperm.slane %v2632, 1
      %v2754 = vperm.slane %v2634, 1
      %v2755 = vsel %vm790, %v2703, %v2702
      %v2756 = vsel %vm792, %v2704, %v2755
      %v2757 = vsel %vm794, %v2752, %v2756
      %v2758 = vsel %vm790, %v2707, %v2706
      %v2759 = vsel %vm792, %v2708, %v2758
      %v2760 = vsel %vm794, %v2753, %v2759
      %v2761 = vsel %vm790, %v2711, %v2710
      %v2762 = vsel %vm792, %v2712, %v2761
      %v2763 = vsel %vm794, %v2754, %v2762
      %2764 = vrot.lane.b32.xlu0 %v2757, 48
      %v2765 = vpop.permute.xlu0 %2764
      %2766 = vrot.lane.b32.xlu0 %v2760, 48
      %v2767 = vpop.permute.xlu0 %2766
      %2768 = vrot.lane.b32.xlu0 %v2763, 48
      %v2769 = vpop.permute.xlu0 %2768
      %v2773 = vperm.slane %v2622, 0
      %v2774 = vperm.slane %v2656, 0
      %v2775 = vperm.slane %v2657, 0
      %v2776 = vperm.slane %v2658, 0
      %v2777 = vperm.slane %v2623, 0
      %v2778 = vperm.slane %v2659, 0
      %v2779 = vperm.slane %v2660, 0
      %v2780 = vperm.slane %v2661, 0
      %v2781 = vperm.slane %v2625, 0
      %v2782 = vperm.slane %v2665, 0
      %v2783 = vperm.slane %v2666, 0
      %v2784 = vperm.slane %v2667, 0
      %v2785 = vperm.slane %v2627, 0
      %v2786 = vperm.slane %v2671, 0
      %v2787 = vperm.slane %v2672, 0
      %v2788 = vperm.slane %v2673, 0
      %v2789 = vsel %vm790, %v2774, %v2773
      %v2790 = vsel %vm792, %v2775, %v2789
      %v2791 = vsel %vm794, %v2776, %v2790
      %v2792 = vsel %vm790, %v2778, %v2777
      %v2793 = vsel %vm792, %v2779, %v2792
      %v2794 = vsel %vm794, %v2780, %v2793
      %v2795 = vsel %vm790, %v2782, %v2781
      %v2796 = vsel %vm792, %v2783, %v2795
      %v2797 = vsel %vm794, %v2784, %v2796
      %v2798 = vsel %vm790, %v2786, %v2785
      %v2799 = vsel %vm792, %v2787, %v2798
      %v2800 = vsel %vm794, %v2788, %v2799
      %2801 = vrot.lane.b32.xlu0 %v2791, 64
      %v2802 = vpop.permute.xlu0 %2801
      %2803 = vrot.lane.b32.xlu0 %v2794, 64
      %v2804 = vpop.permute.xlu0 %2803
      %2805 = vrot.lane.b32.xlu0 %v2797, 64
      %v2806 = vpop.permute.xlu0 %2805
      %2807 = vrot.lane.b32.xlu0 %v2800, 64
      %v2808 = vpop.permute.xlu0 %2807
      %v2813 = vperm.slane %v2622, 1
      %v2814 = vperm.slane %v2656, 1
      %v2815 = vperm.slane %v2657, 1
      %v2816 = vperm.slane %v2658, 1
      %v2817 = vperm.slane %v2623, 1
      %v2818 = vperm.slane %v2659, 1
      %v2819 = vperm.slane %v2660, 1
      %v2820 = vperm.slane %v2661, 1
      %v2821 = vperm.slane %v2625, 1
      %v2822 = vperm.slane %v2665, 1
      %v2823 = vperm.slane %v2666, 1
      %v2824 = vperm.slane %v2667, 1
      %v2825 = vperm.slane %v2627, 1
      %v2826 = vperm.slane %v2671, 1
      %v2827 = vperm.slane %v2672, 1
      %v2828 = vperm.slane %v2673, 1
      %v2829 = vsel %vm790, %v2814, %v2813
      %v2830 = vsel %vm792, %v2815, %v2829
      %v2831 = vsel %vm794, %v2816, %v2830
      %v2832 = vsel %vm790, %v2818, %v2817
      %v2833 = vsel %vm792, %v2819, %v2832
      %v2834 = vsel %vm794, %v2820, %v2833
      %v2835 = vsel %vm790, %v2822, %v2821
      %v2836 = vsel %vm792, %v2823, %v2835
      %v2837 = vsel %vm794, %v2824, %v2836
      %v2838 = vsel %vm790, %v2826, %v2825
      %v2839 = vsel %vm792, %v2827, %v2838
      %v2840 = vsel %vm794, %v2828, %v2839
      %2841 = vrot.lane.b32.xlu0 %v2831, 80
      %v2842 = vpop.permute.xlu0 %2841
      %2843 = vrot.lane.b32.xlu0 %v2834, 80
      %v2844 = vpop.permute.xlu0 %2843
      %2845 = vrot.lane.b32.xlu0 %v2837, 80
      %v2846 = vpop.permute.xlu0 %2845
      %2847 = vrot.lane.b32.xlu0 %v2840, 80
      %v2848 = vpop.permute.xlu0 %2847
      %v2853 = vperm.slane %v2630, 0
      %v2854 = vperm.slane %v2631, 0
      %v2855 = vperm.slane %v2633, 0
      %v2856 = vperm.slane %v2635, 0
      %v2857 = vsel %vm790, %v2775, %v2774
      %v2858 = vsel %vm792, %v2776, %v2857
      %v2859 = vsel %vm794, %v2853, %v2858
      %v2860 = vsel %vm790, %v2779, %v2778
      %v2861 = vsel %vm792, %v2780, %v2860
      %v2862 = vsel %vm794, %v2854, %v2861
      %v2863 = vsel %vm790, %v2783, %v2782
      %v2864 = vsel %vm792, %v2784, %v2863
      %v2865 = vsel %vm794, %v2855, %v2864
      %v2866 = vsel %vm790, %v2787, %v2786
      %v2867 = vsel %vm792, %v2788, %v2866
      %v2868 = vsel %vm794, %v2856, %v2867
      %2869 = vrot.lane.b32.xlu0 %v2859, 96
      %v2870 = vpop.permute.xlu0 %2869
      %2871 = vrot.lane.b32.xlu0 %v2862, 96
      %v2872 = vpop.permute.xlu0 %2871
      %2873 = vrot.lane.b32.xlu0 %v2865, 96
      %v2874 = vpop.permute.xlu0 %2873
      %2875 = vrot.lane.b32.xlu0 %v2868, 96
      %v2876 = vpop.permute.xlu0 %2875
      %v2881 = vperm.slane %v2630, 1
      %v2882 = vperm.slane %v2631, 1
      %v2883 = vperm.slane %v2633, 1
      %v2884 = vperm.slane %v2635, 1
      %v2885 = vsel %vm790, %v2815, %v2814
      %v2886 = vsel %vm792, %v2816, %v2885
      %v2887 = vsel %vm794, %v2881, %v2886
      %v2888 = vsel %vm790, %v2819, %v2818
      %v2889 = vsel %vm792, %v2820, %v2888
      %v2890 = vsel %vm794, %v2882, %v2889
      %v2891 = vsel %vm790, %v2823, %v2822
      %v2892 = vsel %vm792, %v2824, %v2891
      %v2893 = vsel %vm794, %v2883, %v2892
      %v2894 = vsel %vm790, %v2827, %v2826
      %v2895 = vsel %vm792, %v2828, %v2894
      %v2896 = vsel %vm794, %v2884, %v2895
      %2897 = vrot.lane.b32.xlu0 %v2887, 112
      %v2898 = vpop.permute.xlu0 %2897
      %2899 = vrot.lane.b32.xlu0 %v2890, 112
      %v2900 = vpop.permute.xlu0 %2899
      %2901 = vrot.lane.b32.xlu0 %v2893, 112
      %v2902 = vpop.permute.xlu0 %2901
      %2903 = vrot.lane.b32.xlu0 %v2896, 112
      %v2904 = vpop.permute.xlu0 %2903
      %v2909 = vperm.slane %v2628, 0
      %v2910 = vperm.slane %v2674, 0
      %v2911 = vperm.slane %v2675, 0
      %v2912 = vperm.slane %v2676, 0
      %v2913 = vsel %vm790, %v2910, %v2909
      %v2914 = vsel %vm792, %v2911, %v2913
      %v2915 = vsel %vm794, %v2912, %v2914
      %v2917 = vperm.slane %v2628, 1
      %v2918 = vperm.slane %v2674, 1
      %v2919 = vperm.slane %v2675, 1
      %v2920 = vperm.slane %v2676, 1
      %v2921 = vsel %vm790, %v2918, %v2917
      %v2922 = vsel %vm792, %v2919, %v2921
      %v2923 = vsel %vm794, %v2920, %v2922
      %2924 = vrot.lane.b32.xlu0 %v2923, 16
      %v2925 = vpop.permute.xlu0 %2924
      %v2927 = vperm.slane %v2636, 0
      %v2928 = vsel %vm790, %v2911, %v2910
      %v2929 = vsel %vm792, %v2912, %v2928
      %v2930 = vsel %vm794, %v2927, %v2929
      %2931 = vrot.lane.b32.xlu0 %v2930, 32
      %v2932 = vpop.permute.xlu0 %2931
      %v2934 = vperm.slane %v2636, 1
      %v2935 = vsel %vm790, %v2919, %v2918
      %v2936 = vsel %vm792, %v2920, %v2935
      %v2937 = vsel %vm794, %v2934, %v2936
      %2938 = vrot.lane.b32.xlu0 %v2937, 48
      %v2939 = vpop.permute.xlu0 %2938
      %v2941 = vsel %vm1831, %v2691, %v2723
      %v2942 = vsel %vm1831, %v2694, %v2725
      %v2943 = vsel %vm1831, %v2697, %v2727
      %v2944 = vsel %vm1847, %v2941, %v2744
      %v2945 = vsel %vm1847, %v2942, %v2746
      %v2946 = vsel %vm1847, %v2943, %v2748
      %v2947 = vsel %vm1865, %v2944, %v2765
      %v2948 = vsel %vm1865, %v2945, %v2767
      %v2949 = vsel %vm1865, %v2946, %v2769
      %v2950 = vsel %vm1883, %v2947, %v2802
      %v2951 = vsel %vm1883, %v2947, %v2804
      %v2952 = vsel %vm1883, %v2948, %v2806
      %v2953 = vsel %vm1883, %v2949, %v2808
      %v2954 = vsel %vm1901, %v2950, %v2842
      %v2955 = vsel %vm1901, %v2951, %v2844
      %v2956 = vsel %vm1901, %v2952, %v2846
      %v2957 = vsel %vm1901, %v2953, %v2848
      %v2958 = vsel %vm1919, %v2954, %v2870
      %v2959 = vsel %vm1919, %v2955, %v2872
      %v2960 = vsel %vm1919, %v2956, %v2874
      %v2961 = vsel %vm1919, %v2957, %v2876
      %v2962 = vsel %vm1937, %v2958, %v2898
      %v2963 = vsel %vm1937, %v2959, %v2900
      %v2964 = vsel %vm1937, %v2960, %v2902
      %v2965 = vsel %vm1937, %v2961, %v2904
      %v2966 = vsel %vm1831, %v2915, %v2925
      %v2967 = vsel %vm1847, %v2966, %v2932
      %v2968 = vsel %vm1865, %v2967, %v2939
      %v2969 = vsel %vm1883, %v2968, %v2808
      %v2970 = vsel %vm1901, %v2969, %v2848
      %v2971 = vsel %vm1919, %v2970, %v2876
      %v2972 = vsel %vm1937, %v2971, %v2904
      %v2978 = vrot.slane %v2963, 4
      %v2979 = vrot.slane %v2964, 4
      %v2980 = vrot.slane %v2965, 4
      %v2981 = vrot.slane %v2972, 4
      %vm2982 = vcmask 1043456
      %v2983 = vsel %vm2982, %v2962, %v2978
      %v2984 = vsel %vm2982, %v2963, %v2979
      %v2985 = vsel %vm2982, %v2964, %v2980
      %v2986 = vsel %vm2982, %v2965, %v2981
      %v2988 = vperm.slane %v2564, 0
      %2990 = vst [vmem:[#allocation1] ss:$2 sm:$0xff] %v2983
      %s2991 = scalar_lea.vmem [#allocation1], 1
      %2992 = vst [vmem:[%s2991] ss:$2 sm:$0xff] %v2984
      %s2993 = scalar_lea.vmem [#allocation1], 16
      %2994 = vst [vmem:[%s2993] ss:$2 sm:$0xff] %v2985
      %s2995 = scalar_lea.vmem [#allocation1], 17
      %2996 = vst [vmem:[%s2995] ss:$2 sm:$0xff] %v2986
      %v2997 = vld.sshfl [vmem:[#allocation1] sm:$0xff pattern:$0x75316420]
      %v2998 = vld.sshfl [vmem:[#allocation1 + $0x8] sm:$0xff pattern:$0x75316420]
      %v2999 = vld.sshfl [vmem:[#allocation1 + $0x10] sm:$0xff pattern:$0x75316420]
      %v3000 = vld.sshfl [vmem:[#allocation1 + $0x18] sm:$0xff pattern:$0x75316420]
      %v3005 = vand.u32 %v2547, 4294901760
      %3006 = vmatpush.msra.mxu0 %v3005
      %v3007 = vand.u32 %v2546, 4294901760
      %3008 = vmatpush.msra.mxu0 %v3007
      %v3009 = vand.u32 %v2545, 4294901760
      %3010 = vmatpush.msra.mxu0 %v3009
      %v3011 = vand.u32 %v2544, 4294901760
      %3012 = vmatpush.msra.mxu0 %v3011
      %v3013 = vand.u32 %v2543, 4294901760
      %3014 = vmatpush.msra.mxu0 %v3013
      %v3015 = vand.u32 %v2542, 4294901760
      %3016 = vmatpush.msra.mxu0 %v3015
      %v3017 = vand.u32 %v2541, 4294901760
      %3018 = vmatpush.msra.mxu0 %v3017
      %v3019 = vand.u32 %v2540, 4294901760
      %3020 = vmatpush.msra.mxu0 %v3019
      %v3021 = vand.u32 %v2539, 4294901760
      %3022 = vmatpush.msra.mxu0 %v3021
      %v3023 = vand.u32 %v2538, 4294901760
      %3024 = vmatpush.msra.mxu0 %v3023
      %v3025 = vand.u32 %v2537, 4294901760
      %3026 = vmatpush.msra.mxu0 %v3025
      %v3027 = vand.u32 %v2536, 4294901760
      %3028 = vmatpush.msra.mxu0 %v3027
      %v3029 = vand.u32 %v2535, 4294901760
      %3030 = vmatpush.msra.mxu0 %v3029
      %v3031 = vand.u32 %v2534, 4294901760
      %3032 = vmatpush.msra.mxu0 %v3031
      %v3033 = vand.u32 %v2533, 4294901760
      %3034 = vmatpush.msra.mxu0 %v3033
      %v3035 = vand.u32 %v2532, 4294901760
      %3036 = vmatpush.msra.mxu0 %v3035
      %v3037 = vand.u32 %v2997, 4294901760
      %v3038 = vsub.f32 %v2997, %v3037
      %v3039 = vand.u32 %v3038, 4294901760
      %v3040 = vsub.f32 %v3038, %v3039
      %v3041 = vand.u32 %v3040, 4294901760
      %3042 = vmatmul.f32.gmra.mxu0 %v3041
      %v3043 = vpop.f32.mrf.mxu0
      %v3044 = vadd.f32 %v2988, %v3043
      %v3045 = vand.u32 %v2999, 4294901760
      %v3046 = vsub.f32 %v2999, %v3045
      %v3047 = vand.u32 %v3046, 4294901760
      %v3048 = vsub.f32 %v3046, %v3047
      %v3049 = vand.u32 %v3048, 4294901760
      %3050 = vmatmul.f32.gmra.mxu0 %v3049
      %v3051 = vpop.f32.mrf.mxu0
      %v3052 = vadd.f32 %v2988, %v3051
      %3053 = vdwg.mxu0
      %v3054 = vand.u32 %v2547, 4294901760
      %v3055 = vsub.f32 %v2547, %v3054
      %v3056 = vand.u32 %v3055, 4294901760
      %v3057 = vsub.f32 %v3055, %v3056
      %v3058 = vand.u32 %v3057, 4294901760
      %3059 = vmatpush.msra.mxu0 %v3058
      %v3060 = vand.u32 %v2546, 4294901760
      %v3061 = vsub.f32 %v2546, %v3060
      %v3062 = vand.u32 %v3061, 4294901760
      %v3063 = vsub.f32 %v3061, %v3062
      %v3064 = vand.u32 %v3063, 4294901760
      %3065 = vmatpush.msra.mxu0 %v3064
      %v3066 = vand.u32 %v2545, 4294901760
      %v3067 = vsub.f32 %v2545, %v3066
      %v3068 = vand.u32 %v3067, 4294901760
      %v3069 = vsub.f32 %v3067, %v3068
      %v3070 = vand.u32 %v3069, 4294901760
      %3071 = vmatpush.msra.mxu0 %v3070
      %v3072 = vand.u32 %v2544, 4294901760
      %v3073 = vsub.f32 %v2544, %v3072
      %v3074 = vand.u32 %v3073, 4294901760
      %v3075 = vsub.f32 %v3073, %v3074
      %v3076 = vand.u32 %v3075, 4294901760
      %3077 = vmatpush.msra.mxu0 %v3076
      %v3078 = vand.u32 %v2543, 4294901760
      %v3079 = vsub.f32 %v2543, %v3078
      %v3080 = vand.u32 %v3079, 4294901760
      %v3081 = vsub.f32 %v3079, %v3080
      %v3082 = vand.u32 %v3081, 4294901760
      %3083 = vmatpush.msra.mxu0 %v3082
      %v3084 = vand.u32 %v2542, 4294901760
      %v3085 = vsub.f32 %v2542, %v3084
      %v3086 = vand.u32 %v3085, 4294901760
      %v3087 = vsub.f32 %v3085, %v3086
      %v3088 = vand.u32 %v3087, 4294901760
      %3089 = vmatpush.msra.mxu0 %v3088
      %v3090 = vand.u32 %v2541, 4294901760
      %v3091 = vsub.f32 %v2541, %v3090
      %v3092 = vand.u32 %v3091, 4294901760
      %v3093 = vsub.f32 %v3091, %v3092
      %v3094 = vand.u32 %v3093, 4294901760
      %3095 = vmatpush.msra.mxu0 %v3094
      %v3096 = vand.u32 %v2540, 4294901760
      %v3097 = vsub.f32 %v2540, %v3096
      %v3098 = vand.u32 %v3097, 4294901760
      %v3099 = vsub.f32 %v3097, %v3098
      %v3100 = vand.u32 %v3099, 4294901760
      %3101 = vmatpush.msra.mxu0 %v3100
      %v3102 = vand.u32 %v2539, 4294901760
      %v3103 = vsub.f32 %v2539, %v3102
      %v3104 = vand.u32 %v3103, 4294901760
      %v3105 = vsub.f32 %v3103, %v3104
      %v3106 = vand.u32 %v3105, 4294901760
      %3107 = vmatpush.msra.mxu0 %v3106
      %v3108 = vand.u32 %v2538, 4294901760
      %v3109 = vsub.f32 %v2538, %v3108
      %v3110 = vand.u32 %v3109, 4294901760
      %v3111 = vsub.f32 %v3109, %v3110
      %v3112 = vand.u32 %v3111, 4294901760
      %3113 = vmatpush.msra.mxu0 %v3112
      %v3114 = vand.u32 %v2537, 4294901760
      %v3115 = vsub.f32 %v2537, %v3114
      %v3116 = vand.u32 %v3115, 4294901760
      %v3117 = vsub.f32 %v3115, %v3116
      %v3118 = vand.u32 %v3117, 4294901760
      %3119 = vmatpush.msra.mxu0 %v3118
      %v3120 = vand.u32 %v2536, 4294901760
      %v3121 = vsub.f32 %v2536, %v3120
      %v3122 = vand.u32 %v3121, 4294901760
      %v3123 = vsub.f32 %v3121, %v3122
      %v3124 = vand.u32 %v3123, 4294901760
      %3125 = vmatpush.msra.mxu0 %v3124
      %v3126 = vand.u32 %v2535, 4294901760
      %v3127 = vsub.f32 %v2535, %v3126
      %v3128 = vand.u32 %v3127, 4294901760
      %v3129 = vsub.f32 %v3127, %v3128
      %v3130 = vand.u32 %v3129, 4294901760
      %3131 = vmatpush.msra.mxu0 %v3130
      %v3132 = vand.u32 %v2534, 4294901760
      %v3133 = vsub.f32 %v2534, %v3132
      %v3134 = vand.u32 %v3133, 4294901760
      %v3135 = vsub.f32 %v3133, %v3134
      %v3136 = vand.u32 %v3135, 4294901760
      %3137 = vmatpush.msra.mxu0 %v3136
      %v3138 = vand.u32 %v2533, 4294901760
      %v3139 = vsub.f32 %v2533, %v3138
      %v3140 = vand.u32 %v3139, 4294901760
      %v3141 = vsub.f32 %v3139, %v3140
      %v3142 = vand.u32 %v3141, 4294901760
      %3143 = vmatpush.msra.mxu0 %v3142
      %v3144 = vand.u32 %v2532, 4294901760
      %v3145 = vsub.f32 %v2532, %v3144
      %v3146 = vand.u32 %v3145, 4294901760
      %v3147 = vsub.f32 %v3145, %v3146
      %v3148 = vand.u32 %v3147, 4294901760
      %3149 = vmatpush.msra.mxu0 %v3148
      %v3150 = vand.u32 %v2997, 4294901760
      %3151 = vmatmul.f32.gmra.mxu0 %v3150
      %v3152 = vpop.f32.mrf.mxu0
      %v3153 = vadd.f32 %v3044, %v3152
      %v3154 = vand.u32 %v2999, 4294901760
      %3155 = vmatmul.f32.gmra.mxu0 %v3154
      %v3156 = vpop.f32.mrf.mxu0
      %v3157 = vadd.f32 %v3052, %v3156
      %3158 = vdwg.mxu0
      %v3159 = vand.u32 %v2547, 4294901760
      %v3160 = vsub.f32 %v2547, %v3159
      %3161 = vmatpush.msra.mxu0 %v3160
      %v3162 = vand.u32 %v2546, 4294901760
      %v3163 = vsub.f32 %v2546, %v3162
      %3164 = vmatpush.msra.mxu0 %v3163
      %v3165 = vand.u32 %v2545, 4294901760
      %v3166 = vsub.f32 %v2545, %v3165
      %3167 = vmatpush.msra.mxu0 %v3166
      %v3168 = vand.u32 %v2544, 4294901760
      %v3169 = vsub.f32 %v2544, %v3168
      %3170 = vmatpush.msra.mxu0 %v3169
      %v3171 = vand.u32 %v2543, 4294901760
      %v3172 = vsub.f32 %v2543, %v3171
      %3173 = vmatpush.msra.mxu0 %v3172
      %v3174 = vand.u32 %v2542, 4294901760
      %v3175 = vsub.f32 %v2542, %v3174
      %3176 = vmatpush.msra.mxu0 %v3175
      %v3177 = vand.u32 %v2541, 4294901760
      %v3178 = vsub.f32 %v2541, %v3177
      %3179 = vmatpush.msra.mxu0 %v3178
      %v3180 = vand.u32 %v2540, 4294901760
      %v3181 = vsub.f32 %v2540, %v3180
      %3182 = vmatpush.msra.mxu0 %v3181
      %v3183 = vand.u32 %v2539, 4294901760
      %v3184 = vsub.f32 %v2539, %v3183
      %3185 = vmatpush.msra.mxu0 %v3184
      %v3186 = vand.u32 %v2538, 4294901760
      %v3187 = vsub.f32 %v2538, %v3186
      %3188 = vmatpush.msra.mxu0 %v3187
      %v3189 = vand.u32 %v2537, 4294901760
      %v3190 = vsub.f32 %v2537, %v3189
      %3191 = vmatpush.msra.mxu0 %v3190
      %v3192 = vand.u32 %v2536, 4294901760
      %v3193 = vsub.f32 %v2536, %v3192
      %3194 = vmatpush.msra.mxu0 %v3193
      %v3195 = vand.u32 %v2535, 4294901760
      %v3196 = vsub.f32 %v2535, %v3195
      %3197 = vmatpush.msra.mxu0 %v3196
      %v3198 = vand.u32 %v2534, 4294901760
      %v3199 = vsub.f32 %v2534, %v3198
      %3200 = vmatpush.msra.mxu0 %v3199
      %v3201 = vand.u32 %v2533, 4294901760
      %v3202 = vsub.f32 %v2533, %v3201
      %3203 = vmatpush.msra.mxu0 %v3202
      %v3204 = vand.u32 %v2532, 4294901760
      %v3205 = vsub.f32 %v2532, %v3204
      %3206 = vmatpush.msra.mxu0 %v3205
      %v3207 = vand.u32 %v2997, 4294901760
      %v3208 = vsub.f32 %v2997, %v3207
      %3209 = vmatmul.f32.gmra.mxu0 %v3208
      %v3210 = vpop.f32.mrf.mxu0
      %v3211 = vadd.f32 %v3153, %v3210
      %v3212 = vand.u32 %v2999, 4294901760
      %v3213 = vsub.f32 %v2999, %v3212
      %3214 = vmatmul.f32.gmra.mxu0 %v3213
      %v3215 = vpop.f32.mrf.mxu0
      %v3216 = vadd.f32 %v3157, %v3215
      %3217 = vdwg.mxu0
      %v3218 = vand.u32 %v2547, 4294901760
      %3219 = vmatpush.msra.mxu0 %v3218
      %v3220 = vand.u32 %v2546, 4294901760
      %3221 = vmatpush.msra.mxu0 %v3220
      %v3222 = vand.u32 %v2545, 4294901760
      %3223 = vmatpush.msra.mxu0 %v3222
      %v3224 = vand.u32 %v2544, 4294901760
      %3225 = vmatpush.msra.mxu0 %v3224
      %v3226 = vand.u32 %v2543, 4294901760
      %3227 = vmatpush.msra.mxu0 %v3226
      %v3228 = vand.u32 %v2542, 4294901760
      %3229 = vmatpush.msra.mxu0 %v3228
      %v3230 = vand.u32 %v2541, 4294901760
      %3231 = vmatpush.msra.mxu0 %v3230
      %v3232 = vand.u32 %v2540, 4294901760
      %3233 = vmatpush.msra.mxu0 %v3232
      %v3234 = vand.u32 %v2539, 4294901760
      %3235 = vmatpush.msra.mxu0 %v3234
      %v3236 = vand.u32 %v2538, 4294901760
      %3237 = vmatpush.msra.mxu0 %v3236
      %v3238 = vand.u32 %v2537, 4294901760
      %3239 = vmatpush.msra.mxu0 %v3238
      %v3240 = vand.u32 %v2536, 4294901760
      %3241 = vmatpush.msra.mxu0 %v3240
      %v3242 = vand.u32 %v2535, 4294901760
      %3243 = vmatpush.msra.mxu0 %v3242
      %v3244 = vand.u32 %v2534, 4294901760
      %3245 = vmatpush.msra.mxu0 %v3244
      %v3246 = vand.u32 %v2533, 4294901760
      %3247 = vmatpush.msra.mxu0 %v3246
      %v3248 = vand.u32 %v2532, 4294901760
      %3249 = vmatpush.msra.mxu0 %v3248
      %v3250 = vand.u32 %v2997, 4294901760
      %v3251 = vsub.f32 %v2997, %v3250
      %v3252 = vand.u32 %v3251, 4294901760
      %3253 = vmatmul.f32.gmra.mxu0 %v3252
      %v3254 = vpop.f32.mrf.mxu0
      %v3255 = vadd.f32 %v3211, %v3254
      %v3256 = vand.u32 %v2999, 4294901760
      %v3257 = vsub.f32 %v2999, %v3256
      %v3258 = vand.u32 %v3257, 4294901760
      %3259 = vmatmul.f32.gmra.mxu0 %v3258
      %v3260 = vpop.f32.mrf.mxu0
      %v3261 = vadd.f32 %v3216, %v3260
      %3262 = vdwg.mxu0
      %v3263 = vand.u32 %v2547, 4294901760
      %v3264 = vsub.f32 %v2547, %v3263
      %v3265 = vand.u32 %v3264, 4294901760
      %3266 = vmatpush.msra.mxu0 %v3265
      %v3267 = vand.u32 %v2546, 4294901760
      %v3268 = vsub.f32 %v2546, %v3267
      %v3269 = vand.u32 %v3268, 4294901760
      %3270 = vmatpush.msra.mxu0 %v3269
      %v3271 = vand.u32 %v2545, 4294901760
      %v3272 = vsub.f32 %v2545, %v3271
      %v3273 = vand.u32 %v3272, 4294901760
      %3274 = vmatpush.msra.mxu0 %v3273
      %v3275 = vand.u32 %v2544, 4294901760
      %v3276 = vsub.f32 %v2544, %v3275
      %v3277 = vand.u32 %v3276, 4294901760
      %3278 = vmatpush.msra.mxu0 %v3277
      %v3279 = vand.u32 %v2543, 4294901760
      %v3280 = vsub.f32 %v2543, %v3279
      %v3281 = vand.u32 %v3280, 4294901760
      %3282 = vmatpush.msra.mxu0 %v3281
      %v3283 = vand.u32 %v2542, 4294901760
      %v3284 = vsub.f32 %v2542, %v3283
      %v3285 = vand.u32 %v3284, 4294901760
      %3286 = vmatpush.msra.mxu0 %v3285
      %v3287 = vand.u32 %v2541, 4294901760
      %v3288 = vsub.f32 %v2541, %v3287
      %v3289 = vand.u32 %v3288, 4294901760
      %3290 = vmatpush.msra.mxu0 %v3289
      %v3291 = vand.u32 %v2540, 4294901760
      %v3292 = vsub.f32 %v2540, %v3291
      %v3293 = vand.u32 %v3292, 4294901760
      %3294 = vmatpush.msra.mxu0 %v3293
      %v3295 = vand.u32 %v2539, 4294901760
      %v3296 = vsub.f32 %v2539, %v3295
      %v3297 = vand.u32 %v3296, 4294901760
      %3298 = vmatpush.msra.mxu0 %v3297
      %v3299 = vand.u32 %v2538, 4294901760
      %v3300 = vsub.f32 %v2538, %v3299
      %v3301 = vand.u32 %v3300, 4294901760
      %3302 = vmatpush.msra.mxu0 %v3301
      %v3303 = vand.u32 %v2537, 4294901760
      %v3304 = vsub.f32 %v2537, %v3303
      %v3305 = vand.u32 %v3304, 4294901760
      %3306 = vmatpush.msra.mxu0 %v3305
      %v3307 = vand.u32 %v2536, 4294901760
      %v3308 = vsub.f32 %v2536, %v3307
      %v3309 = vand.u32 %v3308, 4294901760
      %3310 = vmatpush.msra.mxu0 %v3309
      %v3311 = vand.u32 %v2535, 4294901760
      %v3312 = vsub.f32 %v2535, %v3311
      %v3313 = vand.u32 %v3312, 4294901760
      %3314 = vmatpush.msra.mxu0 %v3313
      %v3315 = vand.u32 %v2534, 4294901760
      %v3316 = vsub.f32 %v2534, %v3315
      %v3317 = vand.u32 %v3316, 4294901760
      %3318 = vmatpush.msra.mxu0 %v3317
      %v3319 = vand.u32 %v2533, 4294901760
      %v3320 = vsub.f32 %v2533, %v3319
      %v3321 = vand.u32 %v3320, 4294901760
      %3322 = vmatpush.msra.mxu0 %v3321
      %v3323 = vand.u32 %v2532, 4294901760
      %v3324 = vsub.f32 %v2532, %v3323
      %v3325 = vand.u32 %v3324, 4294901760
      %3326 = vmatpush.msra.mxu0 %v3325
      %v3327 = vand.u32 %v2997, 4294901760
      %3328 = vmatmul.f32.gmra.mxu0 %v3327
      %v3329 = vpop.f32.mrf.mxu0
      %v3330 = vadd.f32 %v3255, %v3329
      %v3331 = vand.u32 %v2999, 4294901760
      %3332 = vmatmul.f32.gmra.mxu0 %v3331
      %v3333 = vpop.f32.mrf.mxu0
      %v3334 = vadd.f32 %v3261, %v3333
      %3335 = vdwg.mxu0
      %v3336 = vand.u32 %v2547, 4294901760
      %3337 = vmatpush.msra.mxu0 %v3336
      %v3338 = vand.u32 %v2546, 4294901760
      %3339 = vmatpush.msra.mxu0 %v3338
      %v3340 = vand.u32 %v2545, 4294901760
      %3341 = vmatpush.msra.mxu0 %v3340
      %v3342 = vand.u32 %v2544, 4294901760
      %3343 = vmatpush.msra.mxu0 %v3342
      %v3344 = vand.u32 %v2543, 4294901760
      %3345 = vmatpush.msra.mxu0 %v3344
      %v3346 = vand.u32 %v2542, 4294901760
      %3347 = vmatpush.msra.mxu0 %v3346
      %v3348 = vand.u32 %v2541, 4294901760
      %3349 = vmatpush.msra.mxu0 %v3348
      %v3350 = vand.u32 %v2540, 4294901760
      %3351 = vmatpush.msra.mxu0 %v3350
      %v3352 = vand.u32 %v2539, 4294901760
      %3353 = vmatpush.msra.mxu0 %v3352
      %v3354 = vand.u32 %v2538, 4294901760
      %3355 = vmatpush.msra.mxu0 %v3354
      %v3356 = vand.u32 %v2537, 4294901760
      %3357 = vmatpush.msra.mxu0 %v3356
      %v3358 = vand.u32 %v2536, 4294901760
      %3359 = vmatpush.msra.mxu0 %v3358
      %v3360 = vand.u32 %v2535, 4294901760
      %3361 = vmatpush.msra.mxu0 %v3360
      %v3362 = vand.u32 %v2534, 4294901760
      %3363 = vmatpush.msra.mxu0 %v3362
      %v3364 = vand.u32 %v2533, 4294901760
      %3365 = vmatpush.msra.mxu0 %v3364
      %v3366 = vand.u32 %v2532, 4294901760
      %3367 = vmatpush.msra.mxu0 %v3366
      %v3368 = vand.u32 %v2997, 4294901760
      %3369 = vmatmul.f32.gmra.mxu0 %v3368
      %v3370 = vpop.f32.mrf.mxu0
      %v3371 = vadd.f32 %v3330, %v3370
      %v3372 = vand.u32 %v2999, 4294901760
      %3373 = vmatmul.f32.gmra.mxu0 %v3372
      %v3374 = vpop.f32.mrf.mxu0
      %v3375 = vadd.f32 %v3334, %v3374
      %3376 = vdwg.mxu0
      %v3377 = vand.u32 %v2563, 4294901760
      %3378 = vmatpush.msra.mxu0 %v3377
      %v3379 = vand.u32 %v2562, 4294901760
      %3380 = vmatpush.msra.mxu0 %v3379
      %v3381 = vand.u32 %v2561, 4294901760
      %3382 = vmatpush.msra.mxu0 %v3381
      %v3383 = vand.u32 %v2560, 4294901760
      %3384 = vmatpush.msra.mxu0 %v3383
      %v3385 = vand.u32 %v2559, 4294901760
      %3386 = vmatpush.msra.mxu0 %v3385
      %v3387 = vand.u32 %v2558, 4294901760
      %3388 = vmatpush.msra.mxu0 %v3387
      %v3389 = vand.u32 %v2557, 4294901760
      %3390 = vmatpush.msra.mxu0 %v3389
      %v3391 = vand.u32 %v2556, 4294901760
      %3392 = vmatpush.msra.mxu0 %v3391
      %v3393 = vand.u32 %v2555, 4294901760
      %3394 = vmatpush.msra.mxu0 %v3393
      %v3395 = vand.u32 %v2554, 4294901760
      %3396 = vmatpush.msra.mxu0 %v3395
      %v3397 = vand.u32 %v2553, 4294901760
      %3398 = vmatpush.msra.mxu0 %v3397
      %v3399 = vand.u32 %v2552, 4294901760
      %3400 = vmatpush.msra.mxu0 %v3399
      %v3401 = vand.u32 %v2551, 4294901760
      %3402 = vmatpush.msra.mxu0 %v3401
      %v3403 = vand.u32 %v2550, 4294901760
      %3404 = vmatpush.msra.mxu0 %v3403
      %v3405 = vand.u32 %v2549, 4294901760
      %3406 = vmatpush.msra.mxu0 %v3405
      %v3407 = vand.u32 %v2548, 4294901760
      %3408 = vmatpush.msra.mxu0 %v3407
      %v3409 = vand.u32 %v2998, 4294901760
      %v3410 = vsub.f32 %v2998, %v3409
      %v3411 = vand.u32 %v3410, 4294901760
      %v3412 = vsub.f32 %v3410, %v3411
      %v3413 = vand.u32 %v3412, 4294901760
      %3414 = vmatmul.f32.gmra.mxu0 %v3413
      %v3415 = vpop.f32.mrf.mxu0
      %v3416 = vadd.f32 %v3371, %v3415
      %v3417 = vand.u32 %v3000, 4294901760
      %v3418 = vsub.f32 %v3000, %v3417
      %v3419 = vand.u32 %v3418, 4294901760
      %v3420 = vsub.f32 %v3418, %v3419
      %v3421 = vand.u32 %v3420, 4294901760
      %3422 = vmatmul.f32.gmra.mxu0 %v3421
      %v3423 = vpop.f32.mrf.mxu0
      %v3424 = vadd.f32 %v3375, %v3423
      %3425 = vdwg.mxu0
      %v3426 = vand.u32 %v2563, 4294901760
      %v3427 = vsub.f32 %v2563, %v3426
      %v3428 = vand.u32 %v3427, 4294901760
      %v3429 = vsub.f32 %v3427, %v3428
      %v3430 = vand.u32 %v3429, 4294901760
      %3431 = vmatpush.msra.mxu0 %v3430
      %v3432 = vand.u32 %v2562, 4294901760
      %v3433 = vsub.f32 %v2562, %v3432
      %v3434 = vand.u32 %v3433, 4294901760
      %v3435 = vsub.f32 %v3433, %v3434
      %v3436 = vand.u32 %v3435, 4294901760
      %3437 = vmatpush.msra.mxu0 %v3436
      %v3438 = vand.u32 %v2561, 4294901760
      %v3439 = vsub.f32 %v2561, %v3438
      %v3440 = vand.u32 %v3439, 4294901760
      %v3441 = vsub.f32 %v3439, %v3440
      %v3442 = vand.u32 %v3441, 4294901760
      %3443 = vmatpush.msra.mxu0 %v3442
      %v3444 = vand.u32 %v2560, 4294901760
      %v3445 = vsub.f32 %v2560, %v3444
      %v3446 = vand.u32 %v3445, 4294901760
      %v3447 = vsub.f32 %v3445, %v3446
      %v3448 = vand.u32 %v3447, 4294901760
      %3449 = vmatpush.msra.mxu0 %v3448
      %v3450 = vand.u32 %v2559, 4294901760
      %v3451 = vsub.f32 %v2559, %v3450
      %v3452 = vand.u32 %v3451, 4294901760
      %v3453 = vsub.f32 %v3451, %v3452
      %v3454 = vand.u32 %v3453, 4294901760
      %3455 = vmatpush.msra.mxu0 %v3454
      %v3456 = vand.u32 %v2558, 4294901760
      %v3457 = vsub.f32 %v2558, %v3456
      %v3458 = vand.u32 %v3457, 4294901760
      %v3459 = vsub.f32 %v3457, %v3458
      %v3460 = vand.u32 %v3459, 4294901760
      %3461 = vmatpush.msra.mxu0 %v3460
      %v3462 = vand.u32 %v2557, 4294901760
      %v3463 = vsub.f32 %v2557, %v3462
      %v3464 = vand.u32 %v3463, 4294901760
      %v3465 = vsub.f32 %v3463, %v3464
      %v3466 = vand.u32 %v3465, 4294901760
      %3467 = vmatpush.msra.mxu0 %v3466
      %v3468 = vand.u32 %v2556, 4294901760
      %v3469 = vsub.f32 %v2556, %v3468
      %v3470 = vand.u32 %v3469, 4294901760
      %v3471 = vsub.f32 %v3469, %v3470
      %v3472 = vand.u32 %v3471, 4294901760
      %3473 = vmatpush.msra.mxu0 %v3472
      %v3474 = vand.u32 %v2555, 4294901760
      %v3475 = vsub.f32 %v2555, %v3474
      %v3476 = vand.u32 %v3475, 4294901760
      %v3477 = vsub.f32 %v3475, %v3476
      %v3478 = vand.u32 %v3477, 4294901760
      %3479 = vmatpush.msra.mxu0 %v3478
      %v3480 = vand.u32 %v2554, 4294901760
      %v3481 = vsub.f32 %v2554, %v3480
      %v3482 = vand.u32 %v3481, 4294901760
      %v3483 = vsub.f32 %v3481, %v3482
      %v3484 = vand.u32 %v3483, 4294901760
      %3485 = vmatpush.msra.mxu0 %v3484
      %v3486 = vand.u32 %v2553, 4294901760
      %v3487 = vsub.f32 %v2553, %v3486
      %v3488 = vand.u32 %v3487, 4294901760
      %v3489 = vsub.f32 %v3487, %v3488
      %v3490 = vand.u32 %v3489, 4294901760
      %3491 = vmatpush.msra.mxu0 %v3490
      %v3492 = vand.u32 %v2552, 4294901760
      %v3493 = vsub.f32 %v2552, %v3492
      %v3494 = vand.u32 %v3493, 4294901760
      %v3495 = vsub.f32 %v3493, %v3494
      %v3496 = vand.u32 %v3495, 4294901760
      %3497 = vmatpush.msra.mxu0 %v3496
      %v3498 = vand.u32 %v2551, 4294901760
      %v3499 = vsub.f32 %v2551, %v3498
      %v3500 = vand.u32 %v3499, 4294901760
      %v3501 = vsub.f32 %v3499, %v3500
      %v3502 = vand.u32 %v3501, 4294901760
      %3503 = vmatpush.msra.mxu0 %v3502
      %v3504 = vand.u32 %v2550, 4294901760
      %v3505 = vsub.f32 %v2550, %v3504
      %v3506 = vand.u32 %v3505, 4294901760
      %v3507 = vsub.f32 %v3505, %v3506
      %v3508 = vand.u32 %v3507, 4294901760
      %3509 = vmatpush.msra.mxu0 %v3508
      %v3510 = vand.u32 %v2549, 4294901760
      %v3511 = vsub.f32 %v2549, %v3510
      %v3512 = vand.u32 %v3511, 4294901760
      %v3513 = vsub.f32 %v3511, %v3512
      %v3514 = vand.u32 %v3513, 4294901760
      %3515 = vmatpush.msra.mxu0 %v3514
      %v3516 = vand.u32 %v2548, 4294901760
      %v3517 = vsub.f32 %v2548, %v3516
      %v3518 = vand.u32 %v3517, 4294901760
      %v3519 = vsub.f32 %v3517, %v3518
      %v3520 = vand.u32 %v3519, 4294901760
      %3521 = vmatpush.msra.mxu0 %v3520
      %v3522 = vand.u32 %v2998, 4294901760
      %3523 = vmatmul.f32.gmra.mxu0 %v3522
      %v3524 = vpop.f32.mrf.mxu0
      %v3525 = vadd.f32 %v3416, %v3524
      %v3526 = vand.u32 %v3000, 4294901760
      %3527 = vmatmul.f32.gmra.mxu0 %v3526
      %v3528 = vpop.f32.mrf.mxu0
      %v3529 = vadd.f32 %v3424, %v3528
      %3530 = vdwg.mxu0
      %v3531 = vand.u32 %v2563, 4294901760
      %v3532 = vsub.f32 %v2563, %v3531
      %3533 = vmatpush.msra.mxu0 %v3532
      %v3534 = vand.u32 %v2562, 4294901760
      %v3535 = vsub.f32 %v2562, %v3534
      %3536 = vmatpush.msra.mxu0 %v3535
      %v3537 = vand.u32 %v2561, 4294901760
      %v3538 = vsub.f32 %v2561, %v3537
      %3539 = vmatpush.msra.mxu0 %v3538
      %v3540 = vand.u32 %v2560, 4294901760
      %v3541 = vsub.f32 %v2560, %v3540
      %3542 = vmatpush.msra.mxu0 %v3541
      %v3543 = vand.u32 %v2559, 4294901760
      %v3544 = vsub.f32 %v2559, %v3543
      %3545 = vmatpush.msra.mxu0 %v3544
      %v3546 = vand.u32 %v2558, 4294901760
      %v3547 = vsub.f32 %v2558, %v3546
      %3548 = vmatpush.msra.mxu0 %v3547
      %v3549 = vand.u32 %v2557, 4294901760
      %v3550 = vsub.f32 %v2557, %v3549
      %3551 = vmatpush.msra.mxu0 %v3550
      %v3552 = vand.u32 %v2556, 4294901760
      %v3553 = vsub.f32 %v2556, %v3552
      %3554 = vmatpush.msra.mxu0 %v3553
      %v3555 = vand.u32 %v2555, 4294901760
      %v3556 = vsub.f32 %v2555, %v3555
      %3557 = vmatpush.msra.mxu0 %v3556
      %v3558 = vand.u32 %v2554, 4294901760
      %v3559 = vsub.f32 %v2554, %v3558
      %3560 = vmatpush.msra.mxu0 %v3559
      %v3561 = vand.u32 %v2553, 4294901760
      %v3562 = vsub.f32 %v2553, %v3561
      %3563 = vmatpush.msra.mxu0 %v3562
      %v3564 = vand.u32 %v2552, 4294901760
      %v3565 = vsub.f32 %v2552, %v3564
      %3566 = vmatpush.msra.mxu0 %v3565
      %v3567 = vand.u32 %v2551, 4294901760
      %v3568 = vsub.f32 %v2551, %v3567
      %3569 = vmatpush.msra.mxu0 %v3568
      %v3570 = vand.u32 %v2550, 4294901760
      %v3571 = vsub.f32 %v2550, %v3570
      %3572 = vmatpush.msra.mxu0 %v3571
      %v3573 = vand.u32 %v2549, 4294901760
      %v3574 = vsub.f32 %v2549, %v3573
      %3575 = vmatpush.msra.mxu0 %v3574
      %v3576 = vand.u32 %v2548, 4294901760
      %v3577 = vsub.f32 %v2548, %v3576
      %3578 = vmatpush.msra.mxu0 %v3577
      %v3579 = vand.u32 %v2998, 4294901760
      %v3580 = vsub.f32 %v2998, %v3579
      %3581 = vmatmul.f32.gmra.mxu0 %v3580
      %v3582 = vpop.f32.mrf.mxu0
      %v3583 = vadd.f32 %v3525, %v3582
      %v3584 = vand.u32 %v3000, 4294901760
      %v3585 = vsub.f32 %v3000, %v3584
      %3586 = vmatmul.f32.gmra.mxu0 %v3585
      %v3587 = vpop.f32.mrf.mxu0
      %v3588 = vadd.f32 %v3529, %v3587
      %3589 = vdwg.mxu0
      %v3590 = vand.u32 %v2563, 4294901760
      %3591 = vmatpush.msra.mxu0 %v3590
      %v3592 = vand.u32 %v2562, 4294901760
      %3593 = vmatpush.msra.mxu0 %v3592
      %v3594 = vand.u32 %v2561, 4294901760
      %3595 = vmatpush.msra.mxu0 %v3594
      %v3596 = vand.u32 %v2560, 4294901760
      %3597 = vmatpush.msra.mxu0 %v3596
      %v3598 = vand.u32 %v2559, 4294901760
      %3599 = vmatpush.msra.mxu0 %v3598
      %v3600 = vand.u32 %v2558, 4294901760
      %3601 = vmatpush.msra.mxu0 %v3600
      %v3602 = vand.u32 %v2557, 4294901760
      %3603 = vmatpush.msra.mxu0 %v3602
      %v3604 = vand.u32 %v2556, 4294901760
      %3605 = vmatpush.msra.mxu0 %v3604
      %v3606 = vand.u32 %v2555, 4294901760
      %3607 = vmatpush.msra.mxu0 %v3606
      %v3608 = vand.u32 %v2554, 4294901760
      %3609 = vmatpush.msra.mxu0 %v3608
      %v3610 = vand.u32 %v2553, 4294901760
      %3611 = vmatpush.msra.mxu0 %v3610
      %v3612 = vand.u32 %v2552, 4294901760
      %3613 = vmatpush.msra.mxu0 %v3612
      %v3614 = vand.u32 %v2551, 4294901760
      %3615 = vmatpush.msra.mxu0 %v3614
      %v3616 = vand.u32 %v2550, 4294901760
      %3617 = vmatpush.msra.mxu0 %v3616
      %v3618 = vand.u32 %v2549, 4294901760
      %3619 = vmatpush.msra.mxu0 %v3618
      %v3620 = vand.u32 %v2548, 4294901760
      %3621 = vmatpush.msra.mxu0 %v3620
      %v3622 = vand.u32 %v2998, 4294901760
      %v3623 = vsub.f32 %v2998, %v3622
      %v3624 = vand.u32 %v3623, 4294901760
      %3625 = vmatmul.f32.gmra.mxu0 %v3624
      %v3626 = vpop.f32.mrf.mxu0
      %v3627 = vadd.f32 %v3583, %v3626
      %v3628 = vand.u32 %v3000, 4294901760
      %v3629 = vsub.f32 %v3000, %v3628
      %v3630 = vand.u32 %v3629, 4294901760
      %3631 = vmatmul.f32.gmra.mxu0 %v3630
      %v3632 = vpop.f32.mrf.mxu0
      %v3633 = vadd.f32 %v3588, %v3632
      %3634 = vdwg.mxu0
      %v3635 = vand.u32 %v2563, 4294901760
      %v3636 = vsub.f32 %v2563, %v3635
      %v3637 = vand.u32 %v3636, 4294901760
      %3638 = vmatpush.msra.mxu0 %v3637
      %v3639 = vand.u32 %v2562, 4294901760
      %v3640 = vsub.f32 %v2562, %v3639
      %v3641 = vand.u32 %v3640, 4294901760
      %3642 = vmatpush.msra.mxu0 %v3641
      %v3643 = vand.u32 %v2561, 4294901760
      %v3644 = vsub.f32 %v2561, %v3643
      %v3645 = vand.u32 %v3644, 4294901760
      %3646 = vmatpush.msra.mxu0 %v3645
      %v3647 = vand.u32 %v2560, 4294901760
      %v3648 = vsub.f32 %v2560, %v3647
      %v3649 = vand.u32 %v3648, 4294901760
      %3650 = vmatpush.msra.mxu0 %v3649
      %v3651 = vand.u32 %v2559, 4294901760
      %v3652 = vsub.f32 %v2559, %v3651
      %v3653 = vand.u32 %v3652, 4294901760
      %3654 = vmatpush.msra.mxu0 %v3653
      %v3655 = vand.u32 %v2558, 4294901760
      %v3656 = vsub.f32 %v2558, %v3655
      %v3657 = vand.u32 %v3656, 4294901760
      %3658 = vmatpush.msra.mxu0 %v3657
      %v3659 = vand.u32 %v2557, 4294901760
      %v3660 = vsub.f32 %v2557, %v3659
      %v3661 = vand.u32 %v3660, 4294901760
      %3662 = vmatpush.msra.mxu0 %v3661
      %v3663 = vand.u32 %v2556, 4294901760
      %v3664 = vsub.f32 %v2556, %v3663
      %v3665 = vand.u32 %v3664, 4294901760
      %3666 = vmatpush.msra.mxu0 %v3665
      %v3667 = vand.u32 %v2555, 4294901760
      %v3668 = vsub.f32 %v2555, %v3667
      %v3669 = vand.u32 %v3668, 4294901760
      %3670 = vmatpush.msra.mxu0 %v3669
      %v3671 = vand.u32 %v2554, 4294901760
      %v3672 = vsub.f32 %v2554, %v3671
      %v3673 = vand.u32 %v3672, 4294901760
      %3674 = vmatpush.msra.mxu0 %v3673
      %v3675 = vand.u32 %v2553, 4294901760
      %v3676 = vsub.f32 %v2553, %v3675
      %v3677 = vand.u32 %v3676, 4294901760
      %3678 = vmatpush.msra.mxu0 %v3677
      %v3679 = vand.u32 %v2552, 4294901760
      %v3680 = vsub.f32 %v2552, %v3679
      %v3681 = vand.u32 %v3680, 4294901760
      %3682 = vmatpush.msra.mxu0 %v3681
      %v3683 = vand.u32 %v2551, 4294901760
      %v3684 = vsub.f32 %v2551, %v3683
      %v3685 = vand.u32 %v3684, 4294901760
      %3686 = vmatpush.msra.mxu0 %v3685
      %v3687 = vand.u32 %v2550, 4294901760
      %v3688 = vsub.f32 %v2550, %v3687
      %v3689 = vand.u32 %v3688, 4294901760
      %3690 = vmatpush.msra.mxu0 %v3689
      %v3691 = vand.u32 %v2549, 4294901760
      %v3692 = vsub.f32 %v2549, %v3691
      %v3693 = vand.u32 %v3692, 4294901760
      %3694 = vmatpush.msra.mxu0 %v3693
      %v3695 = vand.u32 %v2548, 4294901760
      %v3696 = vsub.f32 %v2548, %v3695
      %v3697 = vand.u32 %v3696, 4294901760
      %3698 = vmatpush.msra.mxu0 %v3697
      %v3699 = vand.u32 %v2998, 4294901760
      %3700 = vmatmul.f32.gmra.mxu0 %v3699
      %v3701 = vpop.f32.mrf.mxu0
      %v3702 = vadd.f32 %v3627, %v3701
      %v3703 = vand.u32 %v3000, 4294901760
      %3704 = vmatmul.f32.gmra.mxu0 %v3703
      %v3705 = vpop.f32.mrf.mxu0
      %v3706 = vadd.f32 %v3633, %v3705
      %3707 = vdwg.mxu0
      %v3708 = vand.u32 %v2563, 4294901760
      %3709 = vmatpush.msra.mxu0 %v3708
      %v3710 = vand.u32 %v2562, 4294901760
      %3711 = vmatpush.msra.mxu0 %v3710
      %v3712 = vand.u32 %v2561, 4294901760
      %3713 = vmatpush.msra.mxu0 %v3712
      %v3714 = vand.u32 %v2560, 4294901760
      %3715 = vmatpush.msra.mxu0 %v3714
      %v3716 = vand.u32 %v2559, 4294901760
      %3717 = vmatpush.msra.mxu0 %v3716
      %v3718 = vand.u32 %v2558, 4294901760
      %3719 = vmatpush.msra.mxu0 %v3718
      %v3720 = vand.u32 %v2557, 4294901760
      %3721 = vmatpush.msra.mxu0 %v3720
      %v3722 = vand.u32 %v2556, 4294901760
      %3723 = vmatpush.msra.mxu0 %v3722
      %v3724 = vand.u32 %v2555, 4294901760
      %3725 = vmatpush.msra.mxu0 %v3724
      %v3726 = vand.u32 %v2554, 4294901760
      %3727 = vmatpush.msra.mxu0 %v3726
      %v3728 = vand.u32 %v2553, 4294901760
      %3729 = vmatpush.msra.mxu0 %v3728
      %v3730 = vand.u32 %v2552, 4294901760
      %3731 = vmatpush.msra.mxu0 %v3730
      %v3732 = vand.u32 %v2551, 4294901760
      %3733 = vmatpush.msra.mxu0 %v3732
      %v3734 = vand.u32 %v2550, 4294901760
      %3735 = vmatpush.msra.mxu0 %v3734
      %v3736 = vand.u32 %v2549, 4294901760
      %3737 = vmatpush.msra.mxu0 %v3736
      %v3738 = vand.u32 %v2548, 4294901760
      %3739 = vmatpush.msra.mxu0 %v3738
      %v3740 = vand.u32 %v2998, 4294901760
      %3741 = vmatmul.f32.gmra.mxu0 %v3740
      %v3742 = vpop.f32.mrf.mxu0
      %v3743 = vadd.f32 %v3702, %v3742
      %v3744 = vand.u32 %v3000, 4294901760
      %3745 = vmatmul.f32.gmra.mxu0 %v3744
      %v3746 = vpop.f32.mrf.mxu0
      %v3747 = vadd.f32 %v3706, %v3746
      %3748 = vdwg.mxu0
      %v3749 = vmul.f32 %v3743, 0.2
      %v3750 = vmul.f32 %v3747, 0.2
      %v3751 = vmax.f32 %v3743, %v3749
      %v3752 = vmax.f32 %v3747, %v3750
      %v3753 = vld [vmem:[%s5] sm:$0x1]
      %v3755 = vperm.slane %v3753, 0
      %v3757 = vmul.f32 %v3751, %v3755
      %v3758 = vmul.f32 %v3752, %v3755
      %v3759 = vsel %vm1847, %v3757, 0.0
      %3760 = vadd.xlane.f32.xlu0 %v3759
      %v3761 = vpop.xlane.xlu0 %3760
      %v3762 = vsel %vm1847, %v3758, 0.0
      %3763 = vadd.xlane.f32.xlu0 %v3762
      %v3764 = vpop.xlane.xlu0 %3763
      %v3765 = vld [vmem:[#allocation2] sm:$0x1]
      %v3767 = vperm.slane %v3765, 0
      %v3769 = vadd.f32 %v3761, %v3767
      %v3770 = vadd.f32 %v3764, %v3767
      %v3773 = vrot.slane %v3769, 4
      %v3774 = vrot.slane %v3770, 4
      %vm3777 = vcmask 3072
      %3778 = vst.msk [vmem:[%s342] sm:$0xf] %vm3777, %v3769
      %3779 = vst.msk [vmem:[%s342 + $0x4] sm:$0xf] %vm3777, %v3773
      %3780 = vst.msk [vmem:[%s342 + $0x8] sm:$0xf] %vm3777, %v3770
      %3781 = vst.msk [vmem:[%s342 + $0xc] sm:$0xf] %vm3777, %v3774
      %v3782 = vld [vmem:[%s7] sm:$0xff]
      %v3783 = vld [vmem:[%s7 + $0x8] sm:$0xff]
      %v3784 = vld [vmem:[%s7 + $0x10] sm:$0xff]
      %v3785 = vld [vmem:[%s7 + $0x18] sm:$0xff]
      %v3786 = vld [vmem:[%s7 + $0x20] sm:$0xff]
      %v3787 = vld [vmem:[%s7 + $0x28] sm:$0xff]
      %v3788 = vld [vmem:[%s7 + $0x30] sm:$0xff]
      %v3789 = vld [vmem:[%s7 + $0x38] sm:$0xff]
      %v3791 = vrot.slane 0.0, 7
      %v3792 = vsel %vm461, %v3791, %v3791
      %v3811 = vsel %vm461, 0.0, %v3791
      %v3812 = vsel %vm461, 0.0, %v465
      %v3813 = vsel %vm461, 0.0, %v462
      %v3814 = vsel %vm461, 0.0, %v468
      %v3815 = vsel %vm461, 0.0, %v471
      %v3816 = vsel %vm461, 0.0, %v474
      %v3817 = vsel %vm461, 0.0, %v477
      %v3818 = vsel %vm461, 0.0, %v480
      %v3819 = vsel %vm461, 0.0, %v483
      %v3820 = vsel %vm461, 0.0, %v486
      %v3821 = vsel %vm461, 0.0, %v489
      %v3822 = vsel %vm461, 0.0, %v492
      %v3823 = vsel %vm461, 0.0, %v495
      %v3824 = vsel %vm461, 0.0, %v498
      %v3825 = vsel %vm461, 0.0, %v501
      %v3826 = vsel %vm461, 0.0, %v504
      %v3827 = vsel %vm461, 0.0, %v507
      %v3828 = vsel %vm461, %v3791, 0.0
      %v3829 = vsel %vm461, %v466, 0.0
      %v3830 = vsel %vm461, %v463, 0.0
      %v3831 = vsel %vm461, %v469, 0.0
      %v3832 = vsel %vm461, %v472, 0.0
      %v3833 = vsel %vm461, %v475, 0.0
      %v3834 = vsel %vm461, %v478, 0.0
      %v3835 = vsel %vm461, %v481, 0.0
      %v3836 = vsel %vm461, %v484, 0.0
      %v3837 = vsel %vm461, %v487, 0.0
      %v3838 = vsel %vm461, %v490, 0.0
      %v3839 = vsel %vm461, %v493, 0.0
      %v3840 = vsel %vm461, %v496, 0.0
      %v3841 = vsel %vm461, %v499, 0.0
      %v3842 = vsel %vm461, %v502, 0.0
      %v3843 = vsel %vm461, %v505, 0.0
      %v3844 = vsel %vm461, %v508, 0.0
      %v3862 = vrot.slane %v3811, 2
      %v3863 = vrot.slane %v3811, 4
      %v3864 = vrot.slane %v3811, 6
      %v3865 = vrot.slane %v3792, 2
      %v3866 = vrot.slane %v3792, 4
      %v3867 = vrot.slane %v3792, 6
      %v3868 = vrot.slane %v3812, 2
      %v3869 = vrot.slane %v3812, 4
      %v3870 = vrot.slane %v3812, 6
      %v3871 = vrot.slane %v3813, 2
      %v3872 = vrot.slane %v3813, 4
      %v3873 = vrot.slane %v3813, 6
      %v3874 = vrot.slane %v3814, 2
      %v3875 = vrot.slane %v3814, 4
      %v3876 = vrot.slane %v3814, 6
      %v3877 = vrot.slane %v3815, 2
      %v3878 = vrot.slane %v3815, 4
      %v3879 = vrot.slane %v3815, 6
      %v3880 = vrot.slane %v3816, 2
      %v3881 = vrot.slane %v3816, 4
      %v3882 = vrot.slane %v3816, 6
      %v3883 = vrot.slane %v3817, 2
      %v3884 = vrot.slane %v3817, 4
      %v3885 = vrot.slane %v3817, 6
      %v3886 = vrot.slane %v3818, 2
      %v3887 = vrot.slane %v3818, 4
      %v3888 = vrot.slane %v3818, 6
      %v3889 = vrot.slane %v3819, 2
      %v3890 = vrot.slane %v3819, 4
      %v3891 = vrot.slane %v3819, 6
      %v3892 = vrot.slane %v3820, 2
      %v3893 = vrot.slane %v3820, 4
      %v3894 = vrot.slane %v3820, 6
      %v3895 = vrot.slane %v3821, 2
      %v3896 = vrot.slane %v3821, 4
      %v3897 = vrot.slane %v3821, 6
      %v3898 = vrot.slane %v3822, 2
      %v3899 = vrot.slane %v3822, 4
      %v3900 = vrot.slane %v3822, 6
      %v3901 = vrot.slane %v3823, 2
      %v3902 = vrot.slane %v3823, 4
      %v3903 = vrot.slane %v3823, 6
      %v3904 = vrot.slane %v3824, 2
      %v3905 = vrot.slane %v3824, 4
      %v3906 = vrot.slane %v3824, 6
      %v3907 = vrot.slane %v3825, 2
      %v3908 = vrot.slane %v3825, 4
      %v3909 = vrot.slane %v3825, 6
      %v3910 = vrot.slane %v3826, 2
      %v3911 = vrot.slane %v3826, 4
      %v3912 = vrot.slane %v3826, 6
      %v3913 = vrot.slane %v3827, 2
      %v3914 = vrot.slane %v3827, 4
      %v3915 = vrot.slane %v3827, 6
      %v4018 = vadd.f32 %v3811, 0.0
      %v4019 = vadd.f32 %v3862, 0.0
      %v4020 = vadd.f32 %v3863, 0.0
      %v4021 = vadd.f32 %v3864, 0.0
      %v4022 = vadd.f32 %v3792, 0.0
      %v4023 = vadd.f32 %v3865, 0.0
      %v4024 = vadd.f32 %v3866, 0.0
      %v4025 = vadd.f32 %v3867, 0.0
      %v4026 = vadd.f32 %v3813, 0.0
      %v4027 = vadd.f32 %v3871, 0.0
      %v4028 = vadd.f32 %v3872, 0.0
      %v4029 = vadd.f32 %v3873, 0.0
      %v4030 = vadd.f32 %v464, 0.0
      %v4031 = vadd.f32 %v641, 0.0
      %v4032 = vadd.f32 %v642, 0.0
      %v4033 = vadd.f32 %v643, 0.0
      %v4034 = vadd.f32 %v3815, 0.0
      %v4035 = vadd.f32 %v3877, 0.0
      %v4036 = vadd.f32 %v3878, 0.0
      %v4037 = vadd.f32 %v3879, 0.0
      %v4038 = vadd.f32 %v473, 0.0
      %v4039 = vadd.f32 %v659, 0.0
      %v4040 = vadd.f32 %v660, 0.0
      %v4041 = vadd.f32 %v661, 0.0
      %v4042 = vadd.f32 %v3817, 0.0
      %v4043 = vadd.f32 %v3883, 0.0
      %v4044 = vadd.f32 %v3884, 0.0
      %v4045 = vadd.f32 %v3885, 0.0
      %v4046 = vadd.f32 %v479, 0.0
      %v4047 = vadd.f32 %v671, 0.0
      %v4048 = vadd.f32 %v672, 0.0
      %v4049 = vadd.f32 %v673, 0.0
      %v4050 = vadd.f32 %v3819, 0.0
      %v4051 = vadd.f32 %v3889, 0.0
      %v4052 = vadd.f32 %v3890, 0.0
      %v4053 = vadd.f32 %v3891, 0.0
      %v4054 = vadd.f32 %v485, 0.0
      %v4055 = vadd.f32 %v683, 0.0
      %v4056 = vadd.f32 %v684, 0.0
      %v4057 = vadd.f32 %v685, 0.0
      %v4058 = vadd.f32 %v3821, 0.0
      %v4059 = vadd.f32 %v3895, 0.0
      %v4060 = vadd.f32 %v3896, 0.0
      %v4061 = vadd.f32 %v3897, 0.0
      %v4062 = vadd.f32 %v491, 0.0
      %v4063 = vadd.f32 %v695, 0.0
      %v4064 = vadd.f32 %v696, 0.0
      %v4065 = vadd.f32 %v697, 0.0
      %v4066 = vadd.f32 %v3823, 0.0
      %v4067 = vadd.f32 %v3901, 0.0
      %v4068 = vadd.f32 %v3902, 0.0
      %v4069 = vadd.f32 %v3903, 0.0
      %v4070 = vadd.f32 %v497, 0.0
      %v4071 = vadd.f32 %v707, 0.0
      %v4072 = vadd.f32 %v708, 0.0
      %v4073 = vadd.f32 %v709, 0.0
      %v4074 = vadd.f32 %v3825, 0.0
      %v4075 = vadd.f32 %v3907, 0.0
      %v4076 = vadd.f32 %v3908, 0.0
      %v4077 = vadd.f32 %v3909, 0.0
      %v4078 = vadd.f32 %v503, 0.0
      %v4079 = vadd.f32 %v719, 0.0
      %v4080 = vadd.f32 %v720, 0.0
      %v4081 = vadd.f32 %v721, 0.0
      %v4082 = vrot.slane %v3811, 7
      %v4083 = vrot.slane %v4082, 2
      %v4084 = vrot.slane %v3862, 7
      %v4085 = vrot.slane %v4084, 2
      %v4086 = vrot.slane %v3863, 7
      %v4087 = vrot.slane %v4086, 2
      %v4088 = vrot.slane %v3864, 7
      %v4089 = vrot.slane %v4088, 2
      %v4090 = vrot.slane %v3792, 7
      %v4091 = vrot.slane %v4090, 2
      %v4092 = vrot.slane %v3865, 7
      %v4093 = vrot.slane %v4092, 2
      %v4094 = vrot.slane %v3866, 7
      %v4095 = vrot.slane %v4094, 2
      %v4096 = vrot.slane %v3867, 7
      %v4097 = vrot.slane %v4096, 2
      %v4098 = vrot.slane %v3813, 7
      %v4099 = vrot.slane %v4098, 2
      %v4100 = vrot.slane %v3871, 7
      %v4101 = vrot.slane %v4100, 2
      %v4102 = vrot.slane %v3872, 7
      %v4103 = vrot.slane %v4102, 2
      %v4104 = vrot.slane %v3873, 7
      %v4105 = vrot.slane %v4104, 2
      %v4106 = vrot.slane %v464, 7
      %v4107 = vrot.slane %v4106, 2
      %v4108 = vrot.slane %v641, 7
      %v4109 = vrot.slane %v4108, 2
      %v4110 = vrot.slane %v642, 7
      %v4111 = vrot.slane %v4110, 2
      %v4112 = vrot.slane %v643, 7
      %v4113 = vrot.slane %v4112, 2
      %v4114 = vrot.slane %v3815, 7
      %v4115 = vrot.slane %v4114, 2
      %v4116 = vrot.slane %v3877, 7
      %v4117 = vrot.slane %v4116, 2
      %v4118 = vrot.slane %v3878, 7
      %v4119 = vrot.slane %v4118, 2
      %v4120 = vrot.slane %v3879, 7
      %v4121 = vrot.slane %v4120, 2
      %v4122 = vrot.slane %v473, 7
      %v4123 = vrot.slane %v4122, 2
      %v4124 = vrot.slane %v659, 7
      %v4125 = vrot.slane %v4124, 2
      %v4126 = vrot.slane %v660, 7
      %v4127 = vrot.slane %v4126, 2
      %v4128 = vrot.slane %v661, 7
      %v4129 = vrot.slane %v4128, 2
      %v4130 = vrot.slane %v3817, 7
      %v4131 = vrot.slane %v4130, 2
      %v4132 = vrot.slane %v3883, 7
      %v4133 = vrot.slane %v4132, 2
      %v4134 = vrot.slane %v3884, 7
      %v4135 = vrot.slane %v4134, 2
      %v4136 = vrot.slane %v3885, 7
      %v4137 = vrot.slane %v4136, 2
      %v4138 = vrot.slane %v479, 7
      %v4139 = vrot.slane %v4138, 2
      %v4140 = vrot.slane %v671, 7
      %v4141 = vrot.slane %v4140, 2
      %v4142 = vrot.slane %v672, 7
      %v4143 = vrot.slane %v4142, 2
      %v4144 = vrot.slane %v673, 7
      %v4145 = vrot.slane %v4144, 2
      %v4146 = vrot.slane %v3819, 7
      %v4147 = vrot.slane %v4146, 2
      %v4148 = vrot.slane %v3889, 7
      %v4149 = vrot.slane %v4148, 2
      %v4150 = vrot.slane %v3890, 7
      %v4151 = vrot.slane %v4150, 2
      %v4152 = vrot.slane %v3891, 7
      %v4153 = vrot.slane %v4152, 2
      %v4154 = vrot.slane %v485, 7
      %v4155 = vrot.slane %v4154, 2
      %v4156 = vrot.slane %v683, 7
      %v4157 = vrot.slane %v4156, 2
      %v4158 = vrot.slane %v684, 7
      %v4159 = vrot.slane %v4158, 2
      %v4160 = vrot.slane %v685, 7
      %v4161 = vrot.slane %v4160, 2
      %v4162 = vrot.slane %v3821, 7
      %v4163 = vrot.slane %v4162, 2
      %v4164 = vrot.slane %v3895, 7
      %v4165 = vrot.slane %v4164, 2
      %v4166 = vrot.slane %v3896, 7
      %v4167 = vrot.slane %v4166, 2
      %v4168 = vrot.slane %v3897, 7
      %v4169 = vrot.slane %v4168, 2
      %v4170 = vrot.slane %v491, 7
      %v4171 = vrot.slane %v4170, 2
      %v4172 = vrot.slane %v695, 7
      %v4173 = vrot.slane %v4172, 2
      %v4174 = vrot.slane %v696, 7
      %v4175 = vrot.slane %v4174, 2
      %v4176 = vrot.slane %v697, 7
      %v4177 = vrot.slane %v4176, 2
      %v4178 = vrot.slane %v3823, 7
      %v4179 = vrot.slane %v4178, 2
      %v4180 = vrot.slane %v3901, 7
      %v4181 = vrot.slane %v4180, 2
      %v4182 = vrot.slane %v3902, 7
      %v4183 = vrot.slane %v4182, 2
      %v4184 = vrot.slane %v3903, 7
      %v4185 = vrot.slane %v4184, 2
      %v4186 = vrot.slane %v497, 7
      %v4187 = vrot.slane %v4186, 2
      %v4188 = vrot.slane %v707, 7
      %v4189 = vrot.slane %v4188, 2
      %v4190 = vrot.slane %v708, 7
      %v4191 = vrot.slane %v4190, 2
      %v4192 = vrot.slane %v709, 7
      %v4193 = vrot.slane %v4192, 2
      %v4194 = vrot.slane %v3825, 7
      %v4195 = vrot.slane %v4194, 2
      %v4196 = vrot.slane %v3907, 7
      %v4197 = vrot.slane %v4196, 2
      %v4198 = vrot.slane %v3908, 7
      %v4199 = vrot.slane %v4198, 2
      %v4200 = vrot.slane %v3909, 7
      %v4201 = vrot.slane %v4200, 2
      %v4202 = vrot.slane %v503, 7
      %v4203 = vrot.slane %v4202, 2
      %v4204 = vrot.slane %v719, 7
      %v4205 = vrot.slane %v4204, 2
      %v4206 = vrot.slane %v720, 7
      %v4207 = vrot.slane %v4206, 2
      %v4208 = vrot.slane %v721, 7
      %v4209 = vrot.slane %v4208, 2
      %v4274 = vadd.f32 %v4018, %v4083
      %v4275 = vadd.f32 %v4019, %v4085
      %v4276 = vadd.f32 %v4020, %v4087
      %v4277 = vadd.f32 %v4021, %v4089
      %v4278 = vadd.f32 %v4022, %v4091
      %v4279 = vadd.f32 %v4023, %v4093
      %v4280 = vadd.f32 %v4024, %v4095
      %v4281 = vadd.f32 %v4025, %v4097
      %v4282 = vadd.f32 %v4026, %v4099
      %v4283 = vadd.f32 %v4027, %v4101
      %v4284 = vadd.f32 %v4028, %v4103
      %v4285 = vadd.f32 %v4029, %v4105
      %v4286 = vadd.f32 %v4030, %v4107
      %v4287 = vadd.f32 %v4031, %v4109
      %v4288 = vadd.f32 %v4032, %v4111
      %v4289 = vadd.f32 %v4033, %v4113
      %v4290 = vadd.f32 %v4034, %v4115
      %v4291 = vadd.f32 %v4035, %v4117
      %v4292 = vadd.f32 %v4036, %v4119
      %v4293 = vadd.f32 %v4037, %v4121
      %v4294 = vadd.f32 %v4038, %v4123
      %v4295 = vadd.f32 %v4039, %v4125
      %v4296 = vadd.f32 %v4040, %v4127
      %v4297 = vadd.f32 %v4041, %v4129
      %v4298 = vadd.f32 %v4042, %v4131
      %v4299 = vadd.f32 %v4043, %v4133
      %v4300 = vadd.f32 %v4044, %v4135
      %v4301 = vadd.f32 %v4045, %v4137
      %v4302 = vadd.f32 %v4046, %v4139
      %v4303 = vadd.f32 %v4047, %v4141
      %v4304 = vadd.f32 %v4048, %v4143
      %v4305 = vadd.f32 %v4049, %v4145
      %v4306 = vadd.f32 %v4050, %v4147
      %v4307 = vadd.f32 %v4051, %v4149
      %v4308 = vadd.f32 %v4052, %v4151
      %v4309 = vadd.f32 %v4053, %v4153
      %v4310 = vadd.f32 %v4054, %v4155
      %v4311 = vadd.f32 %v4055, %v4157
      %v4312 = vadd.f32 %v4056, %v4159
      %v4313 = vadd.f32 %v4057, %v4161
      %v4314 = vadd.f32 %v4058, %v4163
      %v4315 = vadd.f32 %v4059, %v4165
      %v4316 = vadd.f32 %v4060, %v4167
      %v4317 = vadd.f32 %v4061, %v4169
      %v4318 = vadd.f32 %v4062, %v4171
      %v4319 = vadd.f32 %v4063, %v4173
      %v4320 = vadd.f32 %v4064, %v4175
      %v4321 = vadd.f32 %v4065, %v4177
      %v4322 = vadd.f32 %v4066, %v4179
      %v4323 = vadd.f32 %v4067, %v4181
      %v4324 = vadd.f32 %v4068, %v4183
      %v4325 = vadd.f32 %v4069, %v4185
      %v4326 = vadd.f32 %v4070, %v4187
      %v4327 = vadd.f32 %v4071, %v4189
      %v4328 = vadd.f32 %v4072, %v4191
      %v4329 = vadd.f32 %v4073, %v4193
      %v4330 = vadd.f32 %v4074, %v4195
      %v4331 = vadd.f32 %v4075, %v4197
      %v4332 = vadd.f32 %v4076, %v4199
      %v4333 = vadd.f32 %v4077, %v4201
      %v4334 = vadd.f32 %v4078, %v4203
      %v4335 = vadd.f32 %v4079, %v4205
      %v4336 = vadd.f32 %v4080, %v4207
      %v4337 = vadd.f32 %v4081, %v4209
      %v4338 = vadd.f32 %v4274, %v3862
      %v4339 = vadd.f32 %v4275, %v3863
      %v4340 = vadd.f32 %v4276, %v3864
      %v4341 = vadd.f32 %v4277, %v3792
      %v4342 = vadd.f32 %v4278, %v3865
      %v4343 = vadd.f32 %v4279, %v3866
      %v4344 = vadd.f32 %v4280, %v3867
      %v4345 = vadd.f32 %v4281, %v3828
      %v4346 = vadd.f32 %v4282, %v3871
      %v4347 = vadd.f32 %v4283, %v3872
      %v4348 = vadd.f32 %v4284, %v3873
      %v4349 = vadd.f32 %v4285, %v464
      %v4350 = vadd.f32 %v4286, %v641
      %v4351 = vadd.f32 %v4287, %v642
      %v4352 = vadd.f32 %v4288, %v643
      %v4353 = vadd.f32 %v4289, %v3830
      %v4354 = vadd.f32 %v4290, %v3877
      %v4355 = vadd.f32 %v4291, %v3878
      %v4356 = vadd.f32 %v4292, %v3879
      %v4357 = vadd.f32 %v4293, %v473
      %v4358 = vadd.f32 %v4294, %v659
      %v4359 = vadd.f32 %v4295, %v660
      %v4360 = vadd.f32 %v4296, %v661
      %v4361 = vadd.f32 %v4297, %v3832
      %v4362 = vadd.f32 %v4298, %v3883
      %v4363 = vadd.f32 %v4299, %v3884
      %v4364 = vadd.f32 %v4300, %v3885
      %v4365 = vadd.f32 %v4301, %v479
      %v4366 = vadd.f32 %v4302, %v671
      %v4367 = vadd.f32 %v4303, %v672
      %v4368 = vadd.f32 %v4304, %v673
      %v4369 = vadd.f32 %v4305, %v3834
      %v4370 = vadd.f32 %v4306, %v3889
      %v4371 = vadd.f32 %v4307, %v3890
      %v4372 = vadd.f32 %v4308, %v3891
      %v4373 = vadd.f32 %v4309, %v485
      %v4374 = vadd.f32 %v4310, %v683
      %v4375 = vadd.f32 %v4311, %v684
      %v4376 = vadd.f32 %v4312, %v685
      %v4377 = vadd.f32 %v4313, %v3836
      %v4378 = vadd.f32 %v4314, %v3895
      %v4379 = vadd.f32 %v4315, %v3896
      %v4380 = vadd.f32 %v4316, %v3897
      %v4381 = vadd.f32 %v4317, %v491
      %v4382 = vadd.f32 %v4318, %v695
      %v4383 = vadd.f32 %v4319, %v696
      %v4384 = vadd.f32 %v4320, %v697
      %v4385 = vadd.f32 %v4321, %v3838
      %v4386 = vadd.f32 %v4322, %v3901
      %v4387 = vadd.f32 %v4323, %v3902
      %v4388 = vadd.f32 %v4324, %v3903
      %v4389 = vadd.f32 %v4325, %v497
      %v4390 = vadd.f32 %v4326, %v707
      %v4391 = vadd.f32 %v4327, %v708
      %v4392 = vadd.f32 %v4328, %v709
      %v4393 = vadd.f32 %v4329, %v3840
      %v4394 = vadd.f32 %v4330, %v3907
      %v4395 = vadd.f32 %v4331, %v3908
      %v4396 = vadd.f32 %v4332, %v3909
      %v4397 = vadd.f32 %v4333, %v503
      %v4398 = vadd.f32 %v4334, %v719
      %v4399 = vadd.f32 %v4335, %v720
      %v4400 = vadd.f32 %v4336, %v721
      %v4401 = vadd.f32 %v4337, %v3842
      %v4402 = vadd.f32 %v4338, %v3812
      %v4403 = vadd.f32 %v4339, %v3868
      %v4404 = vadd.f32 %v4340, %v3869
      %v4405 = vadd.f32 %v4341, %v3870
      %v4406 = vadd.f32 %v4342, %v467
      %v4407 = vadd.f32 %v4343, %v647
      %v4408 = vadd.f32 %v4344, %v648
      %v4409 = vadd.f32 %v4345, %v649
      %v4410 = vadd.f32 %v4346, %v3814
      %v4411 = vadd.f32 %v4347, %v3874
      %v4412 = vadd.f32 %v4348, %v3875
      %v4413 = vadd.f32 %v4349, %v3876
      %v4414 = vadd.f32 %v4350, %v470
      %v4415 = vadd.f32 %v4351, %v653
      %v4416 = vadd.f32 %v4352, %v654
      %v4417 = vadd.f32 %v4353, %v655
      %v4418 = vadd.f32 %v4354, %v3816
      %v4419 = vadd.f32 %v4355, %v3880
      %v4420 = vadd.f32 %v4356, %v3881
      %v4421 = vadd.f32 %v4357, %v3882
      %v4422 = vadd.f32 %v4358, %v476
      %v4423 = vadd.f32 %v4359, %v665
      %v4424 = vadd.f32 %v4360, %v666
      %v4425 = vadd.f32 %v4361, %v667
      %v4426 = vadd.f32 %v4362, %v3818
      %v4427 = vadd.f32 %v4363, %v3886
      %v4428 = vadd.f32 %v4364, %v3887
      %v4429 = vadd.f32 %v4365, %v3888
      %v4430 = vadd.f32 %v4366, %v482
      %v4431 = vadd.f32 %v4367, %v677
      %v4432 = vadd.f32 %v4368, %v678
      %v4433 = vadd.f32 %v4369, %v679
      %v4434 = vadd.f32 %v4370, %v3820
      %v4435 = vadd.f32 %v4371, %v3892
      %v4436 = vadd.f32 %v4372, %v3893
      %v4437 = vadd.f32 %v4373, %v3894
      %v4438 = vadd.f32 %v4374, %v488
      %v4439 = vadd.f32 %v4375, %v689
      %v4440 = vadd.f32 %v4376, %v690
      %v4441 = vadd.f32 %v4377, %v691
      %v4442 = vadd.f32 %v4378, %v3822
      %v4443 = vadd.f32 %v4379, %v3898
      %v4444 = vadd.f32 %v4380, %v3899
      %v4445 = vadd.f32 %v4381, %v3900
      %v4446 = vadd.f32 %v4382, %v494
      %v4447 = vadd.f32 %v4383, %v701
      %v4448 = vadd.f32 %v4384, %v702
      %v4449 = vadd.f32 %v4385, %v703
      %v4450 = vadd.f32 %v4386, %v3824
      %v4451 = vadd.f32 %v4387, %v3904
      %v4452 = vadd.f32 %v4388, %v3905
      %v4453 = vadd.f32 %v4389, %v3906
      %v4454 = vadd.f32 %v4390, %v500
      %v4455 = vadd.f32 %v4391, %v713
      %v4456 = vadd.f32 %v4392, %v714
      %v4457 = vadd.f32 %v4393, %v715
      %v4458 = vadd.f32 %v4394, %v3826
      %v4459 = vadd.f32 %v4395, %v3910
      %v4460 = vadd.f32 %v4396, %v3911
      %v4461 = vadd.f32 %v4397, %v3912
      %v4462 = vadd.f32 %v4398, %v506
      %v4463 = vadd.f32 %v4399, %v725
      %v4464 = vadd.f32 %v4400, %v726
      %v4465 = vadd.f32 %v4401, %v727
      %v4466 = vrot.slane %v3812, 7
      %v4467 = vrot.slane %v4466, 2
      %v4468 = vrot.slane %v3868, 7
      %v4469 = vrot.slane %v4468, 2
      %v4470 = vrot.slane %v3869, 7
      %v4471 = vrot.slane %v4470, 2
      %v4472 = vrot.slane %v3870, 7
      %v4473 = vrot.slane %v4472, 2
      %v4474 = vrot.slane %v467, 7
      %v4475 = vrot.slane %v4474, 2
      %v4476 = vrot.slane %v647, 7
      %v4477 = vrot.slane %v4476, 2
      %v4478 = vrot.slane %v648, 7
      %v4479 = vrot.slane %v4478, 2
      %v4480 = vrot.slane %v649, 7
      %v4481 = vrot.slane %v4480, 2
      %v4482 = vrot.slane %v3814, 7
      %v4483 = vrot.slane %v4482, 2
      %v4484 = vrot.slane %v3874, 7
      %v4485 = vrot.slane %v4484, 2
      %v4486 = vrot.slane %v3875, 7
      %v4487 = vrot.slane %v4486, 2
      %v4488 = vrot.slane %v3876, 7
      %v4489 = vrot.slane %v4488, 2
      %v4490 = vrot.slane %v470, 7
      %v4491 = vrot.slane %v4490, 2
      %v4492 = vrot.slane %v653, 7
      %v4493 = vrot.slane %v4492, 2
      %v4494 = vrot.slane %v654, 7
      %v4495 = vrot.slane %v4494, 2
      %v4496 = vrot.slane %v655, 7
      %v4497 = vrot.slane %v4496, 2
      %v4498 = vrot.slane %v3816, 7
      %v4499 = vrot.slane %v4498, 2
      %v4500 = vrot.slane %v3880, 7
      %v4501 = vrot.slane %v4500, 2
      %v4502 = vrot.slane %v3881, 7
      %v4503 = vrot.slane %v4502, 2
      %v4504 = vrot.slane %v3882, 7
      %v4505 = vrot.slane %v4504, 2
      %v4506 = vrot.slane %v476, 7
      %v4507 = vrot.slane %v4506, 2
      %v4508 = vrot.slane %v665, 7
      %v4509 = vrot.slane %v4508, 2
      %v4510 = vrot.slane %v666, 7
      %v4511 = vrot.slane %v4510, 2
      %v4512 = vrot.slane %v667, 7
      %v4513 = vrot.slane %v4512, 2
      %v4514 = vrot.slane %v3818, 7
      %v4515 = vrot.slane %v4514, 2
      %v4516 = vrot.slane %v3886, 7
      %v4517 = vrot.slane %v4516, 2
      %v4518 = vrot.slane %v3887, 7
      %v4519 = vrot.slane %v4518, 2
      %v4520 = vrot.slane %v3888, 7
      %v4521 = vrot.slane %v4520, 2
      %v4522 = vrot.slane %v482, 7
      %v4523 = vrot.slane %v4522, 2
      %v4524 = vrot.slane %v677, 7
      %v4525 = vrot.slane %v4524, 2
      %v4526 = vrot.slane %v678, 7
      %v4527 = vrot.slane %v4526, 2
      %v4528 = vrot.slane %v679, 7
      %v4529 = vrot.slane %v4528, 2
      %v4530 = vrot.slane %v3820, 7
      %v4531 = vrot.slane %v4530, 2
      %v4532 = vrot.slane %v3892, 7
      %v4533 = vrot.slane %v4532, 2
      %v4534 = vrot.slane %v3893, 7
      %v4535 = vrot.slane %v4534, 2
      %v4536 = vrot.slane %v3894, 7
      %v4537 = vrot.slane %v4536, 2
      %v4538 = vrot.slane %v488, 7
      %v4539 = vrot.slane %v4538, 2
      %v4540 = vrot.slane %v689, 7
      %v4541 = vrot.slane %v4540, 2
      %v4542 = vrot.slane %v690, 7
      %v4543 = vrot.slane %v4542, 2
      %v4544 = vrot.slane %v691, 7
      %v4545 = vrot.slane %v4544, 2
      %v4546 = vrot.slane %v3822, 7
      %v4547 = vrot.slane %v4546, 2
      %v4548 = vrot.slane %v3898, 7
      %v4549 = vrot.slane %v4548, 2
      %v4550 = vrot.slane %v3899, 7
      %v4551 = vrot.slane %v4550, 2
      %v4552 = vrot.slane %v3900, 7
      %v4553 = vrot.slane %v4552, 2
      %v4554 = vrot.slane %v494, 7
      %v4555 = vrot.slane %v4554, 2
      %v4556 = vrot.slane %v701, 7
      %v4557 = vrot.slane %v4556, 2
      %v4558 = vrot.slane %v702, 7
      %v4559 = vrot.slane %v4558, 2
      %v4560 = vrot.slane %v703, 7
      %v4561 = vrot.slane %v4560, 2
      %v4562 = vrot.slane %v3824, 7
      %v4563 = vrot.slane %v4562, 2
      %v4564 = vrot.slane %v3904, 7
      %v4565 = vrot.slane %v4564, 2
      %v4566 = vrot.slane %v3905, 7
      %v4567 = vrot.slane %v4566, 2
      %v4568 = vrot.slane %v3906, 7
      %v4569 = vrot.slane %v4568, 2
      %v4570 = vrot.slane %v500, 7
      %v4571 = vrot.slane %v4570, 2
      %v4572 = vrot.slane %v713, 7
      %v4573 = vrot.slane %v4572, 2
      %v4574 = vrot.slane %v714, 7
      %v4575 = vrot.slane %v4574, 2
      %v4576 = vrot.slane %v715, 7
      %v4577 = vrot.slane %v4576, 2
      %v4578 = vrot.slane %v3826, 7
      %v4579 = vrot.slane %v4578, 2
      %v4580 = vrot.slane %v3910, 7
      %v4581 = vrot.slane %v4580, 2
      %v4582 = vrot.slane %v3911, 7
      %v4583 = vrot.slane %v4582, 2
      %v4584 = vrot.slane %v3912, 7
      %v4585 = vrot.slane %v4584, 2
      %v4586 = vrot.slane %v506, 7
      %v4587 = vrot.slane %v4586, 2
      %v4588 = vrot.slane %v725, 7
      %v4589 = vrot.slane %v4588, 2
      %v4590 = vrot.slane %v726, 7
      %v4591 = vrot.slane %v4590, 2
      %v4592 = vrot.slane %v727, 7
      %v4593 = vrot.slane %v4592, 2
      %v4658 = vadd.f32 %v4402, %v4467
      %v4659 = vadd.f32 %v4403, %v4469
      %v4660 = vadd.f32 %v4404, %v4471
      %v4661 = vadd.f32 %v4405, %v4473
      %v4662 = vadd.f32 %v4406, %v4475
      %v4663 = vadd.f32 %v4407, %v4477
      %v4664 = vadd.f32 %v4408, %v4479
      %v4665 = vadd.f32 %v4409, %v4481
      %v4666 = vadd.f32 %v4410, %v4483
      %v4667 = vadd.f32 %v4411, %v4485
      %v4668 = vadd.f32 %v4412, %v4487
      %v4669 = vadd.f32 %v4413, %v4489
      %v4670 = vadd.f32 %v4414, %v4491
      %v4671 = vadd.f32 %v4415, %v4493
      %v4672 = vadd.f32 %v4416, %v4495
      %v4673 = vadd.f32 %v4417, %v4497
      %v4674 = vadd.f32 %v4418, %v4499
      %v4675 = vadd.f32 %v4419, %v4501
      %v4676 = vadd.f32 %v4420, %v4503
      %v4677 = vadd.f32 %v4421, %v4505
      %v4678 = vadd.f32 %v4422, %v4507
      %v4679 = vadd.f32 %v4423, %v4509
      %v4680 = vadd.f32 %v4424, %v4511
      %v4681 = vadd.f32 %v4425, %v4513
      %v4682 = vadd.f32 %v4426, %v4515
      %v4683 = vadd.f32 %v4427, %v4517
      %v4684 = vadd.f32 %v4428, %v4519
      %v4685 = vadd.f32 %v4429, %v4521
      %v4686 = vadd.f32 %v4430, %v4523
      %v4687 = vadd.f32 %v4431, %v4525
      %v4688 = vadd.f32 %v4432, %v4527
      %v4689 = vadd.f32 %v4433, %v4529
      %v4690 = vadd.f32 %v4434, %v4531
      %v4691 = vadd.f32 %v4435, %v4533
      %v4692 = vadd.f32 %v4436, %v4535
      %v4693 = vadd.f32 %v4437, %v4537
      %v4694 = vadd.f32 %v4438, %v4539
      %v4695 = vadd.f32 %v4439, %v4541
      %v4696 = vadd.f32 %v4440, %v4543
      %v4697 = vadd.f32 %v4441, %v4545
      %v4698 = vadd.f32 %v4442, %v4547
      %v4699 = vadd.f32 %v4443, %v4549
      %v4700 = vadd.f32 %v4444, %v4551
      %v4701 = vadd.f32 %v4445, %v4553
      %v4702 = vadd.f32 %v4446, %v4555
      %v4703 = vadd.f32 %v4447, %v4557
      %v4704 = vadd.f32 %v4448, %v4559
      %v4705 = vadd.f32 %v4449, %v4561
      %v4706 = vadd.f32 %v4450, %v4563
      %v4707 = vadd.f32 %v4451, %v4565
      %v4708 = vadd.f32 %v4452, %v4567
      %v4709 = vadd.f32 %v4453, %v4569
      %v4710 = vadd.f32 %v4454, %v4571
      %v4711 = vadd.f32 %v4455, %v4573
      %v4712 = vadd.f32 %v4456, %v4575
      %v4713 = vadd.f32 %v4457, %v4577
      %v4714 = vadd.f32 %v4458, %v4579
      %v4715 = vadd.f32 %v4459, %v4581
      %v4716 = vadd.f32 %v4460, %v4583
      %v4717 = vadd.f32 %v4461, %v4585
      %v4718 = vadd.f32 %v4462, %v4587
      %v4719 = vadd.f32 %v4463, %v4589
      %v4720 = vadd.f32 %v4464, %v4591
      %v4721 = vadd.f32 %v4465, %v4593
      %v4722 = vadd.f32 %v4658, %v3868
      %v4723 = vadd.f32 %v4659, %v3869
      %v4724 = vadd.f32 %v4660, %v3870
      %v4725 = vadd.f32 %v4661, %v467
      %v4726 = vadd.f32 %v4662, %v647
      %v4727 = vadd.f32 %v4663, %v648
      %v4728 = vadd.f32 %v4664, %v649
      %v4729 = vadd.f32 %v4665, %v3829
      %v4730 = vadd.f32 %v4666, %v3874
      %v4731 = vadd.f32 %v4667, %v3875
      %v4732 = vadd.f32 %v4668, %v3876
      %v4733 = vadd.f32 %v4669, %v470
      %v4734 = vadd.f32 %v4670, %v653
      %v4735 = vadd.f32 %v4671, %v654
      %v4736 = vadd.f32 %v4672, %v655
      %v4737 = vadd.f32 %v4673, %v3831
      %v4738 = vadd.f32 %v4674, %v3880
      %v4739 = vadd.f32 %v4675, %v3881
      %v4740 = vadd.f32 %v4676, %v3882
      %v4741 = vadd.f32 %v4677, %v476
      %v4742 = vadd.f32 %v4678, %v665
      %v4743 = vadd.f32 %v4679, %v666
      %v4744 = vadd.f32 %v4680, %v667
      %v4745 = vadd.f32 %v4681, %v3833
      %v4746 = vadd.f32 %v4682, %v3886
      %v4747 = vadd.f32 %v4683, %v3887
      %v4748 = vadd.f32 %v4684, %v3888
      %v4749 = vadd.f32 %v4685, %v482
      %v4750 = vadd.f32 %v4686, %v677
      %v4751 = vadd.f32 %v4687, %v678
      %v4752 = vadd.f32 %v4688, %v679
      %v4753 = vadd.f32 %v4689, %v3835
      %v4754 = vadd.f32 %v4690, %v3892
      %v4755 = vadd.f32 %v4691, %v3893
      %v4756 = vadd.f32 %v4692, %v3894
      %v4757 = vadd.f32 %v4693, %v488
      %v4758 = vadd.f32 %v4694, %v689
      %v4759 = vadd.f32 %v4695, %v690
      %v4760 = vadd.f32 %v4696, %v691
      %v4761 = vadd.f32 %v4697, %v3837
      %v4762 = vadd.f32 %v4698, %v3898
      %v4763 = vadd.f32 %v4699, %v3899
      %v4764 = vadd.f32 %v4700, %v3900
      %v4765 = vadd.f32 %v4701, %v494
      %v4766 = vadd.f32 %v4702, %v701
      %v4767 = vadd.f32 %v4703, %v702
      %v4768 = vadd.f32 %v4704, %v703
      %v4769 = vadd.f32 %v4705, %v3839
      %v4770 = vadd.f32 %v4706, %v3904
      %v4771 = vadd.f32 %v4707, %v3905
      %v4772 = vadd.f32 %v4708, %v3906
      %v4773 = vadd.f32 %v4709, %v500
      %v4774 = vadd.f32 %v4710, %v713
      %v4775 = vadd.f32 %v4711, %v714
      %v4776 = vadd.f32 %v4712, %v715
      %v4777 = vadd.f32 %v4713, %v3841
      %v4778 = vadd.f32 %v4714, %v3910
      %v4779 = vadd.f32 %v4715, %v3911
      %v4780 = vadd.f32 %v4716, %v3912
      %v4781 = vadd.f32 %v4717, %v506
      %v4782 = vadd.f32 %v4718, %v725
      %v4783 = vadd.f32 %v4719, %v726
      %v4784 = vadd.f32 %v4720, %v727
      %v4785 = vadd.f32 %v4721, %v3843
      %v4786 = vadd.f32 %v4722, %v3813
      %v4787 = vadd.f32 %v4723, %v3871
      %v4788 = vadd.f32 %v4724, %v3872
      %v4789 = vadd.f32 %v4725, %v3873
      %v4790 = vadd.f32 %v4726, %v464
      %v4791 = vadd.f32 %v4727, %v641
      %v4792 = vadd.f32 %v4728, %v642
      %v4793 = vadd.f32 %v4729, %v643
      %v4794 = vadd.f32 %v4730, %v3815
      %v4795 = vadd.f32 %v4731, %v3877
      %v4796 = vadd.f32 %v4732, %v3878
      %v4797 = vadd.f32 %v4733, %v3879
      %v4798 = vadd.f32 %v4734, %v473
      %v4799 = vadd.f32 %v4735, %v659
      %v4800 = vadd.f32 %v4736, %v660
      %v4801 = vadd.f32 %v4737, %v661
      %v4802 = vadd.f32 %v4738, %v3817
      %v4803 = vadd.f32 %v4739, %v3883
      %v4804 = vadd.f32 %v4740, %v3884
      %v4805 = vadd.f32 %v4741, %v3885
      %v4806 = vadd.f32 %v4742, %v479
      %v4807 = vadd.f32 %v4743, %v671
      %v4808 = vadd.f32 %v4744, %v672
      %v4809 = vadd.f32 %v4745, %v673
      %v4810 = vadd.f32 %v4746, %v3819
      %v4811 = vadd.f32 %v4747, %v3889
      %v4812 = vadd.f32 %v4748, %v3890
      %v4813 = vadd.f32 %v4749, %v3891
      %v4814 = vadd.f32 %v4750, %v485
      %v4815 = vadd.f32 %v4751, %v683
      %v4816 = vadd.f32 %v4752, %v684
      %v4817 = vadd.f32 %v4753, %v685
      %v4818 = vadd.f32 %v4754, %v3821
      %v4819 = vadd.f32 %v4755, %v3895
      %v4820 = vadd.f32 %v4756, %v3896
      %v4821 = vadd.f32 %v4757, %v3897
      %v4822 = vadd.f32 %v4758, %v491
      %v4823 = vadd.f32 %v4759, %v695
      %v4824 = vadd.f32 %v4760, %v696
      %v4825 = vadd.f32 %v4761, %v697
      %v4826 = vadd.f32 %v4762, %v3823
      %v4827 = vadd.f32 %v4763, %v3901
      %v4828 = vadd.f32 %v4764, %v3902
      %v4829 = vadd.f32 %v4765, %v3903
      %v4830 = vadd.f32 %v4766, %v497
      %v4831 = vadd.f32 %v4767, %v707
      %v4832 = vadd.f32 %v4768, %v708
      %v4833 = vadd.f32 %v4769, %v709
      %v4834 = vadd.f32 %v4770, %v3825
      %v4835 = vadd.f32 %v4771, %v3907
      %v4836 = vadd.f32 %v4772, %v3908
      %v4837 = vadd.f32 %v4773, %v3909
      %v4838 = vadd.f32 %v4774, %v503
      %v4839 = vadd.f32 %v4775, %v719
      %v4840 = vadd.f32 %v4776, %v720
      %v4841 = vadd.f32 %v4777, %v721
      %v4842 = vadd.f32 %v4778, %v3827
      %v4843 = vadd.f32 %v4779, %v3913
      %v4844 = vadd.f32 %v4780, %v3914
      %v4845 = vadd.f32 %v4781, %v3915
      %v4846 = vadd.f32 %v4782, %v509
      %v4847 = vadd.f32 %v4783, %v731
      %v4848 = vadd.f32 %v4784, %v732
      %v4849 = vadd.f32 %v4785, %v733
      %v4850 = vrot.slane %v3827, 7
      %v4851 = vrot.slane %v4850, 2
      %v4852 = vrot.slane %v3913, 7
      %v4853 = vrot.slane %v4852, 2
      %v4854 = vrot.slane %v3914, 7
      %v4855 = vrot.slane %v4854, 2
      %v4856 = vrot.slane %v3915, 7
      %v4857 = vrot.slane %v4856, 2
      %v4858 = vrot.slane %v509, 7
      %v4859 = vrot.slane %v4858, 2
      %v4860 = vrot.slane %v731, 7
      %v4861 = vrot.slane %v4860, 2
      %v4862 = vrot.slane %v732, 7
      %v4863 = vrot.slane %v4862, 2
      %v4864 = vrot.slane %v733, 7
      %v4865 = vrot.slane %v4864, 2
      %v4874 = vadd.f32 %v4786, %v4099
      %v4875 = vadd.f32 %v4787, %v4101
      %v4876 = vadd.f32 %v4788, %v4103
      %v4877 = vadd.f32 %v4789, %v4105
      %v4878 = vadd.f32 %v4790, %v4107
      %v4879 = vadd.f32 %v4791, %v4109
      %v4880 = vadd.f32 %v4792, %v4111
      %v4881 = vadd.f32 %v4793, %v4113
      %v4882 = vadd.f32 %v4794, %v4115
      %v4883 = vadd.f32 %v4795, %v4117
      %v4884 = vadd.f32 %v4796, %v4119
      %v4885 = vadd.f32 %v4797, %v4121
      %v4886 = vadd.f32 %v4798, %v4123
      %v4887 = vadd.f32 %v4799, %v4125
      %v4888 = vadd.f32 %v4800, %v4127
      %v4889 = vadd.f32 %v4801, %v4129
      %v4890 = vadd.f32 %v4802, %v4131
      %v4891 = vadd.f32 %v4803, %v4133
      %v4892 = vadd.f32 %v4804, %v4135
      %v4893 = vadd.f32 %v4805, %v4137
      %v4894 = vadd.f32 %v4806, %v4139
      %v4895 = vadd.f32 %v4807, %v4141
      %v4896 = vadd.f32 %v4808, %v4143
      %v4897 = vadd.f32 %v4809, %v4145
      %v4898 = vadd.f32 %v4810, %v4147
      %v4899 = vadd.f32 %v4811, %v4149
      %v4900 = vadd.f32 %v4812, %v4151
      %v4901 = vadd.f32 %v4813, %v4153
      %v4902 = vadd.f32 %v4814, %v4155
      %v4903 = vadd.f32 %v4815, %v4157
      %v4904 = vadd.f32 %v4816, %v4159
      %v4905 = vadd.f32 %v4817, %v4161
      %v4906 = vadd.f32 %v4818, %v4163
      %v4907 = vadd.f32 %v4819, %v4165
      %v4908 = vadd.f32 %v4820, %v4167
      %v4909 = vadd.f32 %v4821, %v4169
      %v4910 = vadd.f32 %v4822, %v4171
      %v4911 = vadd.f32 %v4823, %v4173
      %v4912 = vadd.f32 %v4824, %v4175
      %v4913 = vadd.f32 %v4825, %v4177
      %v4914 = vadd.f32 %v4826, %v4179
      %v4915 = vadd.f32 %v4827, %v4181
      %v4916 = vadd.f32 %v4828, %v4183
      %v4917 = vadd.f32 %v4829, %v4185
      %v4918 = vadd.f32 %v4830, %v4187
      %v4919 = vadd.f32 %v4831, %v4189
      %v4920 = vadd.f32 %v4832, %v4191
      %v4921 = vadd.f32 %v4833, %v4193
      %v4922 = vadd.f32 %v4834, %v4195
      %v4923 = vadd.f32 %v4835, %v4197
      %v4924 = vadd.f32 %v4836, %v4199
      %v4925 = vadd.f32 %v4837, %v4201
      %v4926 = vadd.f32 %v4838, %v4203
      %v4927 = vadd.f32 %v4839, %v4205
      %v4928 = vadd.f32 %v4840, %v4207
      %v4929 = vadd.f32 %v4841, %v4209
      %v4930 = vadd.f32 %v4842, %v4851
      %v4931 = vadd.f32 %v4843, %v4853
      %v4932 = vadd.f32 %v4844, %v4855
      %v4933 = vadd.f32 %v4845, %v4857
      %v4934 = vadd.f32 %v4846, %v4859
      %v4935 = vadd.f32 %v4847, %v4861
      %v4936 = vadd.f32 %v4848, %v4863
      %v4937 = vadd.f32 %v4849, %v4865
      %v4938 = vadd.f32 %v4874, %v3871
      %v4939 = vadd.f32 %v4875, %v3872
      %v4940 = vadd.f32 %v4876, %v3873
      %v4941 = vadd.f32 %v4877, %v464
      %v4942 = vadd.f32 %v4878, %v641
      %v4943 = vadd.f32 %v4879, %v642
      %v4944 = vadd.f32 %v4880, %v643
      %v4945 = vadd.f32 %v4881, %v3830
      %v4946 = vadd.f32 %v4882, %v3877
      %v4947 = vadd.f32 %v4883, %v3878
      %v4948 = vadd.f32 %v4884, %v3879
      %v4949 = vadd.f32 %v4885, %v473
      %v4950 = vadd.f32 %v4886, %v659
      %v4951 = vadd.f32 %v4887, %v660
      %v4952 = vadd.f32 %v4888, %v661
      %v4953 = vadd.f32 %v4889, %v3832
      %v4954 = vadd.f32 %v4890, %v3883
      %v4955 = vadd.f32 %v4891, %v3884
      %v4956 = vadd.f32 %v4892, %v3885
      %v4957 = vadd.f32 %v4893, %v479
      %v4958 = vadd.f32 %v4894, %v671
      %v4959 = vadd.f32 %v4895, %v672
      %v4960 = vadd.f32 %v4896, %v673
      %v4961 = vadd.f32 %v4897, %v3834
      %v4962 = vadd.f32 %v4898, %v3889
      %v4963 = vadd.f32 %v4899, %v3890
      %v4964 = vadd.f32 %v4900, %v3891
      %v4965 = vadd.f32 %v4901, %v485
      %v4966 = vadd.f32 %v4902, %v683
      %v4967 = vadd.f32 %v4903, %v684
      %v4968 = vadd.f32 %v4904, %v685
      %v4969 = vadd.f32 %v4905, %v3836
      %v4970 = vadd.f32 %v4906, %v3895
      %v4971 = vadd.f32 %v4907, %v3896
      %v4972 = vadd.f32 %v4908, %v3897
      %v4973 = vadd.f32 %v4909, %v491
      %v4974 = vadd.f32 %v4910, %v695
      %v4975 = vadd.f32 %v4911, %v696
      %v4976 = vadd.f32 %v4912, %v697
      %v4977 = vadd.f32 %v4913, %v3838
      %v4978 = vadd.f32 %v4914, %v3901
      %v4979 = vadd.f32 %v4915, %v3902
      %v4980 = vadd.f32 %v4916, %v3903
      %v4981 = vadd.f32 %v4917, %v497
      %v4982 = vadd.f32 %v4918, %v707
      %v4983 = vadd.f32 %v4919, %v708
      %v4984 = vadd.f32 %v4920, %v709
      %v4985 = vadd.f32 %v4921, %v3840
      %v4986 = vadd.f32 %v4922, %v3907
      %v4987 = vadd.f32 %v4923, %v3908
      %v4988 = vadd.f32 %v4924, %v3909
      %v4989 = vadd.f32 %v4925, %v503
      %v4990 = vadd.f32 %v4926, %v719
      %v4991 = vadd.f32 %v4927, %v720
      %v4992 = vadd.f32 %v4928, %v721
      %v4993 = vadd.f32 %v4929, %v3842
      %v4994 = vadd.f32 %v4930, %v3913
      %v4995 = vadd.f32 %v4931, %v3914
      %v4996 = vadd.f32 %v4932, %v3915
      %v4997 = vadd.f32 %v4933, %v509
      %v4998 = vadd.f32 %v4934, %v731
      %v4999 = vadd.f32 %v4935, %v732
      %v5000 = vadd.f32 %v4936, %v733
      %v5001 = vadd.f32 %v4937, %v3844
      %5003 = vset.pattern.permute.xlu0 0
      %5004 = vperm.xlu0 %5003, %v3782
      %v5005 = vpop.permute.xlu0 %5004
      %5007 = vset.pattern.permute.xlu0 0
      %5008 = vperm.xlu0 %5007, %v3783
      %v5009 = vpop.permute.xlu0 %5008
      %5011 = vset.pattern.permute.xlu0 0
      %5012 = vperm.xlu0 %5011, %v3784
      %v5013 = vpop.permute.xlu0 %5012
      %5015 = vset.pattern.permute.xlu0 0
      %5016 = vperm.xlu0 %5015, %v3785
      %v5017 = vpop.permute.xlu0 %5016
      %5019 = vset.pattern.permute.xlu0 0
      %5020 = vperm.xlu0 %5019, %v3786
      %v5021 = vpop.permute.xlu0 %5020
      %5023 = vset.pattern.permute.xlu0 0
      %5024 = vperm.xlu0 %5023, %v3787
      %v5025 = vpop.permute.xlu0 %5024
      %5027 = vset.pattern.permute.xlu0 0
      %5028 = vperm.xlu0 %5027, %v3788
      %v5029 = vpop.permute.xlu0 %5028
      %5031 = vset.pattern.permute.xlu0 0
      %5032 = vperm.xlu0 %5031, %v3789
      %v5033 = vpop.permute.xlu0 %5032
      %v5035 = vunpack.c.l.s4 269488144
      %v5036 = vunpack.c.0.s8 %v5035
      %v5037 = vperm.slane %v5005, %v5036
      %v5039 = vunpack.c.l.s4 842150450
      %v5040 = vunpack.c.0.s8 %v5039
      %v5041 = vperm.slane %v5005, %v5040
      %v5043 = vunpack.c.l.s4 1414812756
      %v5044 = vunpack.c.0.s8 %v5043
      %v5045 = vperm.slane %v5005, %v5044
      %v5047 = vunpack.c.l.s4 1987475062
      %v5048 = vunpack.c.0.s8 %v5047
      %v5049 = vperm.slane %v5005, %v5048
      %v5051 = vunpack.c.l.s4 269488144
      %v5052 = vunpack.c.0.s8 %v5051
      %v5053 = vperm.slane %v5009, %v5052
      %v5055 = vunpack.c.l.s4 842150450
      %v5056 = vunpack.c.0.s8 %v5055
      %v5057 = vperm.slane %v5009, %v5056
      %v5059 = vunpack.c.l.s4 1414812756
      %v5060 = vunpack.c.0.s8 %v5059
      %v5061 = vperm.slane %v5009, %v5060
      %v5063 = vunpack.c.l.s4 1987475062
      %v5064 = vunpack.c.0.s8 %v5063
      %v5065 = vperm.slane %v5009, %v5064
      %v5067 = vunpack.c.l.s4 269488144
      %v5068 = vunpack.c.0.s8 %v5067
      %v5069 = vperm.slane %v5013, %v5068
      %v5071 = vunpack.c.l.s4 842150450
      %v5072 = vunpack.c.0.s8 %v5071
      %v5073 = vperm.slane %v5013, %v5072
      %v5075 = vunpack.c.l.s4 1414812756
      %v5076 = vunpack.c.0.s8 %v5075
      %v5077 = vperm.slane %v5013, %v5076
      %v5079 = vunpack.c.l.s4 1987475062
      %v5080 = vunpack.c.0.s8 %v5079
      %v5081 = vperm.slane %v5013, %v5080
      %v5083 = vunpack.c.l.s4 269488144
      %v5084 = vunpack.c.0.s8 %v5083
      %v5085 = vperm.slane %v5017, %v5084
      %v5087 = vunpack.c.l.s4 842150450
      %v5088 = vunpack.c.0.s8 %v5087
      %v5089 = vperm.slane %v5017, %v5088
      %v5091 = vunpack.c.l.s4 1414812756
      %v5092 = vunpack.c.0.s8 %v5091
      %v5093 = vperm.slane %v5017, %v5092
      %v5095 = vunpack.c.l.s4 1987475062
      %v5096 = vunpack.c.0.s8 %v5095
      %v5097 = vperm.slane %v5017, %v5096
      %v5099 = vunpack.c.l.s4 269488144
      %v5100 = vunpack.c.0.s8 %v5099
      %v5101 = vperm.slane %v5021, %v5100
      %v5103 = vunpack.c.l.s4 842150450
      %v5104 = vunpack.c.0.s8 %v5103
      %v5105 = vperm.slane %v5021, %v5104
      %v5107 = vunpack.c.l.s4 1414812756
      %v5108 = vunpack.c.0.s8 %v5107
      %v5109 = vperm.slane %v5021, %v5108
      %v5111 = vunpack.c.l.s4 1987475062
      %v5112 = vunpack.c.0.s8 %v5111
      %v5113 = vperm.slane %v5021, %v5112
      %v5115 = vunpack.c.l.s4 269488144
      %v5116 = vunpack.c.0.s8 %v5115
      %v5117 = vperm.slane %v5025, %v5116
      %v5119 = vunpack.c.l.s4 842150450
      %v5120 = vunpack.c.0.s8 %v5119
      %v5121 = vperm.slane %v5025, %v5120
      %v5123 = vunpack.c.l.s4 1414812756
      %v5124 = vunpack.c.0.s8 %v5123
      %v5125 = vperm.slane %v5025, %v5124
      %v5127 = vunpack.c.l.s4 1987475062
      %v5128 = vunpack.c.0.s8 %v5127
      %v5129 = vperm.slane %v5025, %v5128
      %v5131 = vunpack.c.l.s4 269488144
      %v5132 = vunpack.c.0.s8 %v5131
      %v5133 = vperm.slane %v5029, %v5132
      %v5135 = vunpack.c.l.s4 842150450
      %v5136 = vunpack.c.0.s8 %v5135
      %v5137 = vperm.slane %v5029, %v5136
      %v5139 = vunpack.c.l.s4 1414812756
      %v5140 = vunpack.c.0.s8 %v5139
      %v5141 = vperm.slane %v5029, %v5140
      %v5143 = vunpack.c.l.s4 1987475062
      %v5144 = vunpack.c.0.s8 %v5143
      %v5145 = vperm.slane %v5029, %v5144
      %v5147 = vunpack.c.l.s4 269488144
      %v5148 = vunpack.c.0.s8 %v5147
      %v5149 = vperm.slane %v5033, %v5148
      %v5151 = vunpack.c.l.s4 842150450
      %v5152 = vunpack.c.0.s8 %v5151
      %v5153 = vperm.slane %v5033, %v5152
      %v5155 = vunpack.c.l.s4 1414812756
      %v5156 = vunpack.c.0.s8 %v5155
      %v5157 = vperm.slane %v5033, %v5156
      %v5159 = vunpack.c.l.s4 1987475062
      %v5160 = vunpack.c.0.s8 %v5159
      %v5161 = vperm.slane %v5033, %v5160
      %v5162 = vrot.slane %v5037, 1
      %v5163 = vrot.slane %v5041, 1
      %v5164 = vrot.slane %v5045, 1
      %v5165 = vrot.slane %v5049, 1
      %v5166 = vrot.slane %v5053, 1
      %v5167 = vrot.slane %v5057, 1
      %v5168 = vrot.slane %v5061, 1
      %v5169 = vrot.slane %v5065, 1
      %v5170 = vrot.slane %v5069, 1
      %v5171 = vrot.slane %v5073, 1
      %v5172 = vrot.slane %v5077, 1
      %v5173 = vrot.slane %v5081, 1
      %v5174 = vrot.slane %v5085, 1
      %v5175 = vrot.slane %v5089, 1
      %v5176 = vrot.slane %v5093, 1
      %v5177 = vrot.slane %v5097, 1
      %v5178 = vrot.slane %v5101, 1
      %v5179 = vrot.slane %v5105, 1
      %v5180 = vrot.slane %v5109, 1
      %v5181 = vrot.slane %v5113, 1
      %v5182 = vrot.slane %v5117, 1
      %v5183 = vrot.slane %v5121, 1
      %v5184 = vrot.slane %v5125, 1
      %v5185 = vrot.slane %v5129, 1
      %v5186 = vrot.slane %v5133, 1
      %v5187 = vrot.slane %v5137, 1
      %v5188 = vrot.slane %v5141, 1
      %v5189 = vrot.slane %v5145, 1
      %v5190 = vrot.slane %v5149, 1
      %v5191 = vrot.slane %v5153, 1
      %v5192 = vrot.slane %v5157, 1
      %v5193 = vrot.slane %v5161, 1
      %v5258 = vmul.f32 %v4938, %v5037
      %v5259 = vmul.f32 %v4939, %v5162
      %v5260 = vmul.f32 %v4940, %v5041
      %v5261 = vmul.f32 %v4941, %v5163
      %v5262 = vmul.f32 %v4942, %v5045
      %v5263 = vmul.f32 %v4943, %v5164
      %v5264 = vmul.f32 %v4944, %v5049
      %v5265 = vmul.f32 %v4945, %v5165
      %v5266 = vmul.f32 %v4946, %v5053
      %v5267 = vmul.f32 %v4947, %v5166
      %v5268 = vmul.f32 %v4948, %v5057
      %v5269 = vmul.f32 %v4949, %v5167
      %v5270 = vmul.f32 %v4950, %v5061
      %v5271 = vmul.f32 %v4951, %v5168
      %v5272 = vmul.f32 %v4952, %v5065
      %v5273 = vmul.f32 %v4953, %v5169
      %v5274 = vmul.f32 %v4954, %v5069
      %v5275 = vmul.f32 %v4955, %v5170
      %v5276 = vmul.f32 %v4956, %v5073
      %v5277 = vmul.f32 %v4957, %v5171
      %v5278 = vmul.f32 %v4958, %v5077
      %v5279 = vmul.f32 %v4959, %v5172
      %v5280 = vmul.f32 %v4960, %v5081
      %v5281 = vmul.f32 %v4961, %v5173
      %v5282 = vmul.f32 %v4962, %v5085
      %v5283 = vmul.f32 %v4963, %v5174
      %v5284 = vmul.f32 %v4964, %v5089
      %v5285 = vmul.f32 %v4965, %v5175
      %v5286 = vmul.f32 %v4966, %v5093
      %v5287 = vmul.f32 %v4967, %v5176
      %v5288 = vmul.f32 %v4968, %v5097
      %v5289 = vmul.f32 %v4969, %v5177
      %v5290 = vmul.f32 %v4970, %v5101
      %v5291 = vmul.f32 %v4971, %v5178
      %v5292 = vmul.f32 %v4972, %v5105
      %v5293 = vmul.f32 %v4973, %v5179
      %v5294 = vmul.f32 %v4974, %v5109
      %v5295 = vmul.f32 %v4975, %v5180
      %v5296 = vmul.f32 %v4976, %v5113
      %v5297 = vmul.f32 %v4977, %v5181
      %v5298 = vmul.f32 %v4978, %v5117
      %v5299 = vmul.f32 %v4979, %v5182
      %v5300 = vmul.f32 %v4980, %v5121
      %v5301 = vmul.f32 %v4981, %v5183
      %v5302 = vmul.f32 %v4982, %v5125
      %v5303 = vmul.f32 %v4983, %v5184
      %v5304 = vmul.f32 %v4984, %v5129
      %v5305 = vmul.f32 %v4985, %v5185
      %v5306 = vmul.f32 %v4986, %v5133
      %v5307 = vmul.f32 %v4987, %v5186
      %v5308 = vmul.f32 %v4988, %v5137
      %v5309 = vmul.f32 %v4989, %v5187
      %v5310 = vmul.f32 %v4990, %v5141
      %v5311 = vmul.f32 %v4991, %v5188
      %v5312 = vmul.f32 %v4992, %v5145
      %v5313 = vmul.f32 %v4993, %v5189
      %v5314 = vmul.f32 %v4994, %v5149
      %v5315 = vmul.f32 %v4995, %v5190
      %v5316 = vmul.f32 %v4996, %v5153
      %v5317 = vmul.f32 %v4997, %v5191
      %v5318 = vmul.f32 %v4998, %v5157
      %v5319 = vmul.f32 %v4999, %v5192
      %v5320 = vmul.f32 %v5000, %v5161
      %v5321 = vmul.f32 %v5001, %v5193
      %v5386 = vperm.slane %v5258, 0
      %v5387 = vperm.slane %v5259, 0
      %v5388 = vperm.slane %v5260, 0
      %v5389 = vperm.slane %v5261, 0
      %v5390 = vperm.slane %v5262, 0
      %v5391 = vperm.slane %v5263, 0
      %v5392 = vperm.slane %v5264, 0
      %v5393 = vperm.slane %v5265, 0
      %v5394 = vperm.slane %v5266, 0
      %v5395 = vperm.slane %v5267, 0
      %v5396 = vperm.slane %v5268, 0
      %v5397 = vperm.slane %v5269, 0
      %v5398 = vperm.slane %v5270, 0
      %v5399 = vperm.slane %v5271, 0
      %v5400 = vperm.slane %v5272, 0
      %v5401 = vperm.slane %v5273, 0
      %v5402 = vperm.slane %v5274, 0
      %v5403 = vperm.slane %v5275, 0
      %v5404 = vperm.slane %v5276, 0
      %v5405 = vperm.slane %v5277, 0
      %v5406 = vperm.slane %v5278, 0
      %v5407 = vperm.slane %v5279, 0
      %v5408 = vperm.slane %v5280, 0
      %v5409 = vperm.slane %v5281, 0
      %v5410 = vperm.slane %v5282, 0
      %v5411 = vperm.slane %v5283, 0
      %v5412 = vperm.slane %v5284, 0
      %v5413 = vperm.slane %v5285, 0
      %v5414 = vperm.slane %v5286, 0
      %v5415 = vperm.slane %v5287, 0
      %v5416 = vperm.slane %v5288, 0
      %v5417 = vperm.slane %v5289, 0
      %v5418 = vperm.slane %v5290, 0
      %v5419 = vperm.slane %v5291, 0
      %v5420 = vperm.slane %v5292, 0
      %v5421 = vperm.slane %v5293, 0
      %v5422 = vperm.slane %v5294, 0
      %v5423 = vperm.slane %v5295, 0
      %v5424 = vperm.slane %v5296, 0
      %v5425 = vperm.slane %v5297, 0
      %v5426 = vperm.slane %v5298, 0
      %v5427 = vperm.slane %v5299, 0
      %v5428 = vperm.slane %v5300, 0
      %v5429 = vperm.slane %v5301, 0
      %v5430 = vperm.slane %v5302, 0
      %v5431 = vperm.slane %v5303, 0
      %v5432 = vperm.slane %v5304, 0
      %v5433 = vperm.slane %v5305, 0
      %v5434 = vperm.slane %v5306, 0
      %v5435 = vperm.slane %v5307, 0
      %v5436 = vperm.slane %v5308, 0
      %v5437 = vperm.slane %v5309, 0
      %v5438 = vperm.slane %v5310, 0
      %v5439 = vperm.slane %v5311, 0
      %v5440 = vperm.slane %v5312, 0
      %v5441 = vperm.slane %v5313, 0
      %v5442 = vperm.slane %v5314, 0
      %v5443 = vperm.slane %v5315, 0
      %v5444 = vperm.slane %v5316, 0
      %v5445 = vperm.slane %v5317, 0
      %v5446 = vperm.slane %v5318, 0
      %v5447 = vperm.slane %v5319, 0
      %v5448 = vperm.slane %v5320, 0
      %v5449 = vperm.slane %v5321, 0
      %v5450 = vsel %vm790, %v5387, %v5386
      %v5451 = vsel %vm792, %v5388, %v5450
      %v5452 = vsel %vm794, %v5389, %v5451
      %v5453 = vsel %vm796, %v5390, %v5452
      %v5454 = vsel %vm798, %v5391, %v5453
      %v5455 = vsel %vm800, %v5392, %v5454
      %v5456 = vsel %vm802, %v5393, %v5455
      %v5457 = vsel %vm790, %v5395, %v5394
      %v5458 = vsel %vm792, %v5396, %v5457
      %v5459 = vsel %vm794, %v5397, %v5458
      %v5460 = vsel %vm796, %v5398, %v5459
      %v5461 = vsel %vm798, %v5399, %v5460
      %v5462 = vsel %vm800, %v5400, %v5461
      %v5463 = vsel %vm802, %v5401, %v5462
      %v5464 = vsel %vm790, %v5403, %v5402
      %v5465 = vsel %vm792, %v5404, %v5464
      %v5466 = vsel %vm794, %v5405, %v5465
      %v5467 = vsel %vm796, %v5406, %v5466
      %v5468 = vsel %vm798, %v5407, %v5467
      %v5469 = vsel %vm800, %v5408, %v5468
      %v5470 = vsel %vm802, %v5409, %v5469
      %v5471 = vsel %vm790, %v5411, %v5410
      %v5472 = vsel %vm792, %v5412, %v5471
      %v5473 = vsel %vm794, %v5413, %v5472
      %v5474 = vsel %vm796, %v5414, %v5473
      %v5475 = vsel %vm798, %v5415, %v5474
      %v5476 = vsel %vm800, %v5416, %v5475
      %v5477 = vsel %vm802, %v5417, %v5476
      %v5478 = vsel %vm790, %v5419, %v5418
      %v5479 = vsel %vm792, %v5420, %v5478
      %v5480 = vsel %vm794, %v5421, %v5479
      %v5481 = vsel %vm796, %v5422, %v5480
      %v5482 = vsel %vm798, %v5423, %v5481
      %v5483 = vsel %vm800, %v5424, %v5482
      %v5484 = vsel %vm802, %v5425, %v5483
      %v5485 = vsel %vm790, %v5427, %v5426
      %v5486 = vsel %vm792, %v5428, %v5485
      %v5487 = vsel %vm794, %v5429, %v5486
      %v5488 = vsel %vm796, %v5430, %v5487
      %v5489 = vsel %vm798, %v5431, %v5488
      %v5490 = vsel %vm800, %v5432, %v5489
      %v5491 = vsel %vm802, %v5433, %v5490
      %v5492 = vsel %vm790, %v5435, %v5434
      %v5493 = vsel %vm792, %v5436, %v5492
      %v5494 = vsel %vm794, %v5437, %v5493
      %v5495 = vsel %vm796, %v5438, %v5494
      %v5496 = vsel %vm798, %v5439, %v5495
      %v5497 = vsel %vm800, %v5440, %v5496
      %v5498 = vsel %vm802, %v5441, %v5497
      %v5499 = vsel %vm790, %v5443, %v5442
      %v5500 = vsel %vm792, %v5444, %v5499
      %v5501 = vsel %vm794, %v5445, %v5500
      %v5502 = vsel %vm796, %v5446, %v5501
      %v5503 = vsel %vm798, %v5447, %v5502
      %v5504 = vsel %vm800, %v5448, %v5503
      %v5505 = vsel %vm802, %v5449, %v5504
      %5514 = vst.msk [vmem:[%s347] sm:$0xff] %vm1823, %v5456
      %5515 = vst.msk [vmem:[%s347 + $0x8] sm:$0xff] %vm1823, %v5463
      %5516 = vst.msk [vmem:[%s347 + $0x10] sm:$0xff] %vm1823, %v5470
      %5517 = vst.msk [vmem:[%s347 + $0x18] sm:$0xff] %vm1823, %v5477
      %5518 = vst.msk [vmem:[%s347 + $0x20] sm:$0xff] %vm1823, %v5484
      %5519 = vst.msk [vmem:[%s347 + $0x28] sm:$0xff] %vm1823, %v5491
      %5520 = vst.msk [vmem:[%s347 + $0x30] sm:$0xff] %vm1823, %v5498
      %5521 = vst.msk [vmem:[%s347 + $0x38] sm:$0xff] %vm1823, %v5505
      %p5522 = scmp.lt.s32.totalorder %s23, 1
      %s5523 = scalar_select %p5522, %s23, 1
      %s5524 = smul.addr %s5523, 4
      %s5525 = smul.addr %s5524, 4
      %s5526 = scalar_lea.vmem %s8, %s5525
      %p5527 = scmp.lt.s32.totalorder %s23, 1
      %s5528 = scalar_select %p5527, %s23, 1
      %s5529 = smul.addr %s5528, 8
      %s5530 = smul.addr %s5529, 8
      %s5531 = scalar_lea.vmem %s9, %s5530
      // Predicated region
      $region53: #{ms_image_dis_forward.2} parent=51 // pred_check
        %p5532 = pneg %p214
      $region54: #{ms_image_dis_forward.2} parent=51 // pred_check_branch
        %5534 = sbr.rel (%p5532) target = $region56
      $region55: #{ms_image_dis_forward.2} parent=51 // pred_region
        _
      $region56: #{ms_image_dis_forward.2} parent=51 // pred_fallthru
        _
      // Predicated region
      $region57: #{ms_image_dis_forward.2} parent=51 // pred_check
        %p5535 = pneg %p240
      $region58: #{ms_image_dis_forward.2} parent=51 // pred_check_branch
        %5537 = sbr.rel (%p5535) target = $region60
      $region59: #{ms_image_dis_forward.2} parent=51 // pred_region
        _
      $region60: #{ms_image_dis_forward.2} parent=51 // pred_fallthru
        _
    $region52: #{ms_image_dis_forward.2} parent=5 // pred_fallthru
      _
    %p5538 = scmp.le.s32.totalorder 2, %s18
    // Predicated region
    $region61: #{ms_image_dis_forward.2} parent=5 // pred_check
      %p5539 = pneg %p5538
    $region62: #{ms_image_dis_forward.2} parent=5 // pred_check_branch
      %5541 = sbr.rel (%p5539) target = $region64
    $region63: #{ms_image_dis_forward.2} parent=5 // pred_region
      %s5542 = ssub.s32 %s18, 2
      // Predicated region
      $region65: #{ms_image_dis_forward.2} parent=63 // pred_check
        %p5543 = pneg %p220
      $region66: #{ms_image_dis_forward.2} parent=63 // pred_check_branch
        %5545 = sbr.rel (%p5543) target = $region68
      $region67: #{ms_image_dis_forward.2} parent=63 // pred_region
        %p5546 = scmp.lt.s32.totalorder %s24, 1
        %s5547 = scalar_select %p5546, %s24, 1
        %s5548 = smul.addr %s5547, 4
        %s5549 = smul.addr %s5548, 4
        %s5550 = scalar_lea.vmem %s8, %s5549
      $region68: #{ms_image_dis_forward.2} parent=63 // pred_fallthru
        _
      // Predicated region
      $region69: #{ms_image_dis_forward.2} parent=63 // pred_check
        %p5551 = pneg %p246
      $region70: #{ms_image_dis_forward.2} parent=63 // pred_check_branch
        %5553 = sbr.rel (%p5551) target = $region72
      $region71: #{ms_image_dis_forward.2} parent=63 // pred_region
        %p5554 = scmp.lt.s32.totalorder %s24, 1
        %s5555 = scalar_select %p5554, %s24, 1
        %s5556 = smul.addr %s5555, 8
        %s5557 = smul.addr %s5556, 8
        %s5558 = scalar_lea.vmem %s9, %s5557
      $region72: #{ms_image_dis_forward.2} parent=63 // pred_fallthru
        _
    $region64: #{ms_image_dis_forward.2} parent=5 // pred_fallthru
      _
  $region6: #{ms_image_dis_forward.2} parent=0 // loop_footer
    %s22 = sadd.s32 1, %s18
  $region7: #{ms_image_dis_forward.2} parent=0 // loop_footer_branch
    %17 = sbr.rel target = $region3
  $region8: #{ms_image_dis_forward.2} parent=0 // loop_exit
    _

</llo_original>
